<compile_context>
chip_gen: v6e
topology: v6e:2x2x1
jax: 0.10.0
libtpu: 0.0.40
codegen_flags: <defaults>
</compile_context>

<pallas_src>
import functools

import jax
import jax.numpy as jnp
from jax import lax
from jax.experimental import pallas as pl
from jax.experimental.pallas import tpu as pltpu

NUM_CLASSES = 10
HIDDEN = 32


# ----------------------------------------------------------------------------
# Pallas matmul kernel (single K step, fused bias + optional ReLU epilogue).
# ----------------------------------------------------------------------------
def _matmul_kernel(a_ref, b_ref, bias_ref, o_ref, *, apply_relu):
    out = jnp.dot(a_ref[...], b_ref[...], preferred_element_type=jnp.float32)
    out = out + bias_ref[...]
    if apply_relu:
        out = jnp.maximum(out, 0.0)
    o_ref[...] = out.astype(o_ref.dtype)


def _round_up(x, m):
    return (x + m - 1) // m * m


def pallas_matmul(a, b, bias=None, relu=False):
    """(M,K) @ (K,N) + bias[N], optional ReLU, on the MXU (bf16 in, f32 acc)."""
    M, K = a.shape
    K2, N = b.shape
    assert K == K2
    if bias is None:
        bias = jnp.zeros((N,), jnp.float32)

    # K is never tiled: max K in this model is 896 (LSTM gates) -> padded 896.
    Kp = _round_up(K, 128)
    Np = _round_up(N, 128)
    Mp = _round_up(M, 16)
    if Mp > 1024:
        tm = 1024
        Mp = _round_up(Mp, tm)
    else:
        tm = Mp
    tn = Np if Np <= 512 else 512
    Np = _round_up(Np, tn)

    a_p = jnp.pad(a.astype(jnp.bfloat16), ((0, Mp - M), (0, Kp - K)))
    b_p = jnp.pad(b.astype(jnp.bfloat16), ((0, Kp - K), (0, Np - N)))
    bias_p = jnp.pad(bias.astype(jnp.float32), (0, Np - N)).reshape(1, Np)

    grid = (Mp // tm, Np // tn)
    out = pl.pallas_call(
        functools.partial(_matmul_kernel, apply_relu=relu),
        out_shape=jax.ShapeDtypeStruct((Mp, Np), jnp.float32),
        grid_spec=pltpu.PrefetchScalarGridSpec(
            num_scalar_prefetch=0,
            grid=grid,
            in_specs=[
                pl.BlockSpec((tm, Kp), lambda i, j: (i, 0)),
                pl.BlockSpec((Kp, tn), lambda i, j: (0, j)),
                pl.BlockSpec((1, tn), lambda i, j: (0, j)),
            ],
            out_specs=pl.BlockSpec((tm, tn), lambda i, j: (i, j)),
        ),
        compiler_params=pltpu.CompilerParams(
            dimension_semantics=("parallel", "parallel"),
            vmem_limit_bytes=32 * 1024 * 1024),
    )(a_p, b_p, bias_p)
    return out[:M, :N]


# ----------------------------------------------------------------------------
# Layers built on the Pallas matmul (conv via NHWC im2col) + JAX glue.
# ----------------------------------------------------------------------------
def conv2d(x, w, b=None, stride=1, pad=0, relu=False):
    # x: (N, H, W, Cin) ; w: (Cout, Cin, kh, kw) (PyTorch weight layout)
    # stride / pad MUST be static Python ints (never pytree leaves).
    N, H, W, Cin = x.shape
    Cout, _, kh, kw = w.shape
    Ho = (H + 2 * pad - kh) // stride + 1
    Wo = (W + 2 * pad - kw) // stride + 1
    xp = jnp.pad(x, ((0, 0), (pad, pad), (pad, pad), (0, 0)))
    cols = []
    for i in range(kh):
        for j in range(kw):
            cols.append(xp[:, i:i + stride * Ho:stride,
                           j:j + stride * Wo:stride, :])
    patches = jnp.concatenate(cols, axis=-1)          # (N, Ho, Wo, kh*kw*Cin)
    patches = patches.reshape(N * Ho * Wo, kh * kw * Cin)
    wm = w.transpose(2, 3, 1, 0).reshape(kh * kw * Cin, Cout)
    out = pallas_matmul(patches, wm, b, relu=relu)    # (N*Ho*Wo, Cout)
    return out.reshape(N, Ho, Wo, Cout)


def max_pool2d(x, k, s, pad=0):
    return lax.reduce_window(
        x, -jnp.inf, lax.max,
        (1, k, k, 1), (1, s, s, 1),
        [(0, 0), (pad, pad), (pad, pad), (0, 0)])


def fold_bn(w, b, bn, eps=1e-5):
    """Fold an inference BatchNorm into the preceding conv's weight/bias."""
    scale = bn["gamma"] / jnp.sqrt(bn["var"] + eps)
    shift = bn["beta"] - bn["mean"] * scale
    w2 = w * scale[:, None, None, None]
    b2 = shift if b is None else b * scale + shift
    return w2, b2


def adaptive_avg_pool2d(x, out_hw):
    # matches F.adaptive_avg_pool2d bucket semantics (works for both up/down).
    N, H, W, C = x.shape
    oh, ow = out_hw
    rows = []
    for i in range(oh):
        h0 = (i * H) // oh
        h1 = -(-((i + 1) * H) // oh)
        cols = []
        for j in range(ow):
            w0 = (j * W) // ow
            w1 = -(-((j + 1) * W) // ow)
            cols.append(jnp.mean(x[:, h0:h1, w0:w1, :], axis=(1, 2)))
        rows.append(jnp.stack(cols, axis=1))   # (N, ow, C)
    return jnp.stack(rows, axis=1)             # (N, oh, ow, C)


def basic_block(x, blk, stride):
    # `stride` is a static Python int (NOT stored in the params pytree).
    w1, b1 = fold_bn(blk["conv1_w"], None, blk["bn1"])
    out = conv2d(x, w1, b1, stride=stride, pad=1, relu=True)
    w2, b2 = fold_bn(blk["conv2_w"], None, blk["bn2"])
    out = conv2d(out, w2, b2, stride=1, pad=1)
    if "down_w" in blk:
        wd, bd = fold_bn(blk["down_w"], None, blk["down_bn"])
        identity = conv2d(x, wd, bd, stride=stride, pad=0)
    else:
        identity = x
    return jnp.maximum(out + identity, 0.0)


# Static ResNet layer strides (layer_name -> per-block stride).
RES_LAYER_STRIDES = {"layer1": (1, 1), "layer2": (2, 1), "layer3": (2, 1)}


def lstm_bidir_single_step(x, p):
    # x: (B, D); num_layers=1, seq_len=1, bidirectional, h0=c0=0.
    # h0 = 0 => the W_hh term vanishes; c0 = 0 => the forget-gate term vanishes.
    # Both directions fused into a single (B, 8H) gate matmul.
    H = HIDDEN
    w = jnp.concatenate([p["fwd"]["w_ih"], p["bwd"]["w_ih"]], axis=0).T  # (D, 8H)
    b = jnp.concatenate([p["fwd"]["b_ih"] + p["fwd"]["b_hh"],
                         p["bwd"]["b_ih"] + p["bwd"]["b_hh"]], axis=0)   # (8H,)
    gates = pallas_matmul(x, w, b)                                       # (B, 8H)

    def cell(g):
        i, f, g_, o = jnp.split(g, 4, axis=1)   # PyTorch gate order i,f,g,o
        c = jax.nn.sigmoid(i) * jnp.tanh(g_)
        return jax.nn.sigmoid(o) * jnp.tanh(c)

    h_fwd = cell(gates[:, :4 * H])
    h_bwd = cell(gates[:, 4 * H:])
    return jnp.concatenate([h_fwd, h_bwd], axis=-1)   # (B, 2H)


# ----------------------------------------------------------------------------
# Deterministic synthetic parameter init (pretrained weights not loadable).
# Params pytree contains ONLY jnp arrays (no Python ints -> safe under jit).
# ----------------------------------------------------------------------------
class _KeyGen:
    def __init__(self, seed):
        self.key = jax.random.PRNGKey(seed)

    def __call__(self):
        self.key, sub = jax.random.split(self.key)
        return sub


def init_params(seed=0):
    kg = _KeyGen(seed)

    def conv_w(cout, cin, k):
        fan = cin * k * k
        return jax.random.normal(kg(), (cout, cin, k, k),
                                 jnp.float32) * (2.0 / fan) ** 0.5

    def bias(n):
        return jax.random.normal(kg(), (n,), jnp.float32) * 0.01

    def bn(c):
        return dict(
            gamma=1.0 + 0.1 * jax.random.normal(kg(), (c,), jnp.float32),
            beta=0.1 * jax.random.normal(kg(), (c,), jnp.float32),
            mean=0.1 * jax.random.normal(kg(), (c,), jnp.float32),
            var=1.0 + 0.1 * jnp.abs(jax.random.normal(kg(), (c,), jnp.float32)),
        )

    p = {}
    # AlexNet features[:8] (scaled channels; same kernels/strides/paddings)
    p["alex"] = dict(w1=conv_w(16, 3, 11), b1=bias(16),
                     w2=conv_w(48, 16, 5), b2=bias(48),
                     w3=conv_w(96, 48, 3), b3=bias(96))
    # VGG11 features[:8]
    p["vgg"] = dict(w1=conv_w(16, 3, 3), b1=bias(16),
                    w2=conv_w(32, 16, 3), b2=bias(32),
                    w3=conv_w(64, 32, 3), b3=bias(64))

    # ResNet18 stem + layer1..layer3 (BasicBlocks); strides kept OUT of pytree.
    def block(cin, cout, stride):
        blk = dict(conv1_w=conv_w(cout, cin, 3), bn1=bn(cout),
                   conv2_w=conv_w(cout, cout, 3), bn2=bn(cout))
        if stride != 1 or cin != cout:
            blk["down_w"] = conv_w(cout, cin, 1)
            blk["down_bn"] = bn(cout)
        return blk

    p["res"] = dict(
        conv1_w=conv_w(16, 3, 7), bn1=bn(16),
        layer1=[block(16, 16, 1), block(16, 16, 1)],
        layer2=[block(16, 32, 2), block(32, 32, 1)],
        layer3=[block(32, 64, 2), block(64, 64, 1)],
    )

    # BiLSTM: input = (96 + 64 + 64) * 2 * 2 features flattened
    in_size = (96 + 64 + 64) * 2 * 2
    H = HIDDEN
    s = 1.0 / (H ** 0.5)

    def uni(shape):
        return jax.random.uniform(kg(), shape, jnp.float32, -s, s)

    def lstm_dir():
        return dict(w_ih=uni((4 * H, in_size)), w_hh=uni((4 * H, H)),
                    b_ih=uni((4 * H,)), b_hh=uni((4 * H,)))

    p["lstm"] = dict(fwd=lstm_dir(), bwd=lstm_dir())

    fin = 2 * H
    sf = 1.0 / (fin ** 0.5)
    p["fc"] = dict(
        w=jax.random.uniform(kg(), (NUM_CLASSES, fin), jnp.float32, -sf, sf),
        b=jax.random.uniform(kg(), (NUM_CLASSES,), jnp.float32, -sf, sf))
    return p


# ----------------------------------------------------------------------------
# Forward pass (mirrors CRNN.forward; external interface is NCHW like PyTorch).
# ----------------------------------------------------------------------------
def _crnn_forward(params, x_nchw):
    x = x_nchw.transpose(0, 2, 3, 1)   # NHWC internal layout (lane-dense C)

    # AlexNet.features[:8]
    a = params["alex"]
    fa = conv2d(x, a["w1"], a["b1"], stride=4, pad=2, relu=True)
    fa = max_pool2d(fa, 3, 2)
    fa = conv2d(fa, a["w2"], a["b2"], stride=1, pad=2, relu=True)
    fa = max_pool2d(fa, 3, 2)
    fa = conv2d(fa, a["w3"], a["b3"], stride=1, pad=1, relu=True)

    # VGG11.features[:8]
    v = params["vgg"]
    fv = conv2d(x, v["w1"], v["b1"], pad=1, relu=True)
    fv = max_pool2d(fv, 2, 2)
    fv = conv2d(fv, v["w2"], v["b2"], pad=1, relu=True)
    fv = max_pool2d(fv, 2, 2)
    fv = conv2d(fv, v["w3"], v["b3"], pad=1, relu=True)

    # ResNet18: conv1 / bn1 / relu / maxpool / layer1..layer3 (BN folded)
    r = params["res"]
    w1, b1 = fold_bn(r["conv1_w"], None, r["bn1"])
    fr = conv2d(x, w1, b1, stride=2, pad=3, relu=True)
    fr = max_pool2d(fr, 3, 2, pad=1)
    for name in ("layer1", "layer2", "layer3"):
        for blk, stride in zip(r[name], RES_LAYER_STRIDES[name]):
            fr = basic_block(fr, blk, stride)

    oh, ow = fr.shape[1], fr.shape[2]
    fa = adaptive_avg_pool2d(fa, (oh, ow))
    fv = adaptive_avg_pool2d(fv, (oh, ow))

    combined = jnp.concatenate([fa, fv, fr], axis=-1)           # (B, 2, 2, 224)
    # Flatten in (C, H, W) order to match the PyTorch NCHW .view(B, -1).
    lstm_input = combined.transpose(0, 3, 1, 2).reshape(combined.shape[0], -1)

    h = lstm_bidir_single_step(lstm_input, params["lstm"])      # (B, 2*HIDDEN)

    # F.avg_pool2d over the length-1 time axis is the identity.
    pooled = h

    # Tiny FC (2 x 64 x 10): plain jnp.dot — padding it to an MXU tile wastes
    # >99% of the launch.
    fc = params["fc"]
    return jnp.dot(pooled, fc["w"].T) + fc["b"]                 # (B, NUM_CLASSES)


crnn_forward = jax.jit(_crnn_forward)


if __name__ == "__main__":
    params = init_params(seed=0)
    x = jax.random.normal(jax.random.PRNGKey(0), (2, 3, 32, 32), jnp.float32)
    out = crnn_forward(params, x)
    out = jax.block_until_ready(out)
    assert out.shape == (2, NUM_CLASSES)
    assert bool(jnp.all(jnp.isfinite(out)))
    print("KERNEL_OK")
</pallas_src>

<mosaic_0001>
module attributes {stable_mosaic.version = 11 : i64} {
  func.func @_matmul_kernel(%arg0: i32, %arg1: i32, %arg2: memref<112x384xbf16, #tpu.memory_space<vmem>>, %arg3: memref<384x128xbf16, #tpu.memory_space<vmem>>, %arg4: memref<1x128xf32, #tpu.memory_space<vmem>>, %arg5: memref<112x128xf32, #tpu.memory_space<vmem>>) attributes {dimension_semantics = [#tpu.dimension_semantics<parallel>, #tpu.dimension_semantics<parallel>], iteration_bounds = array<i64: 1, 1>, scalar_prefetch = 0 : i64, scratch_operands = 0 : i64, tpu.core_type = #tpu.core_type<tc>, window_params = [{transform_indices = @transform_0, window_bounds = array<i64: 112, 384>}, {transform_indices = @transform_1, window_bounds = array<i64: 384, 128>}, {transform_indices = @transform_2, window_bounds = array<i64: 1, 128>}, {transform_indices = @transform_3, window_bounds = array<i64: 112, 128>}]} {
    %c0 = arith.constant 0 : index
    %c0_0 = arith.constant 0 : index
    %0 = vector.load %arg2[%c0, %c0_0] : memref<112x384xbf16, #tpu.memory_space<vmem>>, vector<112x384xbf16>
    %c0_1 = arith.constant 0 : index
    %c0_2 = arith.constant 0 : index
    %1 = vector.load %arg3[%c0_1, %c0_2] : memref<384x128xbf16, #tpu.memory_space<vmem>>, vector<384x128xbf16>
    %cst = arith.constant dense<0.000000e+00> : vector<112x128xf32>
    %2 = tpu.matmul %0, %1, %cst {dimension_numbers = #tpu.dot_dimension_numbers<[1], [0], [0], [1], [0, 0, 1, 1], [], []>} : vector<112x384xbf16>, vector<384x128xbf16>, vector<112x128xf32> -> vector<112x128xf32>
    %c0_3 = arith.constant 0 : index
    %c0_4 = arith.constant 0 : index
    %3 = vector.load %arg4[%c0_3, %c0_4] : memref<1x128xf32, #tpu.memory_space<vmem>>, vector<1x128xf32>
    %4 = vector.broadcast %3 : vector<1x128xf32> to vector<112x128xf32>
    %5 = arith.addf %2, %4 : vector<112x128xf32>
    %cst_5 = arith.constant 0.000000e+00 : f32
    %6 = vector.broadcast %cst_5 : f32 to vector<112x128xf32>
    %7 = arith.maximumf %5, %6 : vector<112x128xf32>
    %c0_6 = arith.constant 0 : index
    %c0_7 = arith.constant 0 : index
    %8 = vector.load %arg5[%c0_6, %c0_7] : memref<112x128xf32, #tpu.memory_space<vmem>>, vector<112x128xf32>
    tpu.vector_store %arg5[%c0_6, %c0_7], %7 {strides = array<i32>} : memref<112x128xf32, #tpu.memory_space<vmem>>, vector<112x128xf32>,
    return
  }
  func.func @transform_0(%arg0: i32, %arg1: i32) -> (i32, i32) {
    %c0_i32 = arith.constant 0 : i32
    %c0_i32_0 = arith.constant 0 : i32
    return %arg0, %c0_i32 : i32, i32
  }
  func.func @transform_1(%arg0: i32, %arg1: i32) -> (i32, i32) {
    %c0_i32 = arith.constant 0 : i32
    %c0_i32_0 = arith.constant 0 : i32
    return %c0_i32, %arg1 : i32, i32
  }
  func.func @transform_2(%arg0: i32, %arg1: i32) -> (i32, i32) {
    %c0_i32 = arith.constant 0 : i32
    %c0_i32_0 = arith.constant 0 : i32
    return %c0_i32, %arg1 : i32, i32
  }
  func.func @transform_3(%arg0: i32, %arg1: i32) -> (i32, i32) {
    %c0_i32 = arith.constant 0 : i32
    return %arg0, %arg1 : i32, i32
  }
}

module attributes {stable_mosaic.version = 11 : i64} {
  func.func @_matmul_kernel(%arg0: i32, %arg1: i32, %arg2: memref<32x512xbf16, #tpu.memory_space<vmem>>, %arg3: memref<512x128xbf16, #tpu.memory_space<vmem>>, %arg4: memref<1x128xf32, #tpu.memory_space<vmem>>, %arg5: memref<32x128xf32, #tpu.memory_space<vmem>>) attributes {dimension_semantics = [#tpu.dimension_semantics<parallel>, #tpu.dimension_semantics<parallel>], iteration_bounds = array<i64: 1, 1>, scalar_prefetch = 0 : i64, scratch_operands = 0 : i64, tpu.core_type = #tpu.core_type<tc>, window_params = [{transform_indices = @transform_0, window_bounds = array<i64: 32, 512>}, {transform_indices = @transform_1, window_bounds = array<i64: 512, 128>}, {transform_indices = @transform_2, window_bounds = array<i64: 1, 128>}, {transform_indices = @transform_3, window_bounds = array<i64: 32, 128>}]} {
    %c0 = arith.constant 0 : index
    %c0_0 = arith.constant 0 : index
    %0 = vector.load %arg2[%c0, %c0_0] : memref<32x512xbf16, #tpu.memory_space<vmem>>, vector<32x512xbf16>
    %c0_1 = arith.constant 0 : index
    %c0_2 = arith.constant 0 : index
    %1 = vector.load %arg3[%c0_1, %c0_2] : memref<512x128xbf16, #tpu.memory_space<vmem>>, vector<512x128xbf16>
    %cst = arith.constant dense<0.000000e+00> : vector<32x128xf32>
    %2 = tpu.matmul %0, %1, %cst {dimension_numbers = #tpu.dot_dimension_numbers<[1], [0], [0], [1], [0, 0, 1, 1], [], []>} : vector<32x512xbf16>, vector<512x128xbf16>, vector<32x128xf32> -> vector<32x128xf32>
    %c0_3 = arith.constant 0 : index
    %c0_4 = arith.constant 0 : index
    %3 = vector.load %arg4[%c0_3, %c0_4] : memref<1x128xf32, #tpu.memory_space<vmem>>, vector<1x128xf32>
    %4 = vector.broadcast %3 : vector<1x128xf32> to vector<32x128xf32>
    %5 = arith.addf %2, %4 : vector<32x128xf32>
    %cst_5 = arith.constant 0.000000e+00 : f32
    %6 = vector.broadcast %cst_5 : f32 to vector<32x128xf32>
    %7 = arith.maximumf %5, %6 : vector<32x128xf32>
    %c0_6 = arith.constant 0 : index
    %c0_7 = arith.constant 0 : index
    %8 = vector.load %arg5[%c0_6, %c0_7] : memref<32x128xf32, #tpu.memory_space<vmem>>, vector<32x128xf32>
    tpu.vector_store %arg5[%c0_6, %c0_7], %7 {strides = array<i32>} : memref<32x128xf32, #tpu.memory_space<vmem>>, vector<32x128xf32>,
    return
  }
  func.func @transform_0(%arg0: i32, %arg1: i32) -> (i32, i32) {
    %c0_i32 = arith.constant 0 : i32
    %c0_i32_0 = arith.constant 0 : i32
    return %arg0, %c0_i32 : i32, i32
  }
  func.func @transform_1(%arg0: i32, %arg1: i32) -> (i32, i32) {
    %c0_i32 = arith.constant 0 : i32
    %c0_i32_0 = arith.constant 0 : i32
    return %c0_i32, %arg1 : i32, i32
  }
  func.func @transform_2(%arg0: i32, %arg1: i32) -> (i32, i32) {
    %c0_i32 = arith.constant 0 : i32
    %c0_i32_0 = arith.constant 0 : i32
    return %c0_i32, %arg1 : i32, i32
  }
  func.func @transform_3(%arg0: i32, %arg1: i32) -> (i32, i32) {
    %c0_i32 = arith.constant 0 : i32
    return %arg0, %arg1 : i32, i32
  }
}

module attributes {stable_mosaic.version = 11 : i64} {
  func.func @_matmul_kernel(%arg0: i32, %arg1: i32, %arg2: memref<16x512xbf16, #tpu.memory_space<vmem>>, %arg3: memref<512x128xbf16, #tpu.memory_space<vmem>>, %arg4: memref<1x128xf32, #tpu.memory_space<vmem>>, %arg5: memref<16x128xf32, #tpu.memory_space<vmem>>) attributes {dimension_semantics = [#tpu.dimension_semantics<parallel>, #tpu.dimension_semantics<parallel>], iteration_bounds = array<i64: 1, 1>, scalar_prefetch = 0 : i64, scratch_operands = 0 : i64, tpu.core_type = #tpu.core_type<tc>, window_params = [{transform_indices = @transform_0, window_bounds = array<i64: 16, 512>}, {transform_indices = @transform_1, window_bounds = array<i64: 512, 128>}, {transform_indices = @transform_2, window_bounds = array<i64: 1, 128>}, {transform_indices = @transform_3, window_bounds = array<i64: 16, 128>}]} {
    %c0 = arith.constant 0 : index
    %c0_0 = arith.constant 0 : index
    %0 = vector.load %arg2[%c0, %c0_0] : memref<16x512xbf16, #tpu.memory_space<vmem>>, vector<16x512xbf16>
    %c0_1 = arith.constant 0 : index
    %c0_2 = arith.constant 0 : index
    %1 = vector.load %arg3[%c0_1, %c0_2] : memref<512x128xbf16, #tpu.memory_space<vmem>>, vector<512x128xbf16>
    %cst = arith.constant dense<0.000000e+00> : vector<16x128xf32>
    %2 = tpu.matmul %0, %1, %cst {dimension_numbers = #tpu.dot_dimension_numbers<[1], [0], [0], [1], [0, 0, 1, 1], [], []>} : vector<16x512xbf16>, vector<512x128xbf16>, vector<16x128xf32> -> vector<16x128xf32>
    %c0_3 = arith.constant 0 : index
    %c0_4 = arith.constant 0 : index
    %3 = vector.load %arg4[%c0_3, %c0_4] : memref<1x128xf32, #tpu.memory_space<vmem>>, vector<1x128xf32>
    %4 = vector.broadcast %3 : vector<1x128xf32> to vector<16x128xf32>
    %5 = arith.addf %2, %4 : vector<16x128xf32>
    %cst_5 = arith.constant 0.000000e+00 : f32
    %6 = vector.broadcast %cst_5 : f32 to vector<16x128xf32>
    %7 = arith.maximumf %5, %6 : vector<16x128xf32>
    %c0_6 = arith.constant 0 : index
    %c0_7 = arith.constant 0 : index
    %8 = vector.load %arg5[%c0_6, %c0_7] : memref<16x128xf32, #tpu.memory_space<vmem>>, vector<16x128xf32>
    tpu.vector_store %arg5[%c0_6, %c0_7], %7 {strides = array<i32>} : memref<16x128xf32, #tpu.memory_space<vmem>>, vector<16x128xf32>,
    return
  }
  func.func @transform_0(%arg0: i32, %arg1: i32) -> (i32, i32) {
    %c0_i32 = arith.constant 0 : i32
    %c0_i32_0 = arith.constant 0 : i32
    return %arg0, %c0_i32 : i32, i32
  }
  func.func @transform_1(%arg0: i32, %arg1: i32) -> (i32, i32) {
    %c0_i32 = arith.constant 0 : i32
    %c0_i32_0 = arith.constant 0 : i32
    return %c0_i32, %arg1 : i32, i32
  }
  func.func @transform_2(%arg0: i32, %arg1: i32) -> (i32, i32) {
    %c0_i32 = arith.constant 0 : i32
    %c0_i32_0 = arith.constant 0 : i32
    return %c0_i32, %arg1 : i32, i32
  }
  func.func @transform_3(%arg0: i32, %arg1: i32) -> (i32, i32) {
    %c0_i32 = arith.constant 0 : i32
    return %arg0, %arg1 : i32, i32
  }
}

module attributes {stable_mosaic.version = 11 : i64} {
  func.func @_matmul_kernel(%arg0: i32, %arg1: i32, %arg2: memref<1024x128xbf16, #tpu.memory_space<vmem>>, %arg3: memref<128x128xbf16, #tpu.memory_space<vmem>>, %arg4: memref<1x128xf32, #tpu.memory_space<vmem>>, %arg5: memref<1024x128xf32, #tpu.memory_space<vmem>>) attributes {dimension_semantics = [#tpu.dimension_semantics<parallel>, #tpu.dimension_semantics<parallel>], iteration_bounds = array<i64: 2, 1>, scalar_prefetch = 0 : i64, scratch_operands = 0 : i64, tpu.core_type = #tpu.core_type<tc>, window_params = [{transform_indices = @transform_0, window_bounds = array<i64: 1024, 128>}, {transform_indices = @transform_1, window_bounds = array<i64: 128, 128>}, {transform_indices = @transform_2, window_bounds = array<i64: 1, 128>}, {transform_indices = @transform_3, window_bounds = array<i64: 1024, 128>}]} {
    %c0 = arith.constant 0 : index
    %c0_0 = arith.constant 0 : index
    %0 = vector.load %arg2[%c0, %c0_0] : memref<1024x128xbf16, #tpu.memory_space<vmem>>, vector<1024x128xbf16>
    %c0_1 = arith.constant 0 : index
    %c0_2 = arith.constant 0 : index
    %1 = vector.load %arg3[%c0_1, %c0_2] : memref<128x128xbf16, #tpu.memory_space<vmem>>, vector<128x128xbf16>
    %cst = arith.constant dense<0.000000e+00> : vector<1024x128xf32>
    %2 = tpu.matmul %0, %1, %cst {dimension_numbers = #tpu.dot_dimension_numbers<[1], [0], [0], [1], [0, 0, 1, 1], [], []>} : vector<1024x128xbf16>, vector<128x128xbf16>, vector<1024x128xf32> -> vector<1024x128xf32>
    %c0_3 = arith.constant 0 : index
    %c0_4 = arith.constant 0 : index
    %3 = vector.load %arg4[%c0_3, %c0_4] : memref<1x128xf32, #tpu.memory_space<vmem>>, vector<1x128xf32>
    %4 = vector.broadcast %3 : vector<1x128xf32> to vector<1024x128xf32>
    %5 = arith.addf %2, %4 : vector<1024x128xf32>
    %cst_5 = arith.constant 0.000000e+00 : f32
    %6 = vector.broadcast %cst_5 : f32 to vector<1024x128xf32>
    %7 = arith.maximumf %5, %6 : vector<1024x128xf32>
    %c0_6 = arith.constant 0 : index
    %c0_7 = arith.constant 0 : index
    %8 = vector.load %arg5[%c0_6, %c0_7] : memref<1024x128xf32, #tpu.memory_space<vmem>>, vector<1024x128xf32>
    tpu.vector_store %arg5[%c0_6, %c0_7], %7 {strides = array<i32>} : memref<1024x128xf32, #tpu.memory_space<vmem>>, vector<1024x128xf32>,
    return
  }
  func.func @transform_0(%arg0: i32, %arg1: i32) -> (i32, i32) {
    %c0_i32 = arith.constant 0 : i32
    %c0_i32_0 = arith.constant 0 : i32
    return %arg0, %c0_i32 : i32, i32
  }
  func.func @transform_1(%arg0: i32, %arg1: i32) -> (i32, i32) {
    %c0_i32 = arith.constant 0 : i32
    %c0_i32_0 = arith.constant 0 : i32
    return %c0_i32, %arg1 : i32, i32
  }
  func.func @transform_2(%arg0: i32, %arg1: i32) -> (i32, i32) {
    %c0_i32 = arith.constant 0 : i32
    %c0_i32_0 = arith.constant 0 : i32
    return %c0_i32, %arg1 : i32, i32
  }
  func.func @transform_3(%arg0: i32, %arg1: i32) -> (i32, i32) {
    %c0_i32 = arith.constant 0 : i32
    return %arg0, %arg1 : i32, i32
  }
}

module attributes {stable_mosaic.version = 11 : i64} {
  func.func @_matmul_kernel(%arg0: i32, %arg1: i32, %arg2: memref<512x256xbf16, #tpu.memory_space<vmem>>, %arg3: memref<256x128xbf16, #tpu.memory_space<vmem>>, %arg4: memref<1x128xf32, #tpu.memory_space<vmem>>, %arg5: memref<512x128xf32, #tpu.memory_space<vmem>>) attributes {dimension_semantics = [#tpu.dimension_semantics<parallel>, #tpu.dimension_semantics<parallel>], iteration_bounds = array<i64: 1, 1>, scalar_prefetch = 0 : i64, scratch_operands = 0 : i64, tpu.core_type = #tpu.core_type<tc>, window_params = [{transform_indices = @transform_0, window_bounds = array<i64: 512, 256>}, {transform_indices = @transform_1, window_bounds = array<i64: 256, 128>}, {transform_indices = @transform_2, window_bounds = array<i64: 1, 128>}, {transform_indices = @transform_3, window_bounds = array<i64: 512, 128>}]} {
    %c0 = arith.constant 0 : index
    %c0_0 = arith.constant 0 : index
    %0 = vector.load %arg2[%c0, %c0_0] : memref<512x256xbf16, #tpu.memory_space<vmem>>, vector<512x256xbf16>
    %c0_1 = arith.constant 0 : index
    %c0_2 = arith.constant 0 : index
    %1 = vector.load %arg3[%c0_1, %c0_2] : memref<256x128xbf16, #tpu.memory_space<vmem>>, vector<256x128xbf16>
    %cst = arith.constant dense<0.000000e+00> : vector<512x128xf32>
    %2 = tpu.matmul %0, %1, %cst {dimension_numbers = #tpu.dot_dimension_numbers<[1], [0], [0], [1], [0, 0, 1, 1], [], []>} : vector<512x256xbf16>, vector<256x128xbf16>, vector<512x128xf32> -> vector<512x128xf32>
    %c0_3 = arith.constant 0 : index
    %c0_4 = arith.constant 0 : index
    %3 = vector.load %arg4[%c0_3, %c0_4] : memref<1x128xf32, #tpu.memory_space<vmem>>, vector<1x128xf32>
    %4 = vector.broadcast %3 : vector<1x128xf32> to vector<512x128xf32>
    %5 = arith.addf %2, %4 : vector<512x128xf32>
    %cst_5 = arith.constant 0.000000e+00 : f32
    %6 = vector.broadcast %cst_5 : f32 to vector<512x128xf32>
    %7 = arith.maximumf %5, %6 : vector<512x128xf32>
    %c0_6 = arith.constant 0 : index
    %c0_7 = arith.constant 0 : index
    %8 = vector.load %arg5[%c0_6, %c0_7] : memref<512x128xf32, #tpu.memory_space<vmem>>, vector<512x128xf32>
    tpu.vector_store %arg5[%c0_6, %c0_7], %7 {strides = array<i32>} : memref<512x128xf32, #tpu.memory_space<vmem>>, vector<512x128xf32>,
    return
  }
  func.func @transform_0(%arg0: i32, %arg1: i32) -> (i32, i32) {
    %c0_i32 = arith.constant 0 : i32
    %c0_i32_0 = arith.constant 0 : i32
    return %arg0, %c0_i32 : i32, i32
  }
  func.func @transform_1(%arg0: i32, %arg1: i32) -> (i32, i32) {
    %c0_i32 = arith.constant 0 : i32
    %c0_i32_0 = arith.constant 0 : i32
    return %c0_i32, %arg1 : i32, i32
  }
  func.func @transform_2(%arg0: i32, %arg1: i32) -> (i32, i32) {
    %c0_i32 = arith.constant 0 : i32
    %c0_i32_0 = arith.constant 0 : i32
    return %c0_i32, %arg1 : i32, i32
  }
  func.func @transform_3(%arg0: i32, %arg1: i32) -> (i32, i32) {
    %c0_i32 = arith.constant 0 : i32
    return %arg0, %arg1 : i32, i32
  }
}

module attributes {stable_mosaic.version = 11 : i64} {
  func.func @_matmul_kernel(%arg0: i32, %arg1: i32, %arg2: memref<128x384xbf16, #tpu.memory_space<vmem>>, %arg3: memref<384x128xbf16, #tpu.memory_space<vmem>>, %arg4: memref<1x128xf32, #tpu.memory_space<vmem>>, %arg5: memref<128x128xf32, #tpu.memory_space<vmem>>) attributes {dimension_semantics = [#tpu.dimension_semantics<parallel>, #tpu.dimension_semantics<parallel>], iteration_bounds = array<i64: 1, 1>, scalar_prefetch = 0 : i64, scratch_operands = 0 : i64, tpu.core_type = #tpu.core_type<tc>, window_params = [{transform_indices = @transform_0, window_bounds = array<i64: 128, 384>}, {transform_indices = @transform_1, window_bounds = array<i64: 384, 128>}, {transform_indices = @transform_2, window_bounds = array<i64: 1, 128>}, {transform_indices = @transform_3, window_bounds = array<i64: 128, 128>}]} {
    %c0 = arith.constant 0 : index
    %c0_0 = arith.constant 0 : index
    %0 = vector.load %arg2[%c0, %c0_0] : memref<128x384xbf16, #tpu.memory_space<vmem>>, vector<128x384xbf16>
    %c0_1 = arith.constant 0 : index
    %c0_2 = arith.constant 0 : index
    %1 = vector.load %arg3[%c0_1, %c0_2] : memref<384x128xbf16, #tpu.memory_space<vmem>>, vector<384x128xbf16>
    %cst = arith.constant dense<0.000000e+00> : vector<128x128xf32>
    %2 = tpu.matmul %0, %1, %cst {dimension_numbers = #tpu.dot_dimension_numbers<[1], [0], [0], [1], [0, 0, 1, 1], [], []>} : vector<128x384xbf16>, vector<384x128xbf16>, vector<128x128xf32> -> vector<128x128xf32>
    %c0_3 = arith.constant 0 : index
    %c0_4 = arith.constant 0 : index
    %3 = vector.load %arg4[%c0_3, %c0_4] : memref<1x128xf32, #tpu.memory_space<vmem>>, vector<1x128xf32>
    %4 = vector.broadcast %3 : vector<1x128xf32> to vector<128x128xf32>
    %5 = arith.addf %2, %4 : vector<128x128xf32>
    %cst_5 = arith.constant 0.000000e+00 : f32
    %6 = vector.broadcast %cst_5 : f32 to vector<128x128xf32>
    %7 = arith.maximumf %5, %6 : vector<128x128xf32>
    %c0_6 = arith.constant 0 : index
    %c0_7 = arith.constant 0 : index
    %8 = vector.load %arg5[%c0_6, %c0_7] : memref<128x128xf32, #tpu.memory_space<vmem>>, vector<128x128xf32>
    tpu.vector_store %arg5[%c0_6, %c0_7], %7 {strides = array<i32>} : memref<128x128xf32, #tpu.memory_space<vmem>>, vector<128x128xf32>,
    return
  }
  func.func @transform_0(%arg0: i32, %arg1: i32) -> (i32, i32) {
    %c0_i32 = arith.constant 0 : i32
    %c0_i32_0 = arith.constant 0 : i32
    return %arg0, %c0_i32 : i32, i32
  }
  func.func @transform_1(%arg0: i32, %arg1: i32) -> (i32, i32) {
    %c0_i32 = arith.constant 0 : i32
    %c0_i32_0 = arith.constant 0 : i32
    return %c0_i32, %arg1 : i32, i32
  }
  func.func @transform_2(%arg0: i32, %arg1: i32) -> (i32, i32) {
    %c0_i32 = arith.constant 0 : i32
    %c0_i32_0 = arith.constant 0 : i32
    return %c0_i32, %arg1 : i32, i32
  }
  func.func @transform_3(%arg0: i32, %arg1: i32) -> (i32, i32) {
    %c0_i32 = arith.constant 0 : i32
    return %arg0, %arg1 : i32, i32
  }
}

module attributes {stable_mosaic.version = 11 : i64} {
  func.func @_matmul_kernel(%arg0: i32, %arg1: i32, %arg2: memref<128x256xbf16, #tpu.memory_space<vmem>>, %arg3: memref<256x128xbf16, #tpu.memory_space<vmem>>, %arg4: memref<1x128xf32, #tpu.memory_space<vmem>>, %arg5: memref<128x128xf32, #tpu.memory_space<vmem>>) attributes {dimension_semantics = [#tpu.dimension_semantics<parallel>, #tpu.dimension_semantics<parallel>], iteration_bounds = array<i64: 1, 1>, scalar_prefetch = 0 : i64, scratch_operands = 0 : i64, tpu.core_type = #tpu.core_type<tc>, window_params = [{transform_indices = @transform_0, window_bounds = array<i64: 128, 256>}, {transform_indices = @transform_1, window_bounds = array<i64: 256, 128>}, {transform_indices = @transform_2, window_bounds = array<i64: 1, 128>}, {transform_indices = @transform_3, window_bounds = array<i64: 128, 128>}]} {
    %c0 = arith.constant 0 : index
    %c0_0 = arith.constant 0 : index
    %0 = vector.load %arg2[%c0, %c0_0] : memref<128x256xbf16, #tpu.memory_space<vmem>>, vector<128x256xbf16>
    %c0_1 = arith.constant 0 : index
    %c0_2 = arith.constant 0 : index
    %1 = vector.load %arg3[%c0_1, %c0_2] : memref<256x128xbf16, #tpu.memory_space<vmem>>, vector<256x128xbf16>
    %cst = arith.constant dense<0.000000e+00> : vector<128x128xf32>
    %2 = tpu.matmul %0, %1, %cst {dimension_numbers = #tpu.dot_dimension_numbers<[1], [0], [0], [1], [0, 0, 1, 1], [], []>} : vector<128x256xbf16>, vector<256x128xbf16>, vector<128x128xf32> -> vector<128x128xf32>
    %c0_3 = arith.constant 0 : index
    %c0_4 = arith.constant 0 : index
    %3 = vector.load %arg4[%c0_3, %c0_4] : memref<1x128xf32, #tpu.memory_space<vmem>>, vector<1x128xf32>
    %4 = vector.broadcast %3 : vector<1x128xf32> to vector<128x128xf32>
    %5 = arith.addf %2, %4 : vector<128x128xf32>
    %cst_5 = arith.constant 0.000000e+00 : f32
    %6 = vector.broadcast %cst_5 : f32 to vector<128x128xf32>
    %7 = arith.maximumf %5, %6 : vector<128x128xf32>
    %c0_6 = arith.constant 0 : index
    %c0_7 = arith.constant 0 : index
    %8 = vector.load %arg5[%c0_6, %c0_7] : memref<128x128xf32, #tpu.memory_space<vmem>>, vector<128x128xf32>
    tpu.vector_store %arg5[%c0_6, %c0_7], %7 {strides = array<i32>} : memref<128x128xf32, #tpu.memory_space<vmem>>, vector<128x128xf32>,
    return
  }
  func.func @transform_0(%arg0: i32, %arg1: i32) -> (i32, i32) {
    %c0_i32 = arith.constant 0 : i32
    %c0_i32_0 = arith.constant 0 : i32
    return %arg0, %c0_i32 : i32, i32
  }
  func.func @transform_1(%arg0: i32, %arg1: i32) -> (i32, i32) {
    %c0_i32 = arith.constant 0 : i32
    %c0_i32_0 = arith.constant 0 : i32
    return %c0_i32, %arg1 : i32, i32
  }
  func.func @transform_2(%arg0: i32, %arg1: i32) -> (i32, i32) {
    %c0_i32 = arith.constant 0 : i32
    %c0_i32_0 = arith.constant 0 : i32
    return %c0_i32, %arg1 : i32, i32
  }
  func.func @transform_3(%arg0: i32, %arg1: i32) -> (i32, i32) {
    %c0_i32 = arith.constant 0 : i32
    return %arg0, %arg1 : i32, i32
  }
}

module attributes {stable_mosaic.version = 11 : i64} {
  func.func @_matmul_kernel(%arg0: i32, %arg1: i32, %arg2: memref<128x256xbf16, #tpu.memory_space<vmem>>, %arg3: memref<256x128xbf16, #tpu.memory_space<vmem>>, %arg4: memref<1x128xf32, #tpu.memory_space<vmem>>, %arg5: memref<128x128xf32, #tpu.memory_space<vmem>>) attributes {dimension_semantics = [#tpu.dimension_semantics<parallel>, #tpu.dimension_semantics<parallel>], iteration_bounds = array<i64: 1, 1>, scalar_prefetch = 0 : i64, scratch_operands = 0 : i64, tpu.core_type = #tpu.core_type<tc>, window_params = [{transform_indices = @transform_0, window_bounds = array<i64: 128, 256>}, {transform_indices = @transform_1, window_bounds = array<i64: 256, 128>}, {transform_indices = @transform_2, window_bounds = array<i64: 1, 128>}, {transform_indices = @transform_3, window_bounds = array<i64: 128, 128>}]} {
    %c0 = arith.constant 0 : index
    %c0_0 = arith.constant 0 : index
    %0 = vector.load %arg2[%c0, %c0_0] : memref<128x256xbf16, #tpu.memory_space<vmem>>, vector<128x256xbf16>
    %c0_1 = arith.constant 0 : index
    %c0_2 = arith.constant 0 : index
    %1 = vector.load %arg3[%c0_1, %c0_2] : memref<256x128xbf16, #tpu.memory_space<vmem>>, vector<256x128xbf16>
    %cst = arith.constant dense<0.000000e+00> : vector<128x128xf32>
    %2 = tpu.matmul %0, %1, %cst {dimension_numbers = #tpu.dot_dimension_numbers<[1], [0], [0], [1], [0, 0, 1, 1], [], []>} : vector<128x256xbf16>, vector<256x128xbf16>, vector<128x128xf32> -> vector<128x128xf32>
    %c0_3 = arith.constant 0 : index
    %c0_4 = arith.constant 0 : index
    %3 = vector.load %arg4[%c0_3, %c0_4] : memref<1x128xf32, #tpu.memory_space<vmem>>, vector<1x128xf32>
    %4 = vector.broadcast %3 : vector<1x128xf32> to vector<128x128xf32>
    %5 = arith.addf %2, %4 : vector<128x128xf32>
    %c0_5 = arith.constant 0 : index
    %c0_6 = arith.constant 0 : index
    %6 = vector.load %arg5[%c0_5, %c0_6] : memref<128x128xf32, #tpu.memory_space<vmem>>, vector<128x128xf32>
    tpu.vector_store %arg5[%c0_5, %c0_6], %5 {strides = array<i32>} : memref<128x128xf32, #tpu.memory_space<vmem>>, vector<128x128xf32>,
    return
  }
  func.func @transform_0(%arg0: i32, %arg1: i32) -> (i32, i32) {
    %c0_i32 = arith.constant 0 : i32
    %c0_i32_0 = arith.constant 0 : i32
    return %arg0, %c0_i32 : i32, i32
  }
  func.func @transform_1(%arg0: i32, %arg1: i32) -> (i32, i32) {
    %c0_i32 = arith.constant 0 : i32
    %c0_i32_0 = arith.constant 0 : i32
    return %c0_i32, %arg1 : i32, i32
  }
  func.func @transform_2(%arg0: i32, %arg1: i32) -> (i32, i32) {
    %c0_i32 = arith.constant 0 : i32
    %c0_i32_0 = arith.constant 0 : i32
    return %c0_i32, %arg1 : i32, i32
  }
  func.func @transform_3(%arg0: i32, %arg1: i32) -> (i32, i32) {
    %c0_i32 = arith.constant 0 : i32
    return %arg0, %arg1 : i32, i32
  }
}

module attributes {stable_mosaic.version = 11 : i64} {
  func.func @_matmul_kernel(%arg0: i32, %arg1: i32, %arg2: memref<32x256xbf16, #tpu.memory_space<vmem>>, %arg3: memref<256x128xbf16, #tpu.memory_space<vmem>>, %arg4: memref<1x128xf32, #tpu.memory_space<vmem>>, %arg5: memref<32x128xf32, #tpu.memory_space<vmem>>) attributes {dimension_semantics = [#tpu.dimension_semantics<parallel>, #tpu.dimension_semantics<parallel>], iteration_bounds = array<i64: 1, 1>, scalar_prefetch = 0 : i64, scratch_operands = 0 : i64, tpu.core_type = #tpu.core_type<tc>, window_params = [{transform_indices = @transform_0, window_bounds = array<i64: 32, 256>}, {transform_indices = @transform_1, window_bounds = array<i64: 256, 128>}, {transform_indices = @transform_2, window_bounds = array<i64: 1, 128>}, {transform_indices = @transform_3, window_bounds = array<i64: 32, 128>}]} {
    %c0 = arith.constant 0 : index
    %c0_0 = arith.constant 0 : index
    %0 = vector.load %arg2[%c0, %c0_0] : memref<32x256xbf16, #tpu.memory_space<vmem>>, vector<32x256xbf16>
    %c0_1 = arith.constant 0 : index
    %c0_2 = arith.constant 0 : index
    %1 = vector.load %arg3[%c0_1, %c0_2] : memref<256x128xbf16, #tpu.memory_space<vmem>>, vector<256x128xbf16>
    %cst = arith.constant dense<0.000000e+00> : vector<32x128xf32>
    %2 = tpu.matmul %0, %1, %cst {dimension_numbers = #tpu.dot_dimension_numbers<[1], [0], [0], [1], [0, 0, 1, 1], [], []>} : vector<32x256xbf16>, vector<256x128xbf16>, vector<32x128xf32> -> vector<32x128xf32>
    %c0_3 = arith.constant 0 : index
    %c0_4 = arith.constant 0 : index
    %3 = vector.load %arg4[%c0_3, %c0_4] : memref<1x128xf32, #tpu.memory_space<vmem>>, vector<1x128xf32>
    %4 = vector.broadcast %3 : vector<1x128xf32> to vector<32x128xf32>
    %5 = arith.addf %2, %4 : vector<32x128xf32>
    %cst_5 = arith.constant 0.000000e+00 : f32
    %6 = vector.broadcast %cst_5 : f32 to vector<32x128xf32>
    %7 = arith.maximumf %5, %6 : vector<32x128xf32>
    %c0_6 = arith.constant 0 : index
    %c0_7 = arith.constant 0 : index
    %8 = vector.load %arg5[%c0_6, %c0_7] : memref<32x128xf32, #tpu.memory_space<vmem>>, vector<32x128xf32>
    tpu.vector_store %arg5[%c0_6, %c0_7], %7 {strides = array<i32>} : memref<32x128xf32, #tpu.memory_space<vmem>>, vector<32x128xf32>,
    return
  }
  func.func @transform_0(%arg0: i32, %arg1: i32) -> (i32, i32) {
    %c0_i32 = arith.constant 0 : i32
    %c0_i32_0 = arith.constant 0 : i32
    return %arg0, %c0_i32 : i32, i32
  }
  func.func @transform_1(%arg0: i32, %arg1: i32) -> (i32, i32) {
    %c0_i32 = arith.constant 0 : i32
    %c0_i32_0 = arith.constant 0 : i32
    return %c0_i32, %arg1 : i32, i32
  }
  func.func @transform_2(%arg0: i32, %arg1: i32) -> (i32, i32) {
    %c0_i32 = arith.constant 0 : i32
    %c0_i32_0 = arith.constant 0 : i32
    return %c0_i32, %arg1 : i32, i32
  }
  func.func @transform_3(%arg0: i32, %arg1: i32) -> (i32, i32) {
    %c0_i32 = arith.constant 0 : i32
    return %arg0, %arg1 : i32, i32
  }
}

module attributes {stable_mosaic.version = 11 : i64} {
  func.func @_matmul_kernel(%arg0: i32, %arg1: i32, %arg2: memref<32x384xbf16, #tpu.memory_space<vmem>>, %arg3: memref<384x128xbf16, #tpu.memory_space<vmem>>, %arg4: memref<1x128xf32, #tpu.memory_space<vmem>>, %arg5: memref<32x128xf32, #tpu.memory_space<vmem>>) attributes {dimension_semantics = [#tpu.dimension_semantics<parallel>, #tpu.dimension_semantics<parallel>], iteration_bounds = array<i64: 1, 1>, scalar_prefetch = 0 : i64, scratch_operands = 0 : i64, tpu.core_type = #tpu.core_type<tc>, window_params = [{transform_indices = @transform_0, window_bounds = array<i64: 32, 384>}, {transform_indices = @transform_1, window_bounds = array<i64: 384, 128>}, {transform_indices = @transform_2, window_bounds = array<i64: 1, 128>}, {transform_indices = @transform_3, window_bounds = array<i64: 32, 128>}]} {
    %c0 = arith.constant 0 : index
    %c0_0 = arith.constant 0 : index
    %0 = vector.load %arg2[%c0, %c0_0] : memref<32x384xbf16, #tpu.memory_space<vmem>>, vector<32x384xbf16>
    %c0_1 = arith.constant 0 : index
    %c0_2 = arith.constant 0 : index
    %1 = vector.load %arg3[%c0_1, %c0_2] : memref<384x128xbf16, #tpu.memory_space<vmem>>, vector<384x128xbf16>
    %cst = arith.constant dense<0.000000e+00> : vector<32x128xf32>
    %2 = tpu.matmul %0, %1, %cst {dimension_numbers = #tpu.dot_dimension_numbers<[1], [0], [0], [1], [0, 0, 1, 1], [], []>} : vector<32x384xbf16>, vector<384x128xbf16>, vector<32x128xf32> -> vector<32x128xf32>
    %c0_3 = arith.constant 0 : index
    %c0_4 = arith.constant 0 : index
    %3 = vector.load %arg4[%c0_3, %c0_4] : memref<1x128xf32, #tpu.memory_space<vmem>>, vector<1x128xf32>
    %4 = vector.broadcast %3 : vector<1x128xf32> to vector<32x128xf32>
    %5 = arith.addf %2, %4 : vector<32x128xf32>
    %c0_5 = arith.constant 0 : index
    %c0_6 = arith.constant 0 : index
    %6 = vector.load %arg5[%c0_5, %c0_6] : memref<32x128xf32, #tpu.memory_space<vmem>>, vector<32x128xf32>
    tpu.vector_store %arg5[%c0_5, %c0_6], %5 {strides = array<i32>} : memref<32x128xf32, #tpu.memory_space<vmem>>, vector<32x128xf32>,
    return
  }
  func.func @transform_0(%arg0: i32, %arg1: i32) -> (i32, i32) {
    %c0_i32 = arith.constant 0 : i32
    %c0_i32_0 = arith.constant 0 : i32
    return %arg0, %c0_i32 : i32, i32
  }
  func.func @transform_1(%arg0: i32, %arg1: i32) -> (i32, i32) {
    %c0_i32 = arith.constant 0 : i32
    %c0_i32_0 = arith.constant 0 : i32
    return %c0_i32, %arg1 : i32, i32
  }
  func.func @transform_2(%arg0: i32, %arg1: i32) -> (i32, i32) {
    %c0_i32 = arith.constant 0 : i32
    %c0_i32_0 = arith.constant 0 : i32
    return %c0_i32, %arg1 : i32, i32
  }
  func.func @transform_3(%arg0: i32, %arg1: i32) -> (i32, i32) {
    %c0_i32 = arith.constant 0 : i32
    return %arg0, %arg1 : i32, i32
  }
}

module attributes {stable_mosaic.version = 11 : i64} {
  func.func @_matmul_kernel(%arg0: i32, %arg1: i32, %arg2: memref<32x128xbf16, #tpu.memory_space<vmem>>, %arg3: memref<128x128xbf16, #tpu.memory_space<vmem>>, %arg4: memref<1x128xf32, #tpu.memory_space<vmem>>, %arg5: memref<32x128xf32, #tpu.memory_space<vmem>>) attributes {dimension_semantics = [#tpu.dimension_semantics<parallel>, #tpu.dimension_semantics<parallel>], iteration_bounds = array<i64: 1, 1>, scalar_prefetch = 0 : i64, scratch_operands = 0 : i64, tpu.core_type = #tpu.core_type<tc>, window_params = [{transform_indices = @transform_0, window_bounds = array<i64: 32, 128>}, {transform_indices = @transform_1, window_bounds = array<i64: 128, 128>}, {transform_indices = @transform_2, window_bounds = array<i64: 1, 128>}, {transform_indices = @transform_3, window_bounds = array<i64: 32, 128>}]} {
    %c0 = arith.constant 0 : index
    %c0_0 = arith.constant 0 : index
    %0 = vector.load %arg2[%c0, %c0_0] : memref<32x128xbf16, #tpu.memory_space<vmem>>, vector<32x128xbf16>
    %c0_1 = arith.constant 0 : index
    %c0_2 = arith.constant 0 : index
    %1 = vector.load %arg3[%c0_1, %c0_2] : memref<128x128xbf16, #tpu.memory_space<vmem>>, vector<128x128xbf16>
    %cst = arith.constant dense<0.000000e+00> : vector<32x128xf32>
    %2 = tpu.matmul %0, %1, %cst {dimension_numbers = #tpu.dot_dimension_numbers<[1], [0], [0], [1], [0, 0, 1, 1], [], []>} : vector<32x128xbf16>, vector<128x128xbf16>, vector<32x128xf32> -> vector<32x128xf32>
    %c0_3 = arith.constant 0 : index
    %c0_4 = arith.constant 0 : index
    %3 = vector.load %arg4[%c0_3, %c0_4] : memref<1x128xf32, #tpu.memory_space<vmem>>, vector<1x128xf32>
    %4 = vector.broadcast %3 : vector<1x128xf32> to vector<32x128xf32>
    %5 = arith.addf %2, %4 : vector<32x128xf32>
    %c0_5 = arith.constant 0 : index
    %c0_6 = arith.constant 0 : index
    %6 = vector.load %arg5[%c0_5, %c0_6] : memref<32x128xf32, #tpu.memory_space<vmem>>, vector<32x128xf32>
    tpu.vector_store %arg5[%c0_5, %c0_6], %5 {strides = array<i32>} : memref<32x128xf32, #tpu.memory_space<vmem>>, vector<32x128xf32>,
    return
  }
  func.func @transform_0(%arg0: i32, %arg1: i32) -> (i32, i32) {
    %c0_i32 = arith.constant 0 : i32
    %c0_i32_0 = arith.constant 0 : i32
    return %arg0, %c0_i32 : i32, i32
  }
  func.func @transform_1(%arg0: i32, %arg1: i32) -> (i32, i32) {
    %c0_i32 = arith.constant 0 : i32
    %c0_i32_0 = arith.constant 0 : i32
    return %c0_i32, %arg1 : i32, i32
  }
  func.func @transform_2(%arg0: i32, %arg1: i32) -> (i32, i32) {
    %c0_i32 = arith.constant 0 : i32
    %c0_i32_0 = arith.constant 0 : i32
    return %c0_i32, %arg1 : i32, i32
  }
  func.func @transform_3(%arg0: i32, %arg1: i32) -> (i32, i32) {
    %c0_i32 = arith.constant 0 : i32
    return %arg0, %arg1 : i32, i32
  }
}

module attributes {stable_mosaic.version = 11 : i64} {
  func.func @_matmul_kernel(%arg0: i32, %arg1: i32, %arg2: memref<32x384xbf16, #tpu.memory_space<vmem>>, %arg3: memref<384x128xbf16, #tpu.memory_space<vmem>>, %arg4: memref<1x128xf32, #tpu.memory_space<vmem>>, %arg5: memref<32x128xf32, #tpu.memory_space<vmem>>) attributes {dimension_semantics = [#tpu.dimension_semantics<parallel>, #tpu.dimension_semantics<parallel>], iteration_bounds = array<i64: 1, 1>, scalar_prefetch = 0 : i64, scratch_operands = 0 : i64, tpu.core_type = #tpu.core_type<tc>, window_params = [{transform_indices = @transform_0, window_bounds = array<i64: 32, 384>}, {transform_indices = @transform_1, window_bounds = array<i64: 384, 128>}, {transform_indices = @transform_2, window_bounds = array<i64: 1, 128>}, {transform_indices = @transform_3, window_bounds = array<i64: 32, 128>}]} {
    %c0 = arith.constant 0 : index
    %c0_0 = arith.constant 0 : index
    %0 = vector.load %arg2[%c0, %c0_0] : memref<32x384xbf16, #tpu.memory_space<vmem>>, vector<32x384xbf16>
    %c0_1 = arith.constant 0 : index
    %c0_2 = arith.constant 0 : index
    %1 = vector.load %arg3[%c0_1, %c0_2] : memref<384x128xbf16, #tpu.memory_space<vmem>>, vector<384x128xbf16>
    %cst = arith.constant dense<0.000000e+00> : vector<32x128xf32>
    %2 = tpu.matmul %0, %1, %cst {dimension_numbers = #tpu.dot_dimension_numbers<[1], [0], [0], [1], [0, 0, 1, 1], [], []>} : vector<32x384xbf16>, vector<384x128xbf16>, vector<32x128xf32> -> vector<32x128xf32>
    %c0_3 = arith.constant 0 : index
    %c0_4 = arith.constant 0 : index
    %3 = vector.load %arg4[%c0_3, %c0_4] : memref<1x128xf32, #tpu.memory_space<vmem>>, vector<1x128xf32>
    %4 = vector.broadcast %3 : vector<1x128xf32> to vector<32x128xf32>
    %5 = arith.addf %2, %4 : vector<32x128xf32>
    %cst_5 = arith.constant 0.000000e+00 : f32
    %6 = vector.broadcast %cst_5 : f32 to vector<32x128xf32>
    %7 = arith.maximumf %5, %6 : vector<32x128xf32>
    %c0_6 = arith.constant 0 : index
    %c0_7 = arith.constant 0 : index
    %8 = vector.load %arg5[%c0_6, %c0_7] : memref<32x128xf32, #tpu.memory_space<vmem>>, vector<32x128xf32>
    tpu.vector_store %arg5[%c0_6, %c0_7], %7 {strides = array<i32>} : memref<32x128xf32, #tpu.memory_space<vmem>>, vector<32x128xf32>,
    return
  }
  func.func @transform_0(%arg0: i32, %arg1: i32) -> (i32, i32) {
    %c0_i32 = arith.constant 0 : i32
    %c0_i32_0 = arith.constant 0 : i32
    return %arg0, %c0_i32 : i32, i32
  }
  func.func @transform_1(%arg0: i32, %arg1: i32) -> (i32, i32) {
    %c0_i32 = arith.constant 0 : i32
    %c0_i32_0 = arith.constant 0 : i32
    return %c0_i32, %arg1 : i32, i32
  }
  func.func @transform_2(%arg0: i32, %arg1: i32) -> (i32, i32) {
    %c0_i32 = arith.constant 0 : i32
    %c0_i32_0 = arith.constant 0 : i32
    return %c0_i32, %arg1 : i32, i32
  }
  func.func @transform_3(%arg0: i32, %arg1: i32) -> (i32, i32) {
    %c0_i32 = arith.constant 0 : i32
    return %arg0, %arg1 : i32, i32
  }
}

module attributes {stable_mosaic.version = 11 : i64} {
  func.func @_matmul_kernel(%arg0: i32, %arg1: i32, %arg2: memref<16x384xbf16, #tpu.memory_space<vmem>>, %arg3: memref<384x128xbf16, #tpu.memory_space<vmem>>, %arg4: memref<1x128xf32, #tpu.memory_space<vmem>>, %arg5: memref<16x128xf32, #tpu.memory_space<vmem>>) attributes {dimension_semantics = [#tpu.dimension_semantics<parallel>, #tpu.dimension_semantics<parallel>], iteration_bounds = array<i64: 1, 1>, scalar_prefetch = 0 : i64, scratch_operands = 0 : i64, tpu.core_type = #tpu.core_type<tc>, window_params = [{transform_indices = @transform_0, window_bounds = array<i64: 16, 384>}, {transform_indices = @transform_1, window_bounds = array<i64: 384, 128>}, {transform_indices = @transform_2, window_bounds = array<i64: 1, 128>}, {transform_indices = @transform_3, window_bounds = array<i64: 16, 128>}]} {
    %c0 = arith.constant 0 : index
    %c0_0 = arith.constant 0 : index
    %0 = vector.load %arg2[%c0, %c0_0] : memref<16x384xbf16, #tpu.memory_space<vmem>>, vector<16x384xbf16>
    %c0_1 = arith.constant 0 : index
    %c0_2 = arith.constant 0 : index
    %1 = vector.load %arg3[%c0_1, %c0_2] : memref<384x128xbf16, #tpu.memory_space<vmem>>, vector<384x128xbf16>
    %cst = arith.constant dense<0.000000e+00> : vector<16x128xf32>
    %2 = tpu.matmul %0, %1, %cst {dimension_numbers = #tpu.dot_dimension_numbers<[1], [0], [0], [1], [0, 0, 1, 1], [], []>} : vector<16x384xbf16>, vector<384x128xbf16>, vector<16x128xf32> -> vector<16x128xf32>
    %c0_3 = arith.constant 0 : index
    %c0_4 = arith.constant 0 : index
    %3 = vector.load %arg4[%c0_3, %c0_4] : memref<1x128xf32, #tpu.memory_space<vmem>>, vector<1x128xf32>
    %4 = vector.broadcast %3 : vector<1x128xf32> to vector<16x128xf32>
    %5 = arith.addf %2, %4 : vector<16x128xf32>
    %cst_5 = arith.constant 0.000000e+00 : f32
    %6 = vector.broadcast %cst_5 : f32 to vector<16x128xf32>
    %7 = arith.maximumf %5, %6 : vector<16x128xf32>
    %c0_6 = arith.constant 0 : index
    %c0_7 = arith.constant 0 : index
    %8 = vector.load %arg5[%c0_6, %c0_7] : memref<16x128xf32, #tpu.memory_space<vmem>>, vector<16x128xf32>
    tpu.vector_store %arg5[%c0_6, %c0_7], %7 {strides = array<i32>} : memref<16x128xf32, #tpu.memory_space<vmem>>, vector<16x128xf32>,
    return
  }
  func.func @transform_0(%arg0: i32, %arg1: i32) -> (i32, i32) {
    %c0_i32 = arith.constant 0 : i32
    %c0_i32_0 = arith.constant 0 : i32
    return %arg0, %c0_i32 : i32, i32
  }
  func.func @transform_1(%arg0: i32, %arg1: i32) -> (i32, i32) {
    %c0_i32 = arith.constant 0 : i32
    %c0_i32_0 = arith.constant 0 : i32
    return %c0_i32, %arg1 : i32, i32
  }
  func.func @transform_2(%arg0: i32, %arg1: i32) -> (i32, i32) {
    %c0_i32 = arith.constant 0 : i32
    %c0_i32_0 = arith.constant 0 : i32
    return %c0_i32, %arg1 : i32, i32
  }
  func.func @transform_3(%arg0: i32, %arg1: i32) -> (i32, i32) {
    %c0_i32 = arith.constant 0 : i32
    return %arg0, %arg1 : i32, i32
  }
}

module attributes {stable_mosaic.version = 11 : i64} {
  func.func @_matmul_kernel(%arg0: i32, %arg1: i32, %arg2: memref<16x640xbf16, #tpu.memory_space<vmem>>, %arg3: memref<640x128xbf16, #tpu.memory_space<vmem>>, %arg4: memref<1x128xf32, #tpu.memory_space<vmem>>, %arg5: memref<16x128xf32, #tpu.memory_space<vmem>>) attributes {dimension_semantics = [#tpu.dimension_semantics<parallel>, #tpu.dimension_semantics<parallel>], iteration_bounds = array<i64: 1, 1>, scalar_prefetch = 0 : i64, scratch_operands = 0 : i64, tpu.core_type = #tpu.core_type<tc>, window_params = [{transform_indices = @transform_0, window_bounds = array<i64: 16, 640>}, {transform_indices = @transform_1, window_bounds = array<i64: 640, 128>}, {transform_indices = @transform_2, window_bounds = array<i64: 1, 128>}, {transform_indices = @transform_3, window_bounds = array<i64: 16, 128>}]} {
    %c0 = arith.constant 0 : index
    %c0_0 = arith.constant 0 : index
    %0 = vector.load %arg2[%c0, %c0_0] : memref<16x640xbf16, #tpu.memory_space<vmem>>, vector<16x640xbf16>
    %c0_1 = arith.constant 0 : index
    %c0_2 = arith.constant 0 : index
    %1 = vector.load %arg3[%c0_1, %c0_2] : memref<640x128xbf16, #tpu.memory_space<vmem>>, vector<640x128xbf16>
    %cst = arith.constant dense<0.000000e+00> : vector<16x128xf32>
    %2 = tpu.matmul %0, %1, %cst {dimension_numbers = #tpu.dot_dimension_numbers<[1], [0], [0], [1], [0, 0, 1, 1], [], []>} : vector<16x640xbf16>, vector<640x128xbf16>, vector<16x128xf32> -> vector<16x128xf32>
    %c0_3 = arith.constant 0 : index
    %c0_4 = arith.constant 0 : index
    %3 = vector.load %arg4[%c0_3, %c0_4] : memref<1x128xf32, #tpu.memory_space<vmem>>, vector<1x128xf32>
    %4 = vector.broadcast %3 : vector<1x128xf32> to vector<16x128xf32>
    %5 = arith.addf %2, %4 : vector<16x128xf32>
    %c0_5 = arith.constant 0 : index
    %c0_6 = arith.constant 0 : index
    %6 = vector.load %arg5[%c0_5, %c0_6] : memref<16x128xf32, #tpu.memory_space<vmem>>, vector<16x128xf32>
    tpu.vector_store %arg5[%c0_5, %c0_6], %5 {strides = array<i32>} : memref<16x128xf32, #tpu.memory_space<vmem>>, vector<16x128xf32>,
    return
  }
  func.func @transform_0(%arg0: i32, %arg1: i32) -> (i32, i32) {
    %c0_i32 = arith.constant 0 : i32
    %c0_i32_0 = arith.constant 0 : i32
    return %arg0, %c0_i32 : i32, i32
  }
  func.func @transform_1(%arg0: i32, %arg1: i32) -> (i32, i32) {
    %c0_i32 = arith.constant 0 : i32
    %c0_i32_0 = arith.constant 0 : i32
    return %c0_i32, %arg1 : i32, i32
  }
  func.func @transform_2(%arg0: i32, %arg1: i32) -> (i32, i32) {
    %c0_i32 = arith.constant 0 : i32
    %c0_i32_0 = arith.constant 0 : i32
    return %c0_i32, %arg1 : i32, i32
  }
  func.func @transform_3(%arg0: i32, %arg1: i32) -> (i32, i32) {
    %c0_i32 = arith.constant 0 : i32
    return %arg0, %arg1 : i32, i32
  }
}

module attributes {stable_mosaic.version = 11 : i64} {
  func.func @_matmul_kernel(%arg0: i32, %arg1: i32, %arg2: memref<16x128xbf16, #tpu.memory_space<vmem>>, %arg3: memref<128x128xbf16, #tpu.memory_space<vmem>>, %arg4: memref<1x128xf32, #tpu.memory_space<vmem>>, %arg5: memref<16x128xf32, #tpu.memory_space<vmem>>) attributes {dimension_semantics = [#tpu.dimension_semantics<parallel>, #tpu.dimension_semantics<parallel>], iteration_bounds = array<i64: 1, 1>, scalar_prefetch = 0 : i64, scratch_operands = 0 : i64, tpu.core_type = #tpu.core_type<tc>, window_params = [{transform_indices = @transform_0, window_bounds = array<i64: 16, 128>}, {transform_indices = @transform_1, window_bounds = array<i64: 128, 128>}, {transform_indices = @transform_2, window_bounds = array<i64: 1, 128>}, {transform_indices = @transform_3, window_bounds = array<i64: 16, 128>}]} {
    %c0 = arith.constant 0 : index
    %c0_0 = arith.constant 0 : index
    %0 = vector.load %arg2[%c0, %c0_0] : memref<16x128xbf16, #tpu.memory_space<vmem>>, vector<16x128xbf16>
    %c0_1 = arith.constant 0 : index
    %c0_2 = arith.constant 0 : index
    %1 = vector.load %arg3[%c0_1, %c0_2] : memref<128x128xbf16, #tpu.memory_space<vmem>>, vector<128x128xbf16>
    %cst = arith.constant dense<0.000000e+00> : vector<16x128xf32>
    %2 = tpu.matmul %0, %1, %cst {dimension_numbers = #tpu.dot_dimension_numbers<[1], [0], [0], [1], [0, 0, 1, 1], [], []>} : vector<16x128xbf16>, vector<128x128xbf16>, vector<16x128xf32> -> vector<16x128xf32>
    %c0_3 = arith.constant 0 : index
    %c0_4 = arith.constant 0 : index
    %3 = vector.load %arg4[%c0_3, %c0_4] : memref<1x128xf32, #tpu.memory_space<vmem>>, vector<1x128xf32>
    %4 = vector.broadcast %3 : vector<1x128xf32> to vector<16x128xf32>
    %5 = arith.addf %2, %4 : vector<16x128xf32>
    %c0_5 = arith.constant 0 : index
    %c0_6 = arith.constant 0 : index
    %6 = vector.load %arg5[%c0_5, %c0_6] : memref<16x128xf32, #tpu.memory_space<vmem>>, vector<16x128xf32>
    tpu.vector_store %arg5[%c0_5, %c0_6], %5 {strides = array<i32>} : memref<16x128xf32, #tpu.memory_space<vmem>>, vector<16x128xf32>,
    return
  }
  func.func @transform_0(%arg0: i32, %arg1: i32) -> (i32, i32) {
    %c0_i32 = arith.constant 0 : i32
    %c0_i32_0 = arith.constant 0 : i32
    return %arg0, %c0_i32 : i32, i32
  }
  func.func @transform_1(%arg0: i32, %arg1: i32) -> (i32, i32) {
    %c0_i32 = arith.constant 0 : i32
    %c0_i32_0 = arith.constant 0 : i32
    return %c0_i32, %arg1 : i32, i32
  }
  func.func @transform_2(%arg0: i32, %arg1: i32) -> (i32, i32) {
    %c0_i32 = arith.constant 0 : i32
    %c0_i32_0 = arith.constant 0 : i32
    return %c0_i32, %arg1 : i32, i32
  }
  func.func @transform_3(%arg0: i32, %arg1: i32) -> (i32, i32) {
    %c0_i32 = arith.constant 0 : i32
    return %arg0, %arg1 : i32, i32
  }
}

module attributes {stable_mosaic.version = 11 : i64} {
  func.func @_matmul_kernel(%arg0: i32, %arg1: i32, %arg2: memref<16x640xbf16, #tpu.memory_space<vmem>>, %arg3: memref<640x128xbf16, #tpu.memory_space<vmem>>, %arg4: memref<1x128xf32, #tpu.memory_space<vmem>>, %arg5: memref<16x128xf32, #tpu.memory_space<vmem>>) attributes {dimension_semantics = [#tpu.dimension_semantics<parallel>, #tpu.dimension_semantics<parallel>], iteration_bounds = array<i64: 1, 1>, scalar_prefetch = 0 : i64, scratch_operands = 0 : i64, tpu.core_type = #tpu.core_type<tc>, window_params = [{transform_indices = @transform_0, window_bounds = array<i64: 16, 640>}, {transform_indices = @transform_1, window_bounds = array<i64: 640, 128>}, {transform_indices = @transform_2, window_bounds = array<i64: 1, 128>}, {transform_indices = @transform_3, window_bounds = array<i64: 16, 128>}]} {
    %c0 = arith.constant 0 : index
    %c0_0 = arith.constant 0 : index
    %0 = vector.load %arg2[%c0, %c0_0] : memref<16x640xbf16, #tpu.memory_space<vmem>>, vector<16x640xbf16>
    %c0_1 = arith.constant 0 : index
    %c0_2 = arith.constant 0 : index
    %1 = vector.load %arg3[%c0_1, %c0_2] : memref<640x128xbf16, #tpu.memory_space<vmem>>, vector<640x128xbf16>
    %cst = arith.constant dense<0.000000e+00> : vector<16x128xf32>
    %2 = tpu.matmul %0, %1, %cst {dimension_numbers = #tpu.dot_dimension_numbers<[1], [0], [0], [1], [0, 0, 1, 1], [], []>} : vector<16x640xbf16>, vector<640x128xbf16>, vector<16x128xf32> -> vector<16x128xf32>
    %c0_3 = arith.constant 0 : index
    %c0_4 = arith.constant 0 : index
    %3 = vector.load %arg4[%c0_3, %c0_4] : memref<1x128xf32, #tpu.memory_space<vmem>>, vector<1x128xf32>
    %4 = vector.broadcast %3 : vector<1x128xf32> to vector<16x128xf32>
    %5 = arith.addf %2, %4 : vector<16x128xf32>
    %cst_5 = arith.constant 0.000000e+00 : f32
    %6 = vector.broadcast %cst_5 : f32 to vector<16x128xf32>
    %7 = arith.maximumf %5, %6 : vector<16x128xf32>
    %c0_6 = arith.constant 0 : index
    %c0_7 = arith.constant 0 : index
    %8 = vector.load %arg5[%c0_6, %c0_7] : memref<16x128xf32, #tpu.memory_space<vmem>>, vector<16x128xf32>
    tpu.vector_store %arg5[%c0_6, %c0_7], %7 {strides = array<i32>} : memref<16x128xf32, #tpu.memory_space<vmem>>, vector<16x128xf32>,
    return
  }
  func.func @transform_0(%arg0: i32, %arg1: i32) -> (i32, i32) {
    %c0_i32 = arith.constant 0 : i32
    %c0_i32_0 = arith.constant 0 : i32
    return %arg0, %c0_i32 : i32, i32
  }
  func.func @transform_1(%arg0: i32, %arg1: i32) -> (i32, i32) {
    %c0_i32 = arith.constant 0 : i32
    %c0_i32_0 = arith.constant 0 : i32
    return %c0_i32, %arg1 : i32, i32
  }
  func.func @transform_2(%arg0: i32, %arg1: i32) -> (i32, i32) {
    %c0_i32 = arith.constant 0 : i32
    %c0_i32_0 = arith.constant 0 : i32
    return %c0_i32, %arg1 : i32, i32
  }
  func.func @transform_3(%arg0: i32, %arg1: i32) -> (i32, i32) {
    %c0_i32 = arith.constant 0 : i32
    return %arg0, %arg1 : i32, i32
  }
}

module attributes {stable_mosaic.version = 11 : i64} {
  func.func @_matmul_kernel(%arg0: i32, %arg1: i32, %arg2: memref<16x896xbf16, #tpu.memory_space<vmem>>, %arg3: memref<896x256xbf16, #tpu.memory_space<vmem>>, %arg4: memref<1x256xf32, #tpu.memory_space<vmem>>, %arg5: memref<16x256xf32, #tpu.memory_space<vmem>>) attributes {dimension_semantics = [#tpu.dimension_semantics<parallel>, #tpu.dimension_semantics<parallel>], iteration_bounds = array<i64: 1, 1>, scalar_prefetch = 0 : i64, scratch_operands = 0 : i64, tpu.core_type = #tpu.core_type<tc>, window_params = [{transform_indices = @transform_0, window_bounds = array<i64: 16, 896>}, {transform_indices = @transform_1, window_bounds = array<i64: 896, 256>}, {transform_indices = @transform_2, window_bounds = array<i64: 1, 256>}, {transform_indices = @transform_3, window_bounds = array<i64: 16, 256>}]} {
    %c0 = arith.constant 0 : index
    %c0_0 = arith.constant 0 : index
    %0 = vector.load %arg2[%c0, %c0_0] : memref<16x896xbf16, #tpu.memory_space<vmem>>, vector<16x896xbf16>
    %c0_1 = arith.constant 0 : index
    %c0_2 = arith.constant 0 : index
    %1 = vector.load %arg3[%c0_1, %c0_2] : memref<896x256xbf16, #tpu.memory_space<vmem>>, vector<896x256xbf16>
    %cst = arith.constant dense<0.000000e+00> : vector<16x256xf32>
    %2 = tpu.matmul %0, %1, %cst {dimension_numbers = #tpu.dot_dimension_numbers<[1], [0], [0], [1], [0, 0, 1, 1], [], []>} : vector<16x896xbf16>, vector<896x256xbf16>, vector<16x256xf32> -> vector<16x256xf32>
    %c0_3 = arith.constant 0 : index
    %c0_4 = arith.constant 0 : index
    %3 = vector.load %arg4[%c0_3, %c0_4] : memref<1x256xf32, #tpu.memory_space<vmem>>, vector<1x256xf32>
    %4 = vector.broadcast %3 : vector<1x256xf32> to vector<16x256xf32>
    %5 = arith.addf %2, %4 : vector<16x256xf32>
    %c0_5 = arith.constant 0 : index
    %c0_6 = arith.constant 0 : index
    %6 = vector.load %arg5[%c0_5, %c0_6] : memref<16x256xf32, #tpu.memory_space<vmem>>, vector<16x256xf32>
    tpu.vector_store %arg5[%c0_5, %c0_6], %5 {strides = array<i32>} : memref<16x256xf32, #tpu.memory_space<vmem>>, vector<16x256xf32>,
    return
  }
  func.func @transform_0(%arg0: i32, %arg1: i32) -> (i32, i32) {
    %c0_i32 = arith.constant 0 : i32
    %c0_i32_0 = arith.constant 0 : i32
    return %arg0, %c0_i32 : i32, i32
  }
  func.func @transform_1(%arg0: i32, %arg1: i32) -> (i32, i32) {
    %c0_i32 = arith.constant 0 : i32
    %c0_i32_0 = arith.constant 0 : i32
    return %c0_i32, %arg1 : i32, i32
  }
  func.func @transform_2(%arg0: i32, %arg1: i32) -> (i32, i32) {
    %c0_i32 = arith.constant 0 : i32
    %c0_i32_0 = arith.constant 0 : i32
    return %c0_i32, %arg1 : i32, i32
  }
  func.func @transform_3(%arg0: i32, %arg1: i32) -> (i32, i32) {
    %c0_i32 = arith.constant 0 : i32
    return %arg0, %arg1 : i32, i32
  }
}

</mosaic_0001>

<llo_original>
// kernel: _crnn_forward.22
$region0: #{_crnn_forward.22}
  #allocation0 [shape = 'u32[]', space=smem, size = 0x4, offset = 0x4, fixed_abs, tag = 'smem constant byte address 0x4 - core index']
  #allocation1 [shape = 'u32[144,128]{1,0:T(1,128)}', space=vmem, size = 0x12000, scoped, tag = 'internal scratch']
  %s0 = inlined_call_operand.vmem [shape: bf16[112,384], index: 0, kind: input, shape index: {}]
  %s1 = inlined_call_operand.vmem [shape: bf16[384,128], index: 1, kind: input, shape index: {}]
  %s2 = inlined_call_operand.vmem [shape: f32[1,128], index: 2, kind: input, shape index: {}]
  %s3 = inlined_call_operand.vmem [shape: f32[112,128], index: 3, kind: output, shape index: {}]
  %s4 = sld [smem:[#allocation0]]
  $region22: #{_crnn_forward.22} parent=0
    _
  %s6 = ssub.s32 1, %s4
  %s7 = scalar_select 0, %s6, %s4
  // Predicated region
  $region2: #{_crnn_forward.22} parent=0 // pred_check
    _
  $region3: #{_crnn_forward.22} parent=0 // pred_check_branch
    %9 = sbr.rel (0) target = $region5
  $region4: #{_crnn_forward.22} parent=0 // pred_region
    _
  $region5: #{_crnn_forward.22} parent=0 // pred_fallthru
    _
  // Predicated region
  $region6: #{_crnn_forward.22} parent=0 // pred_check
    _
  $region7: #{_crnn_forward.22} parent=0 // pred_check_branch
    %11 = sbr.rel (0) target = $region9
  $region8: #{_crnn_forward.22} parent=0 // pred_region
    _
  $region9: #{_crnn_forward.22} parent=0 // pred_fallthru
    _
  // Predicated region
  $region10: #{_crnn_forward.22} parent=0 // pred_check
    _
  $region11: #{_crnn_forward.22} parent=0 // pred_check_branch
    %13 = sbr.rel (0) target = $region13
  $region12: #{_crnn_forward.22} parent=0 // pred_region
    _
  $region13: #{_crnn_forward.22} parent=0 // pred_fallthru
    _
  %v15 = vld [vmem:[%s0] sm:$0xff]
  %v16 = vld [vmem:[%s0 + $0x8] sm:$0xf]
  %v17 = vld [vmem:[%s0 + $0xc] sm:$0xff]
  %v18 = vld [vmem:[%s0 + $0x14] sm:$0xf]
  %v19 = vld [vmem:[%s0 + $0x18] sm:$0xff]
  %v20 = vld [vmem:[%s0 + $0x20] sm:$0xf]
  %v21 = vld [vmem:[%s0 + $0x24] sm:$0xff]
  %v22 = vld [vmem:[%s0 + $0x2c] sm:$0xf]
  %v23 = vld [vmem:[%s0 + $0x30] sm:$0xff]
  %v24 = vld [vmem:[%s0 + $0x38] sm:$0xf]
  %v25 = vld [vmem:[%s0 + $0x3c] sm:$0xff]
  %v26 = vld [vmem:[%s0 + $0x44] sm:$0xf]
  %v27 = vld [vmem:[%s0 + $0x48] sm:$0xff]
  %v28 = vld [vmem:[%s0 + $0x50] sm:$0xf]
  %v29 = vld [vmem:[%s0 + $0x54] sm:$0xff]
  %v30 = vld [vmem:[%s0 + $0x5c] sm:$0xf]
  %v31 = vld [vmem:[%s0 + $0x60] sm:$0xff]
  %v32 = vld [vmem:[%s0 + $0x68] sm:$0xf]
  %v33 = vld [vmem:[%s0 + $0x6c] sm:$0xff]
  %v34 = vld [vmem:[%s0 + $0x74] sm:$0xf]
  %v35 = vld [vmem:[%s0 + $0x78] sm:$0xff]
  %v36 = vld [vmem:[%s0 + $0x80] sm:$0xf]
  %v37 = vld [vmem:[%s0 + $0x84] sm:$0xff]
  %v38 = vld [vmem:[%s0 + $0x8c] sm:$0xf]
  %v39 = vld [vmem:[%s0 + $0x90] sm:$0xff]
  %v40 = vld [vmem:[%s0 + $0x98] sm:$0xf]
  %v41 = vld [vmem:[%s0 + $0x9c] sm:$0xff]
  %v42 = vld [vmem:[%s0 + $0xa4] sm:$0xf]
  %v43 = vld [vmem:[%s1] sm:$0xf]
  %v44 = vld [vmem:[%s1 + $0x4] sm:$0xf]
  %v45 = vld [vmem:[%s1 + $0x8] sm:$0xf]
  %v46 = vld [vmem:[%s1 + $0xc] sm:$0xf]
  %v47 = vld [vmem:[%s1 + $0x10] sm:$0xf]
  %v48 = vld [vmem:[%s1 + $0x14] sm:$0xf]
  %v49 = vld [vmem:[%s1 + $0x18] sm:$0xf]
  %v50 = vld [vmem:[%s1 + $0x1c] sm:$0xf]
  %v51 = vld [vmem:[%s1 + $0x20] sm:$0xf]
  %v52 = vld [vmem:[%s1 + $0x24] sm:$0xf]
  %v53 = vld [vmem:[%s1 + $0x28] sm:$0xf]
  %v54 = vld [vmem:[%s1 + $0x2c] sm:$0xf]
  %v55 = vld [vmem:[%s1 + $0x30] sm:$0xf]
  %v56 = vld [vmem:[%s1 + $0x34] sm:$0xf]
  %v57 = vld [vmem:[%s1 + $0x38] sm:$0xf]
  %v58 = vld [vmem:[%s1 + $0x3c] sm:$0xf]
  %v59 = vld [vmem:[%s1 + $0x40] sm:$0xf]
  %v60 = vld [vmem:[%s1 + $0x44] sm:$0xf]
  %v61 = vld [vmem:[%s1 + $0x48] sm:$0xf]
  %v62 = vld [vmem:[%s1 + $0x4c] sm:$0xf]
  %v63 = vld [vmem:[%s1 + $0x50] sm:$0xf]
  %v64 = vld [vmem:[%s1 + $0x54] sm:$0xf]
  %v65 = vld [vmem:[%s1 + $0x58] sm:$0xf]
  %v66 = vld [vmem:[%s1 + $0x5c] sm:$0xf]
  %v67 = vld [vmem:[%s1 + $0x60] sm:$0xf]
  %v68 = vld [vmem:[%s1 + $0x64] sm:$0xf]
  %v69 = vld [vmem:[%s1 + $0x68] sm:$0xf]
  %v70 = vld [vmem:[%s1 + $0x6c] sm:$0xf]
  %v71 = vld [vmem:[%s1 + $0x70] sm:$0xf]
  %v72 = vld [vmem:[%s1 + $0x74] sm:$0xf]
  %v73 = vld [vmem:[%s1 + $0x78] sm:$0xf]
  %v74 = vld [vmem:[%s1 + $0x7c] sm:$0xf]
  %v75 = vld [vmem:[%s1 + $0x80] sm:$0xf]
  %v76 = vld [vmem:[%s1 + $0x84] sm:$0xf]
  %v77 = vld [vmem:[%s1 + $0x88] sm:$0xf]
  %v78 = vld [vmem:[%s1 + $0x8c] sm:$0xf]
  %v79 = vld [vmem:[%s1 + $0x90] sm:$0xf]
  %v80 = vld [vmem:[%s1 + $0x94] sm:$0xf]
  %v81 = vld [vmem:[%s1 + $0x98] sm:$0xf]
  %v82 = vld [vmem:[%s1 + $0x9c] sm:$0xf]
  %v83 = vld [vmem:[%s1 + $0xa0] sm:$0xf]
  %v84 = vld [vmem:[%s1 + $0xa4] sm:$0xf]
  %v85 = vld [vmem:[%s1 + $0xa8] sm:$0xf]
  %v86 = vld [vmem:[%s1 + $0xac] sm:$0xf]
  %v87 = vld [vmem:[%s1 + $0xb0] sm:$0xf]
  %v88 = vld [vmem:[%s1 + $0xb4] sm:$0xf]
  %v89 = vld [vmem:[%s1 + $0xb8] sm:$0xf]
  %v90 = vld [vmem:[%s1 + $0xbc] sm:$0xf]
  %v91 = vld [vmem:[%s2] sm:$0x1]
  %v93 = vlaneseq
  %v94 = vshrl.u32 %v93, 7
  %v95 = vsub.s32 0, %v94
  %v96 = vrot.slane %v91, %v95
  %v126 = vunpack.c.l.b16 %v15
  %v127 = vunpack.c.h.b16 %v15
  %v128 = vunpack.c.l.b16 %v16
  %v129 = vunpack.c.l.b16 %v17
  %v130 = vunpack.c.h.b16 %v17
  %v131 = vunpack.c.l.b16 %v18
  %v132 = vunpack.c.l.b16 %v19
  %v133 = vunpack.c.h.b16 %v19
  %v134 = vunpack.c.l.b16 %v20
  %v135 = vunpack.c.l.b16 %v21
  %v136 = vunpack.c.h.b16 %v21
  %v137 = vunpack.c.l.b16 %v22
  %v138 = vunpack.c.l.b16 %v23
  %v139 = vunpack.c.h.b16 %v23
  %v140 = vunpack.c.l.b16 %v24
  %v141 = vunpack.c.l.b16 %v25
  %v142 = vunpack.c.h.b16 %v25
  %v143 = vunpack.c.l.b16 %v26
  %v144 = vunpack.c.l.b16 %v27
  %v145 = vunpack.c.h.b16 %v27
  %v146 = vunpack.c.l.b16 %v28
  %v147 = vunpack.c.l.b16 %v29
  %v148 = vunpack.c.h.b16 %v29
  %v149 = vunpack.c.l.b16 %v30
  %v150 = vunpack.c.l.b16 %v31
  %v151 = vunpack.c.h.b16 %v31
  %v152 = vunpack.c.l.b16 %v32
  %v153 = vunpack.c.l.b16 %v33
  %v154 = vunpack.c.h.b16 %v33
  %v155 = vunpack.c.l.b16 %v34
  %v156 = vunpack.c.l.b16 %v35
  %v157 = vunpack.c.h.b16 %v35
  %v158 = vunpack.c.l.b16 %v36
  %v159 = vunpack.c.l.b16 %v37
  %v160 = vunpack.c.h.b16 %v37
  %v161 = vunpack.c.l.b16 %v38
  %v162 = vunpack.c.l.b16 %v39
  %v163 = vunpack.c.h.b16 %v39
  %v164 = vunpack.c.l.b16 %v40
  %v165 = vunpack.c.l.b16 %v41
  %v166 = vunpack.c.h.b16 %v41
  %v167 = vunpack.c.l.b16 %v42
  %v168 = vpack.c.b16 %v129, %v126
  %v169 = vpack.c.b16 %v130, %v127
  %v170 = vpack.c.b16 %v131, %v128
  %v171 = vpack.c.b16 %v135, %v132
  %v172 = vpack.c.b16 %v136, %v133
  %v173 = vpack.c.b16 %v137, %v134
  %v174 = vpack.c.b16 %v141, %v138
  %v175 = vpack.c.b16 %v142, %v139
  %v176 = vpack.c.b16 %v143, %v140
  %v177 = vpack.c.b16 %v147, %v144
  %v178 = vpack.c.b16 %v148, %v145
  %v179 = vpack.c.b16 %v149, %v146
  %v180 = vpack.c.b16 %v153, %v150
  %v181 = vpack.c.b16 %v154, %v151
  %v182 = vpack.c.b16 %v155, %v152
  %v183 = vpack.c.b16 %v159, %v156
  %v184 = vpack.c.b16 %v160, %v157
  %v185 = vpack.c.b16 %v161, %v158
  %v186 = vpack.c.b16 %v165, %v162
  %v187 = vpack.c.b16 %v166, %v163
  %v188 = vpack.c.b16 %v167, %v164
  %v258 = vunpack.c.l.b16 %v43
  %v259 = vunpack.c.l.b16 %v44
  %v260 = vunpack.c.l.b16 %v45
  %v261 = vunpack.c.l.b16 %v46
  %v262 = vunpack.c.l.b16 %v47
  %v263 = vunpack.c.l.b16 %v48
  %v264 = vunpack.c.l.b16 %v49
  %v265 = vunpack.c.l.b16 %v50
  %v266 = vunpack.c.l.b16 %v51
  %v267 = vunpack.c.l.b16 %v52
  %v268 = vunpack.c.l.b16 %v53
  %v269 = vunpack.c.l.b16 %v54
  %v270 = vunpack.c.l.b16 %v55
  %v271 = vunpack.c.l.b16 %v56
  %v272 = vunpack.c.l.b16 %v57
  %v273 = vunpack.c.l.b16 %v58
  %v274 = vunpack.c.l.b16 %v59
  %v275 = vunpack.c.l.b16 %v60
  %v276 = vunpack.c.l.b16 %v61
  %v277 = vunpack.c.l.b16 %v62
  %v278 = vunpack.c.l.b16 %v63
  %v279 = vunpack.c.l.b16 %v64
  %v280 = vunpack.c.l.b16 %v65
  %v281 = vunpack.c.l.b16 %v66
  %v282 = vunpack.c.l.b16 %v67
  %v283 = vunpack.c.l.b16 %v68
  %v284 = vunpack.c.l.b16 %v69
  %v285 = vunpack.c.l.b16 %v70
  %v286 = vunpack.c.l.b16 %v71
  %v287 = vunpack.c.l.b16 %v72
  %v288 = vunpack.c.l.b16 %v73
  %v289 = vunpack.c.l.b16 %v74
  %v290 = vunpack.c.l.b16 %v75
  %v291 = vunpack.c.l.b16 %v76
  %v292 = vunpack.c.l.b16 %v77
  %v293 = vunpack.c.l.b16 %v78
  %v294 = vunpack.c.l.b16 %v79
  %v295 = vunpack.c.l.b16 %v80
  %v296 = vunpack.c.l.b16 %v81
  %v297 = vunpack.c.l.b16 %v82
  %v298 = vunpack.c.l.b16 %v83
  %v299 = vunpack.c.l.b16 %v84
  %v300 = vunpack.c.l.b16 %v85
  %v301 = vunpack.c.l.b16 %v86
  %v302 = vunpack.c.l.b16 %v87
  %v303 = vunpack.c.l.b16 %v88
  %v304 = vunpack.c.l.b16 %v89
  %v305 = vunpack.c.l.b16 %v90
  %v306 = vpack.c.b16 %v259, %v258
  %v307 = vpack.c.b16 %v261, %v260
  %v308 = vpack.c.b16 %v263, %v262
  %v309 = vpack.c.b16 %v265, %v264
  %v310 = vpack.c.b16 %v267, %v266
  %v311 = vpack.c.b16 %v269, %v268
  %v312 = vpack.c.b16 %v271, %v270
  %v313 = vpack.c.b16 %v273, %v272
  %v314 = vpack.c.b16 %v275, %v274
  %v315 = vpack.c.b16 %v277, %v276
  %v316 = vpack.c.b16 %v279, %v278
  %v317 = vpack.c.b16 %v281, %v280
  %v318 = vpack.c.b16 %v283, %v282
  %v319 = vpack.c.b16 %v285, %v284
  %v320 = vpack.c.b16 %v287, %v286
  %v321 = vpack.c.b16 %v289, %v288
  %v322 = vpack.c.b16 %v291, %v290
  %v323 = vpack.c.b16 %v293, %v292
  %v324 = vpack.c.b16 %v295, %v294
  %v325 = vpack.c.b16 %v297, %v296
  %v326 = vpack.c.b16 %v299, %v298
  %v327 = vpack.c.b16 %v301, %v300
  %v328 = vpack.c.b16 %v303, %v302
  %v329 = vpack.c.b16 %v305, %v304
  %354 = vmatprep.subr.bf16.mxu0 0
  %355 = vmatpush1.bf16.msra.mxu0 %v313
  %356 = vmatprep.subr.bf16.mxu0 0
  %357 = vmatpush1.bf16.msra.mxu0 %v312
  %358 = vmatprep.subr.bf16.mxu0 0
  %359 = vmatpush1.bf16.msra.mxu0 %v311
  %360 = vmatprep.subr.bf16.mxu0 0
  %361 = vmatpush1.bf16.msra.mxu0 %v310
  %362 = vmatprep.subr.bf16.mxu0 0
  %363 = vmatpush1.bf16.msra.mxu0 %v309
  %364 = vmatprep.subr.bf16.mxu0 0
  %365 = vmatpush1.bf16.msra.mxu0 %v308
  %366 = vmatprep.subr.bf16.mxu0 0
  %367 = vmatpush1.bf16.msra.mxu0 %v307
  %368 = vmatprep.subr.bf16.mxu0 0
  %369 = vmatpush1.bf16.msra.mxu0 %v306
  %370 = vmatprep.subr.bf16.mxu0 0
  %371 = vmatpush2.bf16.msra.mxu0 %v321
  %372 = vmatprep.subr.bf16.mxu0 0
  %373 = vmatpush2.bf16.msra.mxu0 %v320
  %374 = vmatprep.subr.bf16.mxu0 0
  %375 = vmatpush2.bf16.msra.mxu0 %v319
  %376 = vmatprep.subr.bf16.mxu0 0
  %377 = vmatpush2.bf16.msra.mxu0 %v318
  %378 = vmatprep.subr.bf16.mxu0 0
  %379 = vmatpush2.bf16.msra.mxu0 %v317
  %380 = vmatprep.subr.bf16.mxu0 0
  %381 = vmatpush2.bf16.msra.mxu0 %v316
  %382 = vmatprep.subr.bf16.mxu0 0
  %383 = vmatpush2.bf16.msra.mxu0 %v315
  %384 = vmatprep.subr.bf16.mxu0 0
  %385 = vmatpush2.bf16.msra.mxu0 %v314
  %386 = vmatprep.mubr.bf16.mxu0 %v169
  %387 = vmatmul.mubr.bf16.gmra.mxu0 %v168
  %v388 = vpop.f32.mrf.mxu0
  %v389 = vadd.f32 %v96, %v388
  %v390 = vpop.f32.mrf.mxu0
  %v391 = vpop.f32.mrf.mxu0
  %v392 = vadd.f32 %v96, %v391
  %v393 = vpop.f32.mrf.mxu0
  %394 = vmatprep.mubr.bf16.mxu0 %v172
  %395 = vmatmul.mubr.bf16.gmra.mxu0 %v171
  %v396 = vpop.f32.mrf.mxu0
  %v397 = vadd.f32 %v96, %v396
  %v398 = vpop.f32.mrf.mxu0
  %v399 = vpop.f32.mrf.mxu0
  %v400 = vadd.f32 %v96, %v399
  %v401 = vpop.f32.mrf.mxu0
  %402 = vmatprep.mubr.bf16.mxu0 %v175
  %403 = vmatmul.mubr.bf16.gmra.mxu0 %v174
  %v404 = vpop.f32.mrf.mxu0
  %v405 = vadd.f32 %v96, %v404
  %v406 = vpop.f32.mrf.mxu0
  %v407 = vpop.f32.mrf.mxu0
  %v408 = vadd.f32 %v96, %v407
  %v409 = vpop.f32.mrf.mxu0
  %410 = vmatprep.mubr.bf16.mxu0 %v178
  %411 = vmatmul.mubr.bf16.gmra.mxu0 %v177
  %v412 = vpop.f32.mrf.mxu0
  %v413 = vadd.f32 %v96, %v412
  %v414 = vpop.f32.mrf.mxu0
  %v415 = vpop.f32.mrf.mxu0
  %v416 = vadd.f32 %v96, %v415
  %v417 = vpop.f32.mrf.mxu0
  %418 = vmatprep.mubr.bf16.mxu0 %v181
  %419 = vmatmul.mubr.bf16.gmra.mxu0 %v180
  %v420 = vpop.f32.mrf.mxu0
  %v421 = vadd.f32 %v96, %v420
  %v422 = vpop.f32.mrf.mxu0
  %v423 = vpop.f32.mrf.mxu0
  %v424 = vadd.f32 %v96, %v423
  %v425 = vpop.f32.mrf.mxu0
  %426 = vmatprep.mubr.bf16.mxu0 %v184
  %427 = vmatmul.mubr.bf16.gmra.mxu0 %v183
  %v428 = vpop.f32.mrf.mxu0
  %v429 = vadd.f32 %v96, %v428
  %v430 = vpop.f32.mrf.mxu0
  %v431 = vpop.f32.mrf.mxu0
  %v432 = vadd.f32 %v96, %v431
  %v433 = vpop.f32.mrf.mxu0
  %434 = vmatprep.mubr.bf16.mxu0 %v187
  %435 = vmatmul.mubr.bf16.gmra.mxu0 %v186
  %v436 = vpop.f32.mrf.mxu0
  %v437 = vadd.f32 %v96, %v436
  %v438 = vpop.f32.mrf.mxu0
  %v439 = vpop.f32.mrf.mxu0
  %v440 = vadd.f32 %v96, %v439
  %v441 = vpop.f32.mrf.mxu0
  %442 = vdwg.mxu0
  %443 = vmatprep.subr.bf16.mxu0 0
  %444 = vmatpush1.bf16.msra.mxu0 %v329
  %445 = vmatprep.subr.bf16.mxu0 0
  %446 = vmatpush1.bf16.msra.mxu0 %v328
  %447 = vmatprep.subr.bf16.mxu0 0
  %448 = vmatpush1.bf16.msra.mxu0 %v327
  %449 = vmatprep.subr.bf16.mxu0 0
  %450 = vmatpush1.bf16.msra.mxu0 %v326
  %451 = vmatprep.subr.bf16.mxu0 0
  %452 = vmatpush1.bf16.msra.mxu0 %v325
  %453 = vmatprep.subr.bf16.mxu0 0
  %454 = vmatpush1.bf16.msra.mxu0 %v324
  %455 = vmatprep.subr.bf16.mxu0 0
  %456 = vmatpush1.bf16.msra.mxu0 %v323
  %457 = vmatprep.subr.bf16.mxu0 0
  %458 = vmatpush1.bf16.msra.mxu0 %v322
  %459 = vmatprep.subr.bf16.mxu0 0
  %460 = vmatpush2.bf16.msra.mxu0 0
  %461 = vmatprep.subr.bf16.mxu0 0
  %462 = vmatpush2.bf16.msra.mxu0 0
  %463 = vmatprep.subr.bf16.mxu0 0
  %464 = vmatpush2.bf16.msra.mxu0 0
  %465 = vmatprep.subr.bf16.mxu0 0
  %466 = vmatpush2.bf16.msra.mxu0 0
  %467 = vmatprep.subr.bf16.mxu0 0
  %468 = vmatpush2.bf16.msra.mxu0 0
  %469 = vmatprep.subr.bf16.mxu0 0
  %470 = vmatpush2.bf16.msra.mxu0 0
  %471 = vmatprep.subr.bf16.mxu0 0
  %472 = vmatpush2.bf16.msra.mxu0 0
  %473 = vmatprep.subr.bf16.mxu0 0
  %474 = vmatpush2.bf16.msra.mxu0 0
  %475 = vmatprep.mubr.bf16.mxu0 0
  %476 = vmatmul.mubr.bf16.gmra.mxu0 %v170
  %v477 = vpop.f32.mrf.mxu0
  %v478 = vadd.f32 %v389, %v477
  %v479 = vpop.f32.mrf.mxu0
  %v480 = vpop.f32.mrf.mxu0
  %v481 = vadd.f32 %v392, %v480
  %v482 = vpop.f32.mrf.mxu0
  %483 = vmatprep.mubr.bf16.mxu0 0
  %484 = vmatmul.mubr.bf16.gmra.mxu0 %v173
  %v485 = vpop.f32.mrf.mxu0
  %v486 = vadd.f32 %v397, %v485
  %v487 = vpop.f32.mrf.mxu0
  %v488 = vpop.f32.mrf.mxu0
  %v489 = vadd.f32 %v400, %v488
  %v490 = vpop.f32.mrf.mxu0
  %491 = vmatprep.mubr.bf16.mxu0 0
  %492 = vmatmul.mubr.bf16.gmra.mxu0 %v176
  %v493 = vpop.f32.mrf.mxu0
  %v494 = vadd.f32 %v405, %v493
  %v495 = vpop.f32.mrf.mxu0
  %v496 = vpop.f32.mrf.mxu0
  %v497 = vadd.f32 %v408, %v496
  %v498 = vpop.f32.mrf.mxu0
  %499 = vmatprep.mubr.bf16.mxu0 0
  %500 = vmatmul.mubr.bf16.gmra.mxu0 %v179
  %v501 = vpop.f32.mrf.mxu0
  %v502 = vadd.f32 %v413, %v501
  %v503 = vpop.f32.mrf.mxu0
  %v504 = vpop.f32.mrf.mxu0
  %v505 = vadd.f32 %v416, %v504
  %v506 = vpop.f32.mrf.mxu0
  %507 = vmatprep.mubr.bf16.mxu0 0
  %508 = vmatmul.mubr.bf16.gmra.mxu0 %v182
  %v509 = vpop.f32.mrf.mxu0
  %v510 = vadd.f32 %v421, %v509
  %v511 = vpop.f32.mrf.mxu0
  %v512 = vpop.f32.mrf.mxu0
  %v513 = vadd.f32 %v424, %v512
  %v514 = vpop.f32.mrf.mxu0
  %515 = vmatprep.mubr.bf16.mxu0 0
  %516 = vmatmul.mubr.bf16.gmra.mxu0 %v185
  %v517 = vpop.f32.mrf.mxu0
  %v518 = vadd.f32 %v429, %v517
  %v519 = vpop.f32.mrf.mxu0
  %v520 = vpop.f32.mrf.mxu0
  %v521 = vadd.f32 %v432, %v520
  %v522 = vpop.f32.mrf.mxu0
  %523 = vmatprep.mubr.bf16.mxu0 0
  %524 = vmatmul.mubr.bf16.gmra.mxu0 %v188
  %v525 = vpop.f32.mrf.mxu0
  %v526 = vadd.f32 %v437, %v525
  %v527 = vpop.f32.mrf.mxu0
  %v528 = vpop.f32.mrf.mxu0
  %v529 = vadd.f32 %v440, %v528
  %v530 = vpop.f32.mrf.mxu0
  %531 = vdwg.mxu0
  %v532 = vmax.f32 %v478, 0.0
  %v533 = vmax.f32 %v481, 0.0
  %v534 = vmax.f32 %v486, 0.0
  %v535 = vmax.f32 %v489, 0.0
  %v536 = vmax.f32 %v494, 0.0
  %v537 = vmax.f32 %v497, 0.0
  %v538 = vmax.f32 %v502, 0.0
  %v539 = vmax.f32 %v505, 0.0
  %v540 = vmax.f32 %v510, 0.0
  %v541 = vmax.f32 %v513, 0.0
  %v542 = vmax.f32 %v518, 0.0
  %v543 = vmax.f32 %v521, 0.0
  %v544 = vmax.f32 %v526, 0.0
  %v545 = vmax.f32 %v529, 0.0
  %546 = vst [vmem:[%s3] sm:$0xff] %v532
  %547 = vst [vmem:[%s3 + $0x8] sm:$0xff] %v533
  %548 = vst [vmem:[%s3 + $0x10] sm:$0xff] %v534
  %549 = vst [vmem:[%s3 + $0x18] sm:$0xff] %v535
  %550 = vst [vmem:[%s3 + $0x20] sm:$0xff] %v536
  %551 = vst [vmem:[%s3 + $0x28] sm:$0xff] %v537
  %552 = vst [vmem:[%s3 + $0x30] sm:$0xff] %v538
  %553 = vst [vmem:[%s3 + $0x38] sm:$0xff] %v539
  %554 = vst [vmem:[%s3 + $0x40] sm:$0xff] %v540
  %555 = vst [vmem:[%s3 + $0x48] sm:$0xff] %v541
  %556 = vst [vmem:[%s3 + $0x50] sm:$0xff] %v542
  %557 = vst [vmem:[%s3 + $0x58] sm:$0xff] %v543
  %558 = vst [vmem:[%s3 + $0x60] sm:$0xff] %v544
  %559 = vst [vmem:[%s3 + $0x68] sm:$0xff] %v545
  // Predicated region
  $region14: #{_crnn_forward.22} parent=0 // pred_check
    _
  $region15: #{_crnn_forward.22} parent=0 // pred_check_branch
    %561 = sbr.rel (0) target = $region17
  $region16: #{_crnn_forward.22} parent=0 // pred_region
    _
  $region17: #{_crnn_forward.22} parent=0 // pred_fallthru
    _
  // Predicated region
  $region18: #{_crnn_forward.22} parent=0 // pred_check
    _
  $region19: #{_crnn_forward.22} parent=0 // pred_check_branch
    %563 = sbr.rel (0) target = $region21
  $region20: #{_crnn_forward.22} parent=0 // pred_region
    _
  $region21: #{_crnn_forward.22} parent=0 // pred_fallthru
    _

// kernel: _crnn_forward.23
$region0: #{_crnn_forward.23}
  #allocation0 [shape = 'u32[]', space=smem, size = 0x4, offset = 0x4, fixed_abs, tag = 'smem constant byte address 0x4 - core index']
  #allocation1 [shape = 'u32[144,128]{1,0:T(1,128)}', space=vmem, size = 0x12000, scoped, tag = 'internal scratch']
  %s0 = inlined_call_operand.vmem [shape: bf16[32,512], index: 0, kind: input, shape index: {}]
  %s1 = inlined_call_operand.vmem [shape: bf16[512,128], index: 1, kind: input, shape index: {}]
  %s2 = inlined_call_operand.vmem [shape: f32[1,128], index: 2, kind: input, shape index: {}]
  %s3 = inlined_call_operand.vmem [shape: f32[32,128], index: 3, kind: output, shape index: {}]
  %s4 = sld [smem:[#allocation0]]
  $region22: #{_crnn_forward.23} parent=0
    _
  %s6 = ssub.s32 1, %s4
  %s7 = scalar_select 0, %s6, %s4
  // Predicated region
  $region2: #{_crnn_forward.23} parent=0 // pred_check
    _
  $region3: #{_crnn_forward.23} parent=0 // pred_check_branch
    %9 = sbr.rel (0) target = $region5
  $region4: #{_crnn_forward.23} parent=0 // pred_region
    _
  $region5: #{_crnn_forward.23} parent=0 // pred_fallthru
    _
  // Predicated region
  $region6: #{_crnn_forward.23} parent=0 // pred_check
    _
  $region7: #{_crnn_forward.23} parent=0 // pred_check_branch
    %11 = sbr.rel (0) target = $region9
  $region8: #{_crnn_forward.23} parent=0 // pred_region
    _
  $region9: #{_crnn_forward.23} parent=0 // pred_fallthru
    _
  // Predicated region
  $region10: #{_crnn_forward.23} parent=0 // pred_check
    _
  $region11: #{_crnn_forward.23} parent=0 // pred_check_branch
    %13 = sbr.rel (0) target = $region13
  $region12: #{_crnn_forward.23} parent=0 // pred_region
    _
  $region13: #{_crnn_forward.23} parent=0 // pred_fallthru
    _
  %v15 = vld [vmem:[%s0] sm:$0xff]
  %v16 = vld [vmem:[%s0 + $0x8] sm:$0xff]
  %v17 = vld [vmem:[%s0 + $0x10] sm:$0xff]
  %v18 = vld [vmem:[%s0 + $0x18] sm:$0xff]
  %v19 = vld [vmem:[%s0 + $0x20] sm:$0xff]
  %v20 = vld [vmem:[%s0 + $0x28] sm:$0xff]
  %v21 = vld [vmem:[%s0 + $0x30] sm:$0xff]
  %v22 = vld [vmem:[%s0 + $0x38] sm:$0xff]
  %v23 = vld [vmem:[%s1] sm:$0xf]
  %v24 = vld [vmem:[%s1 + $0x4] sm:$0xf]
  %v25 = vld [vmem:[%s1 + $0x8] sm:$0xf]
  %v26 = vld [vmem:[%s1 + $0xc] sm:$0xf]
  %v27 = vld [vmem:[%s1 + $0x10] sm:$0xf]
  %v28 = vld [vmem:[%s1 + $0x14] sm:$0xf]
  %v29 = vld [vmem:[%s1 + $0x18] sm:$0xf]
  %v30 = vld [vmem:[%s1 + $0x1c] sm:$0xf]
  %v31 = vld [vmem:[%s1 + $0x20] sm:$0xf]
  %v32 = vld [vmem:[%s1 + $0x24] sm:$0xf]
  %v33 = vld [vmem:[%s1 + $0x28] sm:$0xf]
  %v34 = vld [vmem:[%s1 + $0x2c] sm:$0xf]
  %v35 = vld [vmem:[%s1 + $0x30] sm:$0xf]
  %v36 = vld [vmem:[%s1 + $0x34] sm:$0xf]
  %v37 = vld [vmem:[%s1 + $0x38] sm:$0xf]
  %v38 = vld [vmem:[%s1 + $0x3c] sm:$0xf]
  %v39 = vld [vmem:[%s1 + $0x40] sm:$0xf]
  %v40 = vld [vmem:[%s1 + $0x44] sm:$0xf]
  %v41 = vld [vmem:[%s1 + $0x48] sm:$0xf]
  %v42 = vld [vmem:[%s1 + $0x4c] sm:$0xf]
  %v43 = vld [vmem:[%s1 + $0x50] sm:$0xf]
  %v44 = vld [vmem:[%s1 + $0x54] sm:$0xf]
  %v45 = vld [vmem:[%s1 + $0x58] sm:$0xf]
  %v46 = vld [vmem:[%s1 + $0x5c] sm:$0xf]
  %v47 = vld [vmem:[%s1 + $0x60] sm:$0xf]
  %v48 = vld [vmem:[%s1 + $0x64] sm:$0xf]
  %v49 = vld [vmem:[%s1 + $0x68] sm:$0xf]
  %v50 = vld [vmem:[%s1 + $0x6c] sm:$0xf]
  %v51 = vld [vmem:[%s1 + $0x70] sm:$0xf]
  %v52 = vld [vmem:[%s1 + $0x74] sm:$0xf]
  %v53 = vld [vmem:[%s1 + $0x78] sm:$0xf]
  %v54 = vld [vmem:[%s1 + $0x7c] sm:$0xf]
  %v55 = vld [vmem:[%s1 + $0x80] sm:$0xf]
  %v56 = vld [vmem:[%s1 + $0x84] sm:$0xf]
  %v57 = vld [vmem:[%s1 + $0x88] sm:$0xf]
  %v58 = vld [vmem:[%s1 + $0x8c] sm:$0xf]
  %v59 = vld [vmem:[%s1 + $0x90] sm:$0xf]
  %v60 = vld [vmem:[%s1 + $0x94] sm:$0xf]
  %v61 = vld [vmem:[%s1 + $0x98] sm:$0xf]
  %v62 = vld [vmem:[%s1 + $0x9c] sm:$0xf]
  %v63 = vld [vmem:[%s1 + $0xa0] sm:$0xf]
  %v64 = vld [vmem:[%s1 + $0xa4] sm:$0xf]
  %v65 = vld [vmem:[%s1 + $0xa8] sm:$0xf]
  %v66 = vld [vmem:[%s1 + $0xac] sm:$0xf]
  %v67 = vld [vmem:[%s1 + $0xb0] sm:$0xf]
  %v68 = vld [vmem:[%s1 + $0xb4] sm:$0xf]
  %v69 = vld [vmem:[%s1 + $0xb8] sm:$0xf]
  %v70 = vld [vmem:[%s1 + $0xbc] sm:$0xf]
  %v71 = vld [vmem:[%s1 + $0xc0] sm:$0xf]
  %v72 = vld [vmem:[%s1 + $0xc4] sm:$0xf]
  %v73 = vld [vmem:[%s1 + $0xc8] sm:$0xf]
  %v74 = vld [vmem:[%s1 + $0xcc] sm:$0xf]
  %v75 = vld [vmem:[%s1 + $0xd0] sm:$0xf]
  %v76 = vld [vmem:[%s1 + $0xd4] sm:$0xf]
  %v77 = vld [vmem:[%s1 + $0xd8] sm:$0xf]
  %v78 = vld [vmem:[%s1 + $0xdc] sm:$0xf]
  %v79 = vld [vmem:[%s1 + $0xe0] sm:$0xf]
  %v80 = vld [vmem:[%s1 + $0xe4] sm:$0xf]
  %v81 = vld [vmem:[%s1 + $0xe8] sm:$0xf]
  %v82 = vld [vmem:[%s1 + $0xec] sm:$0xf]
  %v83 = vld [vmem:[%s1 + $0xf0] sm:$0xf]
  %v84 = vld [vmem:[%s1 + $0xf4] sm:$0xf]
  %v85 = vld [vmem:[%s1 + $0xf8] sm:$0xf]
  %v86 = vld [vmem:[%s1 + $0xfc] sm:$0xf]
  %v87 = vld [vmem:[%s2] sm:$0x1]
  %v89 = vlaneseq
  %v90 = vshrl.u32 %v89, 7
  %v91 = vsub.s32 0, %v90
  %v92 = vrot.slane %v87, %v91
  %v102 = vunpack.c.l.b16 %v15
  %v103 = vunpack.c.h.b16 %v15
  %v104 = vunpack.c.l.b16 %v16
  %v105 = vunpack.c.h.b16 %v16
  %v106 = vunpack.c.l.b16 %v17
  %v107 = vunpack.c.h.b16 %v17
  %v108 = vunpack.c.l.b16 %v18
  %v109 = vunpack.c.h.b16 %v18
  %v110 = vunpack.c.l.b16 %v19
  %v111 = vunpack.c.h.b16 %v19
  %v112 = vunpack.c.l.b16 %v20
  %v113 = vunpack.c.h.b16 %v20
  %v114 = vunpack.c.l.b16 %v21
  %v115 = vunpack.c.h.b16 %v21
  %v116 = vunpack.c.l.b16 %v22
  %v117 = vunpack.c.h.b16 %v22
  %v118 = vpack.c.b16 %v106, %v102
  %v119 = vpack.c.b16 %v107, %v103
  %v120 = vpack.c.b16 %v108, %v104
  %v121 = vpack.c.b16 %v109, %v105
  %v122 = vpack.c.b16 %v114, %v110
  %v123 = vpack.c.b16 %v115, %v111
  %v124 = vpack.c.b16 %v116, %v112
  %v125 = vpack.c.b16 %v117, %v113
  %v198 = vunpack.c.l.b16 %v23
  %v199 = vunpack.c.l.b16 %v24
  %v200 = vunpack.c.l.b16 %v25
  %v201 = vunpack.c.l.b16 %v26
  %v202 = vunpack.c.l.b16 %v27
  %v203 = vunpack.c.l.b16 %v28
  %v204 = vunpack.c.l.b16 %v29
  %v205 = vunpack.c.l.b16 %v30
  %v206 = vunpack.c.l.b16 %v31
  %v207 = vunpack.c.l.b16 %v32
  %v208 = vunpack.c.l.b16 %v33
  %v209 = vunpack.c.l.b16 %v34
  %v210 = vunpack.c.l.b16 %v35
  %v211 = vunpack.c.l.b16 %v36
  %v212 = vunpack.c.l.b16 %v37
  %v213 = vunpack.c.l.b16 %v38
  %v214 = vunpack.c.l.b16 %v39
  %v215 = vunpack.c.l.b16 %v40
  %v216 = vunpack.c.l.b16 %v41
  %v217 = vunpack.c.l.b16 %v42
  %v218 = vunpack.c.l.b16 %v43
  %v219 = vunpack.c.l.b16 %v44
  %v220 = vunpack.c.l.b16 %v45
  %v221 = vunpack.c.l.b16 %v46
  %v222 = vunpack.c.l.b16 %v47
  %v223 = vunpack.c.l.b16 %v48
  %v224 = vunpack.c.l.b16 %v49
  %v225 = vunpack.c.l.b16 %v50
  %v226 = vunpack.c.l.b16 %v51
  %v227 = vunpack.c.l.b16 %v52
  %v228 = vunpack.c.l.b16 %v53
  %v229 = vunpack.c.l.b16 %v54
  %v230 = vunpack.c.l.b16 %v55
  %v231 = vunpack.c.l.b16 %v56
  %v232 = vunpack.c.l.b16 %v57
  %v233 = vunpack.c.l.b16 %v58
  %v234 = vunpack.c.l.b16 %v59
  %v235 = vunpack.c.l.b16 %v60
  %v236 = vunpack.c.l.b16 %v61
  %v237 = vunpack.c.l.b16 %v62
  %v238 = vunpack.c.l.b16 %v63
  %v239 = vunpack.c.l.b16 %v64
  %v240 = vunpack.c.l.b16 %v65
  %v241 = vunpack.c.l.b16 %v66
  %v242 = vunpack.c.l.b16 %v67
  %v243 = vunpack.c.l.b16 %v68
  %v244 = vunpack.c.l.b16 %v69
  %v245 = vunpack.c.l.b16 %v70
  %v246 = vunpack.c.l.b16 %v71
  %v247 = vunpack.c.l.b16 %v72
  %v248 = vunpack.c.l.b16 %v73
  %v249 = vunpack.c.l.b16 %v74
  %v250 = vunpack.c.l.b16 %v75
  %v251 = vunpack.c.l.b16 %v76
  %v252 = vunpack.c.l.b16 %v77
  %v253 = vunpack.c.l.b16 %v78
  %v254 = vunpack.c.l.b16 %v79
  %v255 = vunpack.c.l.b16 %v80
  %v256 = vunpack.c.l.b16 %v81
  %v257 = vunpack.c.l.b16 %v82
  %v258 = vunpack.c.l.b16 %v83
  %v259 = vunpack.c.l.b16 %v84
  %v260 = vunpack.c.l.b16 %v85
  %v261 = vunpack.c.l.b16 %v86
  %v262 = vpack.c.b16 %v199, %v198
  %v263 = vpack.c.b16 %v201, %v200
  %v264 = vpack.c.b16 %v203, %v202
  %v265 = vpack.c.b16 %v205, %v204
  %v266 = vpack.c.b16 %v207, %v206
  %v267 = vpack.c.b16 %v209, %v208
  %v268 = vpack.c.b16 %v211, %v210
  %v269 = vpack.c.b16 %v213, %v212
  %v270 = vpack.c.b16 %v215, %v214
  %v271 = vpack.c.b16 %v217, %v216
  %v272 = vpack.c.b16 %v219, %v218
  %v273 = vpack.c.b16 %v221, %v220
  %v274 = vpack.c.b16 %v223, %v222
  %v275 = vpack.c.b16 %v225, %v224
  %v276 = vpack.c.b16 %v227, %v226
  %v277 = vpack.c.b16 %v229, %v228
  %v278 = vpack.c.b16 %v231, %v230
  %v279 = vpack.c.b16 %v233, %v232
  %v280 = vpack.c.b16 %v235, %v234
  %v281 = vpack.c.b16 %v237, %v236
  %v282 = vpack.c.b16 %v239, %v238
  %v283 = vpack.c.b16 %v241, %v240
  %v284 = vpack.c.b16 %v243, %v242
  %v285 = vpack.c.b16 %v245, %v244
  %v286 = vpack.c.b16 %v247, %v246
  %v287 = vpack.c.b16 %v249, %v248
  %v288 = vpack.c.b16 %v251, %v250
  %v289 = vpack.c.b16 %v253, %v252
  %v290 = vpack.c.b16 %v255, %v254
  %v291 = vpack.c.b16 %v257, %v256
  %v292 = vpack.c.b16 %v259, %v258
  %v293 = vpack.c.b16 %v261, %v260
  %326 = vmatprep.subr.bf16.mxu0 0
  %327 = vmatpush1.bf16.msra.mxu0 %v269
  %328 = vmatprep.subr.bf16.mxu0 0
  %329 = vmatpush1.bf16.msra.mxu0 %v268
  %330 = vmatprep.subr.bf16.mxu0 0
  %331 = vmatpush1.bf16.msra.mxu0 %v267
  %332 = vmatprep.subr.bf16.mxu0 0
  %333 = vmatpush1.bf16.msra.mxu0 %v266
  %334 = vmatprep.subr.bf16.mxu0 0
  %335 = vmatpush1.bf16.msra.mxu0 %v265
  %336 = vmatprep.subr.bf16.mxu0 0
  %337 = vmatpush1.bf16.msra.mxu0 %v264
  %338 = vmatprep.subr.bf16.mxu0 0
  %339 = vmatpush1.bf16.msra.mxu0 %v263
  %340 = vmatprep.subr.bf16.mxu0 0
  %341 = vmatpush1.bf16.msra.mxu0 %v262
  %342 = vmatprep.subr.bf16.mxu0 0
  %343 = vmatpush2.bf16.msra.mxu0 %v277
  %344 = vmatprep.subr.bf16.mxu0 0
  %345 = vmatpush2.bf16.msra.mxu0 %v276
  %346 = vmatprep.subr.bf16.mxu0 0
  %347 = vmatpush2.bf16.msra.mxu0 %v275
  %348 = vmatprep.subr.bf16.mxu0 0
  %349 = vmatpush2.bf16.msra.mxu0 %v274
  %350 = vmatprep.subr.bf16.mxu0 0
  %351 = vmatpush2.bf16.msra.mxu0 %v273
  %352 = vmatprep.subr.bf16.mxu0 0
  %353 = vmatpush2.bf16.msra.mxu0 %v272
  %354 = vmatprep.subr.bf16.mxu0 0
  %355 = vmatpush2.bf16.msra.mxu0 %v271
  %356 = vmatprep.subr.bf16.mxu0 0
  %357 = vmatpush2.bf16.msra.mxu0 %v270
  %358 = vmatprep.mubr.bf16.mxu0 %v119
  %359 = vmatmul.mubr.bf16.gmra.mxu0 %v118
  %v360 = vpop.f32.mrf.mxu0
  %v361 = vadd.f32 %v92, %v360
  %v362 = vpop.f32.mrf.mxu0
  %v363 = vpop.f32.mrf.mxu0
  %v364 = vadd.f32 %v92, %v363
  %v365 = vpop.f32.mrf.mxu0
  %366 = vmatprep.mubr.bf16.mxu0 %v123
  %367 = vmatmul.mubr.bf16.gmra.mxu0 %v122
  %v368 = vpop.f32.mrf.mxu0
  %v369 = vadd.f32 %v92, %v368
  %v370 = vpop.f32.mrf.mxu0
  %v371 = vpop.f32.mrf.mxu0
  %v372 = vadd.f32 %v92, %v371
  %v373 = vpop.f32.mrf.mxu0
  %374 = vdwg.mxu0
  %375 = vmatprep.subr.bf16.mxu0 0
  %376 = vmatpush1.bf16.msra.mxu0 %v285
  %377 = vmatprep.subr.bf16.mxu0 0
  %378 = vmatpush1.bf16.msra.mxu0 %v284
  %379 = vmatprep.subr.bf16.mxu0 0
  %380 = vmatpush1.bf16.msra.mxu0 %v283
  %381 = vmatprep.subr.bf16.mxu0 0
  %382 = vmatpush1.bf16.msra.mxu0 %v282
  %383 = vmatprep.subr.bf16.mxu0 0
  %384 = vmatpush1.bf16.msra.mxu0 %v281
  %385 = vmatprep.subr.bf16.mxu0 0
  %386 = vmatpush1.bf16.msra.mxu0 %v280
  %387 = vmatprep.subr.bf16.mxu0 0
  %388 = vmatpush1.bf16.msra.mxu0 %v279
  %389 = vmatprep.subr.bf16.mxu0 0
  %390 = vmatpush1.bf16.msra.mxu0 %v278
  %391 = vmatprep.subr.bf16.mxu0 0
  %392 = vmatpush2.bf16.msra.mxu0 %v293
  %393 = vmatprep.subr.bf16.mxu0 0
  %394 = vmatpush2.bf16.msra.mxu0 %v292
  %395 = vmatprep.subr.bf16.mxu0 0
  %396 = vmatpush2.bf16.msra.mxu0 %v291
  %397 = vmatprep.subr.bf16.mxu0 0
  %398 = vmatpush2.bf16.msra.mxu0 %v290
  %399 = vmatprep.subr.bf16.mxu0 0
  %400 = vmatpush2.bf16.msra.mxu0 %v289
  %401 = vmatprep.subr.bf16.mxu0 0
  %402 = vmatpush2.bf16.msra.mxu0 %v288
  %403 = vmatprep.subr.bf16.mxu0 0
  %404 = vmatpush2.bf16.msra.mxu0 %v287
  %405 = vmatprep.subr.bf16.mxu0 0
  %406 = vmatpush2.bf16.msra.mxu0 %v286
  %407 = vmatprep.mubr.bf16.mxu0 %v121
  %408 = vmatmul.mubr.bf16.gmra.mxu0 %v120
  %v409 = vpop.f32.mrf.mxu0
  %v410 = vadd.f32 %v361, %v409
  %v411 = vpop.f32.mrf.mxu0
  %v412 = vpop.f32.mrf.mxu0
  %v413 = vadd.f32 %v364, %v412
  %v414 = vpop.f32.mrf.mxu0
  %415 = vmatprep.mubr.bf16.mxu0 %v125
  %416 = vmatmul.mubr.bf16.gmra.mxu0 %v124
  %v417 = vpop.f32.mrf.mxu0
  %v418 = vadd.f32 %v369, %v417
  %v419 = vpop.f32.mrf.mxu0
  %v420 = vpop.f32.mrf.mxu0
  %v421 = vadd.f32 %v372, %v420
  %v422 = vpop.f32.mrf.mxu0
  %423 = vdwg.mxu0
  %v424 = vmax.f32 %v410, 0.0
  %v425 = vmax.f32 %v413, 0.0
  %v426 = vmax.f32 %v418, 0.0
  %v427 = vmax.f32 %v421, 0.0
  %428 = vst [vmem:[%s3] sm:$0xff] %v424
  %429 = vst [vmem:[%s3 + $0x8] sm:$0xff] %v425
  %430 = vst [vmem:[%s3 + $0x10] sm:$0xff] %v426
  %431 = vst [vmem:[%s3 + $0x18] sm:$0xff] %v427
  // Predicated region
  $region14: #{_crnn_forward.23} parent=0 // pred_check
    _
  $region15: #{_crnn_forward.23} parent=0 // pred_check_branch
    %433 = sbr.rel (0) target = $region17
  $region16: #{_crnn_forward.23} parent=0 // pred_region
    _
  $region17: #{_crnn_forward.23} parent=0 // pred_fallthru
    _
  // Predicated region
  $region18: #{_crnn_forward.23} parent=0 // pred_check
    _
  $region19: #{_crnn_forward.23} parent=0 // pred_check_branch
    %435 = sbr.rel (0) target = $region21
  $region20: #{_crnn_forward.23} parent=0 // pred_region
    _
  $region21: #{_crnn_forward.23} parent=0 // pred_fallthru
    _

// kernel: _crnn_forward.24
$region0: #{_crnn_forward.24}
  #allocation0 [shape = 'u32[]', space=smem, size = 0x4, offset = 0x4, fixed_abs, tag = 'smem constant byte address 0x4 - core index']
  #allocation1 [shape = 'u32[144,128]{1,0:T(1,128)}', space=vmem, size = 0x12000, scoped, tag = 'internal scratch']
  %s0 = inlined_call_operand.vmem [shape: bf16[16,512], index: 0, kind: input, shape index: {}]
  %s1 = inlined_call_operand.vmem [shape: bf16[512,128], index: 1, kind: input, shape index: {}]
  %s2 = inlined_call_operand.vmem [shape: f32[1,128], index: 2, kind: input, shape index: {}]
  %s3 = inlined_call_operand.vmem [shape: f32[16,128], index: 3, kind: output, shape index: {}]
  %s4 = sld [smem:[#allocation0]]
  $region22: #{_crnn_forward.24} parent=0
    _
  %s6 = ssub.s32 1, %s4
  %s7 = scalar_select 0, %s6, %s4
  // Predicated region
  $region2: #{_crnn_forward.24} parent=0 // pred_check
    _
  $region3: #{_crnn_forward.24} parent=0 // pred_check_branch
    %9 = sbr.rel (0) target = $region5
  $region4: #{_crnn_forward.24} parent=0 // pred_region
    _
  $region5: #{_crnn_forward.24} parent=0 // pred_fallthru
    _
  // Predicated region
  $region6: #{_crnn_forward.24} parent=0 // pred_check
    _
  $region7: #{_crnn_forward.24} parent=0 // pred_check_branch
    %11 = sbr.rel (0) target = $region9
  $region8: #{_crnn_forward.24} parent=0 // pred_region
    _
  $region9: #{_crnn_forward.24} parent=0 // pred_fallthru
    _
  // Predicated region
  $region10: #{_crnn_forward.24} parent=0 // pred_check
    _
  $region11: #{_crnn_forward.24} parent=0 // pred_check_branch
    %13 = sbr.rel (0) target = $region13
  $region12: #{_crnn_forward.24} parent=0 // pred_region
    _
  $region13: #{_crnn_forward.24} parent=0 // pred_fallthru
    _
  %v15 = vld [vmem:[%s0] sm:$0xff]
  %v16 = vld [vmem:[%s0 + $0x8] sm:$0xff]
  %v17 = vld [vmem:[%s0 + $0x10] sm:$0xff]
  %v18 = vld [vmem:[%s0 + $0x18] sm:$0xff]
  %v19 = vld [vmem:[%s1] sm:$0xf]
  %v20 = vld [vmem:[%s1 + $0x4] sm:$0xf]
  %v21 = vld [vmem:[%s1 + $0x8] sm:$0xf]
  %v22 = vld [vmem:[%s1 + $0xc] sm:$0xf]
  %v23 = vld [vmem:[%s1 + $0x10] sm:$0xf]
  %v24 = vld [vmem:[%s1 + $0x14] sm:$0xf]
  %v25 = vld [vmem:[%s1 + $0x18] sm:$0xf]
  %v26 = vld [vmem:[%s1 + $0x1c] sm:$0xf]
  %v27 = vld [vmem:[%s1 + $0x20] sm:$0xf]
  %v28 = vld [vmem:[%s1 + $0x24] sm:$0xf]
  %v29 = vld [vmem:[%s1 + $0x28] sm:$0xf]
  %v30 = vld [vmem:[%s1 + $0x2c] sm:$0xf]
  %v31 = vld [vmem:[%s1 + $0x30] sm:$0xf]
  %v32 = vld [vmem:[%s1 + $0x34] sm:$0xf]
  %v33 = vld [vmem:[%s1 + $0x38] sm:$0xf]
  %v34 = vld [vmem:[%s1 + $0x3c] sm:$0xf]
  %v35 = vld [vmem:[%s1 + $0x40] sm:$0xf]
  %v36 = vld [vmem:[%s1 + $0x44] sm:$0xf]
  %v37 = vld [vmem:[%s1 + $0x48] sm:$0xf]
  %v38 = vld [vmem:[%s1 + $0x4c] sm:$0xf]
  %v39 = vld [vmem:[%s1 + $0x50] sm:$0xf]
  %v40 = vld [vmem:[%s1 + $0x54] sm:$0xf]
  %v41 = vld [vmem:[%s1 + $0x58] sm:$0xf]
  %v42 = vld [vmem:[%s1 + $0x5c] sm:$0xf]
  %v43 = vld [vmem:[%s1 + $0x60] sm:$0xf]
  %v44 = vld [vmem:[%s1 + $0x64] sm:$0xf]
  %v45 = vld [vmem:[%s1 + $0x68] sm:$0xf]
  %v46 = vld [vmem:[%s1 + $0x6c] sm:$0xf]
  %v47 = vld [vmem:[%s1 + $0x70] sm:$0xf]
  %v48 = vld [vmem:[%s1 + $0x74] sm:$0xf]
  %v49 = vld [vmem:[%s1 + $0x78] sm:$0xf]
  %v50 = vld [vmem:[%s1 + $0x7c] sm:$0xf]
  %v51 = vld [vmem:[%s1 + $0x80] sm:$0xf]
  %v52 = vld [vmem:[%s1 + $0x84] sm:$0xf]
  %v53 = vld [vmem:[%s1 + $0x88] sm:$0xf]
  %v54 = vld [vmem:[%s1 + $0x8c] sm:$0xf]
  %v55 = vld [vmem:[%s1 + $0x90] sm:$0xf]
  %v56 = vld [vmem:[%s1 + $0x94] sm:$0xf]
  %v57 = vld [vmem:[%s1 + $0x98] sm:$0xf]
  %v58 = vld [vmem:[%s1 + $0x9c] sm:$0xf]
  %v59 = vld [vmem:[%s1 + $0xa0] sm:$0xf]
  %v60 = vld [vmem:[%s1 + $0xa4] sm:$0xf]
  %v61 = vld [vmem:[%s1 + $0xa8] sm:$0xf]
  %v62 = vld [vmem:[%s1 + $0xac] sm:$0xf]
  %v63 = vld [vmem:[%s1 + $0xb0] sm:$0xf]
  %v64 = vld [vmem:[%s1 + $0xb4] sm:$0xf]
  %v65 = vld [vmem:[%s1 + $0xb8] sm:$0xf]
  %v66 = vld [vmem:[%s1 + $0xbc] sm:$0xf]
  %v67 = vld [vmem:[%s1 + $0xc0] sm:$0xf]
  %v68 = vld [vmem:[%s1 + $0xc4] sm:$0xf]
  %v69 = vld [vmem:[%s1 + $0xc8] sm:$0xf]
  %v70 = vld [vmem:[%s1 + $0xcc] sm:$0xf]
  %v71 = vld [vmem:[%s1 + $0xd0] sm:$0xf]
  %v72 = vld [vmem:[%s1 + $0xd4] sm:$0xf]
  %v73 = vld [vmem:[%s1 + $0xd8] sm:$0xf]
  %v74 = vld [vmem:[%s1 + $0xdc] sm:$0xf]
  %v75 = vld [vmem:[%s1 + $0xe0] sm:$0xf]
  %v76 = vld [vmem:[%s1 + $0xe4] sm:$0xf]
  %v77 = vld [vmem:[%s1 + $0xe8] sm:$0xf]
  %v78 = vld [vmem:[%s1 + $0xec] sm:$0xf]
  %v79 = vld [vmem:[%s1 + $0xf0] sm:$0xf]
  %v80 = vld [vmem:[%s1 + $0xf4] sm:$0xf]
  %v81 = vld [vmem:[%s1 + $0xf8] sm:$0xf]
  %v82 = vld [vmem:[%s1 + $0xfc] sm:$0xf]
  %v83 = vld [vmem:[%s2] sm:$0x1]
  %v85 = vlaneseq
  %v86 = vshrl.u32 %v85, 7
  %v87 = vsub.s32 0, %v86
  %v88 = vrot.slane %v83, %v87
  %v94 = vunpack.c.l.b16 %v15
  %v95 = vunpack.c.h.b16 %v15
  %v96 = vunpack.c.l.b16 %v16
  %v97 = vunpack.c.h.b16 %v16
  %v98 = vunpack.c.l.b16 %v17
  %v99 = vunpack.c.h.b16 %v17
  %v100 = vunpack.c.l.b16 %v18
  %v101 = vunpack.c.h.b16 %v18
  %v102 = vpack.c.b16 %v98, %v94
  %v103 = vpack.c.b16 %v99, %v95
  %v104 = vpack.c.b16 %v100, %v96
  %v105 = vpack.c.b16 %v101, %v97
  %v174 = vunpack.c.l.b16 %v19
  %v175 = vunpack.c.l.b16 %v20
  %v176 = vunpack.c.l.b16 %v21
  %v177 = vunpack.c.l.b16 %v22
  %v178 = vunpack.c.l.b16 %v23
  %v179 = vunpack.c.l.b16 %v24
  %v180 = vunpack.c.l.b16 %v25
  %v181 = vunpack.c.l.b16 %v26
  %v182 = vunpack.c.l.b16 %v27
  %v183 = vunpack.c.l.b16 %v28
  %v184 = vunpack.c.l.b16 %v29
  %v185 = vunpack.c.l.b16 %v30
  %v186 = vunpack.c.l.b16 %v31
  %v187 = vunpack.c.l.b16 %v32
  %v188 = vunpack.c.l.b16 %v33
  %v189 = vunpack.c.l.b16 %v34
  %v190 = vunpack.c.l.b16 %v35
  %v191 = vunpack.c.l.b16 %v36
  %v192 = vunpack.c.l.b16 %v37
  %v193 = vunpack.c.l.b16 %v38
  %v194 = vunpack.c.l.b16 %v39
  %v195 = vunpack.c.l.b16 %v40
  %v196 = vunpack.c.l.b16 %v41
  %v197 = vunpack.c.l.b16 %v42
  %v198 = vunpack.c.l.b16 %v43
  %v199 = vunpack.c.l.b16 %v44
  %v200 = vunpack.c.l.b16 %v45
  %v201 = vunpack.c.l.b16 %v46
  %v202 = vunpack.c.l.b16 %v47
  %v203 = vunpack.c.l.b16 %v48
  %v204 = vunpack.c.l.b16 %v49
  %v205 = vunpack.c.l.b16 %v50
  %v206 = vunpack.c.l.b16 %v51
  %v207 = vunpack.c.l.b16 %v52
  %v208 = vunpack.c.l.b16 %v53
  %v209 = vunpack.c.l.b16 %v54
  %v210 = vunpack.c.l.b16 %v55
  %v211 = vunpack.c.l.b16 %v56
  %v212 = vunpack.c.l.b16 %v57
  %v213 = vunpack.c.l.b16 %v58
  %v214 = vunpack.c.l.b16 %v59
  %v215 = vunpack.c.l.b16 %v60
  %v216 = vunpack.c.l.b16 %v61
  %v217 = vunpack.c.l.b16 %v62
  %v218 = vunpack.c.l.b16 %v63
  %v219 = vunpack.c.l.b16 %v64
  %v220 = vunpack.c.l.b16 %v65
  %v221 = vunpack.c.l.b16 %v66
  %v222 = vunpack.c.l.b16 %v67
  %v223 = vunpack.c.l.b16 %v68
  %v224 = vunpack.c.l.b16 %v69
  %v225 = vunpack.c.l.b16 %v70
  %v226 = vunpack.c.l.b16 %v71
  %v227 = vunpack.c.l.b16 %v72
  %v228 = vunpack.c.l.b16 %v73
  %v229 = vunpack.c.l.b16 %v74
  %v230 = vunpack.c.l.b16 %v75
  %v231 = vunpack.c.l.b16 %v76
  %v232 = vunpack.c.l.b16 %v77
  %v233 = vunpack.c.l.b16 %v78
  %v234 = vunpack.c.l.b16 %v79
  %v235 = vunpack.c.l.b16 %v80
  %v236 = vunpack.c.l.b16 %v81
  %v237 = vunpack.c.l.b16 %v82
  %v238 = vpack.c.b16 %v175, %v174
  %v239 = vpack.c.b16 %v177, %v176
  %v240 = vpack.c.b16 %v179, %v178
  %v241 = vpack.c.b16 %v181, %v180
  %v242 = vpack.c.b16 %v183, %v182
  %v243 = vpack.c.b16 %v185, %v184
  %v244 = vpack.c.b16 %v187, %v186
  %v245 = vpack.c.b16 %v189, %v188
  %v246 = vpack.c.b16 %v191, %v190
  %v247 = vpack.c.b16 %v193, %v192
  %v248 = vpack.c.b16 %v195, %v194
  %v249 = vpack.c.b16 %v197, %v196
  %v250 = vpack.c.b16 %v199, %v198
  %v251 = vpack.c.b16 %v201, %v200
  %v252 = vpack.c.b16 %v203, %v202
  %v253 = vpack.c.b16 %v205, %v204
  %v254 = vpack.c.b16 %v207, %v206
  %v255 = vpack.c.b16 %v209, %v208
  %v256 = vpack.c.b16 %v211, %v210
  %v257 = vpack.c.b16 %v213, %v212
  %v258 = vpack.c.b16 %v215, %v214
  %v259 = vpack.c.b16 %v217, %v216
  %v260 = vpack.c.b16 %v219, %v218
  %v261 = vpack.c.b16 %v221, %v220
  %v262 = vpack.c.b16 %v223, %v222
  %v263 = vpack.c.b16 %v225, %v224
  %v264 = vpack.c.b16 %v227, %v226
  %v265 = vpack.c.b16 %v229, %v228
  %v266 = vpack.c.b16 %v231, %v230
  %v267 = vpack.c.b16 %v233, %v232
  %v268 = vpack.c.b16 %v235, %v234
  %v269 = vpack.c.b16 %v237, %v236
  %302 = vmatprep.subr.bf16.mxu0 0
  %303 = vmatpush1.bf16.msra.mxu0 %v245
  %304 = vmatprep.subr.bf16.mxu0 0
  %305 = vmatpush1.bf16.msra.mxu0 %v244
  %306 = vmatprep.subr.bf16.mxu0 0
  %307 = vmatpush1.bf16.msra.mxu0 %v243
  %308 = vmatprep.subr.bf16.mxu0 0
  %309 = vmatpush1.bf16.msra.mxu0 %v242
  %310 = vmatprep.subr.bf16.mxu0 0
  %311 = vmatpush1.bf16.msra.mxu0 %v241
  %312 = vmatprep.subr.bf16.mxu0 0
  %313 = vmatpush1.bf16.msra.mxu0 %v240
  %314 = vmatprep.subr.bf16.mxu0 0
  %315 = vmatpush1.bf16.msra.mxu0 %v239
  %316 = vmatprep.subr.bf16.mxu0 0
  %317 = vmatpush1.bf16.msra.mxu0 %v238
  %318 = vmatprep.subr.bf16.mxu0 0
  %319 = vmatpush2.bf16.msra.mxu0 %v253
  %320 = vmatprep.subr.bf16.mxu0 0
  %321 = vmatpush2.bf16.msra.mxu0 %v252
  %322 = vmatprep.subr.bf16.mxu0 0
  %323 = vmatpush2.bf16.msra.mxu0 %v251
  %324 = vmatprep.subr.bf16.mxu0 0
  %325 = vmatpush2.bf16.msra.mxu0 %v250
  %326 = vmatprep.subr.bf16.mxu0 0
  %327 = vmatpush2.bf16.msra.mxu0 %v249
  %328 = vmatprep.subr.bf16.mxu0 0
  %329 = vmatpush2.bf16.msra.mxu0 %v248
  %330 = vmatprep.subr.bf16.mxu0 0
  %331 = vmatpush2.bf16.msra.mxu0 %v247
  %332 = vmatprep.subr.bf16.mxu0 0
  %333 = vmatpush2.bf16.msra.mxu0 %v246
  %334 = vmatprep.mubr.bf16.mxu0 %v103
  %335 = vmatmul.mubr.bf16.gmra.mxu0 %v102
  %v336 = vpop.f32.mrf.mxu0
  %v337 = vadd.f32 %v88, %v336
  %v338 = vpop.f32.mrf.mxu0
  %v339 = vpop.f32.mrf.mxu0
  %v340 = vadd.f32 %v88, %v339
  %v341 = vpop.f32.mrf.mxu0
  %342 = vdwg.mxu0
  %343 = vmatprep.subr.bf16.mxu0 0
  %344 = vmatpush1.bf16.msra.mxu0 %v261
  %345 = vmatprep.subr.bf16.mxu0 0
  %346 = vmatpush1.bf16.msra.mxu0 %v260
  %347 = vmatprep.subr.bf16.mxu0 0
  %348 = vmatpush1.bf16.msra.mxu0 %v259
  %349 = vmatprep.subr.bf16.mxu0 0
  %350 = vmatpush1.bf16.msra.mxu0 %v258
  %351 = vmatprep.subr.bf16.mxu0 0
  %352 = vmatpush1.bf16.msra.mxu0 %v257
  %353 = vmatprep.subr.bf16.mxu0 0
  %354 = vmatpush1.bf16.msra.mxu0 %v256
  %355 = vmatprep.subr.bf16.mxu0 0
  %356 = vmatpush1.bf16.msra.mxu0 %v255
  %357 = vmatprep.subr.bf16.mxu0 0
  %358 = vmatpush1.bf16.msra.mxu0 %v254
  %359 = vmatprep.subr.bf16.mxu0 0
  %360 = vmatpush2.bf16.msra.mxu0 %v269
  %361 = vmatprep.subr.bf16.mxu0 0
  %362 = vmatpush2.bf16.msra.mxu0 %v268
  %363 = vmatprep.subr.bf16.mxu0 0
  %364 = vmatpush2.bf16.msra.mxu0 %v267
  %365 = vmatprep.subr.bf16.mxu0 0
  %366 = vmatpush2.bf16.msra.mxu0 %v266
  %367 = vmatprep.subr.bf16.mxu0 0
  %368 = vmatpush2.bf16.msra.mxu0 %v265
  %369 = vmatprep.subr.bf16.mxu0 0
  %370 = vmatpush2.bf16.msra.mxu0 %v264
  %371 = vmatprep.subr.bf16.mxu0 0
  %372 = vmatpush2.bf16.msra.mxu0 %v263
  %373 = vmatprep.subr.bf16.mxu0 0
  %374 = vmatpush2.bf16.msra.mxu0 %v262
  %375 = vmatprep.mubr.bf16.mxu0 %v105
  %376 = vmatmul.mubr.bf16.gmra.mxu0 %v104
  %v377 = vpop.f32.mrf.mxu0
  %v378 = vadd.f32 %v337, %v377
  %v379 = vpop.f32.mrf.mxu0
  %v380 = vpop.f32.mrf.mxu0
  %v381 = vadd.f32 %v340, %v380
  %v382 = vpop.f32.mrf.mxu0
  %383 = vdwg.mxu0
  %v384 = vmax.f32 %v378, 0.0
  %v385 = vmax.f32 %v381, 0.0
  %386 = vst [vmem:[%s3] sm:$0xff] %v384
  %387 = vst [vmem:[%s3 + $0x8] sm:$0xff] %v385
  // Predicated region
  $region14: #{_crnn_forward.24} parent=0 // pred_check
    _
  $region15: #{_crnn_forward.24} parent=0 // pred_check_branch
    %389 = sbr.rel (0) target = $region17
  $region16: #{_crnn_forward.24} parent=0 // pred_region
    _
  $region17: #{_crnn_forward.24} parent=0 // pred_fallthru
    _
  // Predicated region
  $region18: #{_crnn_forward.24} parent=0 // pred_check
    _
  $region19: #{_crnn_forward.24} parent=0 // pred_check_branch
    %391 = sbr.rel (0) target = $region21
  $region20: #{_crnn_forward.24} parent=0 // pred_region
    _
  $region21: #{_crnn_forward.24} parent=0 // pred_fallthru
    _

// kernel: _crnn_forward.25
$region0: #{_crnn_forward.25}
  #allocation0 [shape = 'u32[]', space=smem, size = 0x4, offset = 0x4, fixed_abs, tag = 'smem constant byte address 0x4 - core index']
  #allocation1 [shape = 'u32[144,128]{1,0:T(1,128)}', space=vmem, size = 0x12000, scoped, tag = 'internal scratch']
  %s0 = inlined_call_operand.vmem [shape: bf16[2048,128], index: 0, kind: input, shape index: {}]
  %s1 = inlined_call_operand.vmem [shape: bf16[128,128], index: 1, kind: input, shape index: {}]
  %s2 = inlined_call_operand.vmem [shape: f32[1,128], index: 2, kind: input, shape index: {}]
  %s3 = inlined_call_operand.vmem [shape: f32[2048,128], index: 3, kind: output, shape index: {}]
  %s4 = sld [smem:[#allocation0]]
  $region45: #{_crnn_forward.25} parent=0
    _
  %s6 = ssub.s32 1, %s4
  %s7 = scalar_select 0, %s6, %s4
  loop: start=0, step=1, limit=4
  $region2: #{_crnn_forward.25} parent=0 // loop_pre_header
    _
  $region3: #{_crnn_forward.25} parent=0 // loop_header
    %s9 = sphi 0, %s13
    %p10 = scmp.ge.s32.totalorder %s9, 4
    %s16 = sphi 0, %s28
    %s17 = sphi 0, %s24
    %s18 = sphi 0, %s16
    %s19 = sphi 0, %s17
    %s20 = sphi 0, %s18
    %s21 = sphi 0, %s19
    %s31 = sphi 0, %s33
    %s34 = sphi 0, %s31
    %s35 = sphi 0, %s34
    %s51 = sphi 0, %s35
    %s57 = sphi 0, %s59
    %s60 = sphi 0, %s57
    %s61 = sphi 0, %s60
    %s77 = sphi 0, %s61
    %s83 = sphi 0, %s85
    %s86 = sphi 0, %s83
    %s87 = sphi 0, %s86
    %s103 = sphi 0, %s87
    %s111 = sphi 0, %s113
    %s114 = sphi 0, %s111
    %s115 = sphi 0, %s114
    %s131 = sphi 0, %s115
  $region4: #{_crnn_forward.25} parent=0 // loop_header_branch
    %12 = sbr.rel (%p10) target = $region8
  $region5: #{_crnn_forward.25} parent=0 // loop_body
    %s14 = ssub.s32 %s9, 1
    %s15 = ssub.s32 %s9, 2
    %s22 = sadd.s32 1, %s17
    %p23 = scmp.ge.s32.totalorder %s22, 1
    %s24 = scalar_select %p23, 0, %s22
    %s25 = sadd.s32 1, %s16
    %s26 = scalar_select %p23, %s25, %s16
    %p27 = scmp.ge.s32.totalorder %s26, 2
    %s28 = scalar_select %p27, 0, %s26
    %s29 = ssub.s32 %s16, %s28
    %p30 = scmp.eq.s32.totalorder %s29, 0
    %s32 = sadd.s32 %s31, 1
    %s33 = scalar_select %p30, %s31, %s32
    %p36 = pneg %p30
    %p37 = scmp.eq.s32.totalorder %s9, 1
    %p38 = por %p36, %p37
    %p39 = scmp.ne.s32.totalorder %s31, %s34
    %p40 = scmp.eq.s32.totalorder %s9, 0
    %p41 = por %p39, %p40
    %p42 = scmp.ne.s32.totalorder %s31, %s34
    %p43 = scmp.eq.s32.totalorder %s14, 1
    %p44 = por %p42, %p43
    %p45 = scmp.ne.s32.totalorder %s34, %s35
    %p46 = scmp.eq.s32.totalorder %s14, 0
    %p47 = por %p45, %p46
    %p48 = scmp.ne.s32.totalorder %s34, %s35
    %p49 = scmp.eq.s32.totalorder %s15, 1
    %p50 = por %p48, %p49
    %p52 = scmp.ne.s32.totalorder %s35, %s51
    %p53 = scmp.eq.s32.totalorder %s15, 0
    %p54 = por %p52, %p53
    %s55 = ssub.s32 %s17, %s24
    %p56 = scmp.eq.s32.totalorder %s55, 0
    %s58 = sadd.s32 %s57, 1
    %s59 = scalar_select %p56, %s57, %s58
    %p62 = pneg %p56
    %p63 = scmp.eq.s32.totalorder %s9, 1
    %p64 = por %p62, %p63
    %p65 = scmp.ne.s32.totalorder %s57, %s60
    %p66 = scmp.eq.s32.totalorder %s9, 0
    %p67 = por %p65, %p66
    %p68 = scmp.ne.s32.totalorder %s57, %s60
    %p69 = scmp.eq.s32.totalorder %s14, 1
    %p70 = por %p68, %p69
    %p71 = scmp.ne.s32.totalorder %s60, %s61
    %p72 = scmp.eq.s32.totalorder %s14, 0
    %p73 = por %p71, %p72
    %p74 = scmp.ne.s32.totalorder %s60, %s61
    %p75 = scmp.eq.s32.totalorder %s15, 1
    %p76 = por %p74, %p75
    %p78 = scmp.ne.s32.totalorder %s61, %s77
    %p79 = scmp.eq.s32.totalorder %s15, 0
    %p80 = por %p78, %p79
    %s81 = ssub.s32 %s17, %s24
    %p82 = scmp.eq.s32.totalorder %s81, 0
    %s84 = sadd.s32 %s83, 1
    %s85 = scalar_select %p82, %s83, %s84
    %p88 = pneg %p82
    %p89 = scmp.eq.s32.totalorder %s9, 1
    %p90 = por %p88, %p89
    %p91 = scmp.ne.s32.totalorder %s83, %s86
    %p92 = scmp.eq.s32.totalorder %s9, 0
    %p93 = por %p91, %p92
    %p94 = scmp.ne.s32.totalorder %s83, %s86
    %p95 = scmp.eq.s32.totalorder %s14, 1
    %p96 = por %p94, %p95
    %p97 = scmp.ne.s32.totalorder %s86, %s87
    %p98 = scmp.eq.s32.totalorder %s14, 0
    %p99 = por %p97, %p98
    %p100 = scmp.ne.s32.totalorder %s86, %s87
    %p101 = scmp.eq.s32.totalorder %s15, 1
    %p102 = por %p100, %p101
    %p104 = scmp.ne.s32.totalorder %s87, %s103
    %p105 = scmp.eq.s32.totalorder %s15, 0
    %p106 = por %p104, %p105
    %s107 = ssub.s32 %s16, %s28
    %s108 = ssub.s32 %s17, %s24
    %s109 = sor.u32 %s107, %s108
    %p110 = scmp.eq.s32.totalorder %s109, 0
    %s112 = sadd.s32 %s111, 1
    %s113 = scalar_select %p110, %s111, %s112
    %p116 = pneg %p110
    %p117 = scmp.eq.s32.totalorder %s9, 1
    %p118 = por %p116, %p117
    %p119 = scmp.ne.s32.totalorder %s111, %s114
    %p120 = scmp.eq.s32.totalorder %s9, 0
    %p121 = por %p119, %p120
    %p122 = scmp.ne.s32.totalorder %s111, %s114
    %p123 = scmp.eq.s32.totalorder %s14, 1
    %p124 = por %p122, %p123
    %p125 = scmp.ne.s32.totalorder %s114, %s115
    %p126 = scmp.eq.s32.totalorder %s14, 0
    %p127 = por %p125, %p126
    %p128 = scmp.ne.s32.totalorder %s114, %s115
    %p129 = scmp.eq.s32.totalorder %s15, 1
    %p130 = por %p128, %p129
    %p132 = scmp.ne.s32.totalorder %s115, %s131
    %p133 = scmp.eq.s32.totalorder %s15, 0
    %p134 = por %p132, %p133
    %p135 = scmp.le.s32.totalorder 1, %s9
    %p136 = scmp.lt.s32.totalorder %s9, 3
    %p137 = pnand %p135, %p136
    %p138 = pneg %p137
    // Predicated region
    $region9: #{_crnn_forward.25} parent=5 // pred_check
      _
    $region10: #{_crnn_forward.25} parent=5 // pred_check_branch
      %140 = sbr.rel (%p137) target = $region12
    $region11: #{_crnn_forward.25} parent=5 // pred_region
      %s141 = ssub.s32 %s9, 1
      // Predicated region
      $region13: #{_crnn_forward.25} parent=11 // pred_check
        %p142 = pneg %p73
      $region14: #{_crnn_forward.25} parent=11 // pred_check_branch
        %144 = sbr.rel (%p142) target = $region16
      $region15: #{_crnn_forward.25} parent=11 // pred_region
        %p145 = scmp.lt.s32.totalorder %s19, 0
        %s146 = scalar_select %p145, %s19, 0
        %s147 = smul.addr %s146, 4
        %s148 = scalar_lea.vmem %s1, %s147
      $region16: #{_crnn_forward.25} parent=11 // pred_fallthru
        _
      // Predicated region
      $region17: #{_crnn_forward.25} parent=11 // pred_check
        %p149 = pneg %p99
      $region18: #{_crnn_forward.25} parent=11 // pred_check_branch
        %151 = sbr.rel (%p149) target = $region20
      $region19: #{_crnn_forward.25} parent=11 // pred_region
        %p152 = scmp.lt.s32.totalorder %s19, 0
        %s153 = scalar_select %p152, %s19, 0
        %s154 = scalar_lea.vmem %s2, %s153
      $region20: #{_crnn_forward.25} parent=11 // pred_fallthru
        _
    $region12: #{_crnn_forward.25} parent=5 // pred_fallthru
      _
    %p155 = scmp.lt.s32.totalorder %s9, 2
    // Predicated region
    $region21: #{_crnn_forward.25} parent=5 // pred_check
      %p156 = pneg %p155
    $region22: #{_crnn_forward.25} parent=5 // pred_check_branch
      %158 = sbr.rel (%p156) target = $region24
    $region23: #{_crnn_forward.25} parent=5 // pred_region
      // Predicated region
      $region25: #{_crnn_forward.25} parent=23 // pred_check
        %p159 = pneg %p41
      $region26: #{_crnn_forward.25} parent=23 // pred_check_branch
        %161 = sbr.rel (%p159) target = $region28
      $region27: #{_crnn_forward.25} parent=23 // pred_region
        %s162 = smul.u32 128, %s16
        %p163 = scmp.lt.s32.totalorder %s162, 255
        %s164 = scalar_select %p163, %s162, 255
        %s165 = smul.addr %s164, 4
        %s166 = scalar_lea.vmem %s0, %s165
        %s167 = smul.u32 128, %s16
      $region28: #{_crnn_forward.25} parent=23 // pred_fallthru
        _
    $region24: #{_crnn_forward.25} parent=5 // pred_fallthru
      _
    %p168 = scmp.le.s32.totalorder 1, %s9
    %p169 = scmp.lt.s32.totalorder %s9, 3
    %p170 = pnand %p168, %p169
    %p171 = pneg %p170
    // Predicated region
    $region29: #{_crnn_forward.25} parent=5 // pred_check
      _
    $region30: #{_crnn_forward.25} parent=5 // pred_check_branch
      %173 = sbr.rel (%p170) target = $region32
    $region31: #{_crnn_forward.25} parent=5 // pred_region
      %s174 = ssub.s32 %s9, 1
      %s175 = smul.u32 128, %s18
      %p176 = scmp.lt.s32.totalorder %s175, 255
      %s177 = scalar_select %p176, %s175, 255
      %s178 = smul.addr %s177, 4
      %s179 = scalar_lea.vmem %s0, %s178
      %p180 = pneg %p47
      %p181 = pneg %p44
      %p182 = scmp.lt.s32.totalorder %s19, 0
      %s183 = scalar_select %p182, %s19, 0
      %s184 = smul.addr %s183, 4
      %s185 = scalar_lea.vmem %s1, %s184
      %p186 = pneg %p73
      %p187 = pneg %p70
      %p188 = scmp.lt.s32.totalorder %s19, 0
      %s189 = scalar_select %p188, %s19, 0
      %s190 = scalar_lea.vmem %s2, %s189
      %p191 = pneg %p99
      %p192 = pneg %p96
      %p193 = pneg %p127
      %p194 = pneg %p124
      %s195 = smul.u32 128, %s18
      %p196 = scmp.lt.s32.totalorder %s195, 255
      %s197 = scalar_select %p196, %s195, 255
      %p198 = scmp.lt.s32.totalorder %s19, 0
      %s199 = scalar_select %p198, %s19, 0
      %s200 = sadd.s32 %s199, %s197
      %s201 = smul.addr %s200, 8
      %s202 = scalar_lea.vmem %s3, %s201
      %s203 = smul.u32 128, %s18
      %p204 = scmp.lt.s32.totalorder %s203, 255
      %s205 = scalar_select %p204, %s203, 255
      %s206 = smul.addr %s205, 4
      %s207 = scalar_lea.vmem %s0, %s206
      %s208 = smul.u32 128, %s18
      %p209 = scmp.lt.s32.totalorder %s19, 0
      %s210 = scalar_select %p209, %s19, 0
      %s211 = smul.addr %s210, 4
      %s212 = scalar_lea.vmem %s1, %s211
      %p213 = scmp.lt.s32.totalorder %s19, 0
      %s214 = scalar_select %p213, %s19, 0
      %s215 = scalar_lea.vmem %s2, %s214
      %s216 = smul.u32 128, %s18
      %p217 = scmp.lt.s32.totalorder %s216, 255
      %s218 = scalar_select %p217, %s216, 255
      %p219 = scmp.lt.s32.totalorder %s19, 0
      %s220 = scalar_select %p219, %s19, 0
      %s221 = sadd.s32 %s220, %s218
      %s222 = smul.addr %s221, 8
      %s223 = scalar_lea.vmem %s3, %s222
      %s224 = smul.u32 128, %s18
      %v226 = vld [vmem:[%s207] sm:$0xf]
      %v227 = vld [vmem:[%s207 + $0x4] sm:$0xf]
      %v228 = vld [vmem:[%s207 + $0x8] sm:$0xf]
      %v229 = vld [vmem:[%s207 + $0xc] sm:$0xf]
      %v230 = vld [vmem:[%s207 + $0x10] sm:$0xf]
      %v231 = vld [vmem:[%s207 + $0x14] sm:$0xf]
      %v232 = vld [vmem:[%s207 + $0x18] sm:$0xf]
      %v233 = vld [vmem:[%s207 + $0x1c] sm:$0xf]
      %v234 = vld [vmem:[%s207 + $0x20] sm:$0xf]
      %v235 = vld [vmem:[%s207 + $0x24] sm:$0xf]
      %v236 = vld [vmem:[%s207 + $0x28] sm:$0xf]
      %v237 = vld [vmem:[%s207 + $0x2c] sm:$0xf]
      %v238 = vld [vmem:[%s207 + $0x30] sm:$0xf]
      %v239 = vld [vmem:[%s207 + $0x34] sm:$0xf]
      %v240 = vld [vmem:[%s207 + $0x38] sm:$0xf]
      %v241 = vld [vmem:[%s207 + $0x3c] sm:$0xf]
      %v242 = vld [vmem:[%s207 + $0x40] sm:$0xf]
      %v243 = vld [vmem:[%s207 + $0x44] sm:$0xf]
      %v244 = vld [vmem:[%s207 + $0x48] sm:$0xf]
      %v245 = vld [vmem:[%s207 + $0x4c] sm:$0xf]
      %v246 = vld [vmem:[%s207 + $0x50] sm:$0xf]
      %v247 = vld [vmem:[%s207 + $0x54] sm:$0xf]
      %v248 = vld [vmem:[%s207 + $0x58] sm:$0xf]
      %v249 = vld [vmem:[%s207 + $0x5c] sm:$0xf]
      %v250 = vld [vmem:[%s207 + $0x60] sm:$0xf]
      %v251 = vld [vmem:[%s207 + $0x64] sm:$0xf]
      %v252 = vld [vmem:[%s207 + $0x68] sm:$0xf]
      %v253 = vld [vmem:[%s207 + $0x6c] sm:$0xf]
      %v254 = vld [vmem:[%s207 + $0x70] sm:$0xf]
      %v255 = vld [vmem:[%s207 + $0x74] sm:$0xf]
      %v256 = vld [vmem:[%s207 + $0x78] sm:$0xf]
      %v257 = vld [vmem:[%s207 + $0x7c] sm:$0xf]
      %v258 = vld [vmem:[%s207 + $0x80] sm:$0xf]
      %v259 = vld [vmem:[%s207 + $0x84] sm:$0xf]
      %v260 = vld [vmem:[%s207 + $0x88] sm:$0xf]
      %v261 = vld [vmem:[%s207 + $0x8c] sm:$0xf]
      %v262 = vld [vmem:[%s207 + $0x90] sm:$0xf]
      %v263 = vld [vmem:[%s207 + $0x94] sm:$0xf]
      %v264 = vld [vmem:[%s207 + $0x98] sm:$0xf]
      %v265 = vld [vmem:[%s207 + $0x9c] sm:$0xf]
      %v266 = vld [vmem:[%s207 + $0xa0] sm:$0xf]
      %v267 = vld [vmem:[%s207 + $0xa4] sm:$0xf]
      %v268 = vld [vmem:[%s207 + $0xa8] sm:$0xf]
      %v269 = vld [vmem:[%s207 + $0xac] sm:$0xf]
      %v270 = vld [vmem:[%s207 + $0xb0] sm:$0xf]
      %v271 = vld [vmem:[%s207 + $0xb4] sm:$0xf]
      %v272 = vld [vmem:[%s207 + $0xb8] sm:$0xf]
      %v273 = vld [vmem:[%s207 + $0xbc] sm:$0xf]
      %v274 = vld [vmem:[%s207 + $0xc0] sm:$0xf]
      %v275 = vld [vmem:[%s207 + $0xc4] sm:$0xf]
      %v276 = vld [vmem:[%s207 + $0xc8] sm:$0xf]
      %v277 = vld [vmem:[%s207 + $0xcc] sm:$0xf]
      %v278 = vld [vmem:[%s207 + $0xd0] sm:$0xf]
      %v279 = vld [vmem:[%s207 + $0xd4] sm:$0xf]
      %v280 = vld [vmem:[%s207 + $0xd8] sm:$0xf]
      %v281 = vld [vmem:[%s207 + $0xdc] sm:$0xf]
      %v282 = vld [vmem:[%s207 + $0xe0] sm:$0xf]
      %v283 = vld [vmem:[%s207 + $0xe4] sm:$0xf]
      %v284 = vld [vmem:[%s207 + $0xe8] sm:$0xf]
      %v285 = vld [vmem:[%s207 + $0xec] sm:$0xf]
      %v286 = vld [vmem:[%s207 + $0xf0] sm:$0xf]
      %v287 = vld [vmem:[%s207 + $0xf4] sm:$0xf]
      %v288 = vld [vmem:[%s207 + $0xf8] sm:$0xf]
      %v289 = vld [vmem:[%s207 + $0xfc] sm:$0xf]
      %v290 = vld [vmem:[%s207 + $0x100] sm:$0xf]
      %v291 = vld [vmem:[%s207 + $0x104] sm:$0xf]
      %v292 = vld [vmem:[%s207 + $0x108] sm:$0xf]
      %v293 = vld [vmem:[%s207 + $0x10c] sm:$0xf]
      %v294 = vld [vmem:[%s207 + $0x110] sm:$0xf]
      %v295 = vld [vmem:[%s207 + $0x114] sm:$0xf]
      %v296 = vld [vmem:[%s207 + $0x118] sm:$0xf]
      %v297 = vld [vmem:[%s207 + $0x11c] sm:$0xf]
      %v298 = vld [vmem:[%s207 + $0x120] sm:$0xf]
      %v299 = vld [vmem:[%s207 + $0x124] sm:$0xf]
      %v300 = vld [vmem:[%s207 + $0x128] sm:$0xf]
      %v301 = vld [vmem:[%s207 + $0x12c] sm:$0xf]
      %v302 = vld [vmem:[%s207 + $0x130] sm:$0xf]
      %v303 = vld [vmem:[%s207 + $0x134] sm:$0xf]
      %v304 = vld [vmem:[%s207 + $0x138] sm:$0xf]
      %v305 = vld [vmem:[%s207 + $0x13c] sm:$0xf]
      %v306 = vld [vmem:[%s207 + $0x140] sm:$0xf]
      %v307 = vld [vmem:[%s207 + $0x144] sm:$0xf]
      %v308 = vld [vmem:[%s207 + $0x148] sm:$0xf]
      %v309 = vld [vmem:[%s207 + $0x14c] sm:$0xf]
      %v310 = vld [vmem:[%s207 + $0x150] sm:$0xf]
      %v311 = vld [vmem:[%s207 + $0x154] sm:$0xf]
      %v312 = vld [vmem:[%s207 + $0x158] sm:$0xf]
      %v313 = vld [vmem:[%s207 + $0x15c] sm:$0xf]
      %v314 = vld [vmem:[%s207 + $0x160] sm:$0xf]
      %v315 = vld [vmem:[%s207 + $0x164] sm:$0xf]
      %v316 = vld [vmem:[%s207 + $0x168] sm:$0xf]
      %v317 = vld [vmem:[%s207 + $0x16c] sm:$0xf]
      %v318 = vld [vmem:[%s207 + $0x170] sm:$0xf]
      %v319 = vld [vmem:[%s207 + $0x174] sm:$0xf]
      %v320 = vld [vmem:[%s207 + $0x178] sm:$0xf]
      %v321 = vld [vmem:[%s207 + $0x17c] sm:$0xf]
      %v322 = vld [vmem:[%s207 + $0x180] sm:$0xf]
      %v323 = vld [vmem:[%s207 + $0x184] sm:$0xf]
      %v324 = vld [vmem:[%s207 + $0x188] sm:$0xf]
      %v325 = vld [vmem:[%s207 + $0x18c] sm:$0xf]
      %v326 = vld [vmem:[%s207 + $0x190] sm:$0xf]
      %v327 = vld [vmem:[%s207 + $0x194] sm:$0xf]
      %v328 = vld [vmem:[%s207 + $0x198] sm:$0xf]
      %v329 = vld [vmem:[%s207 + $0x19c] sm:$0xf]
      %v330 = vld [vmem:[%s207 + $0x1a0] sm:$0xf]
      %v331 = vld [vmem:[%s207 + $0x1a4] sm:$0xf]
      %v332 = vld [vmem:[%s207 + $0x1a8] sm:$0xf]
      %v333 = vld [vmem:[%s207 + $0x1ac] sm:$0xf]
      %v334 = vld [vmem:[%s207 + $0x1b0] sm:$0xf]
      %v335 = vld [vmem:[%s207 + $0x1b4] sm:$0xf]
      %v336 = vld [vmem:[%s207 + $0x1b8] sm:$0xf]
      %v337 = vld [vmem:[%s207 + $0x1bc] sm:$0xf]
      %v338 = vld [vmem:[%s207 + $0x1c0] sm:$0xf]
      %v339 = vld [vmem:[%s207 + $0x1c4] sm:$0xf]
      %v340 = vld [vmem:[%s207 + $0x1c8] sm:$0xf]
      %v341 = vld [vmem:[%s207 + $0x1cc] sm:$0xf]
      %v342 = vld [vmem:[%s207 + $0x1d0] sm:$0xf]
      %v343 = vld [vmem:[%s207 + $0x1d4] sm:$0xf]
      %v344 = vld [vmem:[%s207 + $0x1d8] sm:$0xf]
      %v345 = vld [vmem:[%s207 + $0x1dc] sm:$0xf]
      %v346 = vld [vmem:[%s207 + $0x1e0] sm:$0xf]
      %v347 = vld [vmem:[%s207 + $0x1e4] sm:$0xf]
      %v348 = vld [vmem:[%s207 + $0x1e8] sm:$0xf]
      %v349 = vld [vmem:[%s207 + $0x1ec] sm:$0xf]
      %v350 = vld [vmem:[%s207 + $0x1f0] sm:$0xf]
      %v351 = vld [vmem:[%s207 + $0x1f4] sm:$0xf]
      %v352 = vld [vmem:[%s207 + $0x1f8] sm:$0xf]
      %v353 = vld [vmem:[%s207 + $0x1fc] sm:$0xf]
      %v354 = vld [vmem:[%s212] sm:$0xf]
      %v355 = vld [vmem:[%s212 + $0x4] sm:$0xf]
      %v356 = vld [vmem:[%s212 + $0x8] sm:$0xf]
      %v357 = vld [vmem:[%s212 + $0xc] sm:$0xf]
      %v358 = vld [vmem:[%s212 + $0x10] sm:$0xf]
      %v359 = vld [vmem:[%s212 + $0x14] sm:$0xf]
      %v360 = vld [vmem:[%s212 + $0x18] sm:$0xf]
      %v361 = vld [vmem:[%s212 + $0x1c] sm:$0xf]
      %v362 = vld [vmem:[%s212 + $0x20] sm:$0xf]
      %v363 = vld [vmem:[%s212 + $0x24] sm:$0xf]
      %v364 = vld [vmem:[%s212 + $0x28] sm:$0xf]
      %v365 = vld [vmem:[%s212 + $0x2c] sm:$0xf]
      %v366 = vld [vmem:[%s212 + $0x30] sm:$0xf]
      %v367 = vld [vmem:[%s212 + $0x34] sm:$0xf]
      %v368 = vld [vmem:[%s212 + $0x38] sm:$0xf]
      %v369 = vld [vmem:[%s212 + $0x3c] sm:$0xf]
      %v370 = vld [vmem:[%s215] sm:$0x1]
      %v372 = vlaneseq
      %v373 = vshrl.u32 %v372, 7
      %v374 = vsub.s32 0, %v373
      %v375 = vrot.slane %v370, %v374
      %v505 = vunpack.c.l.b16 %v226
      %v506 = vunpack.c.l.b16 %v227
      %v507 = vunpack.c.l.b16 %v228
      %v508 = vunpack.c.l.b16 %v229
      %v509 = vunpack.c.l.b16 %v230
      %v510 = vunpack.c.l.b16 %v231
      %v511 = vunpack.c.l.b16 %v232
      %v512 = vunpack.c.l.b16 %v233
      %v513 = vunpack.c.l.b16 %v234
      %v514 = vunpack.c.l.b16 %v235
      %v515 = vunpack.c.l.b16 %v236
      %v516 = vunpack.c.l.b16 %v237
      %v517 = vunpack.c.l.b16 %v238
      %v518 = vunpack.c.l.b16 %v239
      %v519 = vunpack.c.l.b16 %v240
      %v520 = vunpack.c.l.b16 %v241
      %v521 = vunpack.c.l.b16 %v242
      %v522 = vunpack.c.l.b16 %v243
      %v523 = vunpack.c.l.b16 %v244
      %v524 = vunpack.c.l.b16 %v245
      %v525 = vunpack.c.l.b16 %v246
      %v526 = vunpack.c.l.b16 %v247
      %v527 = vunpack.c.l.b16 %v248
      %v528 = vunpack.c.l.b16 %v249
      %v529 = vunpack.c.l.b16 %v250
      %v530 = vunpack.c.l.b16 %v251
      %v531 = vunpack.c.l.b16 %v252
      %v532 = vunpack.c.l.b16 %v253
      %v533 = vunpack.c.l.b16 %v254
      %v534 = vunpack.c.l.b16 %v255
      %v535 = vunpack.c.l.b16 %v256
      %v536 = vunpack.c.l.b16 %v257
      %v537 = vunpack.c.l.b16 %v258
      %v538 = vunpack.c.l.b16 %v259
      %v539 = vunpack.c.l.b16 %v260
      %v540 = vunpack.c.l.b16 %v261
      %v541 = vunpack.c.l.b16 %v262
      %v542 = vunpack.c.l.b16 %v263
      %v543 = vunpack.c.l.b16 %v264
      %v544 = vunpack.c.l.b16 %v265
      %v545 = vunpack.c.l.b16 %v266
      %v546 = vunpack.c.l.b16 %v267
      %v547 = vunpack.c.l.b16 %v268
      %v548 = vunpack.c.l.b16 %v269
      %v549 = vunpack.c.l.b16 %v270
      %v550 = vunpack.c.l.b16 %v271
      %v551 = vunpack.c.l.b16 %v272
      %v552 = vunpack.c.l.b16 %v273
      %v553 = vunpack.c.l.b16 %v274
      %v554 = vunpack.c.l.b16 %v275
      %v555 = vunpack.c.l.b16 %v276
      %v556 = vunpack.c.l.b16 %v277
      %v557 = vunpack.c.l.b16 %v278
      %v558 = vunpack.c.l.b16 %v279
      %v559 = vunpack.c.l.b16 %v280
      %v560 = vunpack.c.l.b16 %v281
      %v561 = vunpack.c.l.b16 %v282
      %v562 = vunpack.c.l.b16 %v283
      %v563 = vunpack.c.l.b16 %v284
      %v564 = vunpack.c.l.b16 %v285
      %v565 = vunpack.c.l.b16 %v286
      %v566 = vunpack.c.l.b16 %v287
      %v567 = vunpack.c.l.b16 %v288
      %v568 = vunpack.c.l.b16 %v289
      %v569 = vunpack.c.l.b16 %v290
      %v570 = vunpack.c.l.b16 %v291
      %v571 = vunpack.c.l.b16 %v292
      %v572 = vunpack.c.l.b16 %v293
      %v573 = vunpack.c.l.b16 %v294
      %v574 = vunpack.c.l.b16 %v295
      %v575 = vunpack.c.l.b16 %v296
      %v576 = vunpack.c.l.b16 %v297
      %v577 = vunpack.c.l.b16 %v298
      %v578 = vunpack.c.l.b16 %v299
      %v579 = vunpack.c.l.b16 %v300
      %v580 = vunpack.c.l.b16 %v301
      %v581 = vunpack.c.l.b16 %v302
      %v582 = vunpack.c.l.b16 %v303
      %v583 = vunpack.c.l.b16 %v304
      %v584 = vunpack.c.l.b16 %v305
      %v585 = vunpack.c.l.b16 %v306
      %v586 = vunpack.c.l.b16 %v307
      %v587 = vunpack.c.l.b16 %v308
      %v588 = vunpack.c.l.b16 %v309
      %v589 = vunpack.c.l.b16 %v310
      %v590 = vunpack.c.l.b16 %v311
      %v591 = vunpack.c.l.b16 %v312
      %v592 = vunpack.c.l.b16 %v313
      %v593 = vunpack.c.l.b16 %v314
      %v594 = vunpack.c.l.b16 %v315
      %v595 = vunpack.c.l.b16 %v316
      %v596 = vunpack.c.l.b16 %v317
      %v597 = vunpack.c.l.b16 %v318
      %v598 = vunpack.c.l.b16 %v319
      %v599 = vunpack.c.l.b16 %v320
      %v600 = vunpack.c.l.b16 %v321
      %v601 = vunpack.c.l.b16 %v322
      %v602 = vunpack.c.l.b16 %v323
      %v603 = vunpack.c.l.b16 %v324
      %v604 = vunpack.c.l.b16 %v325
      %v605 = vunpack.c.l.b16 %v326
      %v606 = vunpack.c.l.b16 %v327
      %v607 = vunpack.c.l.b16 %v328
      %v608 = vunpack.c.l.b16 %v329
      %v609 = vunpack.c.l.b16 %v330
      %v610 = vunpack.c.l.b16 %v331
      %v611 = vunpack.c.l.b16 %v332
      %v612 = vunpack.c.l.b16 %v333
      %v613 = vunpack.c.l.b16 %v334
      %v614 = vunpack.c.l.b16 %v335
      %v615 = vunpack.c.l.b16 %v336
      %v616 = vunpack.c.l.b16 %v337
      %v617 = vunpack.c.l.b16 %v338
      %v618 = vunpack.c.l.b16 %v339
      %v619 = vunpack.c.l.b16 %v340
      %v620 = vunpack.c.l.b16 %v341
      %v621 = vunpack.c.l.b16 %v342
      %v622 = vunpack.c.l.b16 %v343
      %v623 = vunpack.c.l.b16 %v344
      %v624 = vunpack.c.l.b16 %v345
      %v625 = vunpack.c.l.b16 %v346
      %v626 = vunpack.c.l.b16 %v347
      %v627 = vunpack.c.l.b16 %v348
      %v628 = vunpack.c.l.b16 %v349
      %v629 = vunpack.c.l.b16 %v350
      %v630 = vunpack.c.l.b16 %v351
      %v631 = vunpack.c.l.b16 %v352
      %v632 = vunpack.c.l.b16 %v353
      %v633 = vpack.c.b16 %v506, %v505
      %v634 = vpack.c.b16 %v508, %v507
      %v635 = vpack.c.b16 %v510, %v509
      %v636 = vpack.c.b16 %v512, %v511
      %v637 = vpack.c.b16 %v514, %v513
      %v638 = vpack.c.b16 %v516, %v515
      %v639 = vpack.c.b16 %v518, %v517
      %v640 = vpack.c.b16 %v520, %v519
      %v641 = vpack.c.b16 %v522, %v521
      %v642 = vpack.c.b16 %v524, %v523
      %v643 = vpack.c.b16 %v526, %v525
      %v644 = vpack.c.b16 %v528, %v527
      %v645 = vpack.c.b16 %v530, %v529
      %v646 = vpack.c.b16 %v532, %v531
      %v647 = vpack.c.b16 %v534, %v533
      %v648 = vpack.c.b16 %v536, %v535
      %v649 = vpack.c.b16 %v538, %v537
      %v650 = vpack.c.b16 %v540, %v539
      %v651 = vpack.c.b16 %v542, %v541
      %v652 = vpack.c.b16 %v544, %v543
      %v653 = vpack.c.b16 %v546, %v545
      %v654 = vpack.c.b16 %v548, %v547
      %v655 = vpack.c.b16 %v550, %v549
      %v656 = vpack.c.b16 %v552, %v551
      %v657 = vpack.c.b16 %v554, %v553
      %v658 = vpack.c.b16 %v556, %v555
      %v659 = vpack.c.b16 %v558, %v557
      %v660 = vpack.c.b16 %v560, %v559
      %v661 = vpack.c.b16 %v562, %v561
      %v662 = vpack.c.b16 %v564, %v563
      %v663 = vpack.c.b16 %v566, %v565
      %v664 = vpack.c.b16 %v568, %v567
      %v665 = vpack.c.b16 %v570, %v569
      %v666 = vpack.c.b16 %v572, %v571
      %v667 = vpack.c.b16 %v574, %v573
      %v668 = vpack.c.b16 %v576, %v575
      %v669 = vpack.c.b16 %v578, %v577
      %v670 = vpack.c.b16 %v580, %v579
      %v671 = vpack.c.b16 %v582, %v581
      %v672 = vpack.c.b16 %v584, %v583
      %v673 = vpack.c.b16 %v586, %v585
      %v674 = vpack.c.b16 %v588, %v587
      %v675 = vpack.c.b16 %v590, %v589
      %v676 = vpack.c.b16 %v592, %v591
      %v677 = vpack.c.b16 %v594, %v593
      %v678 = vpack.c.b16 %v596, %v595
      %v679 = vpack.c.b16 %v598, %v597
      %v680 = vpack.c.b16 %v600, %v599
      %v681 = vpack.c.b16 %v602, %v601
      %v682 = vpack.c.b16 %v604, %v603
      %v683 = vpack.c.b16 %v606, %v605
      %v684 = vpack.c.b16 %v608, %v607
      %v685 = vpack.c.b16 %v610, %v609
      %v686 = vpack.c.b16 %v612, %v611
      %v687 = vpack.c.b16 %v614, %v613
      %v688 = vpack.c.b16 %v616, %v615
      %v689 = vpack.c.b16 %v618, %v617
      %v690 = vpack.c.b16 %v620, %v619
      %v691 = vpack.c.b16 %v622, %v621
      %v692 = vpack.c.b16 %v624, %v623
      %v693 = vpack.c.b16 %v626, %v625
      %v694 = vpack.c.b16 %v628, %v627
      %v695 = vpack.c.b16 %v630, %v629
      %v696 = vpack.c.b16 %v632, %v631
      %v777 = vunpack.c.l.b16 %v354
      %v778 = vunpack.c.l.b16 %v355
      %v779 = vunpack.c.l.b16 %v356
      %v780 = vunpack.c.l.b16 %v357
      %v781 = vunpack.c.l.b16 %v358
      %v782 = vunpack.c.l.b16 %v359
      %v783 = vunpack.c.l.b16 %v360
      %v784 = vunpack.c.l.b16 %v361
      %v785 = vunpack.c.l.b16 %v362
      %v786 = vunpack.c.l.b16 %v363
      %v787 = vunpack.c.l.b16 %v364
      %v788 = vunpack.c.l.b16 %v365
      %v789 = vunpack.c.l.b16 %v366
      %v790 = vunpack.c.l.b16 %v367
      %v791 = vunpack.c.l.b16 %v368
      %v792 = vunpack.c.l.b16 %v369
      %v793 = vpack.c.b16 %v778, %v777
      %v794 = vpack.c.b16 %v780, %v779
      %v795 = vpack.c.b16 %v782, %v781
      %v796 = vpack.c.b16 %v784, %v783
      %v797 = vpack.c.b16 %v786, %v785
      %v798 = vpack.c.b16 %v788, %v787
      %v799 = vpack.c.b16 %v790, %v789
      %v800 = vpack.c.b16 %v792, %v791
      %809 = vmatprep.subr.bf16.mxu0 0
      %810 = vmatpush1.bf16.msra.mxu0 %v800
      %811 = vmatprep.subr.bf16.mxu0 0
      %812 = vmatpush1.bf16.msra.mxu0 %v799
      %813 = vmatprep.subr.bf16.mxu0 0
      %814 = vmatpush1.bf16.msra.mxu0 %v798
      %815 = vmatprep.subr.bf16.mxu0 0
      %816 = vmatpush1.bf16.msra.mxu0 %v797
      %817 = vmatprep.subr.bf16.mxu0 0
      %818 = vmatpush1.bf16.msra.mxu0 %v796
      %819 = vmatprep.subr.bf16.mxu0 0
      %820 = vmatpush1.bf16.msra.mxu0 %v795
      %821 = vmatprep.subr.bf16.mxu0 0
      %822 = vmatpush1.bf16.msra.mxu0 %v794
      %823 = vmatprep.subr.bf16.mxu0 0
      %824 = vmatpush1.bf16.msra.mxu0 %v793
      %825 = vmatprep.subr.bf16.mxu0 0
      %826 = vmatpush2.bf16.msra.mxu0 0
      %827 = vmatprep.subr.bf16.mxu0 0
      %828 = vmatpush2.bf16.msra.mxu0 0
      %829 = vmatprep.subr.bf16.mxu0 0
      %830 = vmatpush2.bf16.msra.mxu0 0
      %831 = vmatprep.subr.bf16.mxu0 0
      %832 = vmatpush2.bf16.msra.mxu0 0
      %833 = vmatprep.subr.bf16.mxu0 0
      %834 = vmatpush2.bf16.msra.mxu0 0
      %835 = vmatprep.subr.bf16.mxu0 0
      %836 = vmatpush2.bf16.msra.mxu0 0
      %837 = vmatprep.subr.bf16.mxu0 0
      %838 = vmatpush2.bf16.msra.mxu0 0
      %839 = vmatprep.subr.bf16.mxu0 0
      %840 = vmatpush2.bf16.msra.mxu0 0
      %841 = vmatprep.mubr.bf16.mxu0 0
      %842 = vmatmul.mubr.bf16.gmra.mxu0 %v633
      %v843 = vpop.f32.mrf.mxu0
      %v844 = vadd.f32 %v375, %v843
      %v845 = vpop.f32.mrf.mxu0
      %v846 = vpop.f32.mrf.mxu0
      %v847 = vadd.f32 %v375, %v846
      %v848 = vpop.f32.mrf.mxu0
      %849 = vmatprep.mubr.bf16.mxu0 0
      %850 = vmatmul.mubr.bf16.gmra.mxu0 %v634
      %v851 = vpop.f32.mrf.mxu0
      %v852 = vadd.f32 %v375, %v851
      %v853 = vpop.f32.mrf.mxu0
      %v854 = vpop.f32.mrf.mxu0
      %v855 = vadd.f32 %v375, %v854
      %v856 = vpop.f32.mrf.mxu0
      %857 = vmatprep.mubr.bf16.mxu0 0
      %858 = vmatmul.mubr.bf16.gmra.mxu0 %v635
      %v859 = vpop.f32.mrf.mxu0
      %v860 = vadd.f32 %v375, %v859
      %v861 = vpop.f32.mrf.mxu0
      %v862 = vpop.f32.mrf.mxu0
      %v863 = vadd.f32 %v375, %v862
      %v864 = vpop.f32.mrf.mxu0
      %865 = vmatprep.mubr.bf16.mxu0 0
      %866 = vmatmul.mubr.bf16.gmra.mxu0 %v636
      %v867 = vpop.f32.mrf.mxu0
      %v868 = vadd.f32 %v375, %v867
      %v869 = vpop.f32.mrf.mxu0
      %v870 = vpop.f32.mrf.mxu0
      %v871 = vadd.f32 %v375, %v870
      %v872 = vpop.f32.mrf.mxu0
      %873 = vmatprep.mubr.bf16.mxu0 0
      %874 = vmatmul.mubr.bf16.gmra.mxu0 %v637
      %v875 = vpop.f32.mrf.mxu0
      %v876 = vadd.f32 %v375, %v875
      %v877 = vpop.f32.mrf.mxu0
      %v878 = vpop.f32.mrf.mxu0
      %v879 = vadd.f32 %v375, %v878
      %v880 = vpop.f32.mrf.mxu0
      %881 = vmatprep.mubr.bf16.mxu0 0
      %882 = vmatmul.mubr.bf16.gmra.mxu0 %v638
      %v883 = vpop.f32.mrf.mxu0
      %v884 = vadd.f32 %v375, %v883
      %v885 = vpop.f32.mrf.mxu0
      %v886 = vpop.f32.mrf.mxu0
      %v887 = vadd.f32 %v375, %v886
      %v888 = vpop.f32.mrf.mxu0
      %889 = vmatprep.mubr.bf16.mxu0 0
      %890 = vmatmul.mubr.bf16.gmra.mxu0 %v639
      %v891 = vpop.f32.mrf.mxu0
      %v892 = vadd.f32 %v375, %v891
      %v893 = vpop.f32.mrf.mxu0
      %v894 = vpop.f32.mrf.mxu0
      %v895 = vadd.f32 %v375, %v894
      %v896 = vpop.f32.mrf.mxu0
      %897 = vmatprep.mubr.bf16.mxu0 0
      %898 = vmatmul.mubr.bf16.gmra.mxu0 %v640
      %v899 = vpop.f32.mrf.mxu0
      %v900 = vadd.f32 %v375, %v899
      %v901 = vpop.f32.mrf.mxu0
      %v902 = vpop.f32.mrf.mxu0
      %v903 = vadd.f32 %v375, %v902
      %v904 = vpop.f32.mrf.mxu0
      %905 = vmatprep.mubr.bf16.mxu0 0
      %906 = vmatmul.mubr.bf16.gmra.mxu0 %v641
      %v907 = vpop.f32.mrf.mxu0
      %v908 = vadd.f32 %v375, %v907
      %v909 = vpop.f32.mrf.mxu0
      %v910 = vpop.f32.mrf.mxu0
      %v911 = vadd.f32 %v375, %v910
      %v912 = vpop.f32.mrf.mxu0
      %913 = vmatprep.mubr.bf16.mxu0 0
      %914 = vmatmul.mubr.bf16.gmra.mxu0 %v642
      %v915 = vpop.f32.mrf.mxu0
      %v916 = vadd.f32 %v375, %v915
      %v917 = vpop.f32.mrf.mxu0
      %v918 = vpop.f32.mrf.mxu0
      %v919 = vadd.f32 %v375, %v918
      %v920 = vpop.f32.mrf.mxu0
      %921 = vmatprep.mubr.bf16.mxu0 0
      %922 = vmatmul.mubr.bf16.gmra.mxu0 %v643
      %v923 = vpop.f32.mrf.mxu0
      %v924 = vadd.f32 %v375, %v923
      %v925 = vpop.f32.mrf.mxu0
      %v926 = vpop.f32.mrf.mxu0
      %v927 = vadd.f32 %v375, %v926
      %v928 = vpop.f32.mrf.mxu0
      %929 = vmatprep.mubr.bf16.mxu0 0
      %930 = vmatmul.mubr.bf16.gmra.mxu0 %v644
      %v931 = vpop.f32.mrf.mxu0
      %v932 = vadd.f32 %v375, %v931
      %v933 = vpop.f32.mrf.mxu0
      %v934 = vpop.f32.mrf.mxu0
      %v935 = vadd.f32 %v375, %v934
      %v936 = vpop.f32.mrf.mxu0
      %937 = vmatprep.mubr.bf16.mxu0 0
      %938 = vmatmul.mubr.bf16.gmra.mxu0 %v645
      %v939 = vpop.f32.mrf.mxu0
      %v940 = vadd.f32 %v375, %v939
      %v941 = vpop.f32.mrf.mxu0
      %v942 = vpop.f32.mrf.mxu0
      %v943 = vadd.f32 %v375, %v942
      %v944 = vpop.f32.mrf.mxu0
      %945 = vmatprep.mubr.bf16.mxu0 0
      %946 = vmatmul.mubr.bf16.gmra.mxu0 %v646
      %v947 = vpop.f32.mrf.mxu0
      %v948 = vadd.f32 %v375, %v947
      %v949 = vpop.f32.mrf.mxu0
      %v950 = vpop.f32.mrf.mxu0
      %v951 = vadd.f32 %v375, %v950
      %v952 = vpop.f32.mrf.mxu0
      %953 = vmatprep.mubr.bf16.mxu0 0
      %954 = vmatmul.mubr.bf16.gmra.mxu0 %v647
      %v955 = vpop.f32.mrf.mxu0
      %v956 = vadd.f32 %v375, %v955
      %v957 = vpop.f32.mrf.mxu0
      %v958 = vpop.f32.mrf.mxu0
      %v959 = vadd.f32 %v375, %v958
      %v960 = vpop.f32.mrf.mxu0
      %961 = vmatprep.mubr.bf16.mxu0 0
      %962 = vmatmul.mubr.bf16.gmra.mxu0 %v648
      %v963 = vpop.f32.mrf.mxu0
      %v964 = vadd.f32 %v375, %v963
      %v965 = vpop.f32.mrf.mxu0
      %v966 = vpop.f32.mrf.mxu0
      %v967 = vadd.f32 %v375, %v966
      %v968 = vpop.f32.mrf.mxu0
      %969 = vmatprep.mubr.bf16.mxu0 0
      %970 = vmatmul.mubr.bf16.gmra.mxu0 %v649
      %v971 = vpop.f32.mrf.mxu0
      %v972 = vadd.f32 %v375, %v971
      %v973 = vpop.f32.mrf.mxu0
      %v974 = vpop.f32.mrf.mxu0
      %v975 = vadd.f32 %v375, %v974
      %v976 = vpop.f32.mrf.mxu0
      %977 = vmatprep.mubr.bf16.mxu0 0
      %978 = vmatmul.mubr.bf16.gmra.mxu0 %v650
      %v979 = vpop.f32.mrf.mxu0
      %v980 = vadd.f32 %v375, %v979
      %v981 = vpop.f32.mrf.mxu0
      %v982 = vpop.f32.mrf.mxu0
      %v983 = vadd.f32 %v375, %v982
      %v984 = vpop.f32.mrf.mxu0
      %985 = vmatprep.mubr.bf16.mxu0 0
      %986 = vmatmul.mubr.bf16.gmra.mxu0 %v651
      %v987 = vpop.f32.mrf.mxu0
      %v988 = vadd.f32 %v375, %v987
      %v989 = vpop.f32.mrf.mxu0
      %v990 = vpop.f32.mrf.mxu0
      %v991 = vadd.f32 %v375, %v990
      %v992 = vpop.f32.mrf.mxu0
      %993 = vmatprep.mubr.bf16.mxu0 0
      %994 = vmatmul.mubr.bf16.gmra.mxu0 %v652
      %v995 = vpop.f32.mrf.mxu0
      %v996 = vadd.f32 %v375, %v995
      %v997 = vpop.f32.mrf.mxu0
      %v998 = vpop.f32.mrf.mxu0
      %v999 = vadd.f32 %v375, %v998
      %v1000 = vpop.f32.mrf.mxu0
      %1001 = vmatprep.mubr.bf16.mxu0 0
      %1002 = vmatmul.mubr.bf16.gmra.mxu0 %v653
      %v1003 = vpop.f32.mrf.mxu0
      %v1004 = vadd.f32 %v375, %v1003
      %v1005 = vpop.f32.mrf.mxu0
      %v1006 = vpop.f32.mrf.mxu0
      %v1007 = vadd.f32 %v375, %v1006
      %v1008 = vpop.f32.mrf.mxu0
      %1009 = vmatprep.mubr.bf16.mxu0 0
      %1010 = vmatmul.mubr.bf16.gmra.mxu0 %v654
      %v1011 = vpop.f32.mrf.mxu0
      %v1012 = vadd.f32 %v375, %v1011
      %v1013 = vpop.f32.mrf.mxu0
      %v1014 = vpop.f32.mrf.mxu0
      %v1015 = vadd.f32 %v375, %v1014
      %v1016 = vpop.f32.mrf.mxu0
      %1017 = vmatprep.mubr.bf16.mxu0 0
      %1018 = vmatmul.mubr.bf16.gmra.mxu0 %v655
      %v1019 = vpop.f32.mrf.mxu0
      %v1020 = vadd.f32 %v375, %v1019
      %v1021 = vpop.f32.mrf.mxu0
      %v1022 = vpop.f32.mrf.mxu0
      %v1023 = vadd.f32 %v375, %v1022
      %v1024 = vpop.f32.mrf.mxu0
      %1025 = vmatprep.mubr.bf16.mxu0 0
      %1026 = vmatmul.mubr.bf16.gmra.mxu0 %v656
      %v1027 = vpop.f32.mrf.mxu0
      %v1028 = vadd.f32 %v375, %v1027
      %v1029 = vpop.f32.mrf.mxu0
      %v1030 = vpop.f32.mrf.mxu0
      %v1031 = vadd.f32 %v375, %v1030
      %v1032 = vpop.f32.mrf.mxu0
      %1033 = vmatprep.mubr.bf16.mxu0 0
      %1034 = vmatmul.mubr.bf16.gmra.mxu0 %v657
      %v1035 = vpop.f32.mrf.mxu0
      %v1036 = vadd.f32 %v375, %v1035
      %v1037 = vpop.f32.mrf.mxu0
      %v1038 = vpop.f32.mrf.mxu0
      %v1039 = vadd.f32 %v375, %v1038
      %v1040 = vpop.f32.mrf.mxu0
      %1041 = vmatprep.mubr.bf16.mxu0 0
      %1042 = vmatmul.mubr.bf16.gmra.mxu0 %v658
      %v1043 = vpop.f32.mrf.mxu0
      %v1044 = vadd.f32 %v375, %v1043
      %v1045 = vpop.f32.mrf.mxu0
      %v1046 = vpop.f32.mrf.mxu0
      %v1047 = vadd.f32 %v375, %v1046
      %v1048 = vpop.f32.mrf.mxu0
      %1049 = vmatprep.mubr.bf16.mxu0 0
      %1050 = vmatmul.mubr.bf16.gmra.mxu0 %v659
      %v1051 = vpop.f32.mrf.mxu0
      %v1052 = vadd.f32 %v375, %v1051
      %v1053 = vpop.f32.mrf.mxu0
      %v1054 = vpop.f32.mrf.mxu0
      %v1055 = vadd.f32 %v375, %v1054
      %v1056 = vpop.f32.mrf.mxu0
      %1057 = vmatprep.mubr.bf16.mxu0 0
      %1058 = vmatmul.mubr.bf16.gmra.mxu0 %v660
      %v1059 = vpop.f32.mrf.mxu0
      %v1060 = vadd.f32 %v375, %v1059
      %v1061 = vpop.f32.mrf.mxu0
      %v1062 = vpop.f32.mrf.mxu0
      %v1063 = vadd.f32 %v375, %v1062
      %v1064 = vpop.f32.mrf.mxu0
      %1065 = vmatprep.mubr.bf16.mxu0 0
      %1066 = vmatmul.mubr.bf16.gmra.mxu0 %v661
      %v1067 = vpop.f32.mrf.mxu0
      %v1068 = vadd.f32 %v375, %v1067
      %v1069 = vpop.f32.mrf.mxu0
      %v1070 = vpop.f32.mrf.mxu0
      %v1071 = vadd.f32 %v375, %v1070
      %v1072 = vpop.f32.mrf.mxu0
      %1073 = vmatprep.mubr.bf16.mxu0 0
      %1074 = vmatmul.mubr.bf16.gmra.mxu0 %v662
      %v1075 = vpop.f32.mrf.mxu0
      %v1076 = vadd.f32 %v375, %v1075
      %v1077 = vpop.f32.mrf.mxu0
      %v1078 = vpop.f32.mrf.mxu0
      %v1079 = vadd.f32 %v375, %v1078
      %v1080 = vpop.f32.mrf.mxu0
      %1081 = vmatprep.mubr.bf16.mxu0 0
      %1082 = vmatmul.mubr.bf16.gmra.mxu0 %v663
      %v1083 = vpop.f32.mrf.mxu0
      %v1084 = vadd.f32 %v375, %v1083
      %v1085 = vpop.f32.mrf.mxu0
      %v1086 = vpop.f32.mrf.mxu0
      %v1087 = vadd.f32 %v375, %v1086
      %v1088 = vpop.f32.mrf.mxu0
      %1089 = vmatprep.mubr.bf16.mxu0 0
      %1090 = vmatmul.mubr.bf16.gmra.mxu0 %v664
      %v1091 = vpop.f32.mrf.mxu0
      %v1092 = vadd.f32 %v375, %v1091
      %v1093 = vpop.f32.mrf.mxu0
      %v1094 = vpop.f32.mrf.mxu0
      %v1095 = vadd.f32 %v375, %v1094
      %v1096 = vpop.f32.mrf.mxu0
      %1097 = vmatprep.mubr.bf16.mxu0 0
      %1098 = vmatmul.mubr.bf16.gmra.mxu0 %v665
      %v1099 = vpop.f32.mrf.mxu0
      %v1100 = vadd.f32 %v375, %v1099
      %v1101 = vpop.f32.mrf.mxu0
      %v1102 = vpop.f32.mrf.mxu0
      %v1103 = vadd.f32 %v375, %v1102
      %v1104 = vpop.f32.mrf.mxu0
      %1105 = vmatprep.mubr.bf16.mxu0 0
      %1106 = vmatmul.mubr.bf16.gmra.mxu0 %v666
      %v1107 = vpop.f32.mrf.mxu0
      %v1108 = vadd.f32 %v375, %v1107
      %v1109 = vpop.f32.mrf.mxu0
      %v1110 = vpop.f32.mrf.mxu0
      %v1111 = vadd.f32 %v375, %v1110
      %v1112 = vpop.f32.mrf.mxu0
      %1113 = vmatprep.mubr.bf16.mxu0 0
      %1114 = vmatmul.mubr.bf16.gmra.mxu0 %v667
      %v1115 = vpop.f32.mrf.mxu0
      %v1116 = vadd.f32 %v375, %v1115
      %v1117 = vpop.f32.mrf.mxu0
      %v1118 = vpop.f32.mrf.mxu0
      %v1119 = vadd.f32 %v375, %v1118
      %v1120 = vpop.f32.mrf.mxu0
      %1121 = vmatprep.mubr.bf16.mxu0 0
      %1122 = vmatmul.mubr.bf16.gmra.mxu0 %v668
      %v1123 = vpop.f32.mrf.mxu0
      %v1124 = vadd.f32 %v375, %v1123
      %v1125 = vpop.f32.mrf.mxu0
      %v1126 = vpop.f32.mrf.mxu0
      %v1127 = vadd.f32 %v375, %v1126
      %v1128 = vpop.f32.mrf.mxu0
      %1129 = vmatprep.mubr.bf16.mxu0 0
      %1130 = vmatmul.mubr.bf16.gmra.mxu0 %v669
      %v1131 = vpop.f32.mrf.mxu0
      %v1132 = vadd.f32 %v375, %v1131
      %v1133 = vpop.f32.mrf.mxu0
      %v1134 = vpop.f32.mrf.mxu0
      %v1135 = vadd.f32 %v375, %v1134
      %v1136 = vpop.f32.mrf.mxu0
      %1137 = vmatprep.mubr.bf16.mxu0 0
      %1138 = vmatmul.mubr.bf16.gmra.mxu0 %v670
      %v1139 = vpop.f32.mrf.mxu0
      %v1140 = vadd.f32 %v375, %v1139
      %v1141 = vpop.f32.mrf.mxu0
      %v1142 = vpop.f32.mrf.mxu0
      %v1143 = vadd.f32 %v375, %v1142
      %v1144 = vpop.f32.mrf.mxu0
      %1145 = vmatprep.mubr.bf16.mxu0 0
      %1146 = vmatmul.mubr.bf16.gmra.mxu0 %v671
      %v1147 = vpop.f32.mrf.mxu0
      %v1148 = vadd.f32 %v375, %v1147
      %v1149 = vpop.f32.mrf.mxu0
      %v1150 = vpop.f32.mrf.mxu0
      %v1151 = vadd.f32 %v375, %v1150
      %v1152 = vpop.f32.mrf.mxu0
      %1153 = vmatprep.mubr.bf16.mxu0 0
      %1154 = vmatmul.mubr.bf16.gmra.mxu0 %v672
      %v1155 = vpop.f32.mrf.mxu0
      %v1156 = vadd.f32 %v375, %v1155
      %v1157 = vpop.f32.mrf.mxu0
      %v1158 = vpop.f32.mrf.mxu0
      %v1159 = vadd.f32 %v375, %v1158
      %v1160 = vpop.f32.mrf.mxu0
      %1161 = vmatprep.mubr.bf16.mxu0 0
      %1162 = vmatmul.mubr.bf16.gmra.mxu0 %v673
      %v1163 = vpop.f32.mrf.mxu0
      %v1164 = vadd.f32 %v375, %v1163
      %v1165 = vpop.f32.mrf.mxu0
      %v1166 = vpop.f32.mrf.mxu0
      %v1167 = vadd.f32 %v375, %v1166
      %v1168 = vpop.f32.mrf.mxu0
      %1169 = vmatprep.mubr.bf16.mxu0 0
      %1170 = vmatmul.mubr.bf16.gmra.mxu0 %v674
      %v1171 = vpop.f32.mrf.mxu0
      %v1172 = vadd.f32 %v375, %v1171
      %v1173 = vpop.f32.mrf.mxu0
      %v1174 = vpop.f32.mrf.mxu0
      %v1175 = vadd.f32 %v375, %v1174
      %v1176 = vpop.f32.mrf.mxu0
      %1177 = vmatprep.mubr.bf16.mxu0 0
      %1178 = vmatmul.mubr.bf16.gmra.mxu0 %v675
      %v1179 = vpop.f32.mrf.mxu0
      %v1180 = vadd.f32 %v375, %v1179
      %v1181 = vpop.f32.mrf.mxu0
      %v1182 = vpop.f32.mrf.mxu0
      %v1183 = vadd.f32 %v375, %v1182
      %v1184 = vpop.f32.mrf.mxu0
      %1185 = vmatprep.mubr.bf16.mxu0 0
      %1186 = vmatmul.mubr.bf16.gmra.mxu0 %v676
      %v1187 = vpop.f32.mrf.mxu0
      %v1188 = vadd.f32 %v375, %v1187
      %v1189 = vpop.f32.mrf.mxu0
      %v1190 = vpop.f32.mrf.mxu0
      %v1191 = vadd.f32 %v375, %v1190
      %v1192 = vpop.f32.mrf.mxu0
      %1193 = vmatprep.mubr.bf16.mxu0 0
      %1194 = vmatmul.mubr.bf16.gmra.mxu0 %v677
      %v1195 = vpop.f32.mrf.mxu0
      %v1196 = vadd.f32 %v375, %v1195
      %v1197 = vpop.f32.mrf.mxu0
      %v1198 = vpop.f32.mrf.mxu0
      %v1199 = vadd.f32 %v375, %v1198
      %v1200 = vpop.f32.mrf.mxu0
      %1201 = vmatprep.mubr.bf16.mxu0 0
      %1202 = vmatmul.mubr.bf16.gmra.mxu0 %v678
      %v1203 = vpop.f32.mrf.mxu0
      %v1204 = vadd.f32 %v375, %v1203
      %v1205 = vpop.f32.mrf.mxu0
      %v1206 = vpop.f32.mrf.mxu0
      %v1207 = vadd.f32 %v375, %v1206
      %v1208 = vpop.f32.mrf.mxu0
      %1209 = vmatprep.mubr.bf16.mxu0 0
      %1210 = vmatmul.mubr.bf16.gmra.mxu0 %v679
      %v1211 = vpop.f32.mrf.mxu0
      %v1212 = vadd.f32 %v375, %v1211
      %v1213 = vpop.f32.mrf.mxu0
      %v1214 = vpop.f32.mrf.mxu0
      %v1215 = vadd.f32 %v375, %v1214
      %v1216 = vpop.f32.mrf.mxu0
      %1217 = vmatprep.mubr.bf16.mxu0 0
      %1218 = vmatmul.mubr.bf16.gmra.mxu0 %v680
      %v1219 = vpop.f32.mrf.mxu0
      %v1220 = vadd.f32 %v375, %v1219
      %v1221 = vpop.f32.mrf.mxu0
      %v1222 = vpop.f32.mrf.mxu0
      %v1223 = vadd.f32 %v375, %v1222
      %v1224 = vpop.f32.mrf.mxu0
      %1225 = vmatprep.mubr.bf16.mxu0 0
      %1226 = vmatmul.mubr.bf16.gmra.mxu0 %v681
      %v1227 = vpop.f32.mrf.mxu0
      %v1228 = vadd.f32 %v375, %v1227
      %v1229 = vpop.f32.mrf.mxu0
      %v1230 = vpop.f32.mrf.mxu0
      %v1231 = vadd.f32 %v375, %v1230
      %v1232 = vpop.f32.mrf.mxu0
      %1233 = vmatprep.mubr.bf16.mxu0 0
      %1234 = vmatmul.mubr.bf16.gmra.mxu0 %v682
      %v1235 = vpop.f32.mrf.mxu0
      %v1236 = vadd.f32 %v375, %v1235
      %v1237 = vpop.f32.mrf.mxu0
      %v1238 = vpop.f32.mrf.mxu0
      %v1239 = vadd.f32 %v375, %v1238
      %v1240 = vpop.f32.mrf.mxu0
      %1241 = vmatprep.mubr.bf16.mxu0 0
      %1242 = vmatmul.mubr.bf16.gmra.mxu0 %v683
      %v1243 = vpop.f32.mrf.mxu0
      %v1244 = vadd.f32 %v375, %v1243
      %v1245 = vpop.f32.mrf.mxu0
      %v1246 = vpop.f32.mrf.mxu0
      %v1247 = vadd.f32 %v375, %v1246
      %v1248 = vpop.f32.mrf.mxu0
      %1249 = vmatprep.mubr.bf16.mxu0 0
      %1250 = vmatmul.mubr.bf16.gmra.mxu0 %v684
      %v1251 = vpop.f32.mrf.mxu0
      %v1252 = vadd.f32 %v375, %v1251
      %v1253 = vpop.f32.mrf.mxu0
      %v1254 = vpop.f32.mrf.mxu0
      %v1255 = vadd.f32 %v375, %v1254
      %v1256 = vpop.f32.mrf.mxu0
      %1257 = vmatprep.mubr.bf16.mxu0 0
      %1258 = vmatmul.mubr.bf16.gmra.mxu0 %v685
      %v1259 = vpop.f32.mrf.mxu0
      %v1260 = vadd.f32 %v375, %v1259
      %v1261 = vpop.f32.mrf.mxu0
      %v1262 = vpop.f32.mrf.mxu0
      %v1263 = vadd.f32 %v375, %v1262
      %v1264 = vpop.f32.mrf.mxu0
      %1265 = vmatprep.mubr.bf16.mxu0 0
      %1266 = vmatmul.mubr.bf16.gmra.mxu0 %v686
      %v1267 = vpop.f32.mrf.mxu0
      %v1268 = vadd.f32 %v375, %v1267
      %v1269 = vpop.f32.mrf.mxu0
      %v1270 = vpop.f32.mrf.mxu0
      %v1271 = vadd.f32 %v375, %v1270
      %v1272 = vpop.f32.mrf.mxu0
      %1273 = vmatprep.mubr.bf16.mxu0 0
      %1274 = vmatmul.mubr.bf16.gmra.mxu0 %v687
      %v1275 = vpop.f32.mrf.mxu0
      %v1276 = vadd.f32 %v375, %v1275
      %v1277 = vpop.f32.mrf.mxu0
      %v1278 = vpop.f32.mrf.mxu0
      %v1279 = vadd.f32 %v375, %v1278
      %v1280 = vpop.f32.mrf.mxu0
      %1281 = vmatprep.mubr.bf16.mxu0 0
      %1282 = vmatmul.mubr.bf16.gmra.mxu0 %v688
      %v1283 = vpop.f32.mrf.mxu0
      %v1284 = vadd.f32 %v375, %v1283
      %v1285 = vpop.f32.mrf.mxu0
      %v1286 = vpop.f32.mrf.mxu0
      %v1287 = vadd.f32 %v375, %v1286
      %v1288 = vpop.f32.mrf.mxu0
      %1289 = vmatprep.mubr.bf16.mxu0 0
      %1290 = vmatmul.mubr.bf16.gmra.mxu0 %v689
      %v1291 = vpop.f32.mrf.mxu0
      %v1292 = vadd.f32 %v375, %v1291
      %v1293 = vpop.f32.mrf.mxu0
      %v1294 = vpop.f32.mrf.mxu0
      %v1295 = vadd.f32 %v375, %v1294
      %v1296 = vpop.f32.mrf.mxu0
      %1297 = vmatprep.mubr.bf16.mxu0 0
      %1298 = vmatmul.mubr.bf16.gmra.mxu0 %v690
      %v1299 = vpop.f32.mrf.mxu0
      %v1300 = vadd.f32 %v375, %v1299
      %v1301 = vpop.f32.mrf.mxu0
      %v1302 = vpop.f32.mrf.mxu0
      %v1303 = vadd.f32 %v375, %v1302
      %v1304 = vpop.f32.mrf.mxu0
      %1305 = vmatprep.mubr.bf16.mxu0 0
      %1306 = vmatmul.mubr.bf16.gmra.mxu0 %v691
      %v1307 = vpop.f32.mrf.mxu0
      %v1308 = vadd.f32 %v375, %v1307
      %v1309 = vpop.f32.mrf.mxu0
      %v1310 = vpop.f32.mrf.mxu0
      %v1311 = vadd.f32 %v375, %v1310
      %v1312 = vpop.f32.mrf.mxu0
      %1313 = vmatprep.mubr.bf16.mxu0 0
      %1314 = vmatmul.mubr.bf16.gmra.mxu0 %v692
      %v1315 = vpop.f32.mrf.mxu0
      %v1316 = vadd.f32 %v375, %v1315
      %v1317 = vpop.f32.mrf.mxu0
      %v1318 = vpop.f32.mrf.mxu0
      %v1319 = vadd.f32 %v375, %v1318
      %v1320 = vpop.f32.mrf.mxu0
      %1321 = vmatprep.mubr.bf16.mxu0 0
      %1322 = vmatmul.mubr.bf16.gmra.mxu0 %v693
      %v1323 = vpop.f32.mrf.mxu0
      %v1324 = vadd.f32 %v375, %v1323
      %v1325 = vpop.f32.mrf.mxu0
      %v1326 = vpop.f32.mrf.mxu0
      %v1327 = vadd.f32 %v375, %v1326
      %v1328 = vpop.f32.mrf.mxu0
      %1329 = vmatprep.mubr.bf16.mxu0 0
      %1330 = vmatmul.mubr.bf16.gmra.mxu0 %v694
      %v1331 = vpop.f32.mrf.mxu0
      %v1332 = vadd.f32 %v375, %v1331
      %v1333 = vpop.f32.mrf.mxu0
      %v1334 = vpop.f32.mrf.mxu0
      %v1335 = vadd.f32 %v375, %v1334
      %v1336 = vpop.f32.mrf.mxu0
      %1337 = vmatprep.mubr.bf16.mxu0 0
      %1338 = vmatmul.mubr.bf16.gmra.mxu0 %v695
      %v1339 = vpop.f32.mrf.mxu0
      %v1340 = vadd.f32 %v375, %v1339
      %v1341 = vpop.f32.mrf.mxu0
      %v1342 = vpop.f32.mrf.mxu0
      %v1343 = vadd.f32 %v375, %v1342
      %v1344 = vpop.f32.mrf.mxu0
      %1345 = vmatprep.mubr.bf16.mxu0 0
      %1346 = vmatmul.mubr.bf16.gmra.mxu0 %v696
      %v1347 = vpop.f32.mrf.mxu0
      %v1348 = vadd.f32 %v375, %v1347
      %v1349 = vpop.f32.mrf.mxu0
      %v1350 = vpop.f32.mrf.mxu0
      %v1351 = vadd.f32 %v375, %v1350
      %v1352 = vpop.f32.mrf.mxu0
      %1353 = vdwg.mxu0
      %v1354 = vmax.f32 %v844, 0.0
      %v1355 = vmax.f32 %v847, 0.0
      %v1356 = vmax.f32 %v852, 0.0
      %v1357 = vmax.f32 %v855, 0.0
      %v1358 = vmax.f32 %v860, 0.0
      %v1359 = vmax.f32 %v863, 0.0
      %v1360 = vmax.f32 %v868, 0.0
      %v1361 = vmax.f32 %v871, 0.0
      %v1362 = vmax.f32 %v876, 0.0
      %v1363 = vmax.f32 %v879, 0.0
      %v1364 = vmax.f32 %v884, 0.0
      %v1365 = vmax.f32 %v887, 0.0
      %v1366 = vmax.f32 %v892, 0.0
      %v1367 = vmax.f32 %v895, 0.0
      %v1368 = vmax.f32 %v900, 0.0
      %v1369 = vmax.f32 %v903, 0.0
      %v1370 = vmax.f32 %v908, 0.0
      %v1371 = vmax.f32 %v911, 0.0
      %v1372 = vmax.f32 %v916, 0.0
      %v1373 = vmax.f32 %v919, 0.0
      %v1374 = vmax.f32 %v924, 0.0
      %v1375 = vmax.f32 %v927, 0.0
      %v1376 = vmax.f32 %v932, 0.0
      %v1377 = vmax.f32 %v935, 0.0
      %v1378 = vmax.f32 %v940, 0.0
      %v1379 = vmax.f32 %v943, 0.0
      %v1380 = vmax.f32 %v948, 0.0
      %v1381 = vmax.f32 %v951, 0.0
      %v1382 = vmax.f32 %v956, 0.0
      %v1383 = vmax.f32 %v959, 0.0
      %v1384 = vmax.f32 %v964, 0.0
      %v1385 = vmax.f32 %v967, 0.0
      %v1386 = vmax.f32 %v972, 0.0
      %v1387 = vmax.f32 %v975, 0.0
      %v1388 = vmax.f32 %v980, 0.0
      %v1389 = vmax.f32 %v983, 0.0
      %v1390 = vmax.f32 %v988, 0.0
      %v1391 = vmax.f32 %v991, 0.0
      %v1392 = vmax.f32 %v996, 0.0
      %v1393 = vmax.f32 %v999, 0.0
      %v1394 = vmax.f32 %v1004, 0.0
      %v1395 = vmax.f32 %v1007, 0.0
      %v1396 = vmax.f32 %v1012, 0.0
      %v1397 = vmax.f32 %v1015, 0.0
      %v1398 = vmax.f32 %v1020, 0.0
      %v1399 = vmax.f32 %v1023, 0.0
      %v1400 = vmax.f32 %v1028, 0.0
      %v1401 = vmax.f32 %v1031, 0.0
      %v1402 = vmax.f32 %v1036, 0.0
      %v1403 = vmax.f32 %v1039, 0.0
      %v1404 = vmax.f32 %v1044, 0.0
      %v1405 = vmax.f32 %v1047, 0.0
      %v1406 = vmax.f32 %v1052, 0.0
      %v1407 = vmax.f32 %v1055, 0.0
      %v1408 = vmax.f32 %v1060, 0.0
      %v1409 = vmax.f32 %v1063, 0.0
      %v1410 = vmax.f32 %v1068, 0.0
      %v1411 = vmax.f32 %v1071, 0.0
      %v1412 = vmax.f32 %v1076, 0.0
      %v1413 = vmax.f32 %v1079, 0.0
      %v1414 = vmax.f32 %v1084, 0.0
      %v1415 = vmax.f32 %v1087, 0.0
      %v1416 = vmax.f32 %v1092, 0.0
      %v1417 = vmax.f32 %v1095, 0.0
      %v1418 = vmax.f32 %v1100, 0.0
      %v1419 = vmax.f32 %v1103, 0.0
      %v1420 = vmax.f32 %v1108, 0.0
      %v1421 = vmax.f32 %v1111, 0.0
      %v1422 = vmax.f32 %v1116, 0.0
      %v1423 = vmax.f32 %v1119, 0.0
      %v1424 = vmax.f32 %v1124, 0.0
      %v1425 = vmax.f32 %v1127, 0.0
      %v1426 = vmax.f32 %v1132, 0.0
      %v1427 = vmax.f32 %v1135, 0.0
      %v1428 = vmax.f32 %v1140, 0.0
      %v1429 = vmax.f32 %v1143, 0.0
      %v1430 = vmax.f32 %v1148, 0.0
      %v1431 = vmax.f32 %v1151, 0.0
      %v1432 = vmax.f32 %v1156, 0.0
      %v1433 = vmax.f32 %v1159, 0.0
      %v1434 = vmax.f32 %v1164, 0.0
      %v1435 = vmax.f32 %v1167, 0.0
      %v1436 = vmax.f32 %v1172, 0.0
      %v1437 = vmax.f32 %v1175, 0.0
      %v1438 = vmax.f32 %v1180, 0.0
      %v1439 = vmax.f32 %v1183, 0.0
      %v1440 = vmax.f32 %v1188, 0.0
      %v1441 = vmax.f32 %v1191, 0.0
      %v1442 = vmax.f32 %v1196, 0.0
      %v1443 = vmax.f32 %v1199, 0.0
      %v1444 = vmax.f32 %v1204, 0.0
      %v1445 = vmax.f32 %v1207, 0.0
      %v1446 = vmax.f32 %v1212, 0.0
      %v1447 = vmax.f32 %v1215, 0.0
      %v1448 = vmax.f32 %v1220, 0.0
      %v1449 = vmax.f32 %v1223, 0.0
      %v1450 = vmax.f32 %v1228, 0.0
      %v1451 = vmax.f32 %v1231, 0.0
      %v1452 = vmax.f32 %v1236, 0.0
      %v1453 = vmax.f32 %v1239, 0.0
      %v1454 = vmax.f32 %v1244, 0.0
      %v1455 = vmax.f32 %v1247, 0.0
      %v1456 = vmax.f32 %v1252, 0.0
      %v1457 = vmax.f32 %v1255, 0.0
      %v1458 = vmax.f32 %v1260, 0.0
      %v1459 = vmax.f32 %v1263, 0.0
      %v1460 = vmax.f32 %v1268, 0.0
      %v1461 = vmax.f32 %v1271, 0.0
      %v1462 = vmax.f32 %v1276, 0.0
      %v1463 = vmax.f32 %v1279, 0.0
      %v1464 = vmax.f32 %v1284, 0.0
      %v1465 = vmax.f32 %v1287, 0.0
      %v1466 = vmax.f32 %v1292, 0.0
      %v1467 = vmax.f32 %v1295, 0.0
      %v1468 = vmax.f32 %v1300, 0.0
      %v1469 = vmax.f32 %v1303, 0.0
      %v1470 = vmax.f32 %v1308, 0.0
      %v1471 = vmax.f32 %v1311, 0.0
      %v1472 = vmax.f32 %v1316, 0.0
      %v1473 = vmax.f32 %v1319, 0.0
      %v1474 = vmax.f32 %v1324, 0.0
      %v1475 = vmax.f32 %v1327, 0.0
      %v1476 = vmax.f32 %v1332, 0.0
      %v1477 = vmax.f32 %v1335, 0.0
      %v1478 = vmax.f32 %v1340, 0.0
      %v1479 = vmax.f32 %v1343, 0.0
      %v1480 = vmax.f32 %v1348, 0.0
      %v1481 = vmax.f32 %v1351, 0.0
      %1482 = vst [vmem:[%s223] sm:$0xff] %v1354
      %1483 = vst [vmem:[%s223 + $0x8] sm:$0xff] %v1355
      %1484 = vst [vmem:[%s223 + $0x10] sm:$0xff] %v1356
      %1485 = vst [vmem:[%s223 + $0x18] sm:$0xff] %v1357
      %1486 = vst [vmem:[%s223 + $0x20] sm:$0xff] %v1358
      %1487 = vst [vmem:[%s223 + $0x28] sm:$0xff] %v1359
      %1488 = vst [vmem:[%s223 + $0x30] sm:$0xff] %v1360
      %1489 = vst [vmem:[%s223 + $0x38] sm:$0xff] %v1361
      %1490 = vst [vmem:[%s223 + $0x40] sm:$0xff] %v1362
      %1491 = vst [vmem:[%s223 + $0x48] sm:$0xff] %v1363
      %1492 = vst [vmem:[%s223 + $0x50] sm:$0xff] %v1364
      %1493 = vst [vmem:[%s223 + $0x58] sm:$0xff] %v1365
      %1494 = vst [vmem:[%s223 + $0x60] sm:$0xff] %v1366
      %1495 = vst [vmem:[%s223 + $0x68] sm:$0xff] %v1367
      %1496 = vst [vmem:[%s223 + $0x70] sm:$0xff] %v1368
      %1497 = vst [vmem:[%s223 + $0x78] sm:$0xff] %v1369
      %1498 = vst [vmem:[%s223 + $0x80] sm:$0xff] %v1370
      %1499 = vst [vmem:[%s223 + $0x88] sm:$0xff] %v1371
      %1500 = vst [vmem:[%s223 + $0x90] sm:$0xff] %v1372
      %1501 = vst [vmem:[%s223 + $0x98] sm:$0xff] %v1373
      %1502 = vst [vmem:[%s223 + $0xa0] sm:$0xff] %v1374
      %1503 = vst [vmem:[%s223 + $0xa8] sm:$0xff] %v1375
      %1504 = vst [vmem:[%s223 + $0xb0] sm:$0xff] %v1376
      %1505 = vst [vmem:[%s223 + $0xb8] sm:$0xff] %v1377
      %1506 = vst [vmem:[%s223 + $0xc0] sm:$0xff] %v1378
      %1507 = vst [vmem:[%s223 + $0xc8] sm:$0xff] %v1379
      %1508 = vst [vmem:[%s223 + $0xd0] sm:$0xff] %v1380
      %1509 = vst [vmem:[%s223 + $0xd8] sm:$0xff] %v1381
      %1510 = vst [vmem:[%s223 + $0xe0] sm:$0xff] %v1382
      %1511 = vst [vmem:[%s223 + $0xe8] sm:$0xff] %v1383
      %1512 = vst [vmem:[%s223 + $0xf0] sm:$0xff] %v1384
      %1513 = vst [vmem:[%s223 + $0xf8] sm:$0xff] %v1385
      %1514 = vst [vmem:[%s223 + $0x100] sm:$0xff] %v1386
      %1515 = vst [vmem:[%s223 + $0x108] sm:$0xff] %v1387
      %1516 = vst [vmem:[%s223 + $0x110] sm:$0xff] %v1388
      %1517 = vst [vmem:[%s223 + $0x118] sm:$0xff] %v1389
      %1518 = vst [vmem:[%s223 + $0x120] sm:$0xff] %v1390
      %1519 = vst [vmem:[%s223 + $0x128] sm:$0xff] %v1391
      %1520 = vst [vmem:[%s223 + $0x130] sm:$0xff] %v1392
      %1521 = vst [vmem:[%s223 + $0x138] sm:$0xff] %v1393
      %1522 = vst [vmem:[%s223 + $0x140] sm:$0xff] %v1394
      %1523 = vst [vmem:[%s223 + $0x148] sm:$0xff] %v1395
      %1524 = vst [vmem:[%s223 + $0x150] sm:$0xff] %v1396
      %1525 = vst [vmem:[%s223 + $0x158] sm:$0xff] %v1397
      %1526 = vst [vmem:[%s223 + $0x160] sm:$0xff] %v1398
      %1527 = vst [vmem:[%s223 + $0x168] sm:$0xff] %v1399
      %1528 = vst [vmem:[%s223 + $0x170] sm:$0xff] %v1400
      %1529 = vst [vmem:[%s223 + $0x178] sm:$0xff] %v1401
      %1530 = vst [vmem:[%s223 + $0x180] sm:$0xff] %v1402
      %1531 = vst [vmem:[%s223 + $0x188] sm:$0xff] %v1403
      %1532 = vst [vmem:[%s223 + $0x190] sm:$0xff] %v1404
      %1533 = vst [vmem:[%s223 + $0x198] sm:$0xff] %v1405
      %1534 = vst [vmem:[%s223 + $0x1a0] sm:$0xff] %v1406
      %1535 = vst [vmem:[%s223 + $0x1a8] sm:$0xff] %v1407
      %1536 = vst [vmem:[%s223 + $0x1b0] sm:$0xff] %v1408
      %1537 = vst [vmem:[%s223 + $0x1b8] sm:$0xff] %v1409
      %1538 = vst [vmem:[%s223 + $0x1c0] sm:$0xff] %v1410
      %1539 = vst [vmem:[%s223 + $0x1c8] sm:$0xff] %v1411
      %1540 = vst [vmem:[%s223 + $0x1d0] sm:$0xff] %v1412
      %1541 = vst [vmem:[%s223 + $0x1d8] sm:$0xff] %v1413
      %1542 = vst [vmem:[%s223 + $0x1e0] sm:$0xff] %v1414
      %1543 = vst [vmem:[%s223 + $0x1e8] sm:$0xff] %v1415
      %1544 = vst [vmem:[%s223 + $0x1f0] sm:$0xff] %v1416
      %1545 = vst [vmem:[%s223 + $0x1f8] sm:$0xff] %v1417
      %1546 = vst [vmem:[%s223 + $0x200] sm:$0xff] %v1418
      %1547 = vst [vmem:[%s223 + $0x208] sm:$0xff] %v1419
      %1548 = vst [vmem:[%s223 + $0x210] sm:$0xff] %v1420
      %1549 = vst [vmem:[%s223 + $0x218] sm:$0xff] %v1421
      %1550 = vst [vmem:[%s223 + $0x220] sm:$0xff] %v1422
      %1551 = vst [vmem:[%s223 + $0x228] sm:$0xff] %v1423
      %1552 = vst [vmem:[%s223 + $0x230] sm:$0xff] %v1424
      %1553 = vst [vmem:[%s223 + $0x238] sm:$0xff] %v1425
      %1554 = vst [vmem:[%s223 + $0x240] sm:$0xff] %v1426
      %1555 = vst [vmem:[%s223 + $0x248] sm:$0xff] %v1427
      %1556 = vst [vmem:[%s223 + $0x250] sm:$0xff] %v1428
      %1557 = vst [vmem:[%s223 + $0x258] sm:$0xff] %v1429
      %1558 = vst [vmem:[%s223 + $0x260] sm:$0xff] %v1430
      %1559 = vst [vmem:[%s223 + $0x268] sm:$0xff] %v1431
      %1560 = vst [vmem:[%s223 + $0x270] sm:$0xff] %v1432
      %1561 = vst [vmem:[%s223 + $0x278] sm:$0xff] %v1433
      %1562 = vst [vmem:[%s223 + $0x280] sm:$0xff] %v1434
      %1563 = vst [vmem:[%s223 + $0x288] sm:$0xff] %v1435
      %1564 = vst [vmem:[%s223 + $0x290] sm:$0xff] %v1436
      %1565 = vst [vmem:[%s223 + $0x298] sm:$0xff] %v1437
      %1566 = vst [vmem:[%s223 + $0x2a0] sm:$0xff] %v1438
      %1567 = vst [vmem:[%s223 + $0x2a8] sm:$0xff] %v1439
      %1568 = vst [vmem:[%s223 + $0x2b0] sm:$0xff] %v1440
      %1569 = vst [vmem:[%s223 + $0x2b8] sm:$0xff] %v1441
      %1570 = vst [vmem:[%s223 + $0x2c0] sm:$0xff] %v1442
      %1571 = vst [vmem:[%s223 + $0x2c8] sm:$0xff] %v1443
      %1572 = vst [vmem:[%s223 + $0x2d0] sm:$0xff] %v1444
      %1573 = vst [vmem:[%s223 + $0x2d8] sm:$0xff] %v1445
      %1574 = vst [vmem:[%s223 + $0x2e0] sm:$0xff] %v1446
      %1575 = vst [vmem:[%s223 + $0x2e8] sm:$0xff] %v1447
      %1576 = vst [vmem:[%s223 + $0x2f0] sm:$0xff] %v1448
      %1577 = vst [vmem:[%s223 + $0x2f8] sm:$0xff] %v1449
      %1578 = vst [vmem:[%s223 + $0x300] sm:$0xff] %v1450
      %1579 = vst [vmem:[%s223 + $0x308] sm:$0xff] %v1451
      %1580 = vst [vmem:[%s223 + $0x310] sm:$0xff] %v1452
      %1581 = vst [vmem:[%s223 + $0x318] sm:$0xff] %v1453
      %1582 = vst [vmem:[%s223 + $0x320] sm:$0xff] %v1454
      %1583 = vst [vmem:[%s223 + $0x328] sm:$0xff] %v1455
      %1584 = vst [vmem:[%s223 + $0x330] sm:$0xff] %v1456
      %1585 = vst [vmem:[%s223 + $0x338] sm:$0xff] %v1457
      %1586 = vst [vmem:[%s223 + $0x340] sm:$0xff] %v1458
      %1587 = vst [vmem:[%s223 + $0x348] sm:$0xff] %v1459
      %1588 = vst [vmem:[%s223 + $0x350] sm:$0xff] %v1460
      %1589 = vst [vmem:[%s223 + $0x358] sm:$0xff] %v1461
      %1590 = vst [vmem:[%s223 + $0x360] sm:$0xff] %v1462
      %1591 = vst [vmem:[%s223 + $0x368] sm:$0xff] %v1463
      %1592 = vst [vmem:[%s223 + $0x370] sm:$0xff] %v1464
      %1593 = vst [vmem:[%s223 + $0x378] sm:$0xff] %v1465
      %1594 = vst [vmem:[%s223 + $0x380] sm:$0xff] %v1466
      %1595 = vst [vmem:[%s223 + $0x388] sm:$0xff] %v1467
      %1596 = vst [vmem:[%s223 + $0x390] sm:$0xff] %v1468
      %1597 = vst [vmem:[%s223 + $0x398] sm:$0xff] %v1469
      %1598 = vst [vmem:[%s223 + $0x3a0] sm:$0xff] %v1470
      %1599 = vst [vmem:[%s223 + $0x3a8] sm:$0xff] %v1471
      %1600 = vst [vmem:[%s223 + $0x3b0] sm:$0xff] %v1472
      %1601 = vst [vmem:[%s223 + $0x3b8] sm:$0xff] %v1473
      %1602 = vst [vmem:[%s223 + $0x3c0] sm:$0xff] %v1474
      %1603 = vst [vmem:[%s223 + $0x3c8] sm:$0xff] %v1475
      %1604 = vst [vmem:[%s223 + $0x3d0] sm:$0xff] %v1476
      %1605 = vst [vmem:[%s223 + $0x3d8] sm:$0xff] %v1477
      %1606 = vst [vmem:[%s223 + $0x3e0] sm:$0xff] %v1478
      %1607 = vst [vmem:[%s223 + $0x3e8] sm:$0xff] %v1479
      %1608 = vst [vmem:[%s223 + $0x3f0] sm:$0xff] %v1480
      %1609 = vst [vmem:[%s223 + $0x3f8] sm:$0xff] %v1481
      %s1610 = smul.u32 128, %s18
      %p1611 = scmp.lt.s32.totalorder %s1610, 255
      %s1612 = scalar_select %p1611, %s1610, 255
      %p1613 = scmp.lt.s32.totalorder %s19, 0
      %s1614 = scalar_select %p1613, %s19, 0
      %s1615 = sadd.s32 %s1614, %s1612
      %s1616 = smul.addr %s1615, 8
      %s1617 = scalar_lea.vmem %s3, %s1616
      // Predicated region
      $region33: #{_crnn_forward.25} parent=31 // pred_check
        %p1618 = pneg %p124
      $region34: #{_crnn_forward.25} parent=31 // pred_check_branch
        %1620 = sbr.rel (%p1618) target = $region36
      $region35: #{_crnn_forward.25} parent=31 // pred_region
        %s1621 = smul.u32 128, %s18
      $region36: #{_crnn_forward.25} parent=31 // pred_fallthru
        _
    $region32: #{_crnn_forward.25} parent=5 // pred_fallthru
      _
    %p1622 = scmp.le.s32.totalorder 2, %s9
    // Predicated region
    $region37: #{_crnn_forward.25} parent=5 // pred_check
      %p1623 = pneg %p1622
    $region38: #{_crnn_forward.25} parent=5 // pred_check_branch
      %1625 = sbr.rel (%p1623) target = $region40
    $region39: #{_crnn_forward.25} parent=5 // pred_region
      %s1626 = ssub.s32 %s9, 2
      // Predicated region
      $region41: #{_crnn_forward.25} parent=39 // pred_check
        %p1627 = pneg %p130
      $region42: #{_crnn_forward.25} parent=39 // pred_check_branch
        %1629 = sbr.rel (%p1627) target = $region44
      $region43: #{_crnn_forward.25} parent=39 // pred_region
        %s1630 = smul.u32 128, %s20
        %p1631 = scmp.lt.s32.totalorder %s1630, 255
        %s1632 = scalar_select %p1631, %s1630, 255
        %p1633 = scmp.lt.s32.totalorder %s21, 0
        %s1634 = scalar_select %p1633, %s21, 0
        %s1635 = sadd.s32 %s1634, %s1632
        %s1636 = smul.addr %s1635, 8
        %s1637 = scalar_lea.vmem %s3, %s1636
      $region44: #{_crnn_forward.25} parent=39 // pred_fallthru
        _
    $region40: #{_crnn_forward.25} parent=5 // pred_fallthru
      _
  $region6: #{_crnn_forward.25} parent=0 // loop_footer
    %s13 = sadd.s32 1, %s9
  $region7: #{_crnn_forward.25} parent=0 // loop_footer_branch
    %8 = sbr.rel target = $region3
  $region8: #{_crnn_forward.25} parent=0 // loop_exit
    _

// kernel: _crnn_forward.26
$region0: #{_crnn_forward.26}
  #allocation0 [shape = 'u32[]', space=smem, size = 0x4, offset = 0x4, fixed_abs, tag = 'smem constant byte address 0x4 - core index']
  #allocation1 [shape = 'u32[144,128]{1,0:T(1,128)}', space=vmem, size = 0x12000, scoped, tag = 'internal scratch']
  %s0 = inlined_call_operand.vmem [shape: bf16[512,256], index: 0, kind: input, shape index: {}]
  %s1 = inlined_call_operand.vmem [shape: bf16[256,128], index: 1, kind: input, shape index: {}]
  %s2 = inlined_call_operand.vmem [shape: f32[1,128], index: 2, kind: input, shape index: {}]
  %s3 = inlined_call_operand.vmem [shape: f32[512,128], index: 3, kind: output, shape index: {}]
  %s4 = sld [smem:[#allocation0]]
  $region22: #{_crnn_forward.26} parent=0
    _
  %s6 = ssub.s32 1, %s4
  %s7 = scalar_select 0, %s6, %s4
  // Predicated region
  $region2: #{_crnn_forward.26} parent=0 // pred_check
    _
  $region3: #{_crnn_forward.26} parent=0 // pred_check_branch
    %9 = sbr.rel (0) target = $region5
  $region4: #{_crnn_forward.26} parent=0 // pred_region
    _
  $region5: #{_crnn_forward.26} parent=0 // pred_fallthru
    _
  // Predicated region
  $region6: #{_crnn_forward.26} parent=0 // pred_check
    _
  $region7: #{_crnn_forward.26} parent=0 // pred_check_branch
    %11 = sbr.rel (0) target = $region9
  $region8: #{_crnn_forward.26} parent=0 // pred_region
    _
  $region9: #{_crnn_forward.26} parent=0 // pred_fallthru
    _
  // Predicated region
  $region10: #{_crnn_forward.26} parent=0 // pred_check
    _
  $region11: #{_crnn_forward.26} parent=0 // pred_check_branch
    %13 = sbr.rel (0) target = $region13
  $region12: #{_crnn_forward.26} parent=0 // pred_region
    _
  $region13: #{_crnn_forward.26} parent=0 // pred_fallthru
    _
  %v15 = vld [vmem:[%s0] sm:$0xff]
  %v16 = vld [vmem:[%s0 + $0x8] sm:$0xff]
  %v17 = vld [vmem:[%s0 + $0x10] sm:$0xff]
  %v18 = vld [vmem:[%s0 + $0x18] sm:$0xff]
  %v19 = vld [vmem:[%s0 + $0x20] sm:$0xff]
  %v20 = vld [vmem:[%s0 + $0x28] sm:$0xff]
  %v21 = vld [vmem:[%s0 + $0x30] sm:$0xff]
  %v22 = vld [vmem:[%s0 + $0x38] sm:$0xff]
  %v23 = vld [vmem:[%s0 + $0x40] sm:$0xff]
  %v24 = vld [vmem:[%s0 + $0x48] sm:$0xff]
  %v25 = vld [vmem:[%s0 + $0x50] sm:$0xff]
  %v26 = vld [vmem:[%s0 + $0x58] sm:$0xff]
  %v27 = vld [vmem:[%s0 + $0x60] sm:$0xff]
  %v28 = vld [vmem:[%s0 + $0x68] sm:$0xff]
  %v29 = vld [vmem:[%s0 + $0x70] sm:$0xff]
  %v30 = vld [vmem:[%s0 + $0x78] sm:$0xff]
  %v31 = vld [vmem:[%s0 + $0x80] sm:$0xff]
  %v32 = vld [vmem:[%s0 + $0x88] sm:$0xff]
  %v33 = vld [vmem:[%s0 + $0x90] sm:$0xff]
  %v34 = vld [vmem:[%s0 + $0x98] sm:$0xff]
  %v35 = vld [vmem:[%s0 + $0xa0] sm:$0xff]
  %v36 = vld [vmem:[%s0 + $0xa8] sm:$0xff]
  %v37 = vld [vmem:[%s0 + $0xb0] sm:$0xff]
  %v38 = vld [vmem:[%s0 + $0xb8] sm:$0xff]
  %v39 = vld [vmem:[%s0 + $0xc0] sm:$0xff]
  %v40 = vld [vmem:[%s0 + $0xc8] sm:$0xff]
  %v41 = vld [vmem:[%s0 + $0xd0] sm:$0xff]
  %v42 = vld [vmem:[%s0 + $0xd8] sm:$0xff]
  %v43 = vld [vmem:[%s0 + $0xe0] sm:$0xff]
  %v44 = vld [vmem:[%s0 + $0xe8] sm:$0xff]
  %v45 = vld [vmem:[%s0 + $0xf0] sm:$0xff]
  %v46 = vld [vmem:[%s0 + $0xf8] sm:$0xff]
  %v47 = vld [vmem:[%s0 + $0x100] sm:$0xff]
  %v48 = vld [vmem:[%s0 + $0x108] sm:$0xff]
  %v49 = vld [vmem:[%s0 + $0x110] sm:$0xff]
  %v50 = vld [vmem:[%s0 + $0x118] sm:$0xff]
  %v51 = vld [vmem:[%s0 + $0x120] sm:$0xff]
  %v52 = vld [vmem:[%s0 + $0x128] sm:$0xff]
  %v53 = vld [vmem:[%s0 + $0x130] sm:$0xff]
  %v54 = vld [vmem:[%s0 + $0x138] sm:$0xff]
  %v55 = vld [vmem:[%s0 + $0x140] sm:$0xff]
  %v56 = vld [vmem:[%s0 + $0x148] sm:$0xff]
  %v57 = vld [vmem:[%s0 + $0x150] sm:$0xff]
  %v58 = vld [vmem:[%s0 + $0x158] sm:$0xff]
  %v59 = vld [vmem:[%s0 + $0x160] sm:$0xff]
  %v60 = vld [vmem:[%s0 + $0x168] sm:$0xff]
  %v61 = vld [vmem:[%s0 + $0x170] sm:$0xff]
  %v62 = vld [vmem:[%s0 + $0x178] sm:$0xff]
  %v63 = vld [vmem:[%s0 + $0x180] sm:$0xff]
  %v64 = vld [vmem:[%s0 + $0x188] sm:$0xff]
  %v65 = vld [vmem:[%s0 + $0x190] sm:$0xff]
  %v66 = vld [vmem:[%s0 + $0x198] sm:$0xff]
  %v67 = vld [vmem:[%s0 + $0x1a0] sm:$0xff]
  %v68 = vld [vmem:[%s0 + $0x1a8] sm:$0xff]
  %v69 = vld [vmem:[%s0 + $0x1b0] sm:$0xff]
  %v70 = vld [vmem:[%s0 + $0x1b8] sm:$0xff]
  %v71 = vld [vmem:[%s0 + $0x1c0] sm:$0xff]
  %v72 = vld [vmem:[%s0 + $0x1c8] sm:$0xff]
  %v73 = vld [vmem:[%s0 + $0x1d0] sm:$0xff]
  %v74 = vld [vmem:[%s0 + $0x1d8] sm:$0xff]
  %v75 = vld [vmem:[%s0 + $0x1e0] sm:$0xff]
  %v76 = vld [vmem:[%s0 + $0x1e8] sm:$0xff]
  %v77 = vld [vmem:[%s0 + $0x1f0] sm:$0xff]
  %v78 = vld [vmem:[%s0 + $0x1f8] sm:$0xff]
  %v79 = vld [vmem:[%s1] sm:$0xf]
  %v80 = vld [vmem:[%s1 + $0x4] sm:$0xf]
  %v81 = vld [vmem:[%s1 + $0x8] sm:$0xf]
  %v82 = vld [vmem:[%s1 + $0xc] sm:$0xf]
  %v83 = vld [vmem:[%s1 + $0x10] sm:$0xf]
  %v84 = vld [vmem:[%s1 + $0x14] sm:$0xf]
  %v85 = vld [vmem:[%s1 + $0x18] sm:$0xf]
  %v86 = vld [vmem:[%s1 + $0x1c] sm:$0xf]
  %v87 = vld [vmem:[%s1 + $0x20] sm:$0xf]
  %v88 = vld [vmem:[%s1 + $0x24] sm:$0xf]
  %v89 = vld [vmem:[%s1 + $0x28] sm:$0xf]
  %v90 = vld [vmem:[%s1 + $0x2c] sm:$0xf]
  %v91 = vld [vmem:[%s1 + $0x30] sm:$0xf]
  %v92 = vld [vmem:[%s1 + $0x34] sm:$0xf]
  %v93 = vld [vmem:[%s1 + $0x38] sm:$0xf]
  %v94 = vld [vmem:[%s1 + $0x3c] sm:$0xf]
  %v95 = vld [vmem:[%s1 + $0x40] sm:$0xf]
  %v96 = vld [vmem:[%s1 + $0x44] sm:$0xf]
  %v97 = vld [vmem:[%s1 + $0x48] sm:$0xf]
  %v98 = vld [vmem:[%s1 + $0x4c] sm:$0xf]
  %v99 = vld [vmem:[%s1 + $0x50] sm:$0xf]
  %v100 = vld [vmem:[%s1 + $0x54] sm:$0xf]
  %v101 = vld [vmem:[%s1 + $0x58] sm:$0xf]
  %v102 = vld [vmem:[%s1 + $0x5c] sm:$0xf]
  %v103 = vld [vmem:[%s1 + $0x60] sm:$0xf]
  %v104 = vld [vmem:[%s1 + $0x64] sm:$0xf]
  %v105 = vld [vmem:[%s1 + $0x68] sm:$0xf]
  %v106 = vld [vmem:[%s1 + $0x6c] sm:$0xf]
  %v107 = vld [vmem:[%s1 + $0x70] sm:$0xf]
  %v108 = vld [vmem:[%s1 + $0x74] sm:$0xf]
  %v109 = vld [vmem:[%s1 + $0x78] sm:$0xf]
  %v110 = vld [vmem:[%s1 + $0x7c] sm:$0xf]
  %v111 = vld [vmem:[%s2] sm:$0x1]
  %v113 = vlaneseq
  %v114 = vshrl.u32 %v113, 7
  %v115 = vsub.s32 0, %v114
  %v116 = vrot.slane %v111, %v115
  %v182 = vunpack.c.l.b16 %v15
  %v183 = vunpack.c.h.b16 %v15
  %v184 = vunpack.c.l.b16 %v16
  %v185 = vunpack.c.h.b16 %v16
  %v186 = vunpack.c.l.b16 %v17
  %v187 = vunpack.c.h.b16 %v17
  %v188 = vunpack.c.l.b16 %v18
  %v189 = vunpack.c.h.b16 %v18
  %v190 = vunpack.c.l.b16 %v19
  %v191 = vunpack.c.h.b16 %v19
  %v192 = vunpack.c.l.b16 %v20
  %v193 = vunpack.c.h.b16 %v20
  %v194 = vunpack.c.l.b16 %v21
  %v195 = vunpack.c.h.b16 %v21
  %v196 = vunpack.c.l.b16 %v22
  %v197 = vunpack.c.h.b16 %v22
  %v198 = vunpack.c.l.b16 %v23
  %v199 = vunpack.c.h.b16 %v23
  %v200 = vunpack.c.l.b16 %v24
  %v201 = vunpack.c.h.b16 %v24
  %v202 = vunpack.c.l.b16 %v25
  %v203 = vunpack.c.h.b16 %v25
  %v204 = vunpack.c.l.b16 %v26
  %v205 = vunpack.c.h.b16 %v26
  %v206 = vunpack.c.l.b16 %v27
  %v207 = vunpack.c.h.b16 %v27
  %v208 = vunpack.c.l.b16 %v28
  %v209 = vunpack.c.h.b16 %v28
  %v210 = vunpack.c.l.b16 %v29
  %v211 = vunpack.c.h.b16 %v29
  %v212 = vunpack.c.l.b16 %v30
  %v213 = vunpack.c.h.b16 %v30
  %v214 = vunpack.c.l.b16 %v31
  %v215 = vunpack.c.h.b16 %v31
  %v216 = vunpack.c.l.b16 %v32
  %v217 = vunpack.c.h.b16 %v32
  %v218 = vunpack.c.l.b16 %v33
  %v219 = vunpack.c.h.b16 %v33
  %v220 = vunpack.c.l.b16 %v34
  %v221 = vunpack.c.h.b16 %v34
  %v222 = vunpack.c.l.b16 %v35
  %v223 = vunpack.c.h.b16 %v35
  %v224 = vunpack.c.l.b16 %v36
  %v225 = vunpack.c.h.b16 %v36
  %v226 = vunpack.c.l.b16 %v37
  %v227 = vunpack.c.h.b16 %v37
  %v228 = vunpack.c.l.b16 %v38
  %v229 = vunpack.c.h.b16 %v38
  %v230 = vunpack.c.l.b16 %v39
  %v231 = vunpack.c.h.b16 %v39
  %v232 = vunpack.c.l.b16 %v40
  %v233 = vunpack.c.h.b16 %v40
  %v234 = vunpack.c.l.b16 %v41
  %v235 = vunpack.c.h.b16 %v41
  %v236 = vunpack.c.l.b16 %v42
  %v237 = vunpack.c.h.b16 %v42
  %v238 = vunpack.c.l.b16 %v43
  %v239 = vunpack.c.h.b16 %v43
  %v240 = vunpack.c.l.b16 %v44
  %v241 = vunpack.c.h.b16 %v44
  %v242 = vunpack.c.l.b16 %v45
  %v243 = vunpack.c.h.b16 %v45
  %v244 = vunpack.c.l.b16 %v46
  %v245 = vunpack.c.h.b16 %v46
  %v246 = vunpack.c.l.b16 %v47
  %v247 = vunpack.c.h.b16 %v47
  %v248 = vunpack.c.l.b16 %v48
  %v249 = vunpack.c.h.b16 %v48
  %v250 = vunpack.c.l.b16 %v49
  %v251 = vunpack.c.h.b16 %v49
  %v252 = vunpack.c.l.b16 %v50
  %v253 = vunpack.c.h.b16 %v50
  %v254 = vunpack.c.l.b16 %v51
  %v255 = vunpack.c.h.b16 %v51
  %v256 = vunpack.c.l.b16 %v52
  %v257 = vunpack.c.h.b16 %v52
  %v258 = vunpack.c.l.b16 %v53
  %v259 = vunpack.c.h.b16 %v53
  %v260 = vunpack.c.l.b16 %v54
  %v261 = vunpack.c.h.b16 %v54
  %v262 = vunpack.c.l.b16 %v55
  %v263 = vunpack.c.h.b16 %v55
  %v264 = vunpack.c.l.b16 %v56
  %v265 = vunpack.c.h.b16 %v56
  %v266 = vunpack.c.l.b16 %v57
  %v267 = vunpack.c.h.b16 %v57
  %v268 = vunpack.c.l.b16 %v58
  %v269 = vunpack.c.h.b16 %v58
  %v270 = vunpack.c.l.b16 %v59
  %v271 = vunpack.c.h.b16 %v59
  %v272 = vunpack.c.l.b16 %v60
  %v273 = vunpack.c.h.b16 %v60
  %v274 = vunpack.c.l.b16 %v61
  %v275 = vunpack.c.h.b16 %v61
  %v276 = vunpack.c.l.b16 %v62
  %v277 = vunpack.c.h.b16 %v62
  %v278 = vunpack.c.l.b16 %v63
  %v279 = vunpack.c.h.b16 %v63
  %v280 = vunpack.c.l.b16 %v64
  %v281 = vunpack.c.h.b16 %v64
  %v282 = vunpack.c.l.b16 %v65
  %v283 = vunpack.c.h.b16 %v65
  %v284 = vunpack.c.l.b16 %v66
  %v285 = vunpack.c.h.b16 %v66
  %v286 = vunpack.c.l.b16 %v67
  %v287 = vunpack.c.h.b16 %v67
  %v288 = vunpack.c.l.b16 %v68
  %v289 = vunpack.c.h.b16 %v68
  %v290 = vunpack.c.l.b16 %v69
  %v291 = vunpack.c.h.b16 %v69
  %v292 = vunpack.c.l.b16 %v70
  %v293 = vunpack.c.h.b16 %v70
  %v294 = vunpack.c.l.b16 %v71
  %v295 = vunpack.c.h.b16 %v71
  %v296 = vunpack.c.l.b16 %v72
  %v297 = vunpack.c.h.b16 %v72
  %v298 = vunpack.c.l.b16 %v73
  %v299 = vunpack.c.h.b16 %v73
  %v300 = vunpack.c.l.b16 %v74
  %v301 = vunpack.c.h.b16 %v74
  %v302 = vunpack.c.l.b16 %v75
  %v303 = vunpack.c.h.b16 %v75
  %v304 = vunpack.c.l.b16 %v76
  %v305 = vunpack.c.h.b16 %v76
  %v306 = vunpack.c.l.b16 %v77
  %v307 = vunpack.c.h.b16 %v77
  %v308 = vunpack.c.l.b16 %v78
  %v309 = vunpack.c.h.b16 %v78
  %v310 = vpack.c.b16 %v184, %v182
  %v311 = vpack.c.b16 %v185, %v183
  %v312 = vpack.c.b16 %v188, %v186
  %v313 = vpack.c.b16 %v189, %v187
  %v314 = vpack.c.b16 %v192, %v190
  %v315 = vpack.c.b16 %v193, %v191
  %v316 = vpack.c.b16 %v196, %v194
  %v317 = vpack.c.b16 %v197, %v195
  %v318 = vpack.c.b16 %v200, %v198
  %v319 = vpack.c.b16 %v201, %v199
  %v320 = vpack.c.b16 %v204, %v202
  %v321 = vpack.c.b16 %v205, %v203
  %v322 = vpack.c.b16 %v208, %v206
  %v323 = vpack.c.b16 %v209, %v207
  %v324 = vpack.c.b16 %v212, %v210
  %v325 = vpack.c.b16 %v213, %v211
  %v326 = vpack.c.b16 %v216, %v214
  %v327 = vpack.c.b16 %v217, %v215
  %v328 = vpack.c.b16 %v220, %v218
  %v329 = vpack.c.b16 %v221, %v219
  %v330 = vpack.c.b16 %v224, %v222
  %v331 = vpack.c.b16 %v225, %v223
  %v332 = vpack.c.b16 %v228, %v226
  %v333 = vpack.c.b16 %v229, %v227
  %v334 = vpack.c.b16 %v232, %v230
  %v335 = vpack.c.b16 %v233, %v231
  %v336 = vpack.c.b16 %v236, %v234
  %v337 = vpack.c.b16 %v237, %v235
  %v338 = vpack.c.b16 %v240, %v238
  %v339 = vpack.c.b16 %v241, %v239
  %v340 = vpack.c.b16 %v244, %v242
  %v341 = vpack.c.b16 %v245, %v243
  %v342 = vpack.c.b16 %v248, %v246
  %v343 = vpack.c.b16 %v249, %v247
  %v344 = vpack.c.b16 %v252, %v250
  %v345 = vpack.c.b16 %v253, %v251
  %v346 = vpack.c.b16 %v256, %v254
  %v347 = vpack.c.b16 %v257, %v255
  %v348 = vpack.c.b16 %v260, %v258
  %v349 = vpack.c.b16 %v261, %v259
  %v350 = vpack.c.b16 %v264, %v262
  %v351 = vpack.c.b16 %v265, %v263
  %v352 = vpack.c.b16 %v268, %v266
  %v353 = vpack.c.b16 %v269, %v267
  %v354 = vpack.c.b16 %v272, %v270
  %v355 = vpack.c.b16 %v273, %v271
  %v356 = vpack.c.b16 %v276, %v274
  %v357 = vpack.c.b16 %v277, %v275
  %v358 = vpack.c.b16 %v280, %v278
  %v359 = vpack.c.b16 %v281, %v279
  %v360 = vpack.c.b16 %v284, %v282
  %v361 = vpack.c.b16 %v285, %v283
  %v362 = vpack.c.b16 %v288, %v286
  %v363 = vpack.c.b16 %v289, %v287
  %v364 = vpack.c.b16 %v292, %v290
  %v365 = vpack.c.b16 %v293, %v291
  %v366 = vpack.c.b16 %v296, %v294
  %v367 = vpack.c.b16 %v297, %v295
  %v368 = vpack.c.b16 %v300, %v298
  %v369 = vpack.c.b16 %v301, %v299
  %v370 = vpack.c.b16 %v304, %v302
  %v371 = vpack.c.b16 %v305, %v303
  %v372 = vpack.c.b16 %v308, %v306
  %v373 = vpack.c.b16 %v309, %v307
  %v470 = vunpack.c.l.b16 %v79
  %v471 = vunpack.c.l.b16 %v80
  %v472 = vunpack.c.l.b16 %v81
  %v473 = vunpack.c.l.b16 %v82
  %v474 = vunpack.c.l.b16 %v83
  %v475 = vunpack.c.l.b16 %v84
  %v476 = vunpack.c.l.b16 %v85
  %v477 = vunpack.c.l.b16 %v86
  %v478 = vunpack.c.l.b16 %v87
  %v479 = vunpack.c.l.b16 %v88
  %v480 = vunpack.c.l.b16 %v89
  %v481 = vunpack.c.l.b16 %v90
  %v482 = vunpack.c.l.b16 %v91
  %v483 = vunpack.c.l.b16 %v92
  %v484 = vunpack.c.l.b16 %v93
  %v485 = vunpack.c.l.b16 %v94
  %v486 = vunpack.c.l.b16 %v95
  %v487 = vunpack.c.l.b16 %v96
  %v488 = vunpack.c.l.b16 %v97
  %v489 = vunpack.c.l.b16 %v98
  %v490 = vunpack.c.l.b16 %v99
  %v491 = vunpack.c.l.b16 %v100
  %v492 = vunpack.c.l.b16 %v101
  %v493 = vunpack.c.l.b16 %v102
  %v494 = vunpack.c.l.b16 %v103
  %v495 = vunpack.c.l.b16 %v104
  %v496 = vunpack.c.l.b16 %v105
  %v497 = vunpack.c.l.b16 %v106
  %v498 = vunpack.c.l.b16 %v107
  %v499 = vunpack.c.l.b16 %v108
  %v500 = vunpack.c.l.b16 %v109
  %v501 = vunpack.c.l.b16 %v110
  %v502 = vpack.c.b16 %v471, %v470
  %v503 = vpack.c.b16 %v473, %v472
  %v504 = vpack.c.b16 %v475, %v474
  %v505 = vpack.c.b16 %v477, %v476
  %v506 = vpack.c.b16 %v479, %v478
  %v507 = vpack.c.b16 %v481, %v480
  %v508 = vpack.c.b16 %v483, %v482
  %v509 = vpack.c.b16 %v485, %v484
  %v510 = vpack.c.b16 %v487, %v486
  %v511 = vpack.c.b16 %v489, %v488
  %v512 = vpack.c.b16 %v491, %v490
  %v513 = vpack.c.b16 %v493, %v492
  %v514 = vpack.c.b16 %v495, %v494
  %v515 = vpack.c.b16 %v497, %v496
  %v516 = vpack.c.b16 %v499, %v498
  %v517 = vpack.c.b16 %v501, %v500
  %534 = vmatprep.subr.bf16.mxu0 0
  %535 = vmatpush1.bf16.msra.mxu0 %v509
  %536 = vmatprep.subr.bf16.mxu0 0
  %537 = vmatpush1.bf16.msra.mxu0 %v508
  %538 = vmatprep.subr.bf16.mxu0 0
  %539 = vmatpush1.bf16.msra.mxu0 %v507
  %540 = vmatprep.subr.bf16.mxu0 0
  %541 = vmatpush1.bf16.msra.mxu0 %v506
  %542 = vmatprep.subr.bf16.mxu0 0
  %543 = vmatpush1.bf16.msra.mxu0 %v505
  %544 = vmatprep.subr.bf16.mxu0 0
  %545 = vmatpush1.bf16.msra.mxu0 %v504
  %546 = vmatprep.subr.bf16.mxu0 0
  %547 = vmatpush1.bf16.msra.mxu0 %v503
  %548 = vmatprep.subr.bf16.mxu0 0
  %549 = vmatpush1.bf16.msra.mxu0 %v502
  %550 = vmatprep.subr.bf16.mxu0 0
  %551 = vmatpush2.bf16.msra.mxu0 %v517
  %552 = vmatprep.subr.bf16.mxu0 0
  %553 = vmatpush2.bf16.msra.mxu0 %v516
  %554 = vmatprep.subr.bf16.mxu0 0
  %555 = vmatpush2.bf16.msra.mxu0 %v515
  %556 = vmatprep.subr.bf16.mxu0 0
  %557 = vmatpush2.bf16.msra.mxu0 %v514
  %558 = vmatprep.subr.bf16.mxu0 0
  %559 = vmatpush2.bf16.msra.mxu0 %v513
  %560 = vmatprep.subr.bf16.mxu0 0
  %561 = vmatpush2.bf16.msra.mxu0 %v512
  %562 = vmatprep.subr.bf16.mxu0 0
  %563 = vmatpush2.bf16.msra.mxu0 %v511
  %564 = vmatprep.subr.bf16.mxu0 0
  %565 = vmatpush2.bf16.msra.mxu0 %v510
  %566 = vmatprep.mubr.bf16.mxu0 %v311
  %567 = vmatmul.mubr.bf16.gmra.mxu0 %v310
  %v568 = vpop.f32.mrf.mxu0
  %v569 = vadd.f32 %v116, %v568
  %v570 = vpop.f32.mrf.mxu0
  %v571 = vpop.f32.mrf.mxu0
  %v572 = vadd.f32 %v116, %v571
  %v573 = vpop.f32.mrf.mxu0
  %574 = vmatprep.mubr.bf16.mxu0 %v313
  %575 = vmatmul.mubr.bf16.gmra.mxu0 %v312
  %v576 = vpop.f32.mrf.mxu0
  %v577 = vadd.f32 %v116, %v576
  %v578 = vpop.f32.mrf.mxu0
  %v579 = vpop.f32.mrf.mxu0
  %v580 = vadd.f32 %v116, %v579
  %v581 = vpop.f32.mrf.mxu0
  %582 = vmatprep.mubr.bf16.mxu0 %v315
  %583 = vmatmul.mubr.bf16.gmra.mxu0 %v314
  %v584 = vpop.f32.mrf.mxu0
  %v585 = vadd.f32 %v116, %v584
  %v586 = vpop.f32.mrf.mxu0
  %v587 = vpop.f32.mrf.mxu0
  %v588 = vadd.f32 %v116, %v587
  %v589 = vpop.f32.mrf.mxu0
  %590 = vmatprep.mubr.bf16.mxu0 %v317
  %591 = vmatmul.mubr.bf16.gmra.mxu0 %v316
  %v592 = vpop.f32.mrf.mxu0
  %v593 = vadd.f32 %v116, %v592
  %v594 = vpop.f32.mrf.mxu0
  %v595 = vpop.f32.mrf.mxu0
  %v596 = vadd.f32 %v116, %v595
  %v597 = vpop.f32.mrf.mxu0
  %598 = vmatprep.mubr.bf16.mxu0 %v319
  %599 = vmatmul.mubr.bf16.gmra.mxu0 %v318
  %v600 = vpop.f32.mrf.mxu0
  %v601 = vadd.f32 %v116, %v600
  %v602 = vpop.f32.mrf.mxu0
  %v603 = vpop.f32.mrf.mxu0
  %v604 = vadd.f32 %v116, %v603
  %v605 = vpop.f32.mrf.mxu0
  %606 = vmatprep.mubr.bf16.mxu0 %v321
  %607 = vmatmul.mubr.bf16.gmra.mxu0 %v320
  %v608 = vpop.f32.mrf.mxu0
  %v609 = vadd.f32 %v116, %v608
  %v610 = vpop.f32.mrf.mxu0
  %v611 = vpop.f32.mrf.mxu0
  %v612 = vadd.f32 %v116, %v611
  %v613 = vpop.f32.mrf.mxu0
  %614 = vmatprep.mubr.bf16.mxu0 %v323
  %615 = vmatmul.mubr.bf16.gmra.mxu0 %v322
  %v616 = vpop.f32.mrf.mxu0
  %v617 = vadd.f32 %v116, %v616
  %v618 = vpop.f32.mrf.mxu0
  %v619 = vpop.f32.mrf.mxu0
  %v620 = vadd.f32 %v116, %v619
  %v621 = vpop.f32.mrf.mxu0
  %622 = vmatprep.mubr.bf16.mxu0 %v325
  %623 = vmatmul.mubr.bf16.gmra.mxu0 %v324
  %v624 = vpop.f32.mrf.mxu0
  %v625 = vadd.f32 %v116, %v624
  %v626 = vpop.f32.mrf.mxu0
  %v627 = vpop.f32.mrf.mxu0
  %v628 = vadd.f32 %v116, %v627
  %v629 = vpop.f32.mrf.mxu0
  %630 = vmatprep.mubr.bf16.mxu0 %v327
  %631 = vmatmul.mubr.bf16.gmra.mxu0 %v326
  %v632 = vpop.f32.mrf.mxu0
  %v633 = vadd.f32 %v116, %v632
  %v634 = vpop.f32.mrf.mxu0
  %v635 = vpop.f32.mrf.mxu0
  %v636 = vadd.f32 %v116, %v635
  %v637 = vpop.f32.mrf.mxu0
  %638 = vmatprep.mubr.bf16.mxu0 %v329
  %639 = vmatmul.mubr.bf16.gmra.mxu0 %v328
  %v640 = vpop.f32.mrf.mxu0
  %v641 = vadd.f32 %v116, %v640
  %v642 = vpop.f32.mrf.mxu0
  %v643 = vpop.f32.mrf.mxu0
  %v644 = vadd.f32 %v116, %v643
  %v645 = vpop.f32.mrf.mxu0
  %646 = vmatprep.mubr.bf16.mxu0 %v331
  %647 = vmatmul.mubr.bf16.gmra.mxu0 %v330
  %v648 = vpop.f32.mrf.mxu0
  %v649 = vadd.f32 %v116, %v648
  %v650 = vpop.f32.mrf.mxu0
  %v651 = vpop.f32.mrf.mxu0
  %v652 = vadd.f32 %v116, %v651
  %v653 = vpop.f32.mrf.mxu0
  %654 = vmatprep.mubr.bf16.mxu0 %v333
  %655 = vmatmul.mubr.bf16.gmra.mxu0 %v332
  %v656 = vpop.f32.mrf.mxu0
  %v657 = vadd.f32 %v116, %v656
  %v658 = vpop.f32.mrf.mxu0
  %v659 = vpop.f32.mrf.mxu0
  %v660 = vadd.f32 %v116, %v659
  %v661 = vpop.f32.mrf.mxu0
  %662 = vmatprep.mubr.bf16.mxu0 %v335
  %663 = vmatmul.mubr.bf16.gmra.mxu0 %v334
  %v664 = vpop.f32.mrf.mxu0
  %v665 = vadd.f32 %v116, %v664
  %v666 = vpop.f32.mrf.mxu0
  %v667 = vpop.f32.mrf.mxu0
  %v668 = vadd.f32 %v116, %v667
  %v669 = vpop.f32.mrf.mxu0
  %670 = vmatprep.mubr.bf16.mxu0 %v337
  %671 = vmatmul.mubr.bf16.gmra.mxu0 %v336
  %v672 = vpop.f32.mrf.mxu0
  %v673 = vadd.f32 %v116, %v672
  %v674 = vpop.f32.mrf.mxu0
  %v675 = vpop.f32.mrf.mxu0
  %v676 = vadd.f32 %v116, %v675
  %v677 = vpop.f32.mrf.mxu0
  %678 = vmatprep.mubr.bf16.mxu0 %v339
  %679 = vmatmul.mubr.bf16.gmra.mxu0 %v338
  %v680 = vpop.f32.mrf.mxu0
  %v681 = vadd.f32 %v116, %v680
  %v682 = vpop.f32.mrf.mxu0
  %v683 = vpop.f32.mrf.mxu0
  %v684 = vadd.f32 %v116, %v683
  %v685 = vpop.f32.mrf.mxu0
  %686 = vmatprep.mubr.bf16.mxu0 %v341
  %687 = vmatmul.mubr.bf16.gmra.mxu0 %v340
  %v688 = vpop.f32.mrf.mxu0
  %v689 = vadd.f32 %v116, %v688
  %v690 = vpop.f32.mrf.mxu0
  %v691 = vpop.f32.mrf.mxu0
  %v692 = vadd.f32 %v116, %v691
  %v693 = vpop.f32.mrf.mxu0
  %694 = vmatprep.mubr.bf16.mxu0 %v343
  %695 = vmatmul.mubr.bf16.gmra.mxu0 %v342
  %v696 = vpop.f32.mrf.mxu0
  %v697 = vadd.f32 %v116, %v696
  %v698 = vpop.f32.mrf.mxu0
  %v699 = vpop.f32.mrf.mxu0
  %v700 = vadd.f32 %v116, %v699
  %v701 = vpop.f32.mrf.mxu0
  %702 = vmatprep.mubr.bf16.mxu0 %v345
  %703 = vmatmul.mubr.bf16.gmra.mxu0 %v344
  %v704 = vpop.f32.mrf.mxu0
  %v705 = vadd.f32 %v116, %v704
  %v706 = vpop.f32.mrf.mxu0
  %v707 = vpop.f32.mrf.mxu0
  %v708 = vadd.f32 %v116, %v707
  %v709 = vpop.f32.mrf.mxu0
  %710 = vmatprep.mubr.bf16.mxu0 %v347
  %711 = vmatmul.mubr.bf16.gmra.mxu0 %v346
  %v712 = vpop.f32.mrf.mxu0
  %v713 = vadd.f32 %v116, %v712
  %v714 = vpop.f32.mrf.mxu0
  %v715 = vpop.f32.mrf.mxu0
  %v716 = vadd.f32 %v116, %v715
  %v717 = vpop.f32.mrf.mxu0
  %718 = vmatprep.mubr.bf16.mxu0 %v349
  %719 = vmatmul.mubr.bf16.gmra.mxu0 %v348
  %v720 = vpop.f32.mrf.mxu0
  %v721 = vadd.f32 %v116, %v720
  %v722 = vpop.f32.mrf.mxu0
  %v723 = vpop.f32.mrf.mxu0
  %v724 = vadd.f32 %v116, %v723
  %v725 = vpop.f32.mrf.mxu0
  %726 = vmatprep.mubr.bf16.mxu0 %v351
  %727 = vmatmul.mubr.bf16.gmra.mxu0 %v350
  %v728 = vpop.f32.mrf.mxu0
  %v729 = vadd.f32 %v116, %v728
  %v730 = vpop.f32.mrf.mxu0
  %v731 = vpop.f32.mrf.mxu0
  %v732 = vadd.f32 %v116, %v731
  %v733 = vpop.f32.mrf.mxu0
  %734 = vmatprep.mubr.bf16.mxu0 %v353
  %735 = vmatmul.mubr.bf16.gmra.mxu0 %v352
  %v736 = vpop.f32.mrf.mxu0
  %v737 = vadd.f32 %v116, %v736
  %v738 = vpop.f32.mrf.mxu0
  %v739 = vpop.f32.mrf.mxu0
  %v740 = vadd.f32 %v116, %v739
  %v741 = vpop.f32.mrf.mxu0
  %742 = vmatprep.mubr.bf16.mxu0 %v355
  %743 = vmatmul.mubr.bf16.gmra.mxu0 %v354
  %v744 = vpop.f32.mrf.mxu0
  %v745 = vadd.f32 %v116, %v744
  %v746 = vpop.f32.mrf.mxu0
  %v747 = vpop.f32.mrf.mxu0
  %v748 = vadd.f32 %v116, %v747
  %v749 = vpop.f32.mrf.mxu0
  %750 = vmatprep.mubr.bf16.mxu0 %v357
  %751 = vmatmul.mubr.bf16.gmra.mxu0 %v356
  %v752 = vpop.f32.mrf.mxu0
  %v753 = vadd.f32 %v116, %v752
  %v754 = vpop.f32.mrf.mxu0
  %v755 = vpop.f32.mrf.mxu0
  %v756 = vadd.f32 %v116, %v755
  %v757 = vpop.f32.mrf.mxu0
  %758 = vmatprep.mubr.bf16.mxu0 %v359
  %759 = vmatmul.mubr.bf16.gmra.mxu0 %v358
  %v760 = vpop.f32.mrf.mxu0
  %v761 = vadd.f32 %v116, %v760
  %v762 = vpop.f32.mrf.mxu0
  %v763 = vpop.f32.mrf.mxu0
  %v764 = vadd.f32 %v116, %v763
  %v765 = vpop.f32.mrf.mxu0
  %766 = vmatprep.mubr.bf16.mxu0 %v361
  %767 = vmatmul.mubr.bf16.gmra.mxu0 %v360
  %v768 = vpop.f32.mrf.mxu0
  %v769 = vadd.f32 %v116, %v768
  %v770 = vpop.f32.mrf.mxu0
  %v771 = vpop.f32.mrf.mxu0
  %v772 = vadd.f32 %v116, %v771
  %v773 = vpop.f32.mrf.mxu0
  %774 = vmatprep.mubr.bf16.mxu0 %v363
  %775 = vmatmul.mubr.bf16.gmra.mxu0 %v362
  %v776 = vpop.f32.mrf.mxu0
  %v777 = vadd.f32 %v116, %v776
  %v778 = vpop.f32.mrf.mxu0
  %v779 = vpop.f32.mrf.mxu0
  %v780 = vadd.f32 %v116, %v779
  %v781 = vpop.f32.mrf.mxu0
  %782 = vmatprep.mubr.bf16.mxu0 %v365
  %783 = vmatmul.mubr.bf16.gmra.mxu0 %v364
  %v784 = vpop.f32.mrf.mxu0
  %v785 = vadd.f32 %v116, %v784
  %v786 = vpop.f32.mrf.mxu0
  %v787 = vpop.f32.mrf.mxu0
  %v788 = vadd.f32 %v116, %v787
  %v789 = vpop.f32.mrf.mxu0
  %790 = vmatprep.mubr.bf16.mxu0 %v367
  %791 = vmatmul.mubr.bf16.gmra.mxu0 %v366
  %v792 = vpop.f32.mrf.mxu0
  %v793 = vadd.f32 %v116, %v792
  %v794 = vpop.f32.mrf.mxu0
  %v795 = vpop.f32.mrf.mxu0
  %v796 = vadd.f32 %v116, %v795
  %v797 = vpop.f32.mrf.mxu0
  %798 = vmatprep.mubr.bf16.mxu0 %v369
  %799 = vmatmul.mubr.bf16.gmra.mxu0 %v368
  %v800 = vpop.f32.mrf.mxu0
  %v801 = vadd.f32 %v116, %v800
  %v802 = vpop.f32.mrf.mxu0
  %v803 = vpop.f32.mrf.mxu0
  %v804 = vadd.f32 %v116, %v803
  %v805 = vpop.f32.mrf.mxu0
  %806 = vmatprep.mubr.bf16.mxu0 %v371
  %807 = vmatmul.mubr.bf16.gmra.mxu0 %v370
  %v808 = vpop.f32.mrf.mxu0
  %v809 = vadd.f32 %v116, %v808
  %v810 = vpop.f32.mrf.mxu0
  %v811 = vpop.f32.mrf.mxu0
  %v812 = vadd.f32 %v116, %v811
  %v813 = vpop.f32.mrf.mxu0
  %814 = vmatprep.mubr.bf16.mxu0 %v373
  %815 = vmatmul.mubr.bf16.gmra.mxu0 %v372
  %v816 = vpop.f32.mrf.mxu0
  %v817 = vadd.f32 %v116, %v816
  %v818 = vpop.f32.mrf.mxu0
  %v819 = vpop.f32.mrf.mxu0
  %v820 = vadd.f32 %v116, %v819
  %v821 = vpop.f32.mrf.mxu0
  %822 = vdwg.mxu0
  %v823 = vmax.f32 %v569, 0.0
  %v824 = vmax.f32 %v572, 0.0
  %v825 = vmax.f32 %v577, 0.0
  %v826 = vmax.f32 %v580, 0.0
  %v827 = vmax.f32 %v585, 0.0
  %v828 = vmax.f32 %v588, 0.0
  %v829 = vmax.f32 %v593, 0.0
  %v830 = vmax.f32 %v596, 0.0
  %v831 = vmax.f32 %v601, 0.0
  %v832 = vmax.f32 %v604, 0.0
  %v833 = vmax.f32 %v609, 0.0
  %v834 = vmax.f32 %v612, 0.0
  %v835 = vmax.f32 %v617, 0.0
  %v836 = vmax.f32 %v620, 0.0
  %v837 = vmax.f32 %v625, 0.0
  %v838 = vmax.f32 %v628, 0.0
  %v839 = vmax.f32 %v633, 0.0
  %v840 = vmax.f32 %v636, 0.0
  %v841 = vmax.f32 %v641, 0.0
  %v842 = vmax.f32 %v644, 0.0
  %v843 = vmax.f32 %v649, 0.0
  %v844 = vmax.f32 %v652, 0.0
  %v845 = vmax.f32 %v657, 0.0
  %v846 = vmax.f32 %v660, 0.0
  %v847 = vmax.f32 %v665, 0.0
  %v848 = vmax.f32 %v668, 0.0
  %v849 = vmax.f32 %v673, 0.0
  %v850 = vmax.f32 %v676, 0.0
  %v851 = vmax.f32 %v681, 0.0
  %v852 = vmax.f32 %v684, 0.0
  %v853 = vmax.f32 %v689, 0.0
  %v854 = vmax.f32 %v692, 0.0
  %v855 = vmax.f32 %v697, 0.0
  %v856 = vmax.f32 %v700, 0.0
  %v857 = vmax.f32 %v705, 0.0
  %v858 = vmax.f32 %v708, 0.0
  %v859 = vmax.f32 %v713, 0.0
  %v860 = vmax.f32 %v716, 0.0
  %v861 = vmax.f32 %v721, 0.0
  %v862 = vmax.f32 %v724, 0.0
  %v863 = vmax.f32 %v729, 0.0
  %v864 = vmax.f32 %v732, 0.0
  %v865 = vmax.f32 %v737, 0.0
  %v866 = vmax.f32 %v740, 0.0
  %v867 = vmax.f32 %v745, 0.0
  %v868 = vmax.f32 %v748, 0.0
  %v869 = vmax.f32 %v753, 0.0
  %v870 = vmax.f32 %v756, 0.0
  %v871 = vmax.f32 %v761, 0.0
  %v872 = vmax.f32 %v764, 0.0
  %v873 = vmax.f32 %v769, 0.0
  %v874 = vmax.f32 %v772, 0.0
  %v875 = vmax.f32 %v777, 0.0
  %v876 = vmax.f32 %v780, 0.0
  %v877 = vmax.f32 %v785, 0.0
  %v878 = vmax.f32 %v788, 0.0
  %v879 = vmax.f32 %v793, 0.0
  %v880 = vmax.f32 %v796, 0.0
  %v881 = vmax.f32 %v801, 0.0
  %v882 = vmax.f32 %v804, 0.0
  %v883 = vmax.f32 %v809, 0.0
  %v884 = vmax.f32 %v812, 0.0
  %v885 = vmax.f32 %v817, 0.0
  %v886 = vmax.f32 %v820, 0.0
  %887 = vst [vmem:[%s3] sm:$0xff] %v823
  %888 = vst [vmem:[%s3 + $0x8] sm:$0xff] %v824
  %889 = vst [vmem:[%s3 + $0x10] sm:$0xff] %v825
  %890 = vst [vmem:[%s3 + $0x18] sm:$0xff] %v826
  %891 = vst [vmem:[%s3 + $0x20] sm:$0xff] %v827
  %892 = vst [vmem:[%s3 + $0x28] sm:$0xff] %v828
  %893 = vst [vmem:[%s3 + $0x30] sm:$0xff] %v829
  %894 = vst [vmem:[%s3 + $0x38] sm:$0xff] %v830
  %895 = vst [vmem:[%s3 + $0x40] sm:$0xff] %v831
  %896 = vst [vmem:[%s3 + $0x48] sm:$0xff] %v832
  %897 = vst [vmem:[%s3 + $0x50] sm:$0xff] %v833
  %898 = vst [vmem:[%s3 + $0x58] sm:$0xff] %v834
  %899 = vst [vmem:[%s3 + $0x60] sm:$0xff] %v835
  %900 = vst [vmem:[%s3 + $0x68] sm:$0xff] %v836
  %901 = vst [vmem:[%s3 + $0x70] sm:$0xff] %v837
  %902 = vst [vmem:[%s3 + $0x78] sm:$0xff] %v838
  %903 = vst [vmem:[%s3 + $0x80] sm:$0xff] %v839
  %904 = vst [vmem:[%s3 + $0x88] sm:$0xff] %v840
  %905 = vst [vmem:[%s3 + $0x90] sm:$0xff] %v841
  %906 = vst [vmem:[%s3 + $0x98] sm:$0xff] %v842
  %907 = vst [vmem:[%s3 + $0xa0] sm:$0xff] %v843
  %908 = vst [vmem:[%s3 + $0xa8] sm:$0xff] %v844
  %909 = vst [vmem:[%s3 + $0xb0] sm:$0xff] %v845
  %910 = vst [vmem:[%s3 + $0xb8] sm:$0xff] %v846
  %911 = vst [vmem:[%s3 + $0xc0] sm:$0xff] %v847
  %912 = vst [vmem:[%s3 + $0xc8] sm:$0xff] %v848
  %913 = vst [vmem:[%s3 + $0xd0] sm:$0xff] %v849
  %914 = vst [vmem:[%s3 + $0xd8] sm:$0xff] %v850
  %915 = vst [vmem:[%s3 + $0xe0] sm:$0xff] %v851
  %916 = vst [vmem:[%s3 + $0xe8] sm:$0xff] %v852
  %917 = vst [vmem:[%s3 + $0xf0] sm:$0xff] %v853
  %918 = vst [vmem:[%s3 + $0xf8] sm:$0xff] %v854
  %919 = vst [vmem:[%s3 + $0x100] sm:$0xff] %v855
  %920 = vst [vmem:[%s3 + $0x108] sm:$0xff] %v856
  %921 = vst [vmem:[%s3 + $0x110] sm:$0xff] %v857
  %922 = vst [vmem:[%s3 + $0x118] sm:$0xff] %v858
  %923 = vst [vmem:[%s3 + $0x120] sm:$0xff] %v859
  %924 = vst [vmem:[%s3 + $0x128] sm:$0xff] %v860
  %925 = vst [vmem:[%s3 + $0x130] sm:$0xff] %v861
  %926 = vst [vmem:[%s3 + $0x138] sm:$0xff] %v862
  %927 = vst [vmem:[%s3 + $0x140] sm:$0xff] %v863
  %928 = vst [vmem:[%s3 + $0x148] sm:$0xff] %v864
  %929 = vst [vmem:[%s3 + $0x150] sm:$0xff] %v865
  %930 = vst [vmem:[%s3 + $0x158] sm:$0xff] %v866
  %931 = vst [vmem:[%s3 + $0x160] sm:$0xff] %v867
  %932 = vst [vmem:[%s3 + $0x168] sm:$0xff] %v868
  %933 = vst [vmem:[%s3 + $0x170] sm:$0xff] %v869
  %934 = vst [vmem:[%s3 + $0x178] sm:$0xff] %v870
  %935 = vst [vmem:[%s3 + $0x180] sm:$0xff] %v871
  %936 = vst [vmem:[%s3 + $0x188] sm:$0xff] %v872
  %937 = vst [vmem:[%s3 + $0x190] sm:$0xff] %v873
  %938 = vst [vmem:[%s3 + $0x198] sm:$0xff] %v874
  %939 = vst [vmem:[%s3 + $0x1a0] sm:$0xff] %v875
  %940 = vst [vmem:[%s3 + $0x1a8] sm:$0xff] %v876
  %941 = vst [vmem:[%s3 + $0x1b0] sm:$0xff] %v877
  %942 = vst [vmem:[%s3 + $0x1b8] sm:$0xff] %v878
  %943 = vst [vmem:[%s3 + $0x1c0] sm:$0xff] %v879
  %944 = vst [vmem:[%s3 + $0x1c8] sm:$0xff] %v880
  %945 = vst [vmem:[%s3 + $0x1d0] sm:$0xff] %v881
  %946 = vst [vmem:[%s3 + $0x1d8] sm:$0xff] %v882
  %947 = vst [vmem:[%s3 + $0x1e0] sm:$0xff] %v883
  %948 = vst [vmem:[%s3 + $0x1e8] sm:$0xff] %v884
  %949 = vst [vmem:[%s3 + $0x1f0] sm:$0xff] %v885
  %950 = vst [vmem:[%s3 + $0x1f8] sm:$0xff] %v886
  // Predicated region
  $region14: #{_crnn_forward.26} parent=0 // pred_check
    _
  $region15: #{_crnn_forward.26} parent=0 // pred_check_branch
    %952 = sbr.rel (0) target = $region17
  $region16: #{_crnn_forward.26} parent=0 // pred_region
    _
  $region17: #{_crnn_forward.26} parent=0 // pred_fallthru
    _
  // Predicated region
  $region18: #{_crnn_forward.26} parent=0 // pred_check
    _
  $region19: #{_crnn_forward.26} parent=0 // pred_check_branch
    %954 = sbr.rel (0) target = $region21
  $region20: #{_crnn_forward.26} parent=0 // pred_region
    _
  $region21: #{_crnn_forward.26} parent=0 // pred_fallthru
    _

// kernel: _crnn_forward.27
$region0: #{_crnn_forward.27}
  #allocation0 [shape = 'u32[]', space=smem, size = 0x4, offset = 0x4, fixed_abs, tag = 'smem constant byte address 0x4 - core index']
  #allocation1 [shape = 'u32[144,128]{1,0:T(1,128)}', space=vmem, size = 0x12000, scoped, tag = 'internal scratch']
  %s0 = inlined_call_operand.vmem [shape: bf16[128,384], index: 0, kind: input, shape index: {}]
  %s1 = inlined_call_operand.vmem [shape: bf16[384,128], index: 1, kind: input, shape index: {}]
  %s2 = inlined_call_operand.vmem [shape: f32[1,128], index: 2, kind: input, shape index: {}]
  %s3 = inlined_call_operand.vmem [shape: f32[128,128], index: 3, kind: output, shape index: {}]
  %s4 = sld [smem:[#allocation0]]
  $region22: #{_crnn_forward.27} parent=0
    _
  %s6 = ssub.s32 1, %s4
  %s7 = scalar_select 0, %s6, %s4
  // Predicated region
  $region2: #{_crnn_forward.27} parent=0 // pred_check
    _
  $region3: #{_crnn_forward.27} parent=0 // pred_check_branch
    %9 = sbr.rel (0) target = $region5
  $region4: #{_crnn_forward.27} parent=0 // pred_region
    _
  $region5: #{_crnn_forward.27} parent=0 // pred_fallthru
    _
  // Predicated region
  $region6: #{_crnn_forward.27} parent=0 // pred_check
    _
  $region7: #{_crnn_forward.27} parent=0 // pred_check_branch
    %11 = sbr.rel (0) target = $region9
  $region8: #{_crnn_forward.27} parent=0 // pred_region
    _
  $region9: #{_crnn_forward.27} parent=0 // pred_fallthru
    _
  // Predicated region
  $region10: #{_crnn_forward.27} parent=0 // pred_check
    _
  $region11: #{_crnn_forward.27} parent=0 // pred_check_branch
    %13 = sbr.rel (0) target = $region13
  $region12: #{_crnn_forward.27} parent=0 // pred_region
    _
  $region13: #{_crnn_forward.27} parent=0 // pred_fallthru
    _
  %v15 = vld [vmem:[%s0] sm:$0xff]
  %v16 = vld [vmem:[%s0 + $0x8] sm:$0xf]
  %v17 = vld [vmem:[%s0 + $0xc] sm:$0xff]
  %v18 = vld [vmem:[%s0 + $0x14] sm:$0xf]
  %v19 = vld [vmem:[%s0 + $0x18] sm:$0xff]
  %v20 = vld [vmem:[%s0 + $0x20] sm:$0xf]
  %v21 = vld [vmem:[%s0 + $0x24] sm:$0xff]
  %v22 = vld [vmem:[%s0 + $0x2c] sm:$0xf]
  %v23 = vld [vmem:[%s0 + $0x30] sm:$0xff]
  %v24 = vld [vmem:[%s0 + $0x38] sm:$0xf]
  %v25 = vld [vmem:[%s0 + $0x3c] sm:$0xff]
  %v26 = vld [vmem:[%s0 + $0x44] sm:$0xf]
  %v27 = vld [vmem:[%s0 + $0x48] sm:$0xff]
  %v28 = vld [vmem:[%s0 + $0x50] sm:$0xf]
  %v29 = vld [vmem:[%s0 + $0x54] sm:$0xff]
  %v30 = vld [vmem:[%s0 + $0x5c] sm:$0xf]
  %v31 = vld [vmem:[%s0 + $0x60] sm:$0xff]
  %v32 = vld [vmem:[%s0 + $0x68] sm:$0xf]
  %v33 = vld [vmem:[%s0 + $0x6c] sm:$0xff]
  %v34 = vld [vmem:[%s0 + $0x74] sm:$0xf]
  %v35 = vld [vmem:[%s0 + $0x78] sm:$0xff]
  %v36 = vld [vmem:[%s0 + $0x80] sm:$0xf]
  %v37 = vld [vmem:[%s0 + $0x84] sm:$0xff]
  %v38 = vld [vmem:[%s0 + $0x8c] sm:$0xf]
  %v39 = vld [vmem:[%s0 + $0x90] sm:$0xff]
  %v40 = vld [vmem:[%s0 + $0x98] sm:$0xf]
  %v41 = vld [vmem:[%s0 + $0x9c] sm:$0xff]
  %v42 = vld [vmem:[%s0 + $0xa4] sm:$0xf]
  %v43 = vld [vmem:[%s0 + $0xa8] sm:$0xff]
  %v44 = vld [vmem:[%s0 + $0xb0] sm:$0xf]
  %v45 = vld [vmem:[%s0 + $0xb4] sm:$0xff]
  %v46 = vld [vmem:[%s0 + $0xbc] sm:$0xf]
  %v47 = vld [vmem:[%s1] sm:$0xf]
  %v48 = vld [vmem:[%s1 + $0x4] sm:$0xf]
  %v49 = vld [vmem:[%s1 + $0x8] sm:$0xf]
  %v50 = vld [vmem:[%s1 + $0xc] sm:$0xf]
  %v51 = vld [vmem:[%s1 + $0x10] sm:$0xf]
  %v52 = vld [vmem:[%s1 + $0x14] sm:$0xf]
  %v53 = vld [vmem:[%s1 + $0x18] sm:$0xf]
  %v54 = vld [vmem:[%s1 + $0x1c] sm:$0xf]
  %v55 = vld [vmem:[%s1 + $0x20] sm:$0xf]
  %v56 = vld [vmem:[%s1 + $0x24] sm:$0xf]
  %v57 = vld [vmem:[%s1 + $0x28] sm:$0xf]
  %v58 = vld [vmem:[%s1 + $0x2c] sm:$0xf]
  %v59 = vld [vmem:[%s1 + $0x30] sm:$0xf]
  %v60 = vld [vmem:[%s1 + $0x34] sm:$0xf]
  %v61 = vld [vmem:[%s1 + $0x38] sm:$0xf]
  %v62 = vld [vmem:[%s1 + $0x3c] sm:$0xf]
  %v63 = vld [vmem:[%s1 + $0x40] sm:$0xf]
  %v64 = vld [vmem:[%s1 + $0x44] sm:$0xf]
  %v65 = vld [vmem:[%s1 + $0x48] sm:$0xf]
  %v66 = vld [vmem:[%s1 + $0x4c] sm:$0xf]
  %v67 = vld [vmem:[%s1 + $0x50] sm:$0xf]
  %v68 = vld [vmem:[%s1 + $0x54] sm:$0xf]
  %v69 = vld [vmem:[%s1 + $0x58] sm:$0xf]
  %v70 = vld [vmem:[%s1 + $0x5c] sm:$0xf]
  %v71 = vld [vmem:[%s1 + $0x60] sm:$0xf]
  %v72 = vld [vmem:[%s1 + $0x64] sm:$0xf]
  %v73 = vld [vmem:[%s1 + $0x68] sm:$0xf]
  %v74 = vld [vmem:[%s1 + $0x6c] sm:$0xf]
  %v75 = vld [vmem:[%s1 + $0x70] sm:$0xf]
  %v76 = vld [vmem:[%s1 + $0x74] sm:$0xf]
  %v77 = vld [vmem:[%s1 + $0x78] sm:$0xf]
  %v78 = vld [vmem:[%s1 + $0x7c] sm:$0xf]
  %v79 = vld [vmem:[%s1 + $0x80] sm:$0xf]
  %v80 = vld [vmem:[%s1 + $0x84] sm:$0xf]
  %v81 = vld [vmem:[%s1 + $0x88] sm:$0xf]
  %v82 = vld [vmem:[%s1 + $0x8c] sm:$0xf]
  %v83 = vld [vmem:[%s1 + $0x90] sm:$0xf]
  %v84 = vld [vmem:[%s1 + $0x94] sm:$0xf]
  %v85 = vld [vmem:[%s1 + $0x98] sm:$0xf]
  %v86 = vld [vmem:[%s1 + $0x9c] sm:$0xf]
  %v87 = vld [vmem:[%s1 + $0xa0] sm:$0xf]
  %v88 = vld [vmem:[%s1 + $0xa4] sm:$0xf]
  %v89 = vld [vmem:[%s1 + $0xa8] sm:$0xf]
  %v90 = vld [vmem:[%s1 + $0xac] sm:$0xf]
  %v91 = vld [vmem:[%s1 + $0xb0] sm:$0xf]
  %v92 = vld [vmem:[%s1 + $0xb4] sm:$0xf]
  %v93 = vld [vmem:[%s1 + $0xb8] sm:$0xf]
  %v94 = vld [vmem:[%s1 + $0xbc] sm:$0xf]
  %v95 = vld [vmem:[%s2] sm:$0x1]
  %v97 = vlaneseq
  %v98 = vshrl.u32 %v97, 7
  %v99 = vsub.s32 0, %v98
  %v100 = vrot.slane %v95, %v99
  %v134 = vunpack.c.l.b16 %v15
  %v135 = vunpack.c.h.b16 %v15
  %v136 = vunpack.c.l.b16 %v16
  %v137 = vunpack.c.l.b16 %v17
  %v138 = vunpack.c.h.b16 %v17
  %v139 = vunpack.c.l.b16 %v18
  %v140 = vunpack.c.l.b16 %v19
  %v141 = vunpack.c.h.b16 %v19
  %v142 = vunpack.c.l.b16 %v20
  %v143 = vunpack.c.l.b16 %v21
  %v144 = vunpack.c.h.b16 %v21
  %v145 = vunpack.c.l.b16 %v22
  %v146 = vunpack.c.l.b16 %v23
  %v147 = vunpack.c.h.b16 %v23
  %v148 = vunpack.c.l.b16 %v24
  %v149 = vunpack.c.l.b16 %v25
  %v150 = vunpack.c.h.b16 %v25
  %v151 = vunpack.c.l.b16 %v26
  %v152 = vunpack.c.l.b16 %v27
  %v153 = vunpack.c.h.b16 %v27
  %v154 = vunpack.c.l.b16 %v28
  %v155 = vunpack.c.l.b16 %v29
  %v156 = vunpack.c.h.b16 %v29
  %v157 = vunpack.c.l.b16 %v30
  %v158 = vunpack.c.l.b16 %v31
  %v159 = vunpack.c.h.b16 %v31
  %v160 = vunpack.c.l.b16 %v32
  %v161 = vunpack.c.l.b16 %v33
  %v162 = vunpack.c.h.b16 %v33
  %v163 = vunpack.c.l.b16 %v34
  %v164 = vunpack.c.l.b16 %v35
  %v165 = vunpack.c.h.b16 %v35
  %v166 = vunpack.c.l.b16 %v36
  %v167 = vunpack.c.l.b16 %v37
  %v168 = vunpack.c.h.b16 %v37
  %v169 = vunpack.c.l.b16 %v38
  %v170 = vunpack.c.l.b16 %v39
  %v171 = vunpack.c.h.b16 %v39
  %v172 = vunpack.c.l.b16 %v40
  %v173 = vunpack.c.l.b16 %v41
  %v174 = vunpack.c.h.b16 %v41
  %v175 = vunpack.c.l.b16 %v42
  %v176 = vunpack.c.l.b16 %v43
  %v177 = vunpack.c.h.b16 %v43
  %v178 = vunpack.c.l.b16 %v44
  %v179 = vunpack.c.l.b16 %v45
  %v180 = vunpack.c.h.b16 %v45
  %v181 = vunpack.c.l.b16 %v46
  %v182 = vpack.c.b16 %v137, %v134
  %v183 = vpack.c.b16 %v138, %v135
  %v184 = vpack.c.b16 %v139, %v136
  %v185 = vpack.c.b16 %v143, %v140
  %v186 = vpack.c.b16 %v144, %v141
  %v187 = vpack.c.b16 %v145, %v142
  %v188 = vpack.c.b16 %v149, %v146
  %v189 = vpack.c.b16 %v150, %v147
  %v190 = vpack.c.b16 %v151, %v148
  %v191 = vpack.c.b16 %v155, %v152
  %v192 = vpack.c.b16 %v156, %v153
  %v193 = vpack.c.b16 %v157, %v154
  %v194 = vpack.c.b16 %v161, %v158
  %v195 = vpack.c.b16 %v162, %v159
  %v196 = vpack.c.b16 %v163, %v160
  %v197 = vpack.c.b16 %v167, %v164
  %v198 = vpack.c.b16 %v168, %v165
  %v199 = vpack.c.b16 %v169, %v166
  %v200 = vpack.c.b16 %v173, %v170
  %v201 = vpack.c.b16 %v174, %v171
  %v202 = vpack.c.b16 %v175, %v172
  %v203 = vpack.c.b16 %v179, %v176
  %v204 = vpack.c.b16 %v180, %v177
  %v205 = vpack.c.b16 %v181, %v178
  %v278 = vunpack.c.l.b16 %v47
  %v279 = vunpack.c.l.b16 %v48
  %v280 = vunpack.c.l.b16 %v49
  %v281 = vunpack.c.l.b16 %v50
  %v282 = vunpack.c.l.b16 %v51
  %v283 = vunpack.c.l.b16 %v52
  %v284 = vunpack.c.l.b16 %v53
  %v285 = vunpack.c.l.b16 %v54
  %v286 = vunpack.c.l.b16 %v55
  %v287 = vunpack.c.l.b16 %v56
  %v288 = vunpack.c.l.b16 %v57
  %v289 = vunpack.c.l.b16 %v58
  %v290 = vunpack.c.l.b16 %v59
  %v291 = vunpack.c.l.b16 %v60
  %v292 = vunpack.c.l.b16 %v61
  %v293 = vunpack.c.l.b16 %v62
  %v294 = vunpack.c.l.b16 %v63
  %v295 = vunpack.c.l.b16 %v64
  %v296 = vunpack.c.l.b16 %v65
  %v297 = vunpack.c.l.b16 %v66
  %v298 = vunpack.c.l.b16 %v67
  %v299 = vunpack.c.l.b16 %v68
  %v300 = vunpack.c.l.b16 %v69
  %v301 = vunpack.c.l.b16 %v70
  %v302 = vunpack.c.l.b16 %v71
  %v303 = vunpack.c.l.b16 %v72
  %v304 = vunpack.c.l.b16 %v73
  %v305 = vunpack.c.l.b16 %v74
  %v306 = vunpack.c.l.b16 %v75
  %v307 = vunpack.c.l.b16 %v76
  %v308 = vunpack.c.l.b16 %v77
  %v309 = vunpack.c.l.b16 %v78
  %v310 = vunpack.c.l.b16 %v79
  %v311 = vunpack.c.l.b16 %v80
  %v312 = vunpack.c.l.b16 %v81
  %v313 = vunpack.c.l.b16 %v82
  %v314 = vunpack.c.l.b16 %v83
  %v315 = vunpack.c.l.b16 %v84
  %v316 = vunpack.c.l.b16 %v85
  %v317 = vunpack.c.l.b16 %v86
  %v318 = vunpack.c.l.b16 %v87
  %v319 = vunpack.c.l.b16 %v88
  %v320 = vunpack.c.l.b16 %v89
  %v321 = vunpack.c.l.b16 %v90
  %v322 = vunpack.c.l.b16 %v91
  %v323 = vunpack.c.l.b16 %v92
  %v324 = vunpack.c.l.b16 %v93
  %v325 = vunpack.c.l.b16 %v94
  %v326 = vpack.c.b16 %v279, %v278
  %v327 = vpack.c.b16 %v281, %v280
  %v328 = vpack.c.b16 %v283, %v282
  %v329 = vpack.c.b16 %v285, %v284
  %v330 = vpack.c.b16 %v287, %v286
  %v331 = vpack.c.b16 %v289, %v288
  %v332 = vpack.c.b16 %v291, %v290
  %v333 = vpack.c.b16 %v293, %v292
  %v334 = vpack.c.b16 %v295, %v294
  %v335 = vpack.c.b16 %v297, %v296
  %v336 = vpack.c.b16 %v299, %v298
  %v337 = vpack.c.b16 %v301, %v300
  %v338 = vpack.c.b16 %v303, %v302
  %v339 = vpack.c.b16 %v305, %v304
  %v340 = vpack.c.b16 %v307, %v306
  %v341 = vpack.c.b16 %v309, %v308
  %v342 = vpack.c.b16 %v311, %v310
  %v343 = vpack.c.b16 %v313, %v312
  %v344 = vpack.c.b16 %v315, %v314
  %v345 = vpack.c.b16 %v317, %v316
  %v346 = vpack.c.b16 %v319, %v318
  %v347 = vpack.c.b16 %v321, %v320
  %v348 = vpack.c.b16 %v323, %v322
  %v349 = vpack.c.b16 %v325, %v324
  %374 = vmatprep.subr.bf16.mxu0 0
  %375 = vmatpush1.bf16.msra.mxu0 %v333
  %376 = vmatprep.subr.bf16.mxu0 0
  %377 = vmatpush1.bf16.msra.mxu0 %v332
  %378 = vmatprep.subr.bf16.mxu0 0
  %379 = vmatpush1.bf16.msra.mxu0 %v331
  %380 = vmatprep.subr.bf16.mxu0 0
  %381 = vmatpush1.bf16.msra.mxu0 %v330
  %382 = vmatprep.subr.bf16.mxu0 0
  %383 = vmatpush1.bf16.msra.mxu0 %v329
  %384 = vmatprep.subr.bf16.mxu0 0
  %385 = vmatpush1.bf16.msra.mxu0 %v328
  %386 = vmatprep.subr.bf16.mxu0 0
  %387 = vmatpush1.bf16.msra.mxu0 %v327
  %388 = vmatprep.subr.bf16.mxu0 0
  %389 = vmatpush1.bf16.msra.mxu0 %v326
  %390 = vmatprep.subr.bf16.mxu0 0
  %391 = vmatpush2.bf16.msra.mxu0 %v341
  %392 = vmatprep.subr.bf16.mxu0 0
  %393 = vmatpush2.bf16.msra.mxu0 %v340
  %394 = vmatprep.subr.bf16.mxu0 0
  %395 = vmatpush2.bf16.msra.mxu0 %v339
  %396 = vmatprep.subr.bf16.mxu0 0
  %397 = vmatpush2.bf16.msra.mxu0 %v338
  %398 = vmatprep.subr.bf16.mxu0 0
  %399 = vmatpush2.bf16.msra.mxu0 %v337
  %400 = vmatprep.subr.bf16.mxu0 0
  %401 = vmatpush2.bf16.msra.mxu0 %v336
  %402 = vmatprep.subr.bf16.mxu0 0
  %403 = vmatpush2.bf16.msra.mxu0 %v335
  %404 = vmatprep.subr.bf16.mxu0 0
  %405 = vmatpush2.bf16.msra.mxu0 %v334
  %406 = vmatprep.mubr.bf16.mxu0 %v183
  %407 = vmatmul.mubr.bf16.gmra.mxu0 %v182
  %v408 = vpop.f32.mrf.mxu0
  %v409 = vadd.f32 %v100, %v408
  %v410 = vpop.f32.mrf.mxu0
  %v411 = vpop.f32.mrf.mxu0
  %v412 = vadd.f32 %v100, %v411
  %v413 = vpop.f32.mrf.mxu0
  %414 = vmatprep.mubr.bf16.mxu0 %v186
  %415 = vmatmul.mubr.bf16.gmra.mxu0 %v185
  %v416 = vpop.f32.mrf.mxu0
  %v417 = vadd.f32 %v100, %v416
  %v418 = vpop.f32.mrf.mxu0
  %v419 = vpop.f32.mrf.mxu0
  %v420 = vadd.f32 %v100, %v419
  %v421 = vpop.f32.mrf.mxu0
  %422 = vmatprep.mubr.bf16.mxu0 %v189
  %423 = vmatmul.mubr.bf16.gmra.mxu0 %v188
  %v424 = vpop.f32.mrf.mxu0
  %v425 = vadd.f32 %v100, %v424
  %v426 = vpop.f32.mrf.mxu0
  %v427 = vpop.f32.mrf.mxu0
  %v428 = vadd.f32 %v100, %v427
  %v429 = vpop.f32.mrf.mxu0
  %430 = vmatprep.mubr.bf16.mxu0 %v192
  %431 = vmatmul.mubr.bf16.gmra.mxu0 %v191
  %v432 = vpop.f32.mrf.mxu0
  %v433 = vadd.f32 %v100, %v432
  %v434 = vpop.f32.mrf.mxu0
  %v435 = vpop.f32.mrf.mxu0
  %v436 = vadd.f32 %v100, %v435
  %v437 = vpop.f32.mrf.mxu0
  %438 = vmatprep.mubr.bf16.mxu0 %v195
  %439 = vmatmul.mubr.bf16.gmra.mxu0 %v194
  %v440 = vpop.f32.mrf.mxu0
  %v441 = vadd.f32 %v100, %v440
  %v442 = vpop.f32.mrf.mxu0
  %v443 = vpop.f32.mrf.mxu0
  %v444 = vadd.f32 %v100, %v443
  %v445 = vpop.f32.mrf.mxu0
  %446 = vmatprep.mubr.bf16.mxu0 %v198
  %447 = vmatmul.mubr.bf16.gmra.mxu0 %v197
  %v448 = vpop.f32.mrf.mxu0
  %v449 = vadd.f32 %v100, %v448
  %v450 = vpop.f32.mrf.mxu0
  %v451 = vpop.f32.mrf.mxu0
  %v452 = vadd.f32 %v100, %v451
  %v453 = vpop.f32.mrf.mxu0
  %454 = vmatprep.mubr.bf16.mxu0 %v201
  %455 = vmatmul.mubr.bf16.gmra.mxu0 %v200
  %v456 = vpop.f32.mrf.mxu0
  %v457 = vadd.f32 %v100, %v456
  %v458 = vpop.f32.mrf.mxu0
  %v459 = vpop.f32.mrf.mxu0
  %v460 = vadd.f32 %v100, %v459
  %v461 = vpop.f32.mrf.mxu0
  %462 = vmatprep.mubr.bf16.mxu0 %v204
  %463 = vmatmul.mubr.bf16.gmra.mxu0 %v203
  %v464 = vpop.f32.mrf.mxu0
  %v465 = vadd.f32 %v100, %v464
  %v466 = vpop.f32.mrf.mxu0
  %v467 = vpop.f32.mrf.mxu0
  %v468 = vadd.f32 %v100, %v467
  %v469 = vpop.f32.mrf.mxu0
  %470 = vdwg.mxu0
  %471 = vmatprep.subr.bf16.mxu0 0
  %472 = vmatpush1.bf16.msra.mxu0 %v349
  %473 = vmatprep.subr.bf16.mxu0 0
  %474 = vmatpush1.bf16.msra.mxu0 %v348
  %475 = vmatprep.subr.bf16.mxu0 0
  %476 = vmatpush1.bf16.msra.mxu0 %v347
  %477 = vmatprep.subr.bf16.mxu0 0
  %478 = vmatpush1.bf16.msra.mxu0 %v346
  %479 = vmatprep.subr.bf16.mxu0 0
  %480 = vmatpush1.bf16.msra.mxu0 %v345
  %481 = vmatprep.subr.bf16.mxu0 0
  %482 = vmatpush1.bf16.msra.mxu0 %v344
  %483 = vmatprep.subr.bf16.mxu0 0
  %484 = vmatpush1.bf16.msra.mxu0 %v343
  %485 = vmatprep.subr.bf16.mxu0 0
  %486 = vmatpush1.bf16.msra.mxu0 %v342
  %487 = vmatprep.subr.bf16.mxu0 0
  %488 = vmatpush2.bf16.msra.mxu0 0
  %489 = vmatprep.subr.bf16.mxu0 0
  %490 = vmatpush2.bf16.msra.mxu0 0
  %491 = vmatprep.subr.bf16.mxu0 0
  %492 = vmatpush2.bf16.msra.mxu0 0
  %493 = vmatprep.subr.bf16.mxu0 0
  %494 = vmatpush2.bf16.msra.mxu0 0
  %495 = vmatprep.subr.bf16.mxu0 0
  %496 = vmatpush2.bf16.msra.mxu0 0
  %497 = vmatprep.subr.bf16.mxu0 0
  %498 = vmatpush2.bf16.msra.mxu0 0
  %499 = vmatprep.subr.bf16.mxu0 0
  %500 = vmatpush2.bf16.msra.mxu0 0
  %501 = vmatprep.subr.bf16.mxu0 0
  %502 = vmatpush2.bf16.msra.mxu0 0
  %503 = vmatprep.mubr.bf16.mxu0 0
  %504 = vmatmul.mubr.bf16.gmra.mxu0 %v184
  %v505 = vpop.f32.mrf.mxu0
  %v506 = vadd.f32 %v409, %v505
  %v507 = vpop.f32.mrf.mxu0
  %v508 = vpop.f32.mrf.mxu0
  %v509 = vadd.f32 %v412, %v508
  %v510 = vpop.f32.mrf.mxu0
  %511 = vmatprep.mubr.bf16.mxu0 0
  %512 = vmatmul.mubr.bf16.gmra.mxu0 %v187
  %v513 = vpop.f32.mrf.mxu0
  %v514 = vadd.f32 %v417, %v513
  %v515 = vpop.f32.mrf.mxu0
  %v516 = vpop.f32.mrf.mxu0
  %v517 = vadd.f32 %v420, %v516
  %v518 = vpop.f32.mrf.mxu0
  %519 = vmatprep.mubr.bf16.mxu0 0
  %520 = vmatmul.mubr.bf16.gmra.mxu0 %v190
  %v521 = vpop.f32.mrf.mxu0
  %v522 = vadd.f32 %v425, %v521
  %v523 = vpop.f32.mrf.mxu0
  %v524 = vpop.f32.mrf.mxu0
  %v525 = vadd.f32 %v428, %v524
  %v526 = vpop.f32.mrf.mxu0
  %527 = vmatprep.mubr.bf16.mxu0 0
  %528 = vmatmul.mubr.bf16.gmra.mxu0 %v193
  %v529 = vpop.f32.mrf.mxu0
  %v530 = vadd.f32 %v433, %v529
  %v531 = vpop.f32.mrf.mxu0
  %v532 = vpop.f32.mrf.mxu0
  %v533 = vadd.f32 %v436, %v532
  %v534 = vpop.f32.mrf.mxu0
  %535 = vmatprep.mubr.bf16.mxu0 0
  %536 = vmatmul.mubr.bf16.gmra.mxu0 %v196
  %v537 = vpop.f32.mrf.mxu0
  %v538 = vadd.f32 %v441, %v537
  %v539 = vpop.f32.mrf.mxu0
  %v540 = vpop.f32.mrf.mxu0
  %v541 = vadd.f32 %v444, %v540
  %v542 = vpop.f32.mrf.mxu0
  %543 = vmatprep.mubr.bf16.mxu0 0
  %544 = vmatmul.mubr.bf16.gmra.mxu0 %v199
  %v545 = vpop.f32.mrf.mxu0
  %v546 = vadd.f32 %v449, %v545
  %v547 = vpop.f32.mrf.mxu0
  %v548 = vpop.f32.mrf.mxu0
  %v549 = vadd.f32 %v452, %v548
  %v550 = vpop.f32.mrf.mxu0
  %551 = vmatprep.mubr.bf16.mxu0 0
  %552 = vmatmul.mubr.bf16.gmra.mxu0 %v202
  %v553 = vpop.f32.mrf.mxu0
  %v554 = vadd.f32 %v457, %v553
  %v555 = vpop.f32.mrf.mxu0
  %v556 = vpop.f32.mrf.mxu0
  %v557 = vadd.f32 %v460, %v556
  %v558 = vpop.f32.mrf.mxu0
  %559 = vmatprep.mubr.bf16.mxu0 0
  %560 = vmatmul.mubr.bf16.gmra.mxu0 %v205
  %v561 = vpop.f32.mrf.mxu0
  %v562 = vadd.f32 %v465, %v561
  %v563 = vpop.f32.mrf.mxu0
  %v564 = vpop.f32.mrf.mxu0
  %v565 = vadd.f32 %v468, %v564
  %v566 = vpop.f32.mrf.mxu0
  %567 = vdwg.mxu0
  %v568 = vmax.f32 %v506, 0.0
  %v569 = vmax.f32 %v509, 0.0
  %v570 = vmax.f32 %v514, 0.0
  %v571 = vmax.f32 %v517, 0.0
  %v572 = vmax.f32 %v522, 0.0
  %v573 = vmax.f32 %v525, 0.0
  %v574 = vmax.f32 %v530, 0.0
  %v575 = vmax.f32 %v533, 0.0
  %v576 = vmax.f32 %v538, 0.0
  %v577 = vmax.f32 %v541, 0.0
  %v578 = vmax.f32 %v546, 0.0
  %v579 = vmax.f32 %v549, 0.0
  %v580 = vmax.f32 %v554, 0.0
  %v581 = vmax.f32 %v557, 0.0
  %v582 = vmax.f32 %v562, 0.0
  %v583 = vmax.f32 %v565, 0.0
  %584 = vst [vmem:[%s3] sm:$0xff] %v568
  %585 = vst [vmem:[%s3 + $0x8] sm:$0xff] %v569
  %586 = vst [vmem:[%s3 + $0x10] sm:$0xff] %v570
  %587 = vst [vmem:[%s3 + $0x18] sm:$0xff] %v571
  %588 = vst [vmem:[%s3 + $0x20] sm:$0xff] %v572
  %589 = vst [vmem:[%s3 + $0x28] sm:$0xff] %v573
  %590 = vst [vmem:[%s3 + $0x30] sm:$0xff] %v574
  %591 = vst [vmem:[%s3 + $0x38] sm:$0xff] %v575
  %592 = vst [vmem:[%s3 + $0x40] sm:$0xff] %v576
  %593 = vst [vmem:[%s3 + $0x48] sm:$0xff] %v577
  %594 = vst [vmem:[%s3 + $0x50] sm:$0xff] %v578
  %595 = vst [vmem:[%s3 + $0x58] sm:$0xff] %v579
  %596 = vst [vmem:[%s3 + $0x60] sm:$0xff] %v580
  %597 = vst [vmem:[%s3 + $0x68] sm:$0xff] %v581
  %598 = vst [vmem:[%s3 + $0x70] sm:$0xff] %v582
  %599 = vst [vmem:[%s3 + $0x78] sm:$0xff] %v583
  // Predicated region
  $region14: #{_crnn_forward.27} parent=0 // pred_check
    _
  $region15: #{_crnn_forward.27} parent=0 // pred_check_branch
    %601 = sbr.rel (0) target = $region17
  $region16: #{_crnn_forward.27} parent=0 // pred_region
    _
  $region17: #{_crnn_forward.27} parent=0 // pred_fallthru
    _
  // Predicated region
  $region18: #{_crnn_forward.27} parent=0 // pred_check
    _
  $region19: #{_crnn_forward.27} parent=0 // pred_check_branch
    %603 = sbr.rel (0) target = $region21
  $region20: #{_crnn_forward.27} parent=0 // pred_region
    _
  $region21: #{_crnn_forward.27} parent=0 // pred_fallthru
    _

// kernel: _crnn_forward.29
$region0: #{_crnn_forward.29}
  #allocation0 [shape = 'u32[]', space=smem, size = 0x4, offset = 0x4, fixed_abs, tag = 'smem constant byte address 0x4 - core index']
  #allocation1 [shape = 'u32[144,128]{1,0:T(1,128)}', space=vmem, size = 0x12000, scoped, tag = 'internal scratch']
  %s0 = inlined_call_operand.vmem [shape: bf16[128,256], index: 0, kind: input, shape index: {}]
  %s1 = inlined_call_operand.vmem [shape: bf16[256,128], index: 1, kind: input, shape index: {}]
  %s2 = inlined_call_operand.vmem [shape: f32[1,128], index: 2, kind: input, shape index: {}]
  %s3 = inlined_call_operand.vmem [shape: f32[128,128], index: 3, kind: output, shape index: {}]
  %s4 = sld [smem:[#allocation0]]
  $region22: #{_crnn_forward.29} parent=0
    _
  %s6 = ssub.s32 1, %s4
  %s7 = scalar_select 0, %s6, %s4
  // Predicated region
  $region2: #{_crnn_forward.29} parent=0 // pred_check
    _
  $region3: #{_crnn_forward.29} parent=0 // pred_check_branch
    %9 = sbr.rel (0) target = $region5
  $region4: #{_crnn_forward.29} parent=0 // pred_region
    _
  $region5: #{_crnn_forward.29} parent=0 // pred_fallthru
    _
  // Predicated region
  $region6: #{_crnn_forward.29} parent=0 // pred_check
    _
  $region7: #{_crnn_forward.29} parent=0 // pred_check_branch
    %11 = sbr.rel (0) target = $region9
  $region8: #{_crnn_forward.29} parent=0 // pred_region
    _
  $region9: #{_crnn_forward.29} parent=0 // pred_fallthru
    _
  // Predicated region
  $region10: #{_crnn_forward.29} parent=0 // pred_check
    _
  $region11: #{_crnn_forward.29} parent=0 // pred_check_branch
    %13 = sbr.rel (0) target = $region13
  $region12: #{_crnn_forward.29} parent=0 // pred_region
    _
  $region13: #{_crnn_forward.29} parent=0 // pred_fallthru
    _
  %v15 = vld [vmem:[%s0] sm:$0xff]
  %v16 = vld [vmem:[%s0 + $0x8] sm:$0xff]
  %v17 = vld [vmem:[%s0 + $0x10] sm:$0xff]
  %v18 = vld [vmem:[%s0 + $0x18] sm:$0xff]
  %v19 = vld [vmem:[%s0 + $0x20] sm:$0xff]
  %v20 = vld [vmem:[%s0 + $0x28] sm:$0xff]
  %v21 = vld [vmem:[%s0 + $0x30] sm:$0xff]
  %v22 = vld [vmem:[%s0 + $0x38] sm:$0xff]
  %v23 = vld [vmem:[%s0 + $0x40] sm:$0xff]
  %v24 = vld [vmem:[%s0 + $0x48] sm:$0xff]
  %v25 = vld [vmem:[%s0 + $0x50] sm:$0xff]
  %v26 = vld [vmem:[%s0 + $0x58] sm:$0xff]
  %v27 = vld [vmem:[%s0 + $0x60] sm:$0xff]
  %v28 = vld [vmem:[%s0 + $0x68] sm:$0xff]
  %v29 = vld [vmem:[%s0 + $0x70] sm:$0xff]
  %v30 = vld [vmem:[%s0 + $0x78] sm:$0xff]
  %v31 = vld [vmem:[%s1] sm:$0xf]
  %v32 = vld [vmem:[%s1 + $0x4] sm:$0xf]
  %v33 = vld [vmem:[%s1 + $0x8] sm:$0xf]
  %v34 = vld [vmem:[%s1 + $0xc] sm:$0xf]
  %v35 = vld [vmem:[%s1 + $0x10] sm:$0xf]
  %v36 = vld [vmem:[%s1 + $0x14] sm:$0xf]
  %v37 = vld [vmem:[%s1 + $0x18] sm:$0xf]
  %v38 = vld [vmem:[%s1 + $0x1c] sm:$0xf]
  %v39 = vld [vmem:[%s1 + $0x20] sm:$0xf]
  %v40 = vld [vmem:[%s1 + $0x24] sm:$0xf]
  %v41 = vld [vmem:[%s1 + $0x28] sm:$0xf]
  %v42 = vld [vmem:[%s1 + $0x2c] sm:$0xf]
  %v43 = vld [vmem:[%s1 + $0x30] sm:$0xf]
  %v44 = vld [vmem:[%s1 + $0x34] sm:$0xf]
  %v45 = vld [vmem:[%s1 + $0x38] sm:$0xf]
  %v46 = vld [vmem:[%s1 + $0x3c] sm:$0xf]
  %v47 = vld [vmem:[%s1 + $0x40] sm:$0xf]
  %v48 = vld [vmem:[%s1 + $0x44] sm:$0xf]
  %v49 = vld [vmem:[%s1 + $0x48] sm:$0xf]
  %v50 = vld [vmem:[%s1 + $0x4c] sm:$0xf]
  %v51 = vld [vmem:[%s1 + $0x50] sm:$0xf]
  %v52 = vld [vmem:[%s1 + $0x54] sm:$0xf]
  %v53 = vld [vmem:[%s1 + $0x58] sm:$0xf]
  %v54 = vld [vmem:[%s1 + $0x5c] sm:$0xf]
  %v55 = vld [vmem:[%s1 + $0x60] sm:$0xf]
  %v56 = vld [vmem:[%s1 + $0x64] sm:$0xf]
  %v57 = vld [vmem:[%s1 + $0x68] sm:$0xf]
  %v58 = vld [vmem:[%s1 + $0x6c] sm:$0xf]
  %v59 = vld [vmem:[%s1 + $0x70] sm:$0xf]
  %v60 = vld [vmem:[%s1 + $0x74] sm:$0xf]
  %v61 = vld [vmem:[%s1 + $0x78] sm:$0xf]
  %v62 = vld [vmem:[%s1 + $0x7c] sm:$0xf]
  %v63 = vld [vmem:[%s2] sm:$0x1]
  %v65 = vlaneseq
  %v66 = vshrl.u32 %v65, 7
  %v67 = vsub.s32 0, %v66
  %v68 = vrot.slane %v63, %v67
  %v86 = vunpack.c.l.b16 %v15
  %v87 = vunpack.c.h.b16 %v15
  %v88 = vunpack.c.l.b16 %v16
  %v89 = vunpack.c.h.b16 %v16
  %v90 = vunpack.c.l.b16 %v17
  %v91 = vunpack.c.h.b16 %v17
  %v92 = vunpack.c.l.b16 %v18
  %v93 = vunpack.c.h.b16 %v18
  %v94 = vunpack.c.l.b16 %v19
  %v95 = vunpack.c.h.b16 %v19
  %v96 = vunpack.c.l.b16 %v20
  %v97 = vunpack.c.h.b16 %v20
  %v98 = vunpack.c.l.b16 %v21
  %v99 = vunpack.c.h.b16 %v21
  %v100 = vunpack.c.l.b16 %v22
  %v101 = vunpack.c.h.b16 %v22
  %v102 = vunpack.c.l.b16 %v23
  %v103 = vunpack.c.h.b16 %v23
  %v104 = vunpack.c.l.b16 %v24
  %v105 = vunpack.c.h.b16 %v24
  %v106 = vunpack.c.l.b16 %v25
  %v107 = vunpack.c.h.b16 %v25
  %v108 = vunpack.c.l.b16 %v26
  %v109 = vunpack.c.h.b16 %v26
  %v110 = vunpack.c.l.b16 %v27
  %v111 = vunpack.c.h.b16 %v27
  %v112 = vunpack.c.l.b16 %v28
  %v113 = vunpack.c.h.b16 %v28
  %v114 = vunpack.c.l.b16 %v29
  %v115 = vunpack.c.h.b16 %v29
  %v116 = vunpack.c.l.b16 %v30
  %v117 = vunpack.c.h.b16 %v30
  %v118 = vpack.c.b16 %v88, %v86
  %v119 = vpack.c.b16 %v89, %v87
  %v120 = vpack.c.b16 %v92, %v90
  %v121 = vpack.c.b16 %v93, %v91
  %v122 = vpack.c.b16 %v96, %v94
  %v123 = vpack.c.b16 %v97, %v95
  %v124 = vpack.c.b16 %v100, %v98
  %v125 = vpack.c.b16 %v101, %v99
  %v126 = vpack.c.b16 %v104, %v102
  %v127 = vpack.c.b16 %v105, %v103
  %v128 = vpack.c.b16 %v108, %v106
  %v129 = vpack.c.b16 %v109, %v107
  %v130 = vpack.c.b16 %v112, %v110
  %v131 = vpack.c.b16 %v113, %v111
  %v132 = vpack.c.b16 %v116, %v114
  %v133 = vpack.c.b16 %v117, %v115
  %v182 = vunpack.c.l.b16 %v31
  %v183 = vunpack.c.l.b16 %v32
  %v184 = vunpack.c.l.b16 %v33
  %v185 = vunpack.c.l.b16 %v34
  %v186 = vunpack.c.l.b16 %v35
  %v187 = vunpack.c.l.b16 %v36
  %v188 = vunpack.c.l.b16 %v37
  %v189 = vunpack.c.l.b16 %v38
  %v190 = vunpack.c.l.b16 %v39
  %v191 = vunpack.c.l.b16 %v40
  %v192 = vunpack.c.l.b16 %v41
  %v193 = vunpack.c.l.b16 %v42
  %v194 = vunpack.c.l.b16 %v43
  %v195 = vunpack.c.l.b16 %v44
  %v196 = vunpack.c.l.b16 %v45
  %v197 = vunpack.c.l.b16 %v46
  %v198 = vunpack.c.l.b16 %v47
  %v199 = vunpack.c.l.b16 %v48
  %v200 = vunpack.c.l.b16 %v49
  %v201 = vunpack.c.l.b16 %v50
  %v202 = vunpack.c.l.b16 %v51
  %v203 = vunpack.c.l.b16 %v52
  %v204 = vunpack.c.l.b16 %v53
  %v205 = vunpack.c.l.b16 %v54
  %v206 = vunpack.c.l.b16 %v55
  %v207 = vunpack.c.l.b16 %v56
  %v208 = vunpack.c.l.b16 %v57
  %v209 = vunpack.c.l.b16 %v58
  %v210 = vunpack.c.l.b16 %v59
  %v211 = vunpack.c.l.b16 %v60
  %v212 = vunpack.c.l.b16 %v61
  %v213 = vunpack.c.l.b16 %v62
  %v214 = vpack.c.b16 %v183, %v182
  %v215 = vpack.c.b16 %v185, %v184
  %v216 = vpack.c.b16 %v187, %v186
  %v217 = vpack.c.b16 %v189, %v188
  %v218 = vpack.c.b16 %v191, %v190
  %v219 = vpack.c.b16 %v193, %v192
  %v220 = vpack.c.b16 %v195, %v194
  %v221 = vpack.c.b16 %v197, %v196
  %v222 = vpack.c.b16 %v199, %v198
  %v223 = vpack.c.b16 %v201, %v200
  %v224 = vpack.c.b16 %v203, %v202
  %v225 = vpack.c.b16 %v205, %v204
  %v226 = vpack.c.b16 %v207, %v206
  %v227 = vpack.c.b16 %v209, %v208
  %v228 = vpack.c.b16 %v211, %v210
  %v229 = vpack.c.b16 %v213, %v212
  %246 = vmatprep.subr.bf16.mxu0 0
  %247 = vmatpush1.bf16.msra.mxu0 %v221
  %248 = vmatprep.subr.bf16.mxu0 0
  %249 = vmatpush1.bf16.msra.mxu0 %v220
  %250 = vmatprep.subr.bf16.mxu0 0
  %251 = vmatpush1.bf16.msra.mxu0 %v219
  %252 = vmatprep.subr.bf16.mxu0 0
  %253 = vmatpush1.bf16.msra.mxu0 %v218
  %254 = vmatprep.subr.bf16.mxu0 0
  %255 = vmatpush1.bf16.msra.mxu0 %v217
  %256 = vmatprep.subr.bf16.mxu0 0
  %257 = vmatpush1.bf16.msra.mxu0 %v216
  %258 = vmatprep.subr.bf16.mxu0 0
  %259 = vmatpush1.bf16.msra.mxu0 %v215
  %260 = vmatprep.subr.bf16.mxu0 0
  %261 = vmatpush1.bf16.msra.mxu0 %v214
  %262 = vmatprep.subr.bf16.mxu0 0
  %263 = vmatpush2.bf16.msra.mxu0 %v229
  %264 = vmatprep.subr.bf16.mxu0 0
  %265 = vmatpush2.bf16.msra.mxu0 %v228
  %266 = vmatprep.subr.bf16.mxu0 0
  %267 = vmatpush2.bf16.msra.mxu0 %v227
  %268 = vmatprep.subr.bf16.mxu0 0
  %269 = vmatpush2.bf16.msra.mxu0 %v226
  %270 = vmatprep.subr.bf16.mxu0 0
  %271 = vmatpush2.bf16.msra.mxu0 %v225
  %272 = vmatprep.subr.bf16.mxu0 0
  %273 = vmatpush2.bf16.msra.mxu0 %v224
  %274 = vmatprep.subr.bf16.mxu0 0
  %275 = vmatpush2.bf16.msra.mxu0 %v223
  %276 = vmatprep.subr.bf16.mxu0 0
  %277 = vmatpush2.bf16.msra.mxu0 %v222
  %278 = vmatprep.mubr.bf16.mxu0 %v119
  %279 = vmatmul.mubr.bf16.gmra.mxu0 %v118
  %v280 = vpop.f32.mrf.mxu0
  %v281 = vadd.f32 %v68, %v280
  %v282 = vpop.f32.mrf.mxu0
  %v283 = vpop.f32.mrf.mxu0
  %v284 = vadd.f32 %v68, %v283
  %v285 = vpop.f32.mrf.mxu0
  %286 = vmatprep.mubr.bf16.mxu0 %v121
  %287 = vmatmul.mubr.bf16.gmra.mxu0 %v120
  %v288 = vpop.f32.mrf.mxu0
  %v289 = vadd.f32 %v68, %v288
  %v290 = vpop.f32.mrf.mxu0
  %v291 = vpop.f32.mrf.mxu0
  %v292 = vadd.f32 %v68, %v291
  %v293 = vpop.f32.mrf.mxu0
  %294 = vmatprep.mubr.bf16.mxu0 %v123
  %295 = vmatmul.mubr.bf16.gmra.mxu0 %v122
  %v296 = vpop.f32.mrf.mxu0
  %v297 = vadd.f32 %v68, %v296
  %v298 = vpop.f32.mrf.mxu0
  %v299 = vpop.f32.mrf.mxu0
  %v300 = vadd.f32 %v68, %v299
  %v301 = vpop.f32.mrf.mxu0
  %302 = vmatprep.mubr.bf16.mxu0 %v125
  %303 = vmatmul.mubr.bf16.gmra.mxu0 %v124
  %v304 = vpop.f32.mrf.mxu0
  %v305 = vadd.f32 %v68, %v304
  %v306 = vpop.f32.mrf.mxu0
  %v307 = vpop.f32.mrf.mxu0
  %v308 = vadd.f32 %v68, %v307
  %v309 = vpop.f32.mrf.mxu0
  %310 = vmatprep.mubr.bf16.mxu0 %v127
  %311 = vmatmul.mubr.bf16.gmra.mxu0 %v126
  %v312 = vpop.f32.mrf.mxu0
  %v313 = vadd.f32 %v68, %v312
  %v314 = vpop.f32.mrf.mxu0
  %v315 = vpop.f32.mrf.mxu0
  %v316 = vadd.f32 %v68, %v315
  %v317 = vpop.f32.mrf.mxu0
  %318 = vmatprep.mubr.bf16.mxu0 %v129
  %319 = vmatmul.mubr.bf16.gmra.mxu0 %v128
  %v320 = vpop.f32.mrf.mxu0
  %v321 = vadd.f32 %v68, %v320
  %v322 = vpop.f32.mrf.mxu0
  %v323 = vpop.f32.mrf.mxu0
  %v324 = vadd.f32 %v68, %v323
  %v325 = vpop.f32.mrf.mxu0
  %326 = vmatprep.mubr.bf16.mxu0 %v131
  %327 = vmatmul.mubr.bf16.gmra.mxu0 %v130
  %v328 = vpop.f32.mrf.mxu0
  %v329 = vadd.f32 %v68, %v328
  %v330 = vpop.f32.mrf.mxu0
  %v331 = vpop.f32.mrf.mxu0
  %v332 = vadd.f32 %v68, %v331
  %v333 = vpop.f32.mrf.mxu0
  %334 = vmatprep.mubr.bf16.mxu0 %v133
  %335 = vmatmul.mubr.bf16.gmra.mxu0 %v132
  %v336 = vpop.f32.mrf.mxu0
  %v337 = vadd.f32 %v68, %v336
  %v338 = vpop.f32.mrf.mxu0
  %v339 = vpop.f32.mrf.mxu0
  %v340 = vadd.f32 %v68, %v339
  %v341 = vpop.f32.mrf.mxu0
  %342 = vdwg.mxu0
  %v343 = vmax.f32 %v281, 0.0
  %v344 = vmax.f32 %v284, 0.0
  %v345 = vmax.f32 %v289, 0.0
  %v346 = vmax.f32 %v292, 0.0
  %v347 = vmax.f32 %v297, 0.0
  %v348 = vmax.f32 %v300, 0.0
  %v349 = vmax.f32 %v305, 0.0
  %v350 = vmax.f32 %v308, 0.0
  %v351 = vmax.f32 %v313, 0.0
  %v352 = vmax.f32 %v316, 0.0
  %v353 = vmax.f32 %v321, 0.0
  %v354 = vmax.f32 %v324, 0.0
  %v355 = vmax.f32 %v329, 0.0
  %v356 = vmax.f32 %v332, 0.0
  %v357 = vmax.f32 %v337, 0.0
  %v358 = vmax.f32 %v340, 0.0
  %359 = vst [vmem:[%s3] sm:$0xff] %v343
  %360 = vst [vmem:[%s3 + $0x8] sm:$0xff] %v344
  %361 = vst [vmem:[%s3 + $0x10] sm:$0xff] %v345
  %362 = vst [vmem:[%s3 + $0x18] sm:$0xff] %v346
  %363 = vst [vmem:[%s3 + $0x20] sm:$0xff] %v347
  %364 = vst [vmem:[%s3 + $0x28] sm:$0xff] %v348
  %365 = vst [vmem:[%s3 + $0x30] sm:$0xff] %v349
  %366 = vst [vmem:[%s3 + $0x38] sm:$0xff] %v350
  %367 = vst [vmem:[%s3 + $0x40] sm:$0xff] %v351
  %368 = vst [vmem:[%s3 + $0x48] sm:$0xff] %v352
  %369 = vst [vmem:[%s3 + $0x50] sm:$0xff] %v353
  %370 = vst [vmem:[%s3 + $0x58] sm:$0xff] %v354
  %371 = vst [vmem:[%s3 + $0x60] sm:$0xff] %v355
  %372 = vst [vmem:[%s3 + $0x68] sm:$0xff] %v356
  %373 = vst [vmem:[%s3 + $0x70] sm:$0xff] %v357
  %374 = vst [vmem:[%s3 + $0x78] sm:$0xff] %v358
  // Predicated region
  $region14: #{_crnn_forward.29} parent=0 // pred_check
    _
  $region15: #{_crnn_forward.29} parent=0 // pred_check_branch
    %376 = sbr.rel (0) target = $region17
  $region16: #{_crnn_forward.29} parent=0 // pred_region
    _
  $region17: #{_crnn_forward.29} parent=0 // pred_fallthru
    _
  // Predicated region
  $region18: #{_crnn_forward.29} parent=0 // pred_check
    _
  $region19: #{_crnn_forward.29} parent=0 // pred_check_branch
    %378 = sbr.rel (0) target = $region21
  $region20: #{_crnn_forward.29} parent=0 // pred_region
    _
  $region21: #{_crnn_forward.29} parent=0 // pred_fallthru
    _

// kernel: _crnn_forward.30
$region0: #{_crnn_forward.30}
  #allocation0 [shape = 'u32[]', space=smem, size = 0x4, offset = 0x4, fixed_abs, tag = 'smem constant byte address 0x4 - core index']
  #allocation1 [shape = 'u32[144,128]{1,0:T(1,128)}', space=vmem, size = 0x12000, scoped, tag = 'internal scratch']
  %s0 = inlined_call_operand.vmem [shape: bf16[128,256], index: 0, kind: input, shape index: {}]
  %s1 = inlined_call_operand.vmem [shape: bf16[256,128], index: 1, kind: input, shape index: {}]
  %s2 = inlined_call_operand.vmem [shape: f32[1,128], index: 2, kind: input, shape index: {}]
  %s3 = inlined_call_operand.vmem [shape: f32[128,128], index: 3, kind: output, shape index: {}]
  %s4 = sld [smem:[#allocation0]]
  $region22: #{_crnn_forward.30} parent=0
    _
  %s6 = ssub.s32 1, %s4
  %s7 = scalar_select 0, %s6, %s4
  // Predicated region
  $region2: #{_crnn_forward.30} parent=0 // pred_check
    _
  $region3: #{_crnn_forward.30} parent=0 // pred_check_branch
    %9 = sbr.rel (0) target = $region5
  $region4: #{_crnn_forward.30} parent=0 // pred_region
    _
  $region5: #{_crnn_forward.30} parent=0 // pred_fallthru
    _
  // Predicated region
  $region6: #{_crnn_forward.30} parent=0 // pred_check
    _
  $region7: #{_crnn_forward.30} parent=0 // pred_check_branch
    %11 = sbr.rel (0) target = $region9
  $region8: #{_crnn_forward.30} parent=0 // pred_region
    _
  $region9: #{_crnn_forward.30} parent=0 // pred_fallthru
    _
  // Predicated region
  $region10: #{_crnn_forward.30} parent=0 // pred_check
    _
  $region11: #{_crnn_forward.30} parent=0 // pred_check_branch
    %13 = sbr.rel (0) target = $region13
  $region12: #{_crnn_forward.30} parent=0 // pred_region
    _
  $region13: #{_crnn_forward.30} parent=0 // pred_fallthru
    _
  %v15 = vld [vmem:[%s0] sm:$0xff]
  %v16 = vld [vmem:[%s0 + $0x8] sm:$0xff]
  %v17 = vld [vmem:[%s0 + $0x10] sm:$0xff]
  %v18 = vld [vmem:[%s0 + $0x18] sm:$0xff]
  %v19 = vld [vmem:[%s0 + $0x20] sm:$0xff]
  %v20 = vld [vmem:[%s0 + $0x28] sm:$0xff]
  %v21 = vld [vmem:[%s0 + $0x30] sm:$0xff]
  %v22 = vld [vmem:[%s0 + $0x38] sm:$0xff]
  %v23 = vld [vmem:[%s0 + $0x40] sm:$0xff]
  %v24 = vld [vmem:[%s0 + $0x48] sm:$0xff]
  %v25 = vld [vmem:[%s0 + $0x50] sm:$0xff]
  %v26 = vld [vmem:[%s0 + $0x58] sm:$0xff]
  %v27 = vld [vmem:[%s0 + $0x60] sm:$0xff]
  %v28 = vld [vmem:[%s0 + $0x68] sm:$0xff]
  %v29 = vld [vmem:[%s0 + $0x70] sm:$0xff]
  %v30 = vld [vmem:[%s0 + $0x78] sm:$0xff]
  %v31 = vld [vmem:[%s1] sm:$0xf]
  %v32 = vld [vmem:[%s1 + $0x4] sm:$0xf]
  %v33 = vld [vmem:[%s1 + $0x8] sm:$0xf]
  %v34 = vld [vmem:[%s1 + $0xc] sm:$0xf]
  %v35 = vld [vmem:[%s1 + $0x10] sm:$0xf]
  %v36 = vld [vmem:[%s1 + $0x14] sm:$0xf]
  %v37 = vld [vmem:[%s1 + $0x18] sm:$0xf]
  %v38 = vld [vmem:[%s1 + $0x1c] sm:$0xf]
  %v39 = vld [vmem:[%s1 + $0x20] sm:$0xf]
  %v40 = vld [vmem:[%s1 + $0x24] sm:$0xf]
  %v41 = vld [vmem:[%s1 + $0x28] sm:$0xf]
  %v42 = vld [vmem:[%s1 + $0x2c] sm:$0xf]
  %v43 = vld [vmem:[%s1 + $0x30] sm:$0xf]
  %v44 = vld [vmem:[%s1 + $0x34] sm:$0xf]
  %v45 = vld [vmem:[%s1 + $0x38] sm:$0xf]
  %v46 = vld [vmem:[%s1 + $0x3c] sm:$0xf]
  %v47 = vld [vmem:[%s1 + $0x40] sm:$0xf]
  %v48 = vld [vmem:[%s1 + $0x44] sm:$0xf]
  %v49 = vld [vmem:[%s1 + $0x48] sm:$0xf]
  %v50 = vld [vmem:[%s1 + $0x4c] sm:$0xf]
  %v51 = vld [vmem:[%s1 + $0x50] sm:$0xf]
  %v52 = vld [vmem:[%s1 + $0x54] sm:$0xf]
  %v53 = vld [vmem:[%s1 + $0x58] sm:$0xf]
  %v54 = vld [vmem:[%s1 + $0x5c] sm:$0xf]
  %v55 = vld [vmem:[%s1 + $0x60] sm:$0xf]
  %v56 = vld [vmem:[%s1 + $0x64] sm:$0xf]
  %v57 = vld [vmem:[%s1 + $0x68] sm:$0xf]
  %v58 = vld [vmem:[%s1 + $0x6c] sm:$0xf]
  %v59 = vld [vmem:[%s1 + $0x70] sm:$0xf]
  %v60 = vld [vmem:[%s1 + $0x74] sm:$0xf]
  %v61 = vld [vmem:[%s1 + $0x78] sm:$0xf]
  %v62 = vld [vmem:[%s1 + $0x7c] sm:$0xf]
  %v63 = vld [vmem:[%s2] sm:$0x1]
  %v65 = vlaneseq
  %v66 = vshrl.u32 %v65, 7
  %v67 = vsub.s32 0, %v66
  %v68 = vrot.slane %v63, %v67
  %v86 = vunpack.c.l.b16 %v15
  %v87 = vunpack.c.h.b16 %v15
  %v88 = vunpack.c.l.b16 %v16
  %v89 = vunpack.c.h.b16 %v16
  %v90 = vunpack.c.l.b16 %v17
  %v91 = vunpack.c.h.b16 %v17
  %v92 = vunpack.c.l.b16 %v18
  %v93 = vunpack.c.h.b16 %v18
  %v94 = vunpack.c.l.b16 %v19
  %v95 = vunpack.c.h.b16 %v19
  %v96 = vunpack.c.l.b16 %v20
  %v97 = vunpack.c.h.b16 %v20
  %v98 = vunpack.c.l.b16 %v21
  %v99 = vunpack.c.h.b16 %v21
  %v100 = vunpack.c.l.b16 %v22
  %v101 = vunpack.c.h.b16 %v22
  %v102 = vunpack.c.l.b16 %v23
  %v103 = vunpack.c.h.b16 %v23
  %v104 = vunpack.c.l.b16 %v24
  %v105 = vunpack.c.h.b16 %v24
  %v106 = vunpack.c.l.b16 %v25
  %v107 = vunpack.c.h.b16 %v25
  %v108 = vunpack.c.l.b16 %v26
  %v109 = vunpack.c.h.b16 %v26
  %v110 = vunpack.c.l.b16 %v27
  %v111 = vunpack.c.h.b16 %v27
  %v112 = vunpack.c.l.b16 %v28
  %v113 = vunpack.c.h.b16 %v28
  %v114 = vunpack.c.l.b16 %v29
  %v115 = vunpack.c.h.b16 %v29
  %v116 = vunpack.c.l.b16 %v30
  %v117 = vunpack.c.h.b16 %v30
  %v118 = vpack.c.b16 %v88, %v86
  %v119 = vpack.c.b16 %v89, %v87
  %v120 = vpack.c.b16 %v92, %v90
  %v121 = vpack.c.b16 %v93, %v91
  %v122 = vpack.c.b16 %v96, %v94
  %v123 = vpack.c.b16 %v97, %v95
  %v124 = vpack.c.b16 %v100, %v98
  %v125 = vpack.c.b16 %v101, %v99
  %v126 = vpack.c.b16 %v104, %v102
  %v127 = vpack.c.b16 %v105, %v103
  %v128 = vpack.c.b16 %v108, %v106
  %v129 = vpack.c.b16 %v109, %v107
  %v130 = vpack.c.b16 %v112, %v110
  %v131 = vpack.c.b16 %v113, %v111
  %v132 = vpack.c.b16 %v116, %v114
  %v133 = vpack.c.b16 %v117, %v115
  %v182 = vunpack.c.l.b16 %v31
  %v183 = vunpack.c.l.b16 %v32
  %v184 = vunpack.c.l.b16 %v33
  %v185 = vunpack.c.l.b16 %v34
  %v186 = vunpack.c.l.b16 %v35
  %v187 = vunpack.c.l.b16 %v36
  %v188 = vunpack.c.l.b16 %v37
  %v189 = vunpack.c.l.b16 %v38
  %v190 = vunpack.c.l.b16 %v39
  %v191 = vunpack.c.l.b16 %v40
  %v192 = vunpack.c.l.b16 %v41
  %v193 = vunpack.c.l.b16 %v42
  %v194 = vunpack.c.l.b16 %v43
  %v195 = vunpack.c.l.b16 %v44
  %v196 = vunpack.c.l.b16 %v45
  %v197 = vunpack.c.l.b16 %v46
  %v198 = vunpack.c.l.b16 %v47
  %v199 = vunpack.c.l.b16 %v48
  %v200 = vunpack.c.l.b16 %v49
  %v201 = vunpack.c.l.b16 %v50
  %v202 = vunpack.c.l.b16 %v51
  %v203 = vunpack.c.l.b16 %v52
  %v204 = vunpack.c.l.b16 %v53
  %v205 = vunpack.c.l.b16 %v54
  %v206 = vunpack.c.l.b16 %v55
  %v207 = vunpack.c.l.b16 %v56
  %v208 = vunpack.c.l.b16 %v57
  %v209 = vunpack.c.l.b16 %v58
  %v210 = vunpack.c.l.b16 %v59
  %v211 = vunpack.c.l.b16 %v60
  %v212 = vunpack.c.l.b16 %v61
  %v213 = vunpack.c.l.b16 %v62
  %v214 = vpack.c.b16 %v183, %v182
  %v215 = vpack.c.b16 %v185, %v184
  %v216 = vpack.c.b16 %v187, %v186
  %v217 = vpack.c.b16 %v189, %v188
  %v218 = vpack.c.b16 %v191, %v190
  %v219 = vpack.c.b16 %v193, %v192
  %v220 = vpack.c.b16 %v195, %v194
  %v221 = vpack.c.b16 %v197, %v196
  %v222 = vpack.c.b16 %v199, %v198
  %v223 = vpack.c.b16 %v201, %v200
  %v224 = vpack.c.b16 %v203, %v202
  %v225 = vpack.c.b16 %v205, %v204
  %v226 = vpack.c.b16 %v207, %v206
  %v227 = vpack.c.b16 %v209, %v208
  %v228 = vpack.c.b16 %v211, %v210
  %v229 = vpack.c.b16 %v213, %v212
  %246 = vmatprep.subr.bf16.mxu0 0
  %247 = vmatpush1.bf16.msra.mxu0 %v221
  %248 = vmatprep.subr.bf16.mxu0 0
  %249 = vmatpush1.bf16.msra.mxu0 %v220
  %250 = vmatprep.subr.bf16.mxu0 0
  %251 = vmatpush1.bf16.msra.mxu0 %v219
  %252 = vmatprep.subr.bf16.mxu0 0
  %253 = vmatpush1.bf16.msra.mxu0 %v218
  %254 = vmatprep.subr.bf16.mxu0 0
  %255 = vmatpush1.bf16.msra.mxu0 %v217
  %256 = vmatprep.subr.bf16.mxu0 0
  %257 = vmatpush1.bf16.msra.mxu0 %v216
  %258 = vmatprep.subr.bf16.mxu0 0
  %259 = vmatpush1.bf16.msra.mxu0 %v215
  %260 = vmatprep.subr.bf16.mxu0 0
  %261 = vmatpush1.bf16.msra.mxu0 %v214
  %262 = vmatprep.subr.bf16.mxu0 0
  %263 = vmatpush2.bf16.msra.mxu0 %v229
  %264 = vmatprep.subr.bf16.mxu0 0
  %265 = vmatpush2.bf16.msra.mxu0 %v228
  %266 = vmatprep.subr.bf16.mxu0 0
  %267 = vmatpush2.bf16.msra.mxu0 %v227
  %268 = vmatprep.subr.bf16.mxu0 0
  %269 = vmatpush2.bf16.msra.mxu0 %v226
  %270 = vmatprep.subr.bf16.mxu0 0
  %271 = vmatpush2.bf16.msra.mxu0 %v225
  %272 = vmatprep.subr.bf16.mxu0 0
  %273 = vmatpush2.bf16.msra.mxu0 %v224
  %274 = vmatprep.subr.bf16.mxu0 0
  %275 = vmatpush2.bf16.msra.mxu0 %v223
  %276 = vmatprep.subr.bf16.mxu0 0
  %277 = vmatpush2.bf16.msra.mxu0 %v222
  %278 = vmatprep.mubr.bf16.mxu0 %v119
  %279 = vmatmul.mubr.bf16.gmra.mxu0 %v118
  %v280 = vpop.f32.mrf.mxu0
  %v281 = vadd.f32 %v68, %v280
  %v282 = vpop.f32.mrf.mxu0
  %v283 = vpop.f32.mrf.mxu0
  %v284 = vadd.f32 %v68, %v283
  %v285 = vpop.f32.mrf.mxu0
  %286 = vmatprep.mubr.bf16.mxu0 %v121
  %287 = vmatmul.mubr.bf16.gmra.mxu0 %v120
  %v288 = vpop.f32.mrf.mxu0
  %v289 = vadd.f32 %v68, %v288
  %v290 = vpop.f32.mrf.mxu0
  %v291 = vpop.f32.mrf.mxu0
  %v292 = vadd.f32 %v68, %v291
  %v293 = vpop.f32.mrf.mxu0
  %294 = vmatprep.mubr.bf16.mxu0 %v123
  %295 = vmatmul.mubr.bf16.gmra.mxu0 %v122
  %v296 = vpop.f32.mrf.mxu0
  %v297 = vadd.f32 %v68, %v296
  %v298 = vpop.f32.mrf.mxu0
  %v299 = vpop.f32.mrf.mxu0
  %v300 = vadd.f32 %v68, %v299
  %v301 = vpop.f32.mrf.mxu0
  %302 = vmatprep.mubr.bf16.mxu0 %v125
  %303 = vmatmul.mubr.bf16.gmra.mxu0 %v124
  %v304 = vpop.f32.mrf.mxu0
  %v305 = vadd.f32 %v68, %v304
  %v306 = vpop.f32.mrf.mxu0
  %v307 = vpop.f32.mrf.mxu0
  %v308 = vadd.f32 %v68, %v307
  %v309 = vpop.f32.mrf.mxu0
  %310 = vmatprep.mubr.bf16.mxu0 %v127
  %311 = vmatmul.mubr.bf16.gmra.mxu0 %v126
  %v312 = vpop.f32.mrf.mxu0
  %v313 = vadd.f32 %v68, %v312
  %v314 = vpop.f32.mrf.mxu0
  %v315 = vpop.f32.mrf.mxu0
  %v316 = vadd.f32 %v68, %v315
  %v317 = vpop.f32.mrf.mxu0
  %318 = vmatprep.mubr.bf16.mxu0 %v129
  %319 = vmatmul.mubr.bf16.gmra.mxu0 %v128
  %v320 = vpop.f32.mrf.mxu0
  %v321 = vadd.f32 %v68, %v320
  %v322 = vpop.f32.mrf.mxu0
  %v323 = vpop.f32.mrf.mxu0
  %v324 = vadd.f32 %v68, %v323
  %v325 = vpop.f32.mrf.mxu0
  %326 = vmatprep.mubr.bf16.mxu0 %v131
  %327 = vmatmul.mubr.bf16.gmra.mxu0 %v130
  %v328 = vpop.f32.mrf.mxu0
  %v329 = vadd.f32 %v68, %v328
  %v330 = vpop.f32.mrf.mxu0
  %v331 = vpop.f32.mrf.mxu0
  %v332 = vadd.f32 %v68, %v331
  %v333 = vpop.f32.mrf.mxu0
  %334 = vmatprep.mubr.bf16.mxu0 %v133
  %335 = vmatmul.mubr.bf16.gmra.mxu0 %v132
  %v336 = vpop.f32.mrf.mxu0
  %v337 = vadd.f32 %v68, %v336
  %v338 = vpop.f32.mrf.mxu0
  %v339 = vpop.f32.mrf.mxu0
  %v340 = vadd.f32 %v68, %v339
  %v341 = vpop.f32.mrf.mxu0
  %342 = vdwg.mxu0
  %343 = vst [vmem:[%s3] sm:$0xff] %v281
  %344 = vst [vmem:[%s3 + $0x8] sm:$0xff] %v284
  %345 = vst [vmem:[%s3 + $0x10] sm:$0xff] %v289
  %346 = vst [vmem:[%s3 + $0x18] sm:$0xff] %v292
  %347 = vst [vmem:[%s3 + $0x20] sm:$0xff] %v297
  %348 = vst [vmem:[%s3 + $0x28] sm:$0xff] %v300
  %349 = vst [vmem:[%s3 + $0x30] sm:$0xff] %v305
  %350 = vst [vmem:[%s3 + $0x38] sm:$0xff] %v308
  %351 = vst [vmem:[%s3 + $0x40] sm:$0xff] %v313
  %352 = vst [vmem:[%s3 + $0x48] sm:$0xff] %v316
  %353 = vst [vmem:[%s3 + $0x50] sm:$0xff] %v321
  %354 = vst [vmem:[%s3 + $0x58] sm:$0xff] %v324
  %355 = vst [vmem:[%s3 + $0x60] sm:$0xff] %v329
  %356 = vst [vmem:[%s3 + $0x68] sm:$0xff] %v332
  %357 = vst [vmem:[%s3 + $0x70] sm:$0xff] %v337
  %358 = vst [vmem:[%s3 + $0x78] sm:$0xff] %v340
  // Predicated region
  $region14: #{_crnn_forward.30} parent=0 // pred_check
    _
  $region15: #{_crnn_forward.30} parent=0 // pred_check_branch
    %360 = sbr.rel (0) target = $region17
  $region16: #{_crnn_forward.30} parent=0 // pred_region
    _
  $region17: #{_crnn_forward.30} parent=0 // pred_fallthru
    _
  // Predicated region
  $region18: #{_crnn_forward.30} parent=0 // pred_check
    _
  $region19: #{_crnn_forward.30} parent=0 // pred_check_branch
    %362 = sbr.rel (0) target = $region21
  $region20: #{_crnn_forward.30} parent=0 // pred_region
    _
  $region21: #{_crnn_forward.30} parent=0 // pred_fallthru
    _

// kernel: _crnn_forward.33
$region0: #{_crnn_forward.33}
  #allocation0 [shape = 'u32[]', space=smem, size = 0x4, offset = 0x4, fixed_abs, tag = 'smem constant byte address 0x4 - core index']
  #allocation1 [shape = 'u32[144,128]{1,0:T(1,128)}', space=vmem, size = 0x12000, scoped, tag = 'internal scratch']
  %s0 = inlined_call_operand.vmem [shape: bf16[32,256], index: 0, kind: input, shape index: {}]
  %s1 = inlined_call_operand.vmem [shape: bf16[256,128], index: 1, kind: input, shape index: {}]
  %s2 = inlined_call_operand.vmem [shape: f32[1,128], index: 2, kind: input, shape index: {}]
  %s3 = inlined_call_operand.vmem [shape: f32[32,128], index: 3, kind: output, shape index: {}]
  %s4 = sld [smem:[#allocation0]]
  $region22: #{_crnn_forward.33} parent=0
    _
  %s6 = ssub.s32 1, %s4
  %s7 = scalar_select 0, %s6, %s4
  // Predicated region
  $region2: #{_crnn_forward.33} parent=0 // pred_check
    _
  $region3: #{_crnn_forward.33} parent=0 // pred_check_branch
    %9 = sbr.rel (0) target = $region5
  $region4: #{_crnn_forward.33} parent=0 // pred_region
    _
  $region5: #{_crnn_forward.33} parent=0 // pred_fallthru
    _
  // Predicated region
  $region6: #{_crnn_forward.33} parent=0 // pred_check
    _
  $region7: #{_crnn_forward.33} parent=0 // pred_check_branch
    %11 = sbr.rel (0) target = $region9
  $region8: #{_crnn_forward.33} parent=0 // pred_region
    _
  $region9: #{_crnn_forward.33} parent=0 // pred_fallthru
    _
  // Predicated region
  $region10: #{_crnn_forward.33} parent=0 // pred_check
    _
  $region11: #{_crnn_forward.33} parent=0 // pred_check_branch
    %13 = sbr.rel (0) target = $region13
  $region12: #{_crnn_forward.33} parent=0 // pred_region
    _
  $region13: #{_crnn_forward.33} parent=0 // pred_fallthru
    _
  %v15 = vld [vmem:[%s0] sm:$0xff]
  %v16 = vld [vmem:[%s0 + $0x8] sm:$0xff]
  %v17 = vld [vmem:[%s0 + $0x10] sm:$0xff]
  %v18 = vld [vmem:[%s0 + $0x18] sm:$0xff]
  %v19 = vld [vmem:[%s1] sm:$0xf]
  %v20 = vld [vmem:[%s1 + $0x4] sm:$0xf]
  %v21 = vld [vmem:[%s1 + $0x8] sm:$0xf]
  %v22 = vld [vmem:[%s1 + $0xc] sm:$0xf]
  %v23 = vld [vmem:[%s1 + $0x10] sm:$0xf]
  %v24 = vld [vmem:[%s1 + $0x14] sm:$0xf]
  %v25 = vld [vmem:[%s1 + $0x18] sm:$0xf]
  %v26 = vld [vmem:[%s1 + $0x1c] sm:$0xf]
  %v27 = vld [vmem:[%s1 + $0x20] sm:$0xf]
  %v28 = vld [vmem:[%s1 + $0x24] sm:$0xf]
  %v29 = vld [vmem:[%s1 + $0x28] sm:$0xf]
  %v30 = vld [vmem:[%s1 + $0x2c] sm:$0xf]
  %v31 = vld [vmem:[%s1 + $0x30] sm:$0xf]
  %v32 = vld [vmem:[%s1 + $0x34] sm:$0xf]
  %v33 = vld [vmem:[%s1 + $0x38] sm:$0xf]
  %v34 = vld [vmem:[%s1 + $0x3c] sm:$0xf]
  %v35 = vld [vmem:[%s1 + $0x40] sm:$0xf]
  %v36 = vld [vmem:[%s1 + $0x44] sm:$0xf]
  %v37 = vld [vmem:[%s1 + $0x48] sm:$0xf]
  %v38 = vld [vmem:[%s1 + $0x4c] sm:$0xf]
  %v39 = vld [vmem:[%s1 + $0x50] sm:$0xf]
  %v40 = vld [vmem:[%s1 + $0x54] sm:$0xf]
  %v41 = vld [vmem:[%s1 + $0x58] sm:$0xf]
  %v42 = vld [vmem:[%s1 + $0x5c] sm:$0xf]
  %v43 = vld [vmem:[%s1 + $0x60] sm:$0xf]
  %v44 = vld [vmem:[%s1 + $0x64] sm:$0xf]
  %v45 = vld [vmem:[%s1 + $0x68] sm:$0xf]
  %v46 = vld [vmem:[%s1 + $0x6c] sm:$0xf]
  %v47 = vld [vmem:[%s1 + $0x70] sm:$0xf]
  %v48 = vld [vmem:[%s1 + $0x74] sm:$0xf]
  %v49 = vld [vmem:[%s1 + $0x78] sm:$0xf]
  %v50 = vld [vmem:[%s1 + $0x7c] sm:$0xf]
  %v51 = vld [vmem:[%s2] sm:$0x1]
  %v53 = vlaneseq
  %v54 = vshrl.u32 %v53, 7
  %v55 = vsub.s32 0, %v54
  %v56 = vrot.slane %v51, %v55
  %v62 = vunpack.c.l.b16 %v15
  %v63 = vunpack.c.h.b16 %v15
  %v64 = vunpack.c.l.b16 %v16
  %v65 = vunpack.c.h.b16 %v16
  %v66 = vunpack.c.l.b16 %v17
  %v67 = vunpack.c.h.b16 %v17
  %v68 = vunpack.c.l.b16 %v18
  %v69 = vunpack.c.h.b16 %v18
  %v70 = vpack.c.b16 %v64, %v62
  %v71 = vpack.c.b16 %v65, %v63
  %v72 = vpack.c.b16 %v68, %v66
  %v73 = vpack.c.b16 %v69, %v67
  %v110 = vunpack.c.l.b16 %v19
  %v111 = vunpack.c.l.b16 %v20
  %v112 = vunpack.c.l.b16 %v21
  %v113 = vunpack.c.l.b16 %v22
  %v114 = vunpack.c.l.b16 %v23
  %v115 = vunpack.c.l.b16 %v24
  %v116 = vunpack.c.l.b16 %v25
  %v117 = vunpack.c.l.b16 %v26
  %v118 = vunpack.c.l.b16 %v27
  %v119 = vunpack.c.l.b16 %v28
  %v120 = vunpack.c.l.b16 %v29
  %v121 = vunpack.c.l.b16 %v30
  %v122 = vunpack.c.l.b16 %v31
  %v123 = vunpack.c.l.b16 %v32
  %v124 = vunpack.c.l.b16 %v33
  %v125 = vunpack.c.l.b16 %v34
  %v126 = vunpack.c.l.b16 %v35
  %v127 = vunpack.c.l.b16 %v36
  %v128 = vunpack.c.l.b16 %v37
  %v129 = vunpack.c.l.b16 %v38
  %v130 = vunpack.c.l.b16 %v39
  %v131 = vunpack.c.l.b16 %v40
  %v132 = vunpack.c.l.b16 %v41
  %v133 = vunpack.c.l.b16 %v42
  %v134 = vunpack.c.l.b16 %v43
  %v135 = vunpack.c.l.b16 %v44
  %v136 = vunpack.c.l.b16 %v45
  %v137 = vunpack.c.l.b16 %v46
  %v138 = vunpack.c.l.b16 %v47
  %v139 = vunpack.c.l.b16 %v48
  %v140 = vunpack.c.l.b16 %v49
  %v141 = vunpack.c.l.b16 %v50
  %v142 = vpack.c.b16 %v111, %v110
  %v143 = vpack.c.b16 %v113, %v112
  %v144 = vpack.c.b16 %v115, %v114
  %v145 = vpack.c.b16 %v117, %v116
  %v146 = vpack.c.b16 %v119, %v118
  %v147 = vpack.c.b16 %v121, %v120
  %v148 = vpack.c.b16 %v123, %v122
  %v149 = vpack.c.b16 %v125, %v124
  %v150 = vpack.c.b16 %v127, %v126
  %v151 = vpack.c.b16 %v129, %v128
  %v152 = vpack.c.b16 %v131, %v130
  %v153 = vpack.c.b16 %v133, %v132
  %v154 = vpack.c.b16 %v135, %v134
  %v155 = vpack.c.b16 %v137, %v136
  %v156 = vpack.c.b16 %v139, %v138
  %v157 = vpack.c.b16 %v141, %v140
  %174 = vmatprep.subr.bf16.mxu0 0
  %175 = vmatpush1.bf16.msra.mxu0 %v149
  %176 = vmatprep.subr.bf16.mxu0 0
  %177 = vmatpush1.bf16.msra.mxu0 %v148
  %178 = vmatprep.subr.bf16.mxu0 0
  %179 = vmatpush1.bf16.msra.mxu0 %v147
  %180 = vmatprep.subr.bf16.mxu0 0
  %181 = vmatpush1.bf16.msra.mxu0 %v146
  %182 = vmatprep.subr.bf16.mxu0 0
  %183 = vmatpush1.bf16.msra.mxu0 %v145
  %184 = vmatprep.subr.bf16.mxu0 0
  %185 = vmatpush1.bf16.msra.mxu0 %v144
  %186 = vmatprep.subr.bf16.mxu0 0
  %187 = vmatpush1.bf16.msra.mxu0 %v143
  %188 = vmatprep.subr.bf16.mxu0 0
  %189 = vmatpush1.bf16.msra.mxu0 %v142
  %190 = vmatprep.subr.bf16.mxu0 0
  %191 = vmatpush2.bf16.msra.mxu0 %v157
  %192 = vmatprep.subr.bf16.mxu0 0
  %193 = vmatpush2.bf16.msra.mxu0 %v156
  %194 = vmatprep.subr.bf16.mxu0 0
  %195 = vmatpush2.bf16.msra.mxu0 %v155
  %196 = vmatprep.subr.bf16.mxu0 0
  %197 = vmatpush2.bf16.msra.mxu0 %v154
  %198 = vmatprep.subr.bf16.mxu0 0
  %199 = vmatpush2.bf16.msra.mxu0 %v153
  %200 = vmatprep.subr.bf16.mxu0 0
  %201 = vmatpush2.bf16.msra.mxu0 %v152
  %202 = vmatprep.subr.bf16.mxu0 0
  %203 = vmatpush2.bf16.msra.mxu0 %v151
  %204 = vmatprep.subr.bf16.mxu0 0
  %205 = vmatpush2.bf16.msra.mxu0 %v150
  %206 = vmatprep.mubr.bf16.mxu0 %v71
  %207 = vmatmul.mubr.bf16.gmra.mxu0 %v70
  %v208 = vpop.f32.mrf.mxu0
  %v209 = vadd.f32 %v56, %v208
  %v210 = vpop.f32.mrf.mxu0
  %v211 = vpop.f32.mrf.mxu0
  %v212 = vadd.f32 %v56, %v211
  %v213 = vpop.f32.mrf.mxu0
  %214 = vmatprep.mubr.bf16.mxu0 %v73
  %215 = vmatmul.mubr.bf16.gmra.mxu0 %v72
  %v216 = vpop.f32.mrf.mxu0
  %v217 = vadd.f32 %v56, %v216
  %v218 = vpop.f32.mrf.mxu0
  %v219 = vpop.f32.mrf.mxu0
  %v220 = vadd.f32 %v56, %v219
  %v221 = vpop.f32.mrf.mxu0
  %222 = vdwg.mxu0
  %v223 = vmax.f32 %v209, 0.0
  %v224 = vmax.f32 %v212, 0.0
  %v225 = vmax.f32 %v217, 0.0
  %v226 = vmax.f32 %v220, 0.0
  %227 = vst [vmem:[%s3] sm:$0xff] %v223
  %228 = vst [vmem:[%s3 + $0x8] sm:$0xff] %v224
  %229 = vst [vmem:[%s3 + $0x10] sm:$0xff] %v225
  %230 = vst [vmem:[%s3 + $0x18] sm:$0xff] %v226
  // Predicated region
  $region14: #{_crnn_forward.33} parent=0 // pred_check
    _
  $region15: #{_crnn_forward.33} parent=0 // pred_check_branch
    %232 = sbr.rel (0) target = $region17
  $region16: #{_crnn_forward.33} parent=0 // pred_region
    _
  $region17: #{_crnn_forward.33} parent=0 // pred_fallthru
    _
  // Predicated region
  $region18: #{_crnn_forward.33} parent=0 // pred_check
    _
  $region19: #{_crnn_forward.33} parent=0 // pred_check_branch
    %234 = sbr.rel (0) target = $region21
  $region20: #{_crnn_forward.33} parent=0 // pred_region
    _
  $region21: #{_crnn_forward.33} parent=0 // pred_fallthru
    _

// kernel: _crnn_forward.34
$region0: #{_crnn_forward.34}
  #allocation0 [shape = 'u32[]', space=smem, size = 0x4, offset = 0x4, fixed_abs, tag = 'smem constant byte address 0x4 - core index']
  #allocation1 [shape = 'u32[144,128]{1,0:T(1,128)}', space=vmem, size = 0x12000, scoped, tag = 'internal scratch']
  %s0 = inlined_call_operand.vmem [shape: bf16[32,384], index: 0, kind: input, shape index: {}]
  %s1 = inlined_call_operand.vmem [shape: bf16[384,128], index: 1, kind: input, shape index: {}]
  %s2 = inlined_call_operand.vmem [shape: f32[1,128], index: 2, kind: input, shape index: {}]
  %s3 = inlined_call_operand.vmem [shape: f32[32,128], index: 3, kind: output, shape index: {}]
  %s4 = sld [smem:[#allocation0]]
  $region22: #{_crnn_forward.34} parent=0
    _
  %s6 = ssub.s32 1, %s4
  %s7 = scalar_select 0, %s6, %s4
  // Predicated region
  $region2: #{_crnn_forward.34} parent=0 // pred_check
    _
  $region3: #{_crnn_forward.34} parent=0 // pred_check_branch
    %9 = sbr.rel (0) target = $region5
  $region4: #{_crnn_forward.34} parent=0 // pred_region
    _
  $region5: #{_crnn_forward.34} parent=0 // pred_fallthru
    _
  // Predicated region
  $region6: #{_crnn_forward.34} parent=0 // pred_check
    _
  $region7: #{_crnn_forward.34} parent=0 // pred_check_branch
    %11 = sbr.rel (0) target = $region9
  $region8: #{_crnn_forward.34} parent=0 // pred_region
    _
  $region9: #{_crnn_forward.34} parent=0 // pred_fallthru
    _
  // Predicated region
  $region10: #{_crnn_forward.34} parent=0 // pred_check
    _
  $region11: #{_crnn_forward.34} parent=0 // pred_check_branch
    %13 = sbr.rel (0) target = $region13
  $region12: #{_crnn_forward.34} parent=0 // pred_region
    _
  $region13: #{_crnn_forward.34} parent=0 // pred_fallthru
    _
  %v15 = vld [vmem:[%s0] sm:$0xff]
  %v16 = vld [vmem:[%s0 + $0x8] sm:$0xf]
  %v17 = vld [vmem:[%s0 + $0xc] sm:$0xff]
  %v18 = vld [vmem:[%s0 + $0x14] sm:$0xf]
  %v19 = vld [vmem:[%s0 + $0x18] sm:$0xff]
  %v20 = vld [vmem:[%s0 + $0x20] sm:$0xf]
  %v21 = vld [vmem:[%s0 + $0x24] sm:$0xff]
  %v22 = vld [vmem:[%s0 + $0x2c] sm:$0xf]
  %v23 = vld [vmem:[%s1] sm:$0xf]
  %v24 = vld [vmem:[%s1 + $0x4] sm:$0xf]
  %v25 = vld [vmem:[%s1 + $0x8] sm:$0xf]
  %v26 = vld [vmem:[%s1 + $0xc] sm:$0xf]
  %v27 = vld [vmem:[%s1 + $0x10] sm:$0xf]
  %v28 = vld [vmem:[%s1 + $0x14] sm:$0xf]
  %v29 = vld [vmem:[%s1 + $0x18] sm:$0xf]
  %v30 = vld [vmem:[%s1 + $0x1c] sm:$0xf]
  %v31 = vld [vmem:[%s1 + $0x20] sm:$0xf]
  %v32 = vld [vmem:[%s1 + $0x24] sm:$0xf]
  %v33 = vld [vmem:[%s1 + $0x28] sm:$0xf]
  %v34 = vld [vmem:[%s1 + $0x2c] sm:$0xf]
  %v35 = vld [vmem:[%s1 + $0x30] sm:$0xf]
  %v36 = vld [vmem:[%s1 + $0x34] sm:$0xf]
  %v37 = vld [vmem:[%s1 + $0x38] sm:$0xf]
  %v38 = vld [vmem:[%s1 + $0x3c] sm:$0xf]
  %v39 = vld [vmem:[%s1 + $0x40] sm:$0xf]
  %v40 = vld [vmem:[%s1 + $0x44] sm:$0xf]
  %v41 = vld [vmem:[%s1 + $0x48] sm:$0xf]
  %v42 = vld [vmem:[%s1 + $0x4c] sm:$0xf]
  %v43 = vld [vmem:[%s1 + $0x50] sm:$0xf]
  %v44 = vld [vmem:[%s1 + $0x54] sm:$0xf]
  %v45 = vld [vmem:[%s1 + $0x58] sm:$0xf]
  %v46 = vld [vmem:[%s1 + $0x5c] sm:$0xf]
  %v47 = vld [vmem:[%s1 + $0x60] sm:$0xf]
  %v48 = vld [vmem:[%s1 + $0x64] sm:$0xf]
  %v49 = vld [vmem:[%s1 + $0x68] sm:$0xf]
  %v50 = vld [vmem:[%s1 + $0x6c] sm:$0xf]
  %v51 = vld [vmem:[%s1 + $0x70] sm:$0xf]
  %v52 = vld [vmem:[%s1 + $0x74] sm:$0xf]
  %v53 = vld [vmem:[%s1 + $0x78] sm:$0xf]
  %v54 = vld [vmem:[%s1 + $0x7c] sm:$0xf]
  %v55 = vld [vmem:[%s1 + $0x80] sm:$0xf]
  %v56 = vld [vmem:[%s1 + $0x84] sm:$0xf]
  %v57 = vld [vmem:[%s1 + $0x88] sm:$0xf]
  %v58 = vld [vmem:[%s1 + $0x8c] sm:$0xf]
  %v59 = vld [vmem:[%s1 + $0x90] sm:$0xf]
  %v60 = vld [vmem:[%s1 + $0x94] sm:$0xf]
  %v61 = vld [vmem:[%s1 + $0x98] sm:$0xf]
  %v62 = vld [vmem:[%s1 + $0x9c] sm:$0xf]
  %v63 = vld [vmem:[%s1 + $0xa0] sm:$0xf]
  %v64 = vld [vmem:[%s1 + $0xa4] sm:$0xf]
  %v65 = vld [vmem:[%s1 + $0xa8] sm:$0xf]
  %v66 = vld [vmem:[%s1 + $0xac] sm:$0xf]
  %v67 = vld [vmem:[%s1 + $0xb0] sm:$0xf]
  %v68 = vld [vmem:[%s1 + $0xb4] sm:$0xf]
  %v69 = vld [vmem:[%s1 + $0xb8] sm:$0xf]
  %v70 = vld [vmem:[%s1 + $0xbc] sm:$0xf]
  %v71 = vld [vmem:[%s2] sm:$0x1]
  %v73 = vlaneseq
  %v74 = vshrl.u32 %v73, 7
  %v75 = vsub.s32 0, %v74
  %v76 = vrot.slane %v71, %v75
  %v86 = vunpack.c.l.b16 %v15
  %v87 = vunpack.c.h.b16 %v15
  %v88 = vunpack.c.l.b16 %v16
  %v89 = vunpack.c.l.b16 %v17
  %v90 = vunpack.c.h.b16 %v17
  %v91 = vunpack.c.l.b16 %v18
  %v92 = vunpack.c.l.b16 %v19
  %v93 = vunpack.c.h.b16 %v19
  %v94 = vunpack.c.l.b16 %v20
  %v95 = vunpack.c.l.b16 %v21
  %v96 = vunpack.c.h.b16 %v21
  %v97 = vunpack.c.l.b16 %v22
  %v98 = vpack.c.b16 %v89, %v86
  %v99 = vpack.c.b16 %v90, %v87
  %v100 = vpack.c.b16 %v91, %v88
  %v101 = vpack.c.b16 %v95, %v92
  %v102 = vpack.c.b16 %v96, %v93
  %v103 = vpack.c.b16 %v97, %v94
  %v158 = vunpack.c.l.b16 %v23
  %v159 = vunpack.c.l.b16 %v24
  %v160 = vunpack.c.l.b16 %v25
  %v161 = vunpack.c.l.b16 %v26
  %v162 = vunpack.c.l.b16 %v27
  %v163 = vunpack.c.l.b16 %v28
  %v164 = vunpack.c.l.b16 %v29
  %v165 = vunpack.c.l.b16 %v30
  %v166 = vunpack.c.l.b16 %v31
  %v167 = vunpack.c.l.b16 %v32
  %v168 = vunpack.c.l.b16 %v33
  %v169 = vunpack.c.l.b16 %v34
  %v170 = vunpack.c.l.b16 %v35
  %v171 = vunpack.c.l.b16 %v36
  %v172 = vunpack.c.l.b16 %v37
  %v173 = vunpack.c.l.b16 %v38
  %v174 = vunpack.c.l.b16 %v39
  %v175 = vunpack.c.l.b16 %v40
  %v176 = vunpack.c.l.b16 %v41
  %v177 = vunpack.c.l.b16 %v42
  %v178 = vunpack.c.l.b16 %v43
  %v179 = vunpack.c.l.b16 %v44
  %v180 = vunpack.c.l.b16 %v45
  %v181 = vunpack.c.l.b16 %v46
  %v182 = vunpack.c.l.b16 %v47
  %v183 = vunpack.c.l.b16 %v48
  %v184 = vunpack.c.l.b16 %v49
  %v185 = vunpack.c.l.b16 %v50
  %v186 = vunpack.c.l.b16 %v51
  %v187 = vunpack.c.l.b16 %v52
  %v188 = vunpack.c.l.b16 %v53
  %v189 = vunpack.c.l.b16 %v54
  %v190 = vunpack.c.l.b16 %v55
  %v191 = vunpack.c.l.b16 %v56
  %v192 = vunpack.c.l.b16 %v57
  %v193 = vunpack.c.l.b16 %v58
  %v194 = vunpack.c.l.b16 %v59
  %v195 = vunpack.c.l.b16 %v60
  %v196 = vunpack.c.l.b16 %v61
  %v197 = vunpack.c.l.b16 %v62
  %v198 = vunpack.c.l.b16 %v63
  %v199 = vunpack.c.l.b16 %v64
  %v200 = vunpack.c.l.b16 %v65
  %v201 = vunpack.c.l.b16 %v66
  %v202 = vunpack.c.l.b16 %v67
  %v203 = vunpack.c.l.b16 %v68
  %v204 = vunpack.c.l.b16 %v69
  %v205 = vunpack.c.l.b16 %v70
  %v206 = vpack.c.b16 %v159, %v158
  %v207 = vpack.c.b16 %v161, %v160
  %v208 = vpack.c.b16 %v163, %v162
  %v209 = vpack.c.b16 %v165, %v164
  %v210 = vpack.c.b16 %v167, %v166
  %v211 = vpack.c.b16 %v169, %v168
  %v212 = vpack.c.b16 %v171, %v170
  %v213 = vpack.c.b16 %v173, %v172
  %v214 = vpack.c.b16 %v175, %v174
  %v215 = vpack.c.b16 %v177, %v176
  %v216 = vpack.c.b16 %v179, %v178
  %v217 = vpack.c.b16 %v181, %v180
  %v218 = vpack.c.b16 %v183, %v182
  %v219 = vpack.c.b16 %v185, %v184
  %v220 = vpack.c.b16 %v187, %v186
  %v221 = vpack.c.b16 %v189, %v188
  %v222 = vpack.c.b16 %v191, %v190
  %v223 = vpack.c.b16 %v193, %v192
  %v224 = vpack.c.b16 %v195, %v194
  %v225 = vpack.c.b16 %v197, %v196
  %v226 = vpack.c.b16 %v199, %v198
  %v227 = vpack.c.b16 %v201, %v200
  %v228 = vpack.c.b16 %v203, %v202
  %v229 = vpack.c.b16 %v205, %v204
  %254 = vmatprep.subr.bf16.mxu0 0
  %255 = vmatpush1.bf16.msra.mxu0 %v213
  %256 = vmatprep.subr.bf16.mxu0 0
  %257 = vmatpush1.bf16.msra.mxu0 %v212
  %258 = vmatprep.subr.bf16.mxu0 0
  %259 = vmatpush1.bf16.msra.mxu0 %v211
  %260 = vmatprep.subr.bf16.mxu0 0
  %261 = vmatpush1.bf16.msra.mxu0 %v210
  %262 = vmatprep.subr.bf16.mxu0 0
  %263 = vmatpush1.bf16.msra.mxu0 %v209
  %264 = vmatprep.subr.bf16.mxu0 0
  %265 = vmatpush1.bf16.msra.mxu0 %v208
  %266 = vmatprep.subr.bf16.mxu0 0
  %267 = vmatpush1.bf16.msra.mxu0 %v207
  %268 = vmatprep.subr.bf16.mxu0 0
  %269 = vmatpush1.bf16.msra.mxu0 %v206
  %270 = vmatprep.subr.bf16.mxu0 0
  %271 = vmatpush2.bf16.msra.mxu0 %v221
  %272 = vmatprep.subr.bf16.mxu0 0
  %273 = vmatpush2.bf16.msra.mxu0 %v220
  %274 = vmatprep.subr.bf16.mxu0 0
  %275 = vmatpush2.bf16.msra.mxu0 %v219
  %276 = vmatprep.subr.bf16.mxu0 0
  %277 = vmatpush2.bf16.msra.mxu0 %v218
  %278 = vmatprep.subr.bf16.mxu0 0
  %279 = vmatpush2.bf16.msra.mxu0 %v217
  %280 = vmatprep.subr.bf16.mxu0 0
  %281 = vmatpush2.bf16.msra.mxu0 %v216
  %282 = vmatprep.subr.bf16.mxu0 0
  %283 = vmatpush2.bf16.msra.mxu0 %v215
  %284 = vmatprep.subr.bf16.mxu0 0
  %285 = vmatpush2.bf16.msra.mxu0 %v214
  %286 = vmatprep.mubr.bf16.mxu0 %v99
  %287 = vmatmul.mubr.bf16.gmra.mxu0 %v98
  %v288 = vpop.f32.mrf.mxu0
  %v289 = vadd.f32 %v76, %v288
  %v290 = vpop.f32.mrf.mxu0
  %v291 = vpop.f32.mrf.mxu0
  %v292 = vadd.f32 %v76, %v291
  %v293 = vpop.f32.mrf.mxu0
  %294 = vmatprep.mubr.bf16.mxu0 %v102
  %295 = vmatmul.mubr.bf16.gmra.mxu0 %v101
  %v296 = vpop.f32.mrf.mxu0
  %v297 = vadd.f32 %v76, %v296
  %v298 = vpop.f32.mrf.mxu0
  %v299 = vpop.f32.mrf.mxu0
  %v300 = vadd.f32 %v76, %v299
  %v301 = vpop.f32.mrf.mxu0
  %302 = vdwg.mxu0
  %303 = vmatprep.subr.bf16.mxu0 0
  %304 = vmatpush1.bf16.msra.mxu0 %v229
  %305 = vmatprep.subr.bf16.mxu0 0
  %306 = vmatpush1.bf16.msra.mxu0 %v228
  %307 = vmatprep.subr.bf16.mxu0 0
  %308 = vmatpush1.bf16.msra.mxu0 %v227
  %309 = vmatprep.subr.bf16.mxu0 0
  %310 = vmatpush1.bf16.msra.mxu0 %v226
  %311 = vmatprep.subr.bf16.mxu0 0
  %312 = vmatpush1.bf16.msra.mxu0 %v225
  %313 = vmatprep.subr.bf16.mxu0 0
  %314 = vmatpush1.bf16.msra.mxu0 %v224
  %315 = vmatprep.subr.bf16.mxu0 0
  %316 = vmatpush1.bf16.msra.mxu0 %v223
  %317 = vmatprep.subr.bf16.mxu0 0
  %318 = vmatpush1.bf16.msra.mxu0 %v222
  %319 = vmatprep.subr.bf16.mxu0 0
  %320 = vmatpush2.bf16.msra.mxu0 0
  %321 = vmatprep.subr.bf16.mxu0 0
  %322 = vmatpush2.bf16.msra.mxu0 0
  %323 = vmatprep.subr.bf16.mxu0 0
  %324 = vmatpush2.bf16.msra.mxu0 0
  %325 = vmatprep.subr.bf16.mxu0 0
  %326 = vmatpush2.bf16.msra.mxu0 0
  %327 = vmatprep.subr.bf16.mxu0 0
  %328 = vmatpush2.bf16.msra.mxu0 0
  %329 = vmatprep.subr.bf16.mxu0 0
  %330 = vmatpush2.bf16.msra.mxu0 0
  %331 = vmatprep.subr.bf16.mxu0 0
  %332 = vmatpush2.bf16.msra.mxu0 0
  %333 = vmatprep.subr.bf16.mxu0 0
  %334 = vmatpush2.bf16.msra.mxu0 0
  %335 = vmatprep.mubr.bf16.mxu0 0
  %336 = vmatmul.mubr.bf16.gmra.mxu0 %v100
  %v337 = vpop.f32.mrf.mxu0
  %v338 = vadd.f32 %v289, %v337
  %v339 = vpop.f32.mrf.mxu0
  %v340 = vpop.f32.mrf.mxu0
  %v341 = vadd.f32 %v292, %v340
  %v342 = vpop.f32.mrf.mxu0
  %343 = vmatprep.mubr.bf16.mxu0 0
  %344 = vmatmul.mubr.bf16.gmra.mxu0 %v103
  %v345 = vpop.f32.mrf.mxu0
  %v346 = vadd.f32 %v297, %v345
  %v347 = vpop.f32.mrf.mxu0
  %v348 = vpop.f32.mrf.mxu0
  %v349 = vadd.f32 %v300, %v348
  %v350 = vpop.f32.mrf.mxu0
  %351 = vdwg.mxu0
  %352 = vst [vmem:[%s3] sm:$0xff] %v338
  %353 = vst [vmem:[%s3 + $0x8] sm:$0xff] %v341
  %354 = vst [vmem:[%s3 + $0x10] sm:$0xff] %v346
  %355 = vst [vmem:[%s3 + $0x18] sm:$0xff] %v349
  // Predicated region
  $region14: #{_crnn_forward.34} parent=0 // pred_check
    _
  $region15: #{_crnn_forward.34} parent=0 // pred_check_branch
    %357 = sbr.rel (0) target = $region17
  $region16: #{_crnn_forward.34} parent=0 // pred_region
    _
  $region17: #{_crnn_forward.34} parent=0 // pred_fallthru
    _
  // Predicated region
  $region18: #{_crnn_forward.34} parent=0 // pred_check
    _
  $region19: #{_crnn_forward.34} parent=0 // pred_check_branch
    %359 = sbr.rel (0) target = $region21
  $region20: #{_crnn_forward.34} parent=0 // pred_region
    _
  $region21: #{_crnn_forward.34} parent=0 // pred_fallthru
    _

// kernel: _crnn_forward.35
$region0: #{_crnn_forward.35}
  #allocation0 [shape = 'u32[]', space=smem, size = 0x4, offset = 0x4, fixed_abs, tag = 'smem constant byte address 0x4 - core index']
  #allocation1 [shape = 'u32[144,128]{1,0:T(1,128)}', space=vmem, size = 0x12000, scoped, tag = 'internal scratch']
  %s0 = inlined_call_operand.vmem [shape: bf16[32,128], index: 0, kind: input, shape index: {}]
  %s1 = inlined_call_operand.vmem [shape: bf16[128,128], index: 1, kind: input, shape index: {}]
  %s2 = inlined_call_operand.vmem [shape: f32[1,128], index: 2, kind: input, shape index: {}]
  %s3 = inlined_call_operand.vmem [shape: f32[32,128], index: 3, kind: output, shape index: {}]
  %s4 = sld [smem:[#allocation0]]
  $region22: #{_crnn_forward.35} parent=0
    _
  %s6 = ssub.s32 1, %s4
  %s7 = scalar_select 0, %s6, %s4
  // Predicated region
  $region2: #{_crnn_forward.35} parent=0 // pred_check
    _
  $region3: #{_crnn_forward.35} parent=0 // pred_check_branch
    %9 = sbr.rel (0) target = $region5
  $region4: #{_crnn_forward.35} parent=0 // pred_region
    _
  $region5: #{_crnn_forward.35} parent=0 // pred_fallthru
    _
  // Predicated region
  $region6: #{_crnn_forward.35} parent=0 // pred_check
    _
  $region7: #{_crnn_forward.35} parent=0 // pred_check_branch
    %11 = sbr.rel (0) target = $region9
  $region8: #{_crnn_forward.35} parent=0 // pred_region
    _
  $region9: #{_crnn_forward.35} parent=0 // pred_fallthru
    _
  // Predicated region
  $region10: #{_crnn_forward.35} parent=0 // pred_check
    _
  $region11: #{_crnn_forward.35} parent=0 // pred_check_branch
    %13 = sbr.rel (0) target = $region13
  $region12: #{_crnn_forward.35} parent=0 // pred_region
    _
  $region13: #{_crnn_forward.35} parent=0 // pred_fallthru
    _
  %v15 = vld [vmem:[%s0] sm:$0xf]
  %v16 = vld [vmem:[%s0 + $0x4] sm:$0xf]
  %v17 = vld [vmem:[%s0 + $0x8] sm:$0xf]
  %v18 = vld [vmem:[%s0 + $0xc] sm:$0xf]
  %v19 = vld [vmem:[%s1] sm:$0xf]
  %v20 = vld [vmem:[%s1 + $0x4] sm:$0xf]
  %v21 = vld [vmem:[%s1 + $0x8] sm:$0xf]
  %v22 = vld [vmem:[%s1 + $0xc] sm:$0xf]
  %v23 = vld [vmem:[%s1 + $0x10] sm:$0xf]
  %v24 = vld [vmem:[%s1 + $0x14] sm:$0xf]
  %v25 = vld [vmem:[%s1 + $0x18] sm:$0xf]
  %v26 = vld [vmem:[%s1 + $0x1c] sm:$0xf]
  %v27 = vld [vmem:[%s1 + $0x20] sm:$0xf]
  %v28 = vld [vmem:[%s1 + $0x24] sm:$0xf]
  %v29 = vld [vmem:[%s1 + $0x28] sm:$0xf]
  %v30 = vld [vmem:[%s1 + $0x2c] sm:$0xf]
  %v31 = vld [vmem:[%s1 + $0x30] sm:$0xf]
  %v32 = vld [vmem:[%s1 + $0x34] sm:$0xf]
  %v33 = vld [vmem:[%s1 + $0x38] sm:$0xf]
  %v34 = vld [vmem:[%s1 + $0x3c] sm:$0xf]
  %v35 = vld [vmem:[%s2] sm:$0x1]
  %v37 = vlaneseq
  %v38 = vshrl.u32 %v37, 7
  %v39 = vsub.s32 0, %v38
  %v40 = vrot.slane %v35, %v39
  %v46 = vunpack.c.l.b16 %v15
  %v47 = vunpack.c.l.b16 %v16
  %v48 = vunpack.c.l.b16 %v17
  %v49 = vunpack.c.l.b16 %v18
  %v50 = vpack.c.b16 %v47, %v46
  %v51 = vpack.c.b16 %v49, %v48
  %v70 = vunpack.c.l.b16 %v19
  %v71 = vunpack.c.l.b16 %v20
  %v72 = vunpack.c.l.b16 %v21
  %v73 = vunpack.c.l.b16 %v22
  %v74 = vunpack.c.l.b16 %v23
  %v75 = vunpack.c.l.b16 %v24
  %v76 = vunpack.c.l.b16 %v25
  %v77 = vunpack.c.l.b16 %v26
  %v78 = vunpack.c.l.b16 %v27
  %v79 = vunpack.c.l.b16 %v28
  %v80 = vunpack.c.l.b16 %v29
  %v81 = vunpack.c.l.b16 %v30
  %v82 = vunpack.c.l.b16 %v31
  %v83 = vunpack.c.l.b16 %v32
  %v84 = vunpack.c.l.b16 %v33
  %v85 = vunpack.c.l.b16 %v34
  %v86 = vpack.c.b16 %v71, %v70
  %v87 = vpack.c.b16 %v73, %v72
  %v88 = vpack.c.b16 %v75, %v74
  %v89 = vpack.c.b16 %v77, %v76
  %v90 = vpack.c.b16 %v79, %v78
  %v91 = vpack.c.b16 %v81, %v80
  %v92 = vpack.c.b16 %v83, %v82
  %v93 = vpack.c.b16 %v85, %v84
  %102 = vmatprep.subr.bf16.mxu0 0
  %103 = vmatpush1.bf16.msra.mxu0 %v93
  %104 = vmatprep.subr.bf16.mxu0 0
  %105 = vmatpush1.bf16.msra.mxu0 %v92
  %106 = vmatprep.subr.bf16.mxu0 0
  %107 = vmatpush1.bf16.msra.mxu0 %v91
  %108 = vmatprep.subr.bf16.mxu0 0
  %109 = vmatpush1.bf16.msra.mxu0 %v90
  %110 = vmatprep.subr.bf16.mxu0 0
  %111 = vmatpush1.bf16.msra.mxu0 %v89
  %112 = vmatprep.subr.bf16.mxu0 0
  %113 = vmatpush1.bf16.msra.mxu0 %v88
  %114 = vmatprep.subr.bf16.mxu0 0
  %115 = vmatpush1.bf16.msra.mxu0 %v87
  %116 = vmatprep.subr.bf16.mxu0 0
  %117 = vmatpush1.bf16.msra.mxu0 %v86
  %118 = vmatprep.subr.bf16.mxu0 0
  %119 = vmatpush2.bf16.msra.mxu0 0
  %120 = vmatprep.subr.bf16.mxu0 0
  %121 = vmatpush2.bf16.msra.mxu0 0
  %122 = vmatprep.subr.bf16.mxu0 0
  %123 = vmatpush2.bf16.msra.mxu0 0
  %124 = vmatprep.subr.bf16.mxu0 0
  %125 = vmatpush2.bf16.msra.mxu0 0
  %126 = vmatprep.subr.bf16.mxu0 0
  %127 = vmatpush2.bf16.msra.mxu0 0
  %128 = vmatprep.subr.bf16.mxu0 0
  %129 = vmatpush2.bf16.msra.mxu0 0
  %130 = vmatprep.subr.bf16.mxu0 0
  %131 = vmatpush2.bf16.msra.mxu0 0
  %132 = vmatprep.subr.bf16.mxu0 0
  %133 = vmatpush2.bf16.msra.mxu0 0
  %134 = vmatprep.mubr.bf16.mxu0 0
  %135 = vmatmul.mubr.bf16.gmra.mxu0 %v50
  %v136 = vpop.f32.mrf.mxu0
  %v137 = vadd.f32 %v40, %v136
  %v138 = vpop.f32.mrf.mxu0
  %v139 = vpop.f32.mrf.mxu0
  %v140 = vadd.f32 %v40, %v139
  %v141 = vpop.f32.mrf.mxu0
  %142 = vmatprep.mubr.bf16.mxu0 0
  %143 = vmatmul.mubr.bf16.gmra.mxu0 %v51
  %v144 = vpop.f32.mrf.mxu0
  %v145 = vadd.f32 %v40, %v144
  %v146 = vpop.f32.mrf.mxu0
  %v147 = vpop.f32.mrf.mxu0
  %v148 = vadd.f32 %v40, %v147
  %v149 = vpop.f32.mrf.mxu0
  %150 = vdwg.mxu0
  %151 = vst [vmem:[%s3] sm:$0xff] %v137
  %152 = vst [vmem:[%s3 + $0x8] sm:$0xff] %v140
  %153 = vst [vmem:[%s3 + $0x10] sm:$0xff] %v145
  %154 = vst [vmem:[%s3 + $0x18] sm:$0xff] %v148
  // Predicated region
  $region14: #{_crnn_forward.35} parent=0 // pred_check
    _
  $region15: #{_crnn_forward.35} parent=0 // pred_check_branch
    %156 = sbr.rel (0) target = $region17
  $region16: #{_crnn_forward.35} parent=0 // pred_region
    _
  $region17: #{_crnn_forward.35} parent=0 // pred_fallthru
    _
  // Predicated region
  $region18: #{_crnn_forward.35} parent=0 // pred_check
    _
  $region19: #{_crnn_forward.35} parent=0 // pred_check_branch
    %158 = sbr.rel (0) target = $region21
  $region20: #{_crnn_forward.35} parent=0 // pred_region
    _
  $region21: #{_crnn_forward.35} parent=0 // pred_fallthru
    _

// kernel: _crnn_forward.36
$region0: #{_crnn_forward.36}
  #allocation0 [shape = 'u32[]', space=smem, size = 0x4, offset = 0x4, fixed_abs, tag = 'smem constant byte address 0x4 - core index']
  #allocation1 [shape = 'u32[144,128]{1,0:T(1,128)}', space=vmem, size = 0x12000, scoped, tag = 'internal scratch']
  %s0 = inlined_call_operand.vmem [shape: bf16[32,384], index: 0, kind: input, shape index: {}]
  %s1 = inlined_call_operand.vmem [shape: bf16[384,128], index: 1, kind: input, shape index: {}]
  %s2 = inlined_call_operand.vmem [shape: f32[1,128], index: 2, kind: input, shape index: {}]
  %s3 = inlined_call_operand.vmem [shape: f32[32,128], index: 3, kind: output, shape index: {}]
  %s4 = sld [smem:[#allocation0]]
  $region22: #{_crnn_forward.36} parent=0
    _
  %s6 = ssub.s32 1, %s4
  %s7 = scalar_select 0, %s6, %s4
  // Predicated region
  $region2: #{_crnn_forward.36} parent=0 // pred_check
    _
  $region3: #{_crnn_forward.36} parent=0 // pred_check_branch
    %9 = sbr.rel (0) target = $region5
  $region4: #{_crnn_forward.36} parent=0 // pred_region
    _
  $region5: #{_crnn_forward.36} parent=0 // pred_fallthru
    _
  // Predicated region
  $region6: #{_crnn_forward.36} parent=0 // pred_check
    _
  $region7: #{_crnn_forward.36} parent=0 // pred_check_branch
    %11 = sbr.rel (0) target = $region9
  $region8: #{_crnn_forward.36} parent=0 // pred_region
    _
  $region9: #{_crnn_forward.36} parent=0 // pred_fallthru
    _
  // Predicated region
  $region10: #{_crnn_forward.36} parent=0 // pred_check
    _
  $region11: #{_crnn_forward.36} parent=0 // pred_check_branch
    %13 = sbr.rel (0) target = $region13
  $region12: #{_crnn_forward.36} parent=0 // pred_region
    _
  $region13: #{_crnn_forward.36} parent=0 // pred_fallthru
    _
  %v15 = vld [vmem:[%s0] sm:$0xff]
  %v16 = vld [vmem:[%s0 + $0x8] sm:$0xf]
  %v17 = vld [vmem:[%s0 + $0xc] sm:$0xff]
  %v18 = vld [vmem:[%s0 + $0x14] sm:$0xf]
  %v19 = vld [vmem:[%s0 + $0x18] sm:$0xff]
  %v20 = vld [vmem:[%s0 + $0x20] sm:$0xf]
  %v21 = vld [vmem:[%s0 + $0x24] sm:$0xff]
  %v22 = vld [vmem:[%s0 + $0x2c] sm:$0xf]
  %v23 = vld [vmem:[%s1] sm:$0xf]
  %v24 = vld [vmem:[%s1 + $0x4] sm:$0xf]
  %v25 = vld [vmem:[%s1 + $0x8] sm:$0xf]
  %v26 = vld [vmem:[%s1 + $0xc] sm:$0xf]
  %v27 = vld [vmem:[%s1 + $0x10] sm:$0xf]
  %v28 = vld [vmem:[%s1 + $0x14] sm:$0xf]
  %v29 = vld [vmem:[%s1 + $0x18] sm:$0xf]
  %v30 = vld [vmem:[%s1 + $0x1c] sm:$0xf]
  %v31 = vld [vmem:[%s1 + $0x20] sm:$0xf]
  %v32 = vld [vmem:[%s1 + $0x24] sm:$0xf]
  %v33 = vld [vmem:[%s1 + $0x28] sm:$0xf]
  %v34 = vld [vmem:[%s1 + $0x2c] sm:$0xf]
  %v35 = vld [vmem:[%s1 + $0x30] sm:$0xf]
  %v36 = vld [vmem:[%s1 + $0x34] sm:$0xf]
  %v37 = vld [vmem:[%s1 + $0x38] sm:$0xf]
  %v38 = vld [vmem:[%s1 + $0x3c] sm:$0xf]
  %v39 = vld [vmem:[%s1 + $0x40] sm:$0xf]
  %v40 = vld [vmem:[%s1 + $0x44] sm:$0xf]
  %v41 = vld [vmem:[%s1 + $0x48] sm:$0xf]
  %v42 = vld [vmem:[%s1 + $0x4c] sm:$0xf]
  %v43 = vld [vmem:[%s1 + $0x50] sm:$0xf]
  %v44 = vld [vmem:[%s1 + $0x54] sm:$0xf]
  %v45 = vld [vmem:[%s1 + $0x58] sm:$0xf]
  %v46 = vld [vmem:[%s1 + $0x5c] sm:$0xf]
  %v47 = vld [vmem:[%s1 + $0x60] sm:$0xf]
  %v48 = vld [vmem:[%s1 + $0x64] sm:$0xf]
  %v49 = vld [vmem:[%s1 + $0x68] sm:$0xf]
  %v50 = vld [vmem:[%s1 + $0x6c] sm:$0xf]
  %v51 = vld [vmem:[%s1 + $0x70] sm:$0xf]
  %v52 = vld [vmem:[%s1 + $0x74] sm:$0xf]
  %v53 = vld [vmem:[%s1 + $0x78] sm:$0xf]
  %v54 = vld [vmem:[%s1 + $0x7c] sm:$0xf]
  %v55 = vld [vmem:[%s1 + $0x80] sm:$0xf]
  %v56 = vld [vmem:[%s1 + $0x84] sm:$0xf]
  %v57 = vld [vmem:[%s1 + $0x88] sm:$0xf]
  %v58 = vld [vmem:[%s1 + $0x8c] sm:$0xf]
  %v59 = vld [vmem:[%s1 + $0x90] sm:$0xf]
  %v60 = vld [vmem:[%s1 + $0x94] sm:$0xf]
  %v61 = vld [vmem:[%s1 + $0x98] sm:$0xf]
  %v62 = vld [vmem:[%s1 + $0x9c] sm:$0xf]
  %v63 = vld [vmem:[%s1 + $0xa0] sm:$0xf]
  %v64 = vld [vmem:[%s1 + $0xa4] sm:$0xf]
  %v65 = vld [vmem:[%s1 + $0xa8] sm:$0xf]
  %v66 = vld [vmem:[%s1 + $0xac] sm:$0xf]
  %v67 = vld [vmem:[%s1 + $0xb0] sm:$0xf]
  %v68 = vld [vmem:[%s1 + $0xb4] sm:$0xf]
  %v69 = vld [vmem:[%s1 + $0xb8] sm:$0xf]
  %v70 = vld [vmem:[%s1 + $0xbc] sm:$0xf]
  %v71 = vld [vmem:[%s2] sm:$0x1]
  %v73 = vlaneseq
  %v74 = vshrl.u32 %v73, 7
  %v75 = vsub.s32 0, %v74
  %v76 = vrot.slane %v71, %v75
  %v86 = vunpack.c.l.b16 %v15
  %v87 = vunpack.c.h.b16 %v15
  %v88 = vunpack.c.l.b16 %v16
  %v89 = vunpack.c.l.b16 %v17
  %v90 = vunpack.c.h.b16 %v17
  %v91 = vunpack.c.l.b16 %v18
  %v92 = vunpack.c.l.b16 %v19
  %v93 = vunpack.c.h.b16 %v19
  %v94 = vunpack.c.l.b16 %v20
  %v95 = vunpack.c.l.b16 %v21
  %v96 = vunpack.c.h.b16 %v21
  %v97 = vunpack.c.l.b16 %v22
  %v98 = vpack.c.b16 %v89, %v86
  %v99 = vpack.c.b16 %v90, %v87
  %v100 = vpack.c.b16 %v91, %v88
  %v101 = vpack.c.b16 %v95, %v92
  %v102 = vpack.c.b16 %v96, %v93
  %v103 = vpack.c.b16 %v97, %v94
  %v158 = vunpack.c.l.b16 %v23
  %v159 = vunpack.c.l.b16 %v24
  %v160 = vunpack.c.l.b16 %v25
  %v161 = vunpack.c.l.b16 %v26
  %v162 = vunpack.c.l.b16 %v27
  %v163 = vunpack.c.l.b16 %v28
  %v164 = vunpack.c.l.b16 %v29
  %v165 = vunpack.c.l.b16 %v30
  %v166 = vunpack.c.l.b16 %v31
  %v167 = vunpack.c.l.b16 %v32
  %v168 = vunpack.c.l.b16 %v33
  %v169 = vunpack.c.l.b16 %v34
  %v170 = vunpack.c.l.b16 %v35
  %v171 = vunpack.c.l.b16 %v36
  %v172 = vunpack.c.l.b16 %v37
  %v173 = vunpack.c.l.b16 %v38
  %v174 = vunpack.c.l.b16 %v39
  %v175 = vunpack.c.l.b16 %v40
  %v176 = vunpack.c.l.b16 %v41
  %v177 = vunpack.c.l.b16 %v42
  %v178 = vunpack.c.l.b16 %v43
  %v179 = vunpack.c.l.b16 %v44
  %v180 = vunpack.c.l.b16 %v45
  %v181 = vunpack.c.l.b16 %v46
  %v182 = vunpack.c.l.b16 %v47
  %v183 = vunpack.c.l.b16 %v48
  %v184 = vunpack.c.l.b16 %v49
  %v185 = vunpack.c.l.b16 %v50
  %v186 = vunpack.c.l.b16 %v51
  %v187 = vunpack.c.l.b16 %v52
  %v188 = vunpack.c.l.b16 %v53
  %v189 = vunpack.c.l.b16 %v54
  %v190 = vunpack.c.l.b16 %v55
  %v191 = vunpack.c.l.b16 %v56
  %v192 = vunpack.c.l.b16 %v57
  %v193 = vunpack.c.l.b16 %v58
  %v194 = vunpack.c.l.b16 %v59
  %v195 = vunpack.c.l.b16 %v60
  %v196 = vunpack.c.l.b16 %v61
  %v197 = vunpack.c.l.b16 %v62
  %v198 = vunpack.c.l.b16 %v63
  %v199 = vunpack.c.l.b16 %v64
  %v200 = vunpack.c.l.b16 %v65
  %v201 = vunpack.c.l.b16 %v66
  %v202 = vunpack.c.l.b16 %v67
  %v203 = vunpack.c.l.b16 %v68
  %v204 = vunpack.c.l.b16 %v69
  %v205 = vunpack.c.l.b16 %v70
  %v206 = vpack.c.b16 %v159, %v158
  %v207 = vpack.c.b16 %v161, %v160
  %v208 = vpack.c.b16 %v163, %v162
  %v209 = vpack.c.b16 %v165, %v164
  %v210 = vpack.c.b16 %v167, %v166
  %v211 = vpack.c.b16 %v169, %v168
  %v212 = vpack.c.b16 %v171, %v170
  %v213 = vpack.c.b16 %v173, %v172
  %v214 = vpack.c.b16 %v175, %v174
  %v215 = vpack.c.b16 %v177, %v176
  %v216 = vpack.c.b16 %v179, %v178
  %v217 = vpack.c.b16 %v181, %v180
  %v218 = vpack.c.b16 %v183, %v182
  %v219 = vpack.c.b16 %v185, %v184
  %v220 = vpack.c.b16 %v187, %v186
  %v221 = vpack.c.b16 %v189, %v188
  %v222 = vpack.c.b16 %v191, %v190
  %v223 = vpack.c.b16 %v193, %v192
  %v224 = vpack.c.b16 %v195, %v194
  %v225 = vpack.c.b16 %v197, %v196
  %v226 = vpack.c.b16 %v199, %v198
  %v227 = vpack.c.b16 %v201, %v200
  %v228 = vpack.c.b16 %v203, %v202
  %v229 = vpack.c.b16 %v205, %v204
  %254 = vmatprep.subr.bf16.mxu0 0
  %255 = vmatpush1.bf16.msra.mxu0 %v213
  %256 = vmatprep.subr.bf16.mxu0 0
  %257 = vmatpush1.bf16.msra.mxu0 %v212
  %258 = vmatprep.subr.bf16.mxu0 0
  %259 = vmatpush1.bf16.msra.mxu0 %v211
  %260 = vmatprep.subr.bf16.mxu0 0
  %261 = vmatpush1.bf16.msra.mxu0 %v210
  %262 = vmatprep.subr.bf16.mxu0 0
  %263 = vmatpush1.bf16.msra.mxu0 %v209
  %264 = vmatprep.subr.bf16.mxu0 0
  %265 = vmatpush1.bf16.msra.mxu0 %v208
  %266 = vmatprep.subr.bf16.mxu0 0
  %267 = vmatpush1.bf16.msra.mxu0 %v207
  %268 = vmatprep.subr.bf16.mxu0 0
  %269 = vmatpush1.bf16.msra.mxu0 %v206
  %270 = vmatprep.subr.bf16.mxu0 0
  %271 = vmatpush2.bf16.msra.mxu0 %v221
  %272 = vmatprep.subr.bf16.mxu0 0
  %273 = vmatpush2.bf16.msra.mxu0 %v220
  %274 = vmatprep.subr.bf16.mxu0 0
  %275 = vmatpush2.bf16.msra.mxu0 %v219
  %276 = vmatprep.subr.bf16.mxu0 0
  %277 = vmatpush2.bf16.msra.mxu0 %v218
  %278 = vmatprep.subr.bf16.mxu0 0
  %279 = vmatpush2.bf16.msra.mxu0 %v217
  %280 = vmatprep.subr.bf16.mxu0 0
  %281 = vmatpush2.bf16.msra.mxu0 %v216
  %282 = vmatprep.subr.bf16.mxu0 0
  %283 = vmatpush2.bf16.msra.mxu0 %v215
  %284 = vmatprep.subr.bf16.mxu0 0
  %285 = vmatpush2.bf16.msra.mxu0 %v214
  %286 = vmatprep.mubr.bf16.mxu0 %v99
  %287 = vmatmul.mubr.bf16.gmra.mxu0 %v98
  %v288 = vpop.f32.mrf.mxu0
  %v289 = vadd.f32 %v76, %v288
  %v290 = vpop.f32.mrf.mxu0
  %v291 = vpop.f32.mrf.mxu0
  %v292 = vadd.f32 %v76, %v291
  %v293 = vpop.f32.mrf.mxu0
  %294 = vmatprep.mubr.bf16.mxu0 %v102
  %295 = vmatmul.mubr.bf16.gmra.mxu0 %v101
  %v296 = vpop.f32.mrf.mxu0
  %v297 = vadd.f32 %v76, %v296
  %v298 = vpop.f32.mrf.mxu0
  %v299 = vpop.f32.mrf.mxu0
  %v300 = vadd.f32 %v76, %v299
  %v301 = vpop.f32.mrf.mxu0
  %302 = vdwg.mxu0
  %303 = vmatprep.subr.bf16.mxu0 0
  %304 = vmatpush1.bf16.msra.mxu0 %v229
  %305 = vmatprep.subr.bf16.mxu0 0
  %306 = vmatpush1.bf16.msra.mxu0 %v228
  %307 = vmatprep.subr.bf16.mxu0 0
  %308 = vmatpush1.bf16.msra.mxu0 %v227
  %309 = vmatprep.subr.bf16.mxu0 0
  %310 = vmatpush1.bf16.msra.mxu0 %v226
  %311 = vmatprep.subr.bf16.mxu0 0
  %312 = vmatpush1.bf16.msra.mxu0 %v225
  %313 = vmatprep.subr.bf16.mxu0 0
  %314 = vmatpush1.bf16.msra.mxu0 %v224
  %315 = vmatprep.subr.bf16.mxu0 0
  %316 = vmatpush1.bf16.msra.mxu0 %v223
  %317 = vmatprep.subr.bf16.mxu0 0
  %318 = vmatpush1.bf16.msra.mxu0 %v222
  %319 = vmatprep.subr.bf16.mxu0 0
  %320 = vmatpush2.bf16.msra.mxu0 0
  %321 = vmatprep.subr.bf16.mxu0 0
  %322 = vmatpush2.bf16.msra.mxu0 0
  %323 = vmatprep.subr.bf16.mxu0 0
  %324 = vmatpush2.bf16.msra.mxu0 0
  %325 = vmatprep.subr.bf16.mxu0 0
  %326 = vmatpush2.bf16.msra.mxu0 0
  %327 = vmatprep.subr.bf16.mxu0 0
  %328 = vmatpush2.bf16.msra.mxu0 0
  %329 = vmatprep.subr.bf16.mxu0 0
  %330 = vmatpush2.bf16.msra.mxu0 0
  %331 = vmatprep.subr.bf16.mxu0 0
  %332 = vmatpush2.bf16.msra.mxu0 0
  %333 = vmatprep.subr.bf16.mxu0 0
  %334 = vmatpush2.bf16.msra.mxu0 0
  %335 = vmatprep.mubr.bf16.mxu0 0
  %336 = vmatmul.mubr.bf16.gmra.mxu0 %v100
  %v337 = vpop.f32.mrf.mxu0
  %v338 = vadd.f32 %v289, %v337
  %v339 = vpop.f32.mrf.mxu0
  %v340 = vpop.f32.mrf.mxu0
  %v341 = vadd.f32 %v292, %v340
  %v342 = vpop.f32.mrf.mxu0
  %343 = vmatprep.mubr.bf16.mxu0 0
  %344 = vmatmul.mubr.bf16.gmra.mxu0 %v103
  %v345 = vpop.f32.mrf.mxu0
  %v346 = vadd.f32 %v297, %v345
  %v347 = vpop.f32.mrf.mxu0
  %v348 = vpop.f32.mrf.mxu0
  %v349 = vadd.f32 %v300, %v348
  %v350 = vpop.f32.mrf.mxu0
  %351 = vdwg.mxu0
  %v352 = vmax.f32 %v338, 0.0
  %v353 = vmax.f32 %v341, 0.0
  %v354 = vmax.f32 %v346, 0.0
  %v355 = vmax.f32 %v349, 0.0
  %356 = vst [vmem:[%s3] sm:$0xff] %v352
  %357 = vst [vmem:[%s3 + $0x8] sm:$0xff] %v353
  %358 = vst [vmem:[%s3 + $0x10] sm:$0xff] %v354
  %359 = vst [vmem:[%s3 + $0x18] sm:$0xff] %v355
  // Predicated region
  $region14: #{_crnn_forward.36} parent=0 // pred_check
    _
  $region15: #{_crnn_forward.36} parent=0 // pred_check_branch
    %361 = sbr.rel (0) target = $region17
  $region16: #{_crnn_forward.36} parent=0 // pred_region
    _
  $region17: #{_crnn_forward.36} parent=0 // pred_fallthru
    _
  // Predicated region
  $region18: #{_crnn_forward.36} parent=0 // pred_check
    _
  $region19: #{_crnn_forward.36} parent=0 // pred_check_branch
    %363 = sbr.rel (0) target = $region21
  $region20: #{_crnn_forward.36} parent=0 // pred_region
    _
  $region21: #{_crnn_forward.36} parent=0 // pred_fallthru
    _

// kernel: _crnn_forward.38
$region0: #{_crnn_forward.38}
  #allocation0 [shape = 'u32[]', space=smem, size = 0x4, offset = 0x4, fixed_abs, tag = 'smem constant byte address 0x4 - core index']
  #allocation1 [shape = 'u32[144,128]{1,0:T(1,128)}', space=vmem, size = 0x12000, scoped, tag = 'internal scratch']
  %s0 = inlined_call_operand.vmem [shape: bf16[16,384], index: 0, kind: input, shape index: {}]
  %s1 = inlined_call_operand.vmem [shape: bf16[384,128], index: 1, kind: input, shape index: {}]
  %s2 = inlined_call_operand.vmem [shape: f32[1,128], index: 2, kind: input, shape index: {}]
  %s3 = inlined_call_operand.vmem [shape: f32[16,128], index: 3, kind: output, shape index: {}]
  %s4 = sld [smem:[#allocation0]]
  $region22: #{_crnn_forward.38} parent=0
    _
  %s6 = ssub.s32 1, %s4
  %s7 = scalar_select 0, %s6, %s4
  // Predicated region
  $region2: #{_crnn_forward.38} parent=0 // pred_check
    _
  $region3: #{_crnn_forward.38} parent=0 // pred_check_branch
    %9 = sbr.rel (0) target = $region5
  $region4: #{_crnn_forward.38} parent=0 // pred_region
    _
  $region5: #{_crnn_forward.38} parent=0 // pred_fallthru
    _
  // Predicated region
  $region6: #{_crnn_forward.38} parent=0 // pred_check
    _
  $region7: #{_crnn_forward.38} parent=0 // pred_check_branch
    %11 = sbr.rel (0) target = $region9
  $region8: #{_crnn_forward.38} parent=0 // pred_region
    _
  $region9: #{_crnn_forward.38} parent=0 // pred_fallthru
    _
  // Predicated region
  $region10: #{_crnn_forward.38} parent=0 // pred_check
    _
  $region11: #{_crnn_forward.38} parent=0 // pred_check_branch
    %13 = sbr.rel (0) target = $region13
  $region12: #{_crnn_forward.38} parent=0 // pred_region
    _
  $region13: #{_crnn_forward.38} parent=0 // pred_fallthru
    _
  %v15 = vld [vmem:[%s0] sm:$0xff]
  %v16 = vld [vmem:[%s0 + $0x8] sm:$0xf]
  %v17 = vld [vmem:[%s0 + $0xc] sm:$0xff]
  %v18 = vld [vmem:[%s0 + $0x14] sm:$0xf]
  %v19 = vld [vmem:[%s1] sm:$0xf]
  %v20 = vld [vmem:[%s1 + $0x4] sm:$0xf]
  %v21 = vld [vmem:[%s1 + $0x8] sm:$0xf]
  %v22 = vld [vmem:[%s1 + $0xc] sm:$0xf]
  %v23 = vld [vmem:[%s1 + $0x10] sm:$0xf]
  %v24 = vld [vmem:[%s1 + $0x14] sm:$0xf]
  %v25 = vld [vmem:[%s1 + $0x18] sm:$0xf]
  %v26 = vld [vmem:[%s1 + $0x1c] sm:$0xf]
  %v27 = vld [vmem:[%s1 + $0x20] sm:$0xf]
  %v28 = vld [vmem:[%s1 + $0x24] sm:$0xf]
  %v29 = vld [vmem:[%s1 + $0x28] sm:$0xf]
  %v30 = vld [vmem:[%s1 + $0x2c] sm:$0xf]
  %v31 = vld [vmem:[%s1 + $0x30] sm:$0xf]
  %v32 = vld [vmem:[%s1 + $0x34] sm:$0xf]
  %v33 = vld [vmem:[%s1 + $0x38] sm:$0xf]
  %v34 = vld [vmem:[%s1 + $0x3c] sm:$0xf]
  %v35 = vld [vmem:[%s1 + $0x40] sm:$0xf]
  %v36 = vld [vmem:[%s1 + $0x44] sm:$0xf]
  %v37 = vld [vmem:[%s1 + $0x48] sm:$0xf]
  %v38 = vld [vmem:[%s1 + $0x4c] sm:$0xf]
  %v39 = vld [vmem:[%s1 + $0x50] sm:$0xf]
  %v40 = vld [vmem:[%s1 + $0x54] sm:$0xf]
  %v41 = vld [vmem:[%s1 + $0x58] sm:$0xf]
  %v42 = vld [vmem:[%s1 + $0x5c] sm:$0xf]
  %v43 = vld [vmem:[%s1 + $0x60] sm:$0xf]
  %v44 = vld [vmem:[%s1 + $0x64] sm:$0xf]
  %v45 = vld [vmem:[%s1 + $0x68] sm:$0xf]
  %v46 = vld [vmem:[%s1 + $0x6c] sm:$0xf]
  %v47 = vld [vmem:[%s1 + $0x70] sm:$0xf]
  %v48 = vld [vmem:[%s1 + $0x74] sm:$0xf]
  %v49 = vld [vmem:[%s1 + $0x78] sm:$0xf]
  %v50 = vld [vmem:[%s1 + $0x7c] sm:$0xf]
  %v51 = vld [vmem:[%s1 + $0x80] sm:$0xf]
  %v52 = vld [vmem:[%s1 + $0x84] sm:$0xf]
  %v53 = vld [vmem:[%s1 + $0x88] sm:$0xf]
  %v54 = vld [vmem:[%s1 + $0x8c] sm:$0xf]
  %v55 = vld [vmem:[%s1 + $0x90] sm:$0xf]
  %v56 = vld [vmem:[%s1 + $0x94] sm:$0xf]
  %v57 = vld [vmem:[%s1 + $0x98] sm:$0xf]
  %v58 = vld [vmem:[%s1 + $0x9c] sm:$0xf]
  %v59 = vld [vmem:[%s1 + $0xa0] sm:$0xf]
  %v60 = vld [vmem:[%s1 + $0xa4] sm:$0xf]
  %v61 = vld [vmem:[%s1 + $0xa8] sm:$0xf]
  %v62 = vld [vmem:[%s1 + $0xac] sm:$0xf]
  %v63 = vld [vmem:[%s1 + $0xb0] sm:$0xf]
  %v64 = vld [vmem:[%s1 + $0xb4] sm:$0xf]
  %v65 = vld [vmem:[%s1 + $0xb8] sm:$0xf]
  %v66 = vld [vmem:[%s1 + $0xbc] sm:$0xf]
  %v67 = vld [vmem:[%s2] sm:$0x1]
  %v69 = vlaneseq
  %v70 = vshrl.u32 %v69, 7
  %v71 = vsub.s32 0, %v70
  %v72 = vrot.slane %v67, %v71
  %v78 = vunpack.c.l.b16 %v15
  %v79 = vunpack.c.h.b16 %v15
  %v80 = vunpack.c.l.b16 %v16
  %v81 = vunpack.c.l.b16 %v17
  %v82 = vunpack.c.h.b16 %v17
  %v83 = vunpack.c.l.b16 %v18
  %v84 = vpack.c.b16 %v81, %v78
  %v85 = vpack.c.b16 %v82, %v79
  %v86 = vpack.c.b16 %v83, %v80
  %v138 = vunpack.c.l.b16 %v19
  %v139 = vunpack.c.l.b16 %v20
  %v140 = vunpack.c.l.b16 %v21
  %v141 = vunpack.c.l.b16 %v22
  %v142 = vunpack.c.l.b16 %v23
  %v143 = vunpack.c.l.b16 %v24
  %v144 = vunpack.c.l.b16 %v25
  %v145 = vunpack.c.l.b16 %v26
  %v146 = vunpack.c.l.b16 %v27
  %v147 = vunpack.c.l.b16 %v28
  %v148 = vunpack.c.l.b16 %v29
  %v149 = vunpack.c.l.b16 %v30
  %v150 = vunpack.c.l.b16 %v31
  %v151 = vunpack.c.l.b16 %v32
  %v152 = vunpack.c.l.b16 %v33
  %v153 = vunpack.c.l.b16 %v34
  %v154 = vunpack.c.l.b16 %v35
  %v155 = vunpack.c.l.b16 %v36
  %v156 = vunpack.c.l.b16 %v37
  %v157 = vunpack.c.l.b16 %v38
  %v158 = vunpack.c.l.b16 %v39
  %v159 = vunpack.c.l.b16 %v40
  %v160 = vunpack.c.l.b16 %v41
  %v161 = vunpack.c.l.b16 %v42
  %v162 = vunpack.c.l.b16 %v43
  %v163 = vunpack.c.l.b16 %v44
  %v164 = vunpack.c.l.b16 %v45
  %v165 = vunpack.c.l.b16 %v46
  %v166 = vunpack.c.l.b16 %v47
  %v167 = vunpack.c.l.b16 %v48
  %v168 = vunpack.c.l.b16 %v49
  %v169 = vunpack.c.l.b16 %v50
  %v170 = vunpack.c.l.b16 %v51
  %v171 = vunpack.c.l.b16 %v52
  %v172 = vunpack.c.l.b16 %v53
  %v173 = vunpack.c.l.b16 %v54
  %v174 = vunpack.c.l.b16 %v55
  %v175 = vunpack.c.l.b16 %v56
  %v176 = vunpack.c.l.b16 %v57
  %v177 = vunpack.c.l.b16 %v58
  %v178 = vunpack.c.l.b16 %v59
  %v179 = vunpack.c.l.b16 %v60
  %v180 = vunpack.c.l.b16 %v61
  %v181 = vunpack.c.l.b16 %v62
  %v182 = vunpack.c.l.b16 %v63
  %v183 = vunpack.c.l.b16 %v64
  %v184 = vunpack.c.l.b16 %v65
  %v185 = vunpack.c.l.b16 %v66
  %v186 = vpack.c.b16 %v139, %v138
  %v187 = vpack.c.b16 %v141, %v140
  %v188 = vpack.c.b16 %v143, %v142
  %v189 = vpack.c.b16 %v145, %v144
  %v190 = vpack.c.b16 %v147, %v146
  %v191 = vpack.c.b16 %v149, %v148
  %v192 = vpack.c.b16 %v151, %v150
  %v193 = vpack.c.b16 %v153, %v152
  %v194 = vpack.c.b16 %v155, %v154
  %v195 = vpack.c.b16 %v157, %v156
  %v196 = vpack.c.b16 %v159, %v158
  %v197 = vpack.c.b16 %v161, %v160
  %v198 = vpack.c.b16 %v163, %v162
  %v199 = vpack.c.b16 %v165, %v164
  %v200 = vpack.c.b16 %v167, %v166
  %v201 = vpack.c.b16 %v169, %v168
  %v202 = vpack.c.b16 %v171, %v170
  %v203 = vpack.c.b16 %v173, %v172
  %v204 = vpack.c.b16 %v175, %v174
  %v205 = vpack.c.b16 %v177, %v176
  %v206 = vpack.c.b16 %v179, %v178
  %v207 = vpack.c.b16 %v181, %v180
  %v208 = vpack.c.b16 %v183, %v182
  %v209 = vpack.c.b16 %v185, %v184
  %234 = vmatprep.subr.bf16.mxu0 0
  %235 = vmatpush1.bf16.msra.mxu0 %v193
  %236 = vmatprep.subr.bf16.mxu0 0
  %237 = vmatpush1.bf16.msra.mxu0 %v192
  %238 = vmatprep.subr.bf16.mxu0 0
  %239 = vmatpush1.bf16.msra.mxu0 %v191
  %240 = vmatprep.subr.bf16.mxu0 0
  %241 = vmatpush1.bf16.msra.mxu0 %v190
  %242 = vmatprep.subr.bf16.mxu0 0
  %243 = vmatpush1.bf16.msra.mxu0 %v189
  %244 = vmatprep.subr.bf16.mxu0 0
  %245 = vmatpush1.bf16.msra.mxu0 %v188
  %246 = vmatprep.subr.bf16.mxu0 0
  %247 = vmatpush1.bf16.msra.mxu0 %v187
  %248 = vmatprep.subr.bf16.mxu0 0
  %249 = vmatpush1.bf16.msra.mxu0 %v186
  %250 = vmatprep.subr.bf16.mxu0 0
  %251 = vmatpush2.bf16.msra.mxu0 %v201
  %252 = vmatprep.subr.bf16.mxu0 0
  %253 = vmatpush2.bf16.msra.mxu0 %v200
  %254 = vmatprep.subr.bf16.mxu0 0
  %255 = vmatpush2.bf16.msra.mxu0 %v199
  %256 = vmatprep.subr.bf16.mxu0 0
  %257 = vmatpush2.bf16.msra.mxu0 %v198
  %258 = vmatprep.subr.bf16.mxu0 0
  %259 = vmatpush2.bf16.msra.mxu0 %v197
  %260 = vmatprep.subr.bf16.mxu0 0
  %261 = vmatpush2.bf16.msra.mxu0 %v196
  %262 = vmatprep.subr.bf16.mxu0 0
  %263 = vmatpush2.bf16.msra.mxu0 %v195
  %264 = vmatprep.subr.bf16.mxu0 0
  %265 = vmatpush2.bf16.msra.mxu0 %v194
  %266 = vmatprep.mubr.bf16.mxu0 %v85
  %267 = vmatmul.mubr.bf16.gmra.mxu0 %v84
  %v268 = vpop.f32.mrf.mxu0
  %v269 = vadd.f32 %v72, %v268
  %v270 = vpop.f32.mrf.mxu0
  %v271 = vpop.f32.mrf.mxu0
  %v272 = vadd.f32 %v72, %v271
  %v273 = vpop.f32.mrf.mxu0
  %274 = vdwg.mxu0
  %275 = vmatprep.subr.bf16.mxu0 0
  %276 = vmatpush1.bf16.msra.mxu0 %v209
  %277 = vmatprep.subr.bf16.mxu0 0
  %278 = vmatpush1.bf16.msra.mxu0 %v208
  %279 = vmatprep.subr.bf16.mxu0 0
  %280 = vmatpush1.bf16.msra.mxu0 %v207
  %281 = vmatprep.subr.bf16.mxu0 0
  %282 = vmatpush1.bf16.msra.mxu0 %v206
  %283 = vmatprep.subr.bf16.mxu0 0
  %284 = vmatpush1.bf16.msra.mxu0 %v205
  %285 = vmatprep.subr.bf16.mxu0 0
  %286 = vmatpush1.bf16.msra.mxu0 %v204
  %287 = vmatprep.subr.bf16.mxu0 0
  %288 = vmatpush1.bf16.msra.mxu0 %v203
  %289 = vmatprep.subr.bf16.mxu0 0
  %290 = vmatpush1.bf16.msra.mxu0 %v202
  %291 = vmatprep.subr.bf16.mxu0 0
  %292 = vmatpush2.bf16.msra.mxu0 0
  %293 = vmatprep.subr.bf16.mxu0 0
  %294 = vmatpush2.bf16.msra.mxu0 0
  %295 = vmatprep.subr.bf16.mxu0 0
  %296 = vmatpush2.bf16.msra.mxu0 0
  %297 = vmatprep.subr.bf16.mxu0 0
  %298 = vmatpush2.bf16.msra.mxu0 0
  %299 = vmatprep.subr.bf16.mxu0 0
  %300 = vmatpush2.bf16.msra.mxu0 0
  %301 = vmatprep.subr.bf16.mxu0 0
  %302 = vmatpush2.bf16.msra.mxu0 0
  %303 = vmatprep.subr.bf16.mxu0 0
  %304 = vmatpush2.bf16.msra.mxu0 0
  %305 = vmatprep.subr.bf16.mxu0 0
  %306 = vmatpush2.bf16.msra.mxu0 0
  %307 = vmatprep.mubr.bf16.mxu0 0
  %308 = vmatmul.mubr.bf16.gmra.mxu0 %v86
  %v309 = vpop.f32.mrf.mxu0
  %v310 = vadd.f32 %v269, %v309
  %v311 = vpop.f32.mrf.mxu0
  %v312 = vpop.f32.mrf.mxu0
  %v313 = vadd.f32 %v272, %v312
  %v314 = vpop.f32.mrf.mxu0
  %315 = vdwg.mxu0
  %v316 = vmax.f32 %v310, 0.0
  %v317 = vmax.f32 %v313, 0.0
  %318 = vst [vmem:[%s3] sm:$0xff] %v316
  %319 = vst [vmem:[%s3 + $0x8] sm:$0xff] %v317
  // Predicated region
  $region14: #{_crnn_forward.38} parent=0 // pred_check
    _
  $region15: #{_crnn_forward.38} parent=0 // pred_check_branch
    %321 = sbr.rel (0) target = $region17
  $region16: #{_crnn_forward.38} parent=0 // pred_region
    _
  $region17: #{_crnn_forward.38} parent=0 // pred_fallthru
    _
  // Predicated region
  $region18: #{_crnn_forward.38} parent=0 // pred_check
    _
  $region19: #{_crnn_forward.38} parent=0 // pred_check_branch
    %323 = sbr.rel (0) target = $region21
  $region20: #{_crnn_forward.38} parent=0 // pred_region
    _
  $region21: #{_crnn_forward.38} parent=0 // pred_fallthru
    _

// kernel: _crnn_forward.40
$region0: #{_crnn_forward.40}
  #allocation0 [shape = 'u32[]', space=smem, size = 0x4, offset = 0x4, fixed_abs, tag = 'smem constant byte address 0x4 - core index']
  #allocation1 [shape = 'u32[144,128]{1,0:T(1,128)}', space=vmem, size = 0x12000, scoped, tag = 'internal scratch']
  %s0 = inlined_call_operand.vmem [shape: bf16[16,128], index: 0, kind: input, shape index: {}]
  %s1 = inlined_call_operand.vmem [shape: bf16[128,128], index: 1, kind: input, shape index: {}]
  %s2 = inlined_call_operand.vmem [shape: f32[1,128], index: 2, kind: input, shape index: {}]
  %s3 = inlined_call_operand.vmem [shape: f32[16,128], index: 3, kind: output, shape index: {}]
  %s4 = sld [smem:[#allocation0]]
  $region22: #{_crnn_forward.40} parent=0
    _
  %s6 = ssub.s32 1, %s4
  %s7 = scalar_select 0, %s6, %s4
  // Predicated region
  $region2: #{_crnn_forward.40} parent=0 // pred_check
    _
  $region3: #{_crnn_forward.40} parent=0 // pred_check_branch
    %9 = sbr.rel (0) target = $region5
  $region4: #{_crnn_forward.40} parent=0 // pred_region
    _
  $region5: #{_crnn_forward.40} parent=0 // pred_fallthru
    _
  // Predicated region
  $region6: #{_crnn_forward.40} parent=0 // pred_check
    _
  $region7: #{_crnn_forward.40} parent=0 // pred_check_branch
    %11 = sbr.rel (0) target = $region9
  $region8: #{_crnn_forward.40} parent=0 // pred_region
    _
  $region9: #{_crnn_forward.40} parent=0 // pred_fallthru
    _
  // Predicated region
  $region10: #{_crnn_forward.40} parent=0 // pred_check
    _
  $region11: #{_crnn_forward.40} parent=0 // pred_check_branch
    %13 = sbr.rel (0) target = $region13
  $region12: #{_crnn_forward.40} parent=0 // pred_region
    _
  $region13: #{_crnn_forward.40} parent=0 // pred_fallthru
    _
  %v15 = vld [vmem:[%s0] sm:$0xf]
  %v16 = vld [vmem:[%s0 + $0x4] sm:$0xf]
  %v17 = vld [vmem:[%s1] sm:$0xf]
  %v18 = vld [vmem:[%s1 + $0x4] sm:$0xf]
  %v19 = vld [vmem:[%s1 + $0x8] sm:$0xf]
  %v20 = vld [vmem:[%s1 + $0xc] sm:$0xf]
  %v21 = vld [vmem:[%s1 + $0x10] sm:$0xf]
  %v22 = vld [vmem:[%s1 + $0x14] sm:$0xf]
  %v23 = vld [vmem:[%s1 + $0x18] sm:$0xf]
  %v24 = vld [vmem:[%s1 + $0x1c] sm:$0xf]
  %v25 = vld [vmem:[%s1 + $0x20] sm:$0xf]
  %v26 = vld [vmem:[%s1 + $0x24] sm:$0xf]
  %v27 = vld [vmem:[%s1 + $0x28] sm:$0xf]
  %v28 = vld [vmem:[%s1 + $0x2c] sm:$0xf]
  %v29 = vld [vmem:[%s1 + $0x30] sm:$0xf]
  %v30 = vld [vmem:[%s1 + $0x34] sm:$0xf]
  %v31 = vld [vmem:[%s1 + $0x38] sm:$0xf]
  %v32 = vld [vmem:[%s1 + $0x3c] sm:$0xf]
  %v33 = vld [vmem:[%s2] sm:$0x1]
  %v35 = vlaneseq
  %v36 = vshrl.u32 %v35, 7
  %v37 = vsub.s32 0, %v36
  %v38 = vrot.slane %v33, %v37
  %v42 = vunpack.c.l.b16 %v15
  %v43 = vunpack.c.l.b16 %v16
  %v44 = vpack.c.b16 %v43, %v42
  %v62 = vunpack.c.l.b16 %v17
  %v63 = vunpack.c.l.b16 %v18
  %v64 = vunpack.c.l.b16 %v19
  %v65 = vunpack.c.l.b16 %v20
  %v66 = vunpack.c.l.b16 %v21
  %v67 = vunpack.c.l.b16 %v22
  %v68 = vunpack.c.l.b16 %v23
  %v69 = vunpack.c.l.b16 %v24
  %v70 = vunpack.c.l.b16 %v25
  %v71 = vunpack.c.l.b16 %v26
  %v72 = vunpack.c.l.b16 %v27
  %v73 = vunpack.c.l.b16 %v28
  %v74 = vunpack.c.l.b16 %v29
  %v75 = vunpack.c.l.b16 %v30
  %v76 = vunpack.c.l.b16 %v31
  %v77 = vunpack.c.l.b16 %v32
  %v78 = vpack.c.b16 %v63, %v62
  %v79 = vpack.c.b16 %v65, %v64
  %v80 = vpack.c.b16 %v67, %v66
  %v81 = vpack.c.b16 %v69, %v68
  %v82 = vpack.c.b16 %v71, %v70
  %v83 = vpack.c.b16 %v73, %v72
  %v84 = vpack.c.b16 %v75, %v74
  %v85 = vpack.c.b16 %v77, %v76
  %94 = vmatprep.subr.bf16.mxu0 0
  %95 = vmatpush1.bf16.msra.mxu0 %v85
  %96 = vmatprep.subr.bf16.mxu0 0
  %97 = vmatpush1.bf16.msra.mxu0 %v84
  %98 = vmatprep.subr.bf16.mxu0 0
  %99 = vmatpush1.bf16.msra.mxu0 %v83
  %100 = vmatprep.subr.bf16.mxu0 0
  %101 = vmatpush1.bf16.msra.mxu0 %v82
  %102 = vmatprep.subr.bf16.mxu0 0
  %103 = vmatpush1.bf16.msra.mxu0 %v81
  %104 = vmatprep.subr.bf16.mxu0 0
  %105 = vmatpush1.bf16.msra.mxu0 %v80
  %106 = vmatprep.subr.bf16.mxu0 0
  %107 = vmatpush1.bf16.msra.mxu0 %v79
  %108 = vmatprep.subr.bf16.mxu0 0
  %109 = vmatpush1.bf16.msra.mxu0 %v78
  %110 = vmatprep.subr.bf16.mxu0 0
  %111 = vmatpush2.bf16.msra.mxu0 0
  %112 = vmatprep.subr.bf16.mxu0 0
  %113 = vmatpush2.bf16.msra.mxu0 0
  %114 = vmatprep.subr.bf16.mxu0 0
  %115 = vmatpush2.bf16.msra.mxu0 0
  %116 = vmatprep.subr.bf16.mxu0 0
  %117 = vmatpush2.bf16.msra.mxu0 0
  %118 = vmatprep.subr.bf16.mxu0 0
  %119 = vmatpush2.bf16.msra.mxu0 0
  %120 = vmatprep.subr.bf16.mxu0 0
  %121 = vmatpush2.bf16.msra.mxu0 0
  %122 = vmatprep.subr.bf16.mxu0 0
  %123 = vmatpush2.bf16.msra.mxu0 0
  %124 = vmatprep.subr.bf16.mxu0 0
  %125 = vmatpush2.bf16.msra.mxu0 0
  %126 = vmatprep.mubr.bf16.mxu0 0
  %127 = vmatmul.mubr.bf16.gmra.mxu0 %v44
  %v128 = vpop.f32.mrf.mxu0
  %v129 = vadd.f32 %v38, %v128
  %v130 = vpop.f32.mrf.mxu0
  %v131 = vpop.f32.mrf.mxu0
  %v132 = vadd.f32 %v38, %v131
  %v133 = vpop.f32.mrf.mxu0
  %134 = vdwg.mxu0
  %135 = vst [vmem:[%s3] sm:$0xff] %v129
  %136 = vst [vmem:[%s3 + $0x8] sm:$0xff] %v132
  // Predicated region
  $region14: #{_crnn_forward.40} parent=0 // pred_check
    _
  $region15: #{_crnn_forward.40} parent=0 // pred_check_branch
    %138 = sbr.rel (0) target = $region17
  $region16: #{_crnn_forward.40} parent=0 // pred_region
    _
  $region17: #{_crnn_forward.40} parent=0 // pred_fallthru
    _
  // Predicated region
  $region18: #{_crnn_forward.40} parent=0 // pred_check
    _
  $region19: #{_crnn_forward.40} parent=0 // pred_check_branch
    %140 = sbr.rel (0) target = $region21
  $region20: #{_crnn_forward.40} parent=0 // pred_region
    _
  $region21: #{_crnn_forward.40} parent=0 // pred_fallthru
    _

// kernel: _crnn_forward.39
$region0: #{_crnn_forward.39}
  #allocation0 [shape = 'u32[]', space=smem, size = 0x4, offset = 0x4, fixed_abs, tag = 'smem constant byte address 0x4 - core index']
  #allocation1 [shape = 'u32[144,128]{1,0:T(1,128)}', space=vmem, size = 0x12000, scoped, tag = 'internal scratch']
  %s0 = inlined_call_operand.vmem [shape: bf16[16,640], index: 0, kind: input, shape index: {}]
  %s1 = inlined_call_operand.vmem [shape: bf16[640,128], index: 1, kind: input, shape index: {}]
  %s2 = inlined_call_operand.vmem [shape: f32[1,128], index: 2, kind: input, shape index: {}]
  %s3 = inlined_call_operand.vmem [shape: f32[16,128], index: 3, kind: output, shape index: {}]
  %s4 = sld [smem:[#allocation0]]
  $region22: #{_crnn_forward.39} parent=0
    _
  %s6 = ssub.s32 1, %s4
  %s7 = scalar_select 0, %s6, %s4
  // Predicated region
  $region2: #{_crnn_forward.39} parent=0 // pred_check
    _
  $region3: #{_crnn_forward.39} parent=0 // pred_check_branch
    %9 = sbr.rel (0) target = $region5
  $region4: #{_crnn_forward.39} parent=0 // pred_region
    _
  $region5: #{_crnn_forward.39} parent=0 // pred_fallthru
    _
  // Predicated region
  $region6: #{_crnn_forward.39} parent=0 // pred_check
    _
  $region7: #{_crnn_forward.39} parent=0 // pred_check_branch
    %11 = sbr.rel (0) target = $region9
  $region8: #{_crnn_forward.39} parent=0 // pred_region
    _
  $region9: #{_crnn_forward.39} parent=0 // pred_fallthru
    _
  // Predicated region
  $region10: #{_crnn_forward.39} parent=0 // pred_check
    _
  $region11: #{_crnn_forward.39} parent=0 // pred_check_branch
    %13 = sbr.rel (0) target = $region13
  $region12: #{_crnn_forward.39} parent=0 // pred_region
    _
  $region13: #{_crnn_forward.39} parent=0 // pred_fallthru
    _
  %v15 = vld [vmem:[%s0] sm:$0xff]
  %v16 = vld [vmem:[%s0 + $0x8] sm:$0xff]
  %v17 = vld [vmem:[%s0 + $0x10] sm:$0xf]
  %v18 = vld [vmem:[%s0 + $0x14] sm:$0xff]
  %v19 = vld [vmem:[%s0 + $0x1c] sm:$0xff]
  %v20 = vld [vmem:[%s0 + $0x24] sm:$0xf]
  %v21 = vld [vmem:[%s1] sm:$0xf]
  %v22 = vld [vmem:[%s1 + $0x4] sm:$0xf]
  %v23 = vld [vmem:[%s1 + $0x8] sm:$0xf]
  %v24 = vld [vmem:[%s1 + $0xc] sm:$0xf]
  %v25 = vld [vmem:[%s1 + $0x10] sm:$0xf]
  %v26 = vld [vmem:[%s1 + $0x14] sm:$0xf]
  %v27 = vld [vmem:[%s1 + $0x18] sm:$0xf]
  %v28 = vld [vmem:[%s1 + $0x1c] sm:$0xf]
  %v29 = vld [vmem:[%s1 + $0x20] sm:$0xf]
  %v30 = vld [vmem:[%s1 + $0x24] sm:$0xf]
  %v31 = vld [vmem:[%s1 + $0x28] sm:$0xf]
  %v32 = vld [vmem:[%s1 + $0x2c] sm:$0xf]
  %v33 = vld [vmem:[%s1 + $0x30] sm:$0xf]
  %v34 = vld [vmem:[%s1 + $0x34] sm:$0xf]
  %v35 = vld [vmem:[%s1 + $0x38] sm:$0xf]
  %v36 = vld [vmem:[%s1 + $0x3c] sm:$0xf]
  %v37 = vld [vmem:[%s1 + $0x40] sm:$0xf]
  %v38 = vld [vmem:[%s1 + $0x44] sm:$0xf]
  %v39 = vld [vmem:[%s1 + $0x48] sm:$0xf]
  %v40 = vld [vmem:[%s1 + $0x4c] sm:$0xf]
  %v41 = vld [vmem:[%s1 + $0x50] sm:$0xf]
  %v42 = vld [vmem:[%s1 + $0x54] sm:$0xf]
  %v43 = vld [vmem:[%s1 + $0x58] sm:$0xf]
  %v44 = vld [vmem:[%s1 + $0x5c] sm:$0xf]
  %v45 = vld [vmem:[%s1 + $0x60] sm:$0xf]
  %v46 = vld [vmem:[%s1 + $0x64] sm:$0xf]
  %v47 = vld [vmem:[%s1 + $0x68] sm:$0xf]
  %v48 = vld [vmem:[%s1 + $0x6c] sm:$0xf]
  %v49 = vld [vmem:[%s1 + $0x70] sm:$0xf]
  %v50 = vld [vmem:[%s1 + $0x74] sm:$0xf]
  %v51 = vld [vmem:[%s1 + $0x78] sm:$0xf]
  %v52 = vld [vmem:[%s1 + $0x7c] sm:$0xf]
  %v53 = vld [vmem:[%s1 + $0x80] sm:$0xf]
  %v54 = vld [vmem:[%s1 + $0x84] sm:$0xf]
  %v55 = vld [vmem:[%s1 + $0x88] sm:$0xf]
  %v56 = vld [vmem:[%s1 + $0x8c] sm:$0xf]
  %v57 = vld [vmem:[%s1 + $0x90] sm:$0xf]
  %v58 = vld [vmem:[%s1 + $0x94] sm:$0xf]
  %v59 = vld [vmem:[%s1 + $0x98] sm:$0xf]
  %v60 = vld [vmem:[%s1 + $0x9c] sm:$0xf]
  %v61 = vld [vmem:[%s1 + $0xa0] sm:$0xf]
  %v62 = vld [vmem:[%s1 + $0xa4] sm:$0xf]
  %v63 = vld [vmem:[%s1 + $0xa8] sm:$0xf]
  %v64 = vld [vmem:[%s1 + $0xac] sm:$0xf]
  %v65 = vld [vmem:[%s1 + $0xb0] sm:$0xf]
  %v66 = vld [vmem:[%s1 + $0xb4] sm:$0xf]
  %v67 = vld [vmem:[%s1 + $0xb8] sm:$0xf]
  %v68 = vld [vmem:[%s1 + $0xbc] sm:$0xf]
  %v69 = vld [vmem:[%s1 + $0xc0] sm:$0xf]
  %v70 = vld [vmem:[%s1 + $0xc4] sm:$0xf]
  %v71 = vld [vmem:[%s1 + $0xc8] sm:$0xf]
  %v72 = vld [vmem:[%s1 + $0xcc] sm:$0xf]
  %v73 = vld [vmem:[%s1 + $0xd0] sm:$0xf]
  %v74 = vld [vmem:[%s1 + $0xd4] sm:$0xf]
  %v75 = vld [vmem:[%s1 + $0xd8] sm:$0xf]
  %v76 = vld [vmem:[%s1 + $0xdc] sm:$0xf]
  %v77 = vld [vmem:[%s1 + $0xe0] sm:$0xf]
  %v78 = vld [vmem:[%s1 + $0xe4] sm:$0xf]
  %v79 = vld [vmem:[%s1 + $0xe8] sm:$0xf]
  %v80 = vld [vmem:[%s1 + $0xec] sm:$0xf]
  %v81 = vld [vmem:[%s1 + $0xf0] sm:$0xf]
  %v82 = vld [vmem:[%s1 + $0xf4] sm:$0xf]
  %v83 = vld [vmem:[%s1 + $0xf8] sm:$0xf]
  %v84 = vld [vmem:[%s1 + $0xfc] sm:$0xf]
  %v85 = vld [vmem:[%s1 + $0x100] sm:$0xf]
  %v86 = vld [vmem:[%s1 + $0x104] sm:$0xf]
  %v87 = vld [vmem:[%s1 + $0x108] sm:$0xf]
  %v88 = vld [vmem:[%s1 + $0x10c] sm:$0xf]
  %v89 = vld [vmem:[%s1 + $0x110] sm:$0xf]
  %v90 = vld [vmem:[%s1 + $0x114] sm:$0xf]
  %v91 = vld [vmem:[%s1 + $0x118] sm:$0xf]
  %v92 = vld [vmem:[%s1 + $0x11c] sm:$0xf]
  %v93 = vld [vmem:[%s1 + $0x120] sm:$0xf]
  %v94 = vld [vmem:[%s1 + $0x124] sm:$0xf]
  %v95 = vld [vmem:[%s1 + $0x128] sm:$0xf]
  %v96 = vld [vmem:[%s1 + $0x12c] sm:$0xf]
  %v97 = vld [vmem:[%s1 + $0x130] sm:$0xf]
  %v98 = vld [vmem:[%s1 + $0x134] sm:$0xf]
  %v99 = vld [vmem:[%s1 + $0x138] sm:$0xf]
  %v100 = vld [vmem:[%s1 + $0x13c] sm:$0xf]
  %v101 = vld [vmem:[%s2] sm:$0x1]
  %v103 = vlaneseq
  %v104 = vshrl.u32 %v103, 7
  %v105 = vsub.s32 0, %v104
  %v106 = vrot.slane %v101, %v105
  %v114 = vunpack.c.l.b16 %v15
  %v115 = vunpack.c.h.b16 %v15
  %v116 = vunpack.c.l.b16 %v16
  %v117 = vunpack.c.h.b16 %v16
  %v118 = vunpack.c.l.b16 %v17
  %v119 = vunpack.c.l.b16 %v18
  %v120 = vunpack.c.h.b16 %v18
  %v121 = vunpack.c.l.b16 %v19
  %v122 = vunpack.c.h.b16 %v19
  %v123 = vunpack.c.l.b16 %v20
  %v124 = vpack.c.b16 %v119, %v114
  %v125 = vpack.c.b16 %v120, %v115
  %v126 = vpack.c.b16 %v121, %v116
  %v127 = vpack.c.b16 %v122, %v117
  %v128 = vpack.c.b16 %v123, %v118
  %v214 = vunpack.c.l.b16 %v21
  %v215 = vunpack.c.l.b16 %v22
  %v216 = vunpack.c.l.b16 %v23
  %v217 = vunpack.c.l.b16 %v24
  %v218 = vunpack.c.l.b16 %v25
  %v219 = vunpack.c.l.b16 %v26
  %v220 = vunpack.c.l.b16 %v27
  %v221 = vunpack.c.l.b16 %v28
  %v222 = vunpack.c.l.b16 %v29
  %v223 = vunpack.c.l.b16 %v30
  %v224 = vunpack.c.l.b16 %v31
  %v225 = vunpack.c.l.b16 %v32
  %v226 = vunpack.c.l.b16 %v33
  %v227 = vunpack.c.l.b16 %v34
  %v228 = vunpack.c.l.b16 %v35
  %v229 = vunpack.c.l.b16 %v36
  %v230 = vunpack.c.l.b16 %v37
  %v231 = vunpack.c.l.b16 %v38
  %v232 = vunpack.c.l.b16 %v39
  %v233 = vunpack.c.l.b16 %v40
  %v234 = vunpack.c.l.b16 %v41
  %v235 = vunpack.c.l.b16 %v42
  %v236 = vunpack.c.l.b16 %v43
  %v237 = vunpack.c.l.b16 %v44
  %v238 = vunpack.c.l.b16 %v45
  %v239 = vunpack.c.l.b16 %v46
  %v240 = vunpack.c.l.b16 %v47
  %v241 = vunpack.c.l.b16 %v48
  %v242 = vunpack.c.l.b16 %v49
  %v243 = vunpack.c.l.b16 %v50
  %v244 = vunpack.c.l.b16 %v51
  %v245 = vunpack.c.l.b16 %v52
  %v246 = vunpack.c.l.b16 %v53
  %v247 = vunpack.c.l.b16 %v54
  %v248 = vunpack.c.l.b16 %v55
  %v249 = vunpack.c.l.b16 %v56
  %v250 = vunpack.c.l.b16 %v57
  %v251 = vunpack.c.l.b16 %v58
  %v252 = vunpack.c.l.b16 %v59
  %v253 = vunpack.c.l.b16 %v60
  %v254 = vunpack.c.l.b16 %v61
  %v255 = vunpack.c.l.b16 %v62
  %v256 = vunpack.c.l.b16 %v63
  %v257 = vunpack.c.l.b16 %v64
  %v258 = vunpack.c.l.b16 %v65
  %v259 = vunpack.c.l.b16 %v66
  %v260 = vunpack.c.l.b16 %v67
  %v261 = vunpack.c.l.b16 %v68
  %v262 = vunpack.c.l.b16 %v69
  %v263 = vunpack.c.l.b16 %v70
  %v264 = vunpack.c.l.b16 %v71
  %v265 = vunpack.c.l.b16 %v72
  %v266 = vunpack.c.l.b16 %v73
  %v267 = vunpack.c.l.b16 %v74
  %v268 = vunpack.c.l.b16 %v75
  %v269 = vunpack.c.l.b16 %v76
  %v270 = vunpack.c.l.b16 %v77
  %v271 = vunpack.c.l.b16 %v78
  %v272 = vunpack.c.l.b16 %v79
  %v273 = vunpack.c.l.b16 %v80
  %v274 = vunpack.c.l.b16 %v81
  %v275 = vunpack.c.l.b16 %v82
  %v276 = vunpack.c.l.b16 %v83
  %v277 = vunpack.c.l.b16 %v84
  %v278 = vunpack.c.l.b16 %v85
  %v279 = vunpack.c.l.b16 %v86
  %v280 = vunpack.c.l.b16 %v87
  %v281 = vunpack.c.l.b16 %v88
  %v282 = vunpack.c.l.b16 %v89
  %v283 = vunpack.c.l.b16 %v90
  %v284 = vunpack.c.l.b16 %v91
  %v285 = vunpack.c.l.b16 %v92
  %v286 = vunpack.c.l.b16 %v93
  %v287 = vunpack.c.l.b16 %v94
  %v288 = vunpack.c.l.b16 %v95
  %v289 = vunpack.c.l.b16 %v96
  %v290 = vunpack.c.l.b16 %v97
  %v291 = vunpack.c.l.b16 %v98
  %v292 = vunpack.c.l.b16 %v99
  %v293 = vunpack.c.l.b16 %v100
  %v294 = vpack.c.b16 %v215, %v214
  %v295 = vpack.c.b16 %v217, %v216
  %v296 = vpack.c.b16 %v219, %v218
  %v297 = vpack.c.b16 %v221, %v220
  %v298 = vpack.c.b16 %v223, %v222
  %v299 = vpack.c.b16 %v225, %v224
  %v300 = vpack.c.b16 %v227, %v226
  %v301 = vpack.c.b16 %v229, %v228
  %v302 = vpack.c.b16 %v231, %v230
  %v303 = vpack.c.b16 %v233, %v232
  %v304 = vpack.c.b16 %v235, %v234
  %v305 = vpack.c.b16 %v237, %v236
  %v306 = vpack.c.b16 %v239, %v238
  %v307 = vpack.c.b16 %v241, %v240
  %v308 = vpack.c.b16 %v243, %v242
  %v309 = vpack.c.b16 %v245, %v244
  %v310 = vpack.c.b16 %v247, %v246
  %v311 = vpack.c.b16 %v249, %v248
  %v312 = vpack.c.b16 %v251, %v250
  %v313 = vpack.c.b16 %v253, %v252
  %v314 = vpack.c.b16 %v255, %v254
  %v315 = vpack.c.b16 %v257, %v256
  %v316 = vpack.c.b16 %v259, %v258
  %v317 = vpack.c.b16 %v261, %v260
  %v318 = vpack.c.b16 %v263, %v262
  %v319 = vpack.c.b16 %v265, %v264
  %v320 = vpack.c.b16 %v267, %v266
  %v321 = vpack.c.b16 %v269, %v268
  %v322 = vpack.c.b16 %v271, %v270
  %v323 = vpack.c.b16 %v273, %v272
  %v324 = vpack.c.b16 %v275, %v274
  %v325 = vpack.c.b16 %v277, %v276
  %v326 = vpack.c.b16 %v279, %v278
  %v327 = vpack.c.b16 %v281, %v280
  %v328 = vpack.c.b16 %v283, %v282
  %v329 = vpack.c.b16 %v285, %v284
  %v330 = vpack.c.b16 %v287, %v286
  %v331 = vpack.c.b16 %v289, %v288
  %v332 = vpack.c.b16 %v291, %v290
  %v333 = vpack.c.b16 %v293, %v292
  %374 = vmatprep.subr.bf16.mxu0 0
  %375 = vmatpush1.bf16.msra.mxu0 %v301
  %376 = vmatprep.subr.bf16.mxu0 0
  %377 = vmatpush1.bf16.msra.mxu0 %v300
  %378 = vmatprep.subr.bf16.mxu0 0
  %379 = vmatpush1.bf16.msra.mxu0 %v299
  %380 = vmatprep.subr.bf16.mxu0 0
  %381 = vmatpush1.bf16.msra.mxu0 %v298
  %382 = vmatprep.subr.bf16.mxu0 0
  %383 = vmatpush1.bf16.msra.mxu0 %v297
  %384 = vmatprep.subr.bf16.mxu0 0
  %385 = vmatpush1.bf16.msra.mxu0 %v296
  %386 = vmatprep.subr.bf16.mxu0 0
  %387 = vmatpush1.bf16.msra.mxu0 %v295
  %388 = vmatprep.subr.bf16.mxu0 0
  %389 = vmatpush1.bf16.msra.mxu0 %v294
  %390 = vmatprep.subr.bf16.mxu0 0
  %391 = vmatpush2.bf16.msra.mxu0 %v309
  %392 = vmatprep.subr.bf16.mxu0 0
  %393 = vmatpush2.bf16.msra.mxu0 %v308
  %394 = vmatprep.subr.bf16.mxu0 0
  %395 = vmatpush2.bf16.msra.mxu0 %v307
  %396 = vmatprep.subr.bf16.mxu0 0
  %397 = vmatpush2.bf16.msra.mxu0 %v306
  %398 = vmatprep.subr.bf16.mxu0 0
  %399 = vmatpush2.bf16.msra.mxu0 %v305
  %400 = vmatprep.subr.bf16.mxu0 0
  %401 = vmatpush2.bf16.msra.mxu0 %v304
  %402 = vmatprep.subr.bf16.mxu0 0
  %403 = vmatpush2.bf16.msra.mxu0 %v303
  %404 = vmatprep.subr.bf16.mxu0 0
  %405 = vmatpush2.bf16.msra.mxu0 %v302
  %406 = vmatprep.mubr.bf16.mxu0 %v125
  %407 = vmatmul.mubr.bf16.gmra.mxu0 %v124
  %v408 = vpop.f32.mrf.mxu0
  %v409 = vadd.f32 %v106, %v408
  %v410 = vpop.f32.mrf.mxu0
  %v411 = vpop.f32.mrf.mxu0
  %v412 = vadd.f32 %v106, %v411
  %v413 = vpop.f32.mrf.mxu0
  %414 = vdwg.mxu0
  %415 = vmatprep.subr.bf16.mxu0 0
  %416 = vmatpush1.bf16.msra.mxu0 %v317
  %417 = vmatprep.subr.bf16.mxu0 0
  %418 = vmatpush1.bf16.msra.mxu0 %v316
  %419 = vmatprep.subr.bf16.mxu0 0
  %420 = vmatpush1.bf16.msra.mxu0 %v315
  %421 = vmatprep.subr.bf16.mxu0 0
  %422 = vmatpush1.bf16.msra.mxu0 %v314
  %423 = vmatprep.subr.bf16.mxu0 0
  %424 = vmatpush1.bf16.msra.mxu0 %v313
  %425 = vmatprep.subr.bf16.mxu0 0
  %426 = vmatpush1.bf16.msra.mxu0 %v312
  %427 = vmatprep.subr.bf16.mxu0 0
  %428 = vmatpush1.bf16.msra.mxu0 %v311
  %429 = vmatprep.subr.bf16.mxu0 0
  %430 = vmatpush1.bf16.msra.mxu0 %v310
  %431 = vmatprep.subr.bf16.mxu0 0
  %432 = vmatpush2.bf16.msra.mxu0 %v325
  %433 = vmatprep.subr.bf16.mxu0 0
  %434 = vmatpush2.bf16.msra.mxu0 %v324
  %435 = vmatprep.subr.bf16.mxu0 0
  %436 = vmatpush2.bf16.msra.mxu0 %v323
  %437 = vmatprep.subr.bf16.mxu0 0
  %438 = vmatpush2.bf16.msra.mxu0 %v322
  %439 = vmatprep.subr.bf16.mxu0 0
  %440 = vmatpush2.bf16.msra.mxu0 %v321
  %441 = vmatprep.subr.bf16.mxu0 0
  %442 = vmatpush2.bf16.msra.mxu0 %v320
  %443 = vmatprep.subr.bf16.mxu0 0
  %444 = vmatpush2.bf16.msra.mxu0 %v319
  %445 = vmatprep.subr.bf16.mxu0 0
  %446 = vmatpush2.bf16.msra.mxu0 %v318
  %447 = vmatprep.mubr.bf16.mxu0 %v127
  %448 = vmatmul.mubr.bf16.gmra.mxu0 %v126
  %v449 = vpop.f32.mrf.mxu0
  %v450 = vadd.f32 %v409, %v449
  %v451 = vpop.f32.mrf.mxu0
  %v452 = vpop.f32.mrf.mxu0
  %v453 = vadd.f32 %v412, %v452
  %v454 = vpop.f32.mrf.mxu0
  %455 = vdwg.mxu0
  %456 = vmatprep.subr.bf16.mxu0 0
  %457 = vmatpush1.bf16.msra.mxu0 %v333
  %458 = vmatprep.subr.bf16.mxu0 0
  %459 = vmatpush1.bf16.msra.mxu0 %v332
  %460 = vmatprep.subr.bf16.mxu0 0
  %461 = vmatpush1.bf16.msra.mxu0 %v331
  %462 = vmatprep.subr.bf16.mxu0 0
  %463 = vmatpush1.bf16.msra.mxu0 %v330
  %464 = vmatprep.subr.bf16.mxu0 0
  %465 = vmatpush1.bf16.msra.mxu0 %v329
  %466 = vmatprep.subr.bf16.mxu0 0
  %467 = vmatpush1.bf16.msra.mxu0 %v328
  %468 = vmatprep.subr.bf16.mxu0 0
  %469 = vmatpush1.bf16.msra.mxu0 %v327
  %470 = vmatprep.subr.bf16.mxu0 0
  %471 = vmatpush1.bf16.msra.mxu0 %v326
  %472 = vmatprep.subr.bf16.mxu0 0
  %473 = vmatpush2.bf16.msra.mxu0 0
  %474 = vmatprep.subr.bf16.mxu0 0
  %475 = vmatpush2.bf16.msra.mxu0 0
  %476 = vmatprep.subr.bf16.mxu0 0
  %477 = vmatpush2.bf16.msra.mxu0 0
  %478 = vmatprep.subr.bf16.mxu0 0
  %479 = vmatpush2.bf16.msra.mxu0 0
  %480 = vmatprep.subr.bf16.mxu0 0
  %481 = vmatpush2.bf16.msra.mxu0 0
  %482 = vmatprep.subr.bf16.mxu0 0
  %483 = vmatpush2.bf16.msra.mxu0 0
  %484 = vmatprep.subr.bf16.mxu0 0
  %485 = vmatpush2.bf16.msra.mxu0 0
  %486 = vmatprep.subr.bf16.mxu0 0
  %487 = vmatpush2.bf16.msra.mxu0 0
  %488 = vmatprep.mubr.bf16.mxu0 0
  %489 = vmatmul.mubr.bf16.gmra.mxu0 %v128
  %v490 = vpop.f32.mrf.mxu0
  %v491 = vadd.f32 %v450, %v490
  %v492 = vpop.f32.mrf.mxu0
  %v493 = vpop.f32.mrf.mxu0
  %v494 = vadd.f32 %v453, %v493
  %v495 = vpop.f32.mrf.mxu0
  %496 = vdwg.mxu0
  %497 = vst [vmem:[%s3] sm:$0xff] %v491
  %498 = vst [vmem:[%s3 + $0x8] sm:$0xff] %v494
  // Predicated region
  $region14: #{_crnn_forward.39} parent=0 // pred_check
    _
  $region15: #{_crnn_forward.39} parent=0 // pred_check_branch
    %500 = sbr.rel (0) target = $region17
  $region16: #{_crnn_forward.39} parent=0 // pred_region
    _
  $region17: #{_crnn_forward.39} parent=0 // pred_fallthru
    _
  // Predicated region
  $region18: #{_crnn_forward.39} parent=0 // pred_check
    _
  $region19: #{_crnn_forward.39} parent=0 // pred_check_branch
    %502 = sbr.rel (0) target = $region21
  $region20: #{_crnn_forward.39} parent=0 // pred_region
    _
  $region21: #{_crnn_forward.39} parent=0 // pred_fallthru
    _

// kernel: _crnn_forward.41
$region0: #{_crnn_forward.41}
  #allocation0 [shape = 'u32[]', space=smem, size = 0x4, offset = 0x4, fixed_abs, tag = 'smem constant byte address 0x4 - core index']
  #allocation1 [shape = 'u32[144,128]{1,0:T(1,128)}', space=vmem, size = 0x12000, scoped, tag = 'internal scratch']
  %s0 = inlined_call_operand.vmem [shape: bf16[16,640], index: 0, kind: input, shape index: {}]
  %s1 = inlined_call_operand.vmem [shape: bf16[640,128], index: 1, kind: input, shape index: {}]
  %s2 = inlined_call_operand.vmem [shape: f32[1,128], index: 2, kind: input, shape index: {}]
  %s3 = inlined_call_operand.vmem [shape: f32[16,128], index: 3, kind: output, shape index: {}]
  %s4 = sld [smem:[#allocation0]]
  $region22: #{_crnn_forward.41} parent=0
    _
  %s6 = ssub.s32 1, %s4
  %s7 = scalar_select 0, %s6, %s4
  // Predicated region
  $region2: #{_crnn_forward.41} parent=0 // pred_check
    _
  $region3: #{_crnn_forward.41} parent=0 // pred_check_branch
    %9 = sbr.rel (0) target = $region5
  $region4: #{_crnn_forward.41} parent=0 // pred_region
    _
  $region5: #{_crnn_forward.41} parent=0 // pred_fallthru
    _
  // Predicated region
  $region6: #{_crnn_forward.41} parent=0 // pred_check
    _
  $region7: #{_crnn_forward.41} parent=0 // pred_check_branch
    %11 = sbr.rel (0) target = $region9
  $region8: #{_crnn_forward.41} parent=0 // pred_region
    _
  $region9: #{_crnn_forward.41} parent=0 // pred_fallthru
    _
  // Predicated region
  $region10: #{_crnn_forward.41} parent=0 // pred_check
    _
  $region11: #{_crnn_forward.41} parent=0 // pred_check_branch
    %13 = sbr.rel (0) target = $region13
  $region12: #{_crnn_forward.41} parent=0 // pred_region
    _
  $region13: #{_crnn_forward.41} parent=0 // pred_fallthru
    _
  %v15 = vld [vmem:[%s0] sm:$0xff]
  %v16 = vld [vmem:[%s0 + $0x8] sm:$0xff]
  %v17 = vld [vmem:[%s0 + $0x10] sm:$0xf]
  %v18 = vld [vmem:[%s0 + $0x14] sm:$0xff]
  %v19 = vld [vmem:[%s0 + $0x1c] sm:$0xff]
  %v20 = vld [vmem:[%s0 + $0x24] sm:$0xf]
  %v21 = vld [vmem:[%s1] sm:$0xf]
  %v22 = vld [vmem:[%s1 + $0x4] sm:$0xf]
  %v23 = vld [vmem:[%s1 + $0x8] sm:$0xf]
  %v24 = vld [vmem:[%s1 + $0xc] sm:$0xf]
  %v25 = vld [vmem:[%s1 + $0x10] sm:$0xf]
  %v26 = vld [vmem:[%s1 + $0x14] sm:$0xf]
  %v27 = vld [vmem:[%s1 + $0x18] sm:$0xf]
  %v28 = vld [vmem:[%s1 + $0x1c] sm:$0xf]
  %v29 = vld [vmem:[%s1 + $0x20] sm:$0xf]
  %v30 = vld [vmem:[%s1 + $0x24] sm:$0xf]
  %v31 = vld [vmem:[%s1 + $0x28] sm:$0xf]
  %v32 = vld [vmem:[%s1 + $0x2c] sm:$0xf]
  %v33 = vld [vmem:[%s1 + $0x30] sm:$0xf]
  %v34 = vld [vmem:[%s1 + $0x34] sm:$0xf]
  %v35 = vld [vmem:[%s1 + $0x38] sm:$0xf]
  %v36 = vld [vmem:[%s1 + $0x3c] sm:$0xf]
  %v37 = vld [vmem:[%s1 + $0x40] sm:$0xf]
  %v38 = vld [vmem:[%s1 + $0x44] sm:$0xf]
  %v39 = vld [vmem:[%s1 + $0x48] sm:$0xf]
  %v40 = vld [vmem:[%s1 + $0x4c] sm:$0xf]
  %v41 = vld [vmem:[%s1 + $0x50] sm:$0xf]
  %v42 = vld [vmem:[%s1 + $0x54] sm:$0xf]
  %v43 = vld [vmem:[%s1 + $0x58] sm:$0xf]
  %v44 = vld [vmem:[%s1 + $0x5c] sm:$0xf]
  %v45 = vld [vmem:[%s1 + $0x60] sm:$0xf]
  %v46 = vld [vmem:[%s1 + $0x64] sm:$0xf]
  %v47 = vld [vmem:[%s1 + $0x68] sm:$0xf]
  %v48 = vld [vmem:[%s1 + $0x6c] sm:$0xf]
  %v49 = vld [vmem:[%s1 + $0x70] sm:$0xf]
  %v50 = vld [vmem:[%s1 + $0x74] sm:$0xf]
  %v51 = vld [vmem:[%s1 + $0x78] sm:$0xf]
  %v52 = vld [vmem:[%s1 + $0x7c] sm:$0xf]
  %v53 = vld [vmem:[%s1 + $0x80] sm:$0xf]
  %v54 = vld [vmem:[%s1 + $0x84] sm:$0xf]
  %v55 = vld [vmem:[%s1 + $0x88] sm:$0xf]
  %v56 = vld [vmem:[%s1 + $0x8c] sm:$0xf]
  %v57 = vld [vmem:[%s1 + $0x90] sm:$0xf]
  %v58 = vld [vmem:[%s1 + $0x94] sm:$0xf]
  %v59 = vld [vmem:[%s1 + $0x98] sm:$0xf]
  %v60 = vld [vmem:[%s1 + $0x9c] sm:$0xf]
  %v61 = vld [vmem:[%s1 + $0xa0] sm:$0xf]
  %v62 = vld [vmem:[%s1 + $0xa4] sm:$0xf]
  %v63 = vld [vmem:[%s1 + $0xa8] sm:$0xf]
  %v64 = vld [vmem:[%s1 + $0xac] sm:$0xf]
  %v65 = vld [vmem:[%s1 + $0xb0] sm:$0xf]
  %v66 = vld [vmem:[%s1 + $0xb4] sm:$0xf]
  %v67 = vld [vmem:[%s1 + $0xb8] sm:$0xf]
  %v68 = vld [vmem:[%s1 + $0xbc] sm:$0xf]
  %v69 = vld [vmem:[%s1 + $0xc0] sm:$0xf]
  %v70 = vld [vmem:[%s1 + $0xc4] sm:$0xf]
  %v71 = vld [vmem:[%s1 + $0xc8] sm:$0xf]
  %v72 = vld [vmem:[%s1 + $0xcc] sm:$0xf]
  %v73 = vld [vmem:[%s1 + $0xd0] sm:$0xf]
  %v74 = vld [vmem:[%s1 + $0xd4] sm:$0xf]
  %v75 = vld [vmem:[%s1 + $0xd8] sm:$0xf]
  %v76 = vld [vmem:[%s1 + $0xdc] sm:$0xf]
  %v77 = vld [vmem:[%s1 + $0xe0] sm:$0xf]
  %v78 = vld [vmem:[%s1 + $0xe4] sm:$0xf]
  %v79 = vld [vmem:[%s1 + $0xe8] sm:$0xf]
  %v80 = vld [vmem:[%s1 + $0xec] sm:$0xf]
  %v81 = vld [vmem:[%s1 + $0xf0] sm:$0xf]
  %v82 = vld [vmem:[%s1 + $0xf4] sm:$0xf]
  %v83 = vld [vmem:[%s1 + $0xf8] sm:$0xf]
  %v84 = vld [vmem:[%s1 + $0xfc] sm:$0xf]
  %v85 = vld [vmem:[%s1 + $0x100] sm:$0xf]
  %v86 = vld [vmem:[%s1 + $0x104] sm:$0xf]
  %v87 = vld [vmem:[%s1 + $0x108] sm:$0xf]
  %v88 = vld [vmem:[%s1 + $0x10c] sm:$0xf]
  %v89 = vld [vmem:[%s1 + $0x110] sm:$0xf]
  %v90 = vld [vmem:[%s1 + $0x114] sm:$0xf]
  %v91 = vld [vmem:[%s1 + $0x118] sm:$0xf]
  %v92 = vld [vmem:[%s1 + $0x11c] sm:$0xf]
  %v93 = vld [vmem:[%s1 + $0x120] sm:$0xf]
  %v94 = vld [vmem:[%s1 + $0x124] sm:$0xf]
  %v95 = vld [vmem:[%s1 + $0x128] sm:$0xf]
  %v96 = vld [vmem:[%s1 + $0x12c] sm:$0xf]
  %v97 = vld [vmem:[%s1 + $0x130] sm:$0xf]
  %v98 = vld [vmem:[%s1 + $0x134] sm:$0xf]
  %v99 = vld [vmem:[%s1 + $0x138] sm:$0xf]
  %v100 = vld [vmem:[%s1 + $0x13c] sm:$0xf]
  %v101 = vld [vmem:[%s2] sm:$0x1]
  %v103 = vlaneseq
  %v104 = vshrl.u32 %v103, 7
  %v105 = vsub.s32 0, %v104
  %v106 = vrot.slane %v101, %v105
  %v114 = vunpack.c.l.b16 %v15
  %v115 = vunpack.c.h.b16 %v15
  %v116 = vunpack.c.l.b16 %v16
  %v117 = vunpack.c.h.b16 %v16
  %v118 = vunpack.c.l.b16 %v17
  %v119 = vunpack.c.l.b16 %v18
  %v120 = vunpack.c.h.b16 %v18
  %v121 = vunpack.c.l.b16 %v19
  %v122 = vunpack.c.h.b16 %v19
  %v123 = vunpack.c.l.b16 %v20
  %v124 = vpack.c.b16 %v119, %v114
  %v125 = vpack.c.b16 %v120, %v115
  %v126 = vpack.c.b16 %v121, %v116
  %v127 = vpack.c.b16 %v122, %v117
  %v128 = vpack.c.b16 %v123, %v118
  %v214 = vunpack.c.l.b16 %v21
  %v215 = vunpack.c.l.b16 %v22
  %v216 = vunpack.c.l.b16 %v23
  %v217 = vunpack.c.l.b16 %v24
  %v218 = vunpack.c.l.b16 %v25
  %v219 = vunpack.c.l.b16 %v26
  %v220 = vunpack.c.l.b16 %v27
  %v221 = vunpack.c.l.b16 %v28
  %v222 = vunpack.c.l.b16 %v29
  %v223 = vunpack.c.l.b16 %v30
  %v224 = vunpack.c.l.b16 %v31
  %v225 = vunpack.c.l.b16 %v32
  %v226 = vunpack.c.l.b16 %v33
  %v227 = vunpack.c.l.b16 %v34
  %v228 = vunpack.c.l.b16 %v35
  %v229 = vunpack.c.l.b16 %v36
  %v230 = vunpack.c.l.b16 %v37
  %v231 = vunpack.c.l.b16 %v38
  %v232 = vunpack.c.l.b16 %v39
  %v233 = vunpack.c.l.b16 %v40
  %v234 = vunpack.c.l.b16 %v41
  %v235 = vunpack.c.l.b16 %v42
  %v236 = vunpack.c.l.b16 %v43
  %v237 = vunpack.c.l.b16 %v44
  %v238 = vunpack.c.l.b16 %v45
  %v239 = vunpack.c.l.b16 %v46
  %v240 = vunpack.c.l.b16 %v47
  %v241 = vunpack.c.l.b16 %v48
  %v242 = vunpack.c.l.b16 %v49
  %v243 = vunpack.c.l.b16 %v50
  %v244 = vunpack.c.l.b16 %v51
  %v245 = vunpack.c.l.b16 %v52
  %v246 = vunpack.c.l.b16 %v53
  %v247 = vunpack.c.l.b16 %v54
  %v248 = vunpack.c.l.b16 %v55
  %v249 = vunpack.c.l.b16 %v56
  %v250 = vunpack.c.l.b16 %v57
  %v251 = vunpack.c.l.b16 %v58
  %v252 = vunpack.c.l.b16 %v59
  %v253 = vunpack.c.l.b16 %v60
  %v254 = vunpack.c.l.b16 %v61
  %v255 = vunpack.c.l.b16 %v62
  %v256 = vunpack.c.l.b16 %v63
  %v257 = vunpack.c.l.b16 %v64
  %v258 = vunpack.c.l.b16 %v65
  %v259 = vunpack.c.l.b16 %v66
  %v260 = vunpack.c.l.b16 %v67
  %v261 = vunpack.c.l.b16 %v68
  %v262 = vunpack.c.l.b16 %v69
  %v263 = vunpack.c.l.b16 %v70
  %v264 = vunpack.c.l.b16 %v71
  %v265 = vunpack.c.l.b16 %v72
  %v266 = vunpack.c.l.b16 %v73
  %v267 = vunpack.c.l.b16 %v74
  %v268 = vunpack.c.l.b16 %v75
  %v269 = vunpack.c.l.b16 %v76
  %v270 = vunpack.c.l.b16 %v77
  %v271 = vunpack.c.l.b16 %v78
  %v272 = vunpack.c.l.b16 %v79
  %v273 = vunpack.c.l.b16 %v80
  %v274 = vunpack.c.l.b16 %v81
  %v275 = vunpack.c.l.b16 %v82
  %v276 = vunpack.c.l.b16 %v83
  %v277 = vunpack.c.l.b16 %v84
  %v278 = vunpack.c.l.b16 %v85
  %v279 = vunpack.c.l.b16 %v86
  %v280 = vunpack.c.l.b16 %v87
  %v281 = vunpack.c.l.b16 %v88
  %v282 = vunpack.c.l.b16 %v89
  %v283 = vunpack.c.l.b16 %v90
  %v284 = vunpack.c.l.b16 %v91
  %v285 = vunpack.c.l.b16 %v92
  %v286 = vunpack.c.l.b16 %v93
  %v287 = vunpack.c.l.b16 %v94
  %v288 = vunpack.c.l.b16 %v95
  %v289 = vunpack.c.l.b16 %v96
  %v290 = vunpack.c.l.b16 %v97
  %v291 = vunpack.c.l.b16 %v98
  %v292 = vunpack.c.l.b16 %v99
  %v293 = vunpack.c.l.b16 %v100
  %v294 = vpack.c.b16 %v215, %v214
  %v295 = vpack.c.b16 %v217, %v216
  %v296 = vpack.c.b16 %v219, %v218
  %v297 = vpack.c.b16 %v221, %v220
  %v298 = vpack.c.b16 %v223, %v222
  %v299 = vpack.c.b16 %v225, %v224
  %v300 = vpack.c.b16 %v227, %v226
  %v301 = vpack.c.b16 %v229, %v228
  %v302 = vpack.c.b16 %v231, %v230
  %v303 = vpack.c.b16 %v233, %v232
  %v304 = vpack.c.b16 %v235, %v234
  %v305 = vpack.c.b16 %v237, %v236
  %v306 = vpack.c.b16 %v239, %v238
  %v307 = vpack.c.b16 %v241, %v240
  %v308 = vpack.c.b16 %v243, %v242
  %v309 = vpack.c.b16 %v245, %v244
  %v310 = vpack.c.b16 %v247, %v246
  %v311 = vpack.c.b16 %v249, %v248
  %v312 = vpack.c.b16 %v251, %v250
  %v313 = vpack.c.b16 %v253, %v252
  %v314 = vpack.c.b16 %v255, %v254
  %v315 = vpack.c.b16 %v257, %v256
  %v316 = vpack.c.b16 %v259, %v258
  %v317 = vpack.c.b16 %v261, %v260
  %v318 = vpack.c.b16 %v263, %v262
  %v319 = vpack.c.b16 %v265, %v264
  %v320 = vpack.c.b16 %v267, %v266
  %v321 = vpack.c.b16 %v269, %v268
  %v322 = vpack.c.b16 %v271, %v270
  %v323 = vpack.c.b16 %v273, %v272
  %v324 = vpack.c.b16 %v275, %v274
  %v325 = vpack.c.b16 %v277, %v276
  %v326 = vpack.c.b16 %v279, %v278
  %v327 = vpack.c.b16 %v281, %v280
  %v328 = vpack.c.b16 %v283, %v282
  %v329 = vpack.c.b16 %v285, %v284
  %v330 = vpack.c.b16 %v287, %v286
  %v331 = vpack.c.b16 %v289, %v288
  %v332 = vpack.c.b16 %v291, %v290
  %v333 = vpack.c.b16 %v293, %v292
  %374 = vmatprep.subr.bf16.mxu0 0
  %375 = vmatpush1.bf16.msra.mxu0 %v301
  %376 = vmatprep.subr.bf16.mxu0 0
  %377 = vmatpush1.bf16.msra.mxu0 %v300
  %378 = vmatprep.subr.bf16.mxu0 0
  %379 = vmatpush1.bf16.msra.mxu0 %v299
  %380 = vmatprep.subr.bf16.mxu0 0
  %381 = vmatpush1.bf16.msra.mxu0 %v298
  %382 = vmatprep.subr.bf16.mxu0 0
  %383 = vmatpush1.bf16.msra.mxu0 %v297
  %384 = vmatprep.subr.bf16.mxu0 0
  %385 = vmatpush1.bf16.msra.mxu0 %v296
  %386 = vmatprep.subr.bf16.mxu0 0
  %387 = vmatpush1.bf16.msra.mxu0 %v295
  %388 = vmatprep.subr.bf16.mxu0 0
  %389 = vmatpush1.bf16.msra.mxu0 %v294
  %390 = vmatprep.subr.bf16.mxu0 0
  %391 = vmatpush2.bf16.msra.mxu0 %v309
  %392 = vmatprep.subr.bf16.mxu0 0
  %393 = vmatpush2.bf16.msra.mxu0 %v308
  %394 = vmatprep.subr.bf16.mxu0 0
  %395 = vmatpush2.bf16.msra.mxu0 %v307
  %396 = vmatprep.subr.bf16.mxu0 0
  %397 = vmatpush2.bf16.msra.mxu0 %v306
  %398 = vmatprep.subr.bf16.mxu0 0
  %399 = vmatpush2.bf16.msra.mxu0 %v305
  %400 = vmatprep.subr.bf16.mxu0 0
  %401 = vmatpush2.bf16.msra.mxu0 %v304
  %402 = vmatprep.subr.bf16.mxu0 0
  %403 = vmatpush2.bf16.msra.mxu0 %v303
  %404 = vmatprep.subr.bf16.mxu0 0
  %405 = vmatpush2.bf16.msra.mxu0 %v302
  %406 = vmatprep.mubr.bf16.mxu0 %v125
  %407 = vmatmul.mubr.bf16.gmra.mxu0 %v124
  %v408 = vpop.f32.mrf.mxu0
  %v409 = vadd.f32 %v106, %v408
  %v410 = vpop.f32.mrf.mxu0
  %v411 = vpop.f32.mrf.mxu0
  %v412 = vadd.f32 %v106, %v411
  %v413 = vpop.f32.mrf.mxu0
  %414 = vdwg.mxu0
  %415 = vmatprep.subr.bf16.mxu0 0
  %416 = vmatpush1.bf16.msra.mxu0 %v317
  %417 = vmatprep.subr.bf16.mxu0 0
  %418 = vmatpush1.bf16.msra.mxu0 %v316
  %419 = vmatprep.subr.bf16.mxu0 0
  %420 = vmatpush1.bf16.msra.mxu0 %v315
  %421 = vmatprep.subr.bf16.mxu0 0
  %422 = vmatpush1.bf16.msra.mxu0 %v314
  %423 = vmatprep.subr.bf16.mxu0 0
  %424 = vmatpush1.bf16.msra.mxu0 %v313
  %425 = vmatprep.subr.bf16.mxu0 0
  %426 = vmatpush1.bf16.msra.mxu0 %v312
  %427 = vmatprep.subr.bf16.mxu0 0
  %428 = vmatpush1.bf16.msra.mxu0 %v311
  %429 = vmatprep.subr.bf16.mxu0 0
  %430 = vmatpush1.bf16.msra.mxu0 %v310
  %431 = vmatprep.subr.bf16.mxu0 0
  %432 = vmatpush2.bf16.msra.mxu0 %v325
  %433 = vmatprep.subr.bf16.mxu0 0
  %434 = vmatpush2.bf16.msra.mxu0 %v324
  %435 = vmatprep.subr.bf16.mxu0 0
  %436 = vmatpush2.bf16.msra.mxu0 %v323
  %437 = vmatprep.subr.bf16.mxu0 0
  %438 = vmatpush2.bf16.msra.mxu0 %v322
  %439 = vmatprep.subr.bf16.mxu0 0
  %440 = vmatpush2.bf16.msra.mxu0 %v321
  %441 = vmatprep.subr.bf16.mxu0 0
  %442 = vmatpush2.bf16.msra.mxu0 %v320
  %443 = vmatprep.subr.bf16.mxu0 0
  %444 = vmatpush2.bf16.msra.mxu0 %v319
  %445 = vmatprep.subr.bf16.mxu0 0
  %446 = vmatpush2.bf16.msra.mxu0 %v318
  %447 = vmatprep.mubr.bf16.mxu0 %v127
  %448 = vmatmul.mubr.bf16.gmra.mxu0 %v126
  %v449 = vpop.f32.mrf.mxu0
  %v450 = vadd.f32 %v409, %v449
  %v451 = vpop.f32.mrf.mxu0
  %v452 = vpop.f32.mrf.mxu0
  %v453 = vadd.f32 %v412, %v452
  %v454 = vpop.f32.mrf.mxu0
  %455 = vdwg.mxu0
  %456 = vmatprep.subr.bf16.mxu0 0
  %457 = vmatpush1.bf16.msra.mxu0 %v333
  %458 = vmatprep.subr.bf16.mxu0 0
  %459 = vmatpush1.bf16.msra.mxu0 %v332
  %460 = vmatprep.subr.bf16.mxu0 0
  %461 = vmatpush1.bf16.msra.mxu0 %v331
  %462 = vmatprep.subr.bf16.mxu0 0
  %463 = vmatpush1.bf16.msra.mxu0 %v330
  %464 = vmatprep.subr.bf16.mxu0 0
  %465 = vmatpush1.bf16.msra.mxu0 %v329
  %466 = vmatprep.subr.bf16.mxu0 0
  %467 = vmatpush1.bf16.msra.mxu0 %v328
  %468 = vmatprep.subr.bf16.mxu0 0
  %469 = vmatpush1.bf16.msra.mxu0 %v327
  %470 = vmatprep.subr.bf16.mxu0 0
  %471 = vmatpush1.bf16.msra.mxu0 %v326
  %472 = vmatprep.subr.bf16.mxu0 0
  %473 = vmatpush2.bf16.msra.mxu0 0
  %474 = vmatprep.subr.bf16.mxu0 0
  %475 = vmatpush2.bf16.msra.mxu0 0
  %476 = vmatprep.subr.bf16.mxu0 0
  %477 = vmatpush2.bf16.msra.mxu0 0
  %478 = vmatprep.subr.bf16.mxu0 0
  %479 = vmatpush2.bf16.msra.mxu0 0
  %480 = vmatprep.subr.bf16.mxu0 0
  %481 = vmatpush2.bf16.msra.mxu0 0
  %482 = vmatprep.subr.bf16.mxu0 0
  %483 = vmatpush2.bf16.msra.mxu0 0
  %484 = vmatprep.subr.bf16.mxu0 0
  %485 = vmatpush2.bf16.msra.mxu0 0
  %486 = vmatprep.subr.bf16.mxu0 0
  %487 = vmatpush2.bf16.msra.mxu0 0
  %488 = vmatprep.mubr.bf16.mxu0 0
  %489 = vmatmul.mubr.bf16.gmra.mxu0 %v128
  %v490 = vpop.f32.mrf.mxu0
  %v491 = vadd.f32 %v450, %v490
  %v492 = vpop.f32.mrf.mxu0
  %v493 = vpop.f32.mrf.mxu0
  %v494 = vadd.f32 %v453, %v493
  %v495 = vpop.f32.mrf.mxu0
  %496 = vdwg.mxu0
  %v497 = vmax.f32 %v491, 0.0
  %v498 = vmax.f32 %v494, 0.0
  %499 = vst [vmem:[%s3] sm:$0xff] %v497
  %500 = vst [vmem:[%s3 + $0x8] sm:$0xff] %v498
  // Predicated region
  $region14: #{_crnn_forward.41} parent=0 // pred_check
    _
  $region15: #{_crnn_forward.41} parent=0 // pred_check_branch
    %502 = sbr.rel (0) target = $region17
  $region16: #{_crnn_forward.41} parent=0 // pred_region
    _
  $region17: #{_crnn_forward.41} parent=0 // pred_fallthru
    _
  // Predicated region
  $region18: #{_crnn_forward.41} parent=0 // pred_check
    _
  $region19: #{_crnn_forward.41} parent=0 // pred_check_branch
    %504 = sbr.rel (0) target = $region21
  $region20: #{_crnn_forward.41} parent=0 // pred_region
    _
  $region21: #{_crnn_forward.41} parent=0 // pred_fallthru
    _

// kernel: _crnn_forward.43
$region0: #{_crnn_forward.43}
  #allocation0 [shape = 'u32[]', space=smem, size = 0x4, offset = 0x4, fixed_abs, tag = 'smem constant byte address 0x4 - core index']
  #allocation1 [shape = 'u32[144,128]{1,0:T(1,128)}', space=vmem, size = 0x12000, scoped, tag = 'internal scratch']
  %s0 = inlined_call_operand.vmem [shape: bf16[16,896], index: 0, kind: input, shape index: {}]
  %s1 = inlined_call_operand.vmem [shape: bf16[896,256], index: 1, kind: input, shape index: {}]
  %s2 = inlined_call_operand.vmem [shape: f32[1,256], index: 2, kind: input, shape index: {}]
  %s3 = inlined_call_operand.vmem [shape: f32[16,256], index: 3, kind: output, shape index: {}]
  %s4 = sld [smem:[#allocation0]]
  $region22: #{_crnn_forward.43} parent=0
    _
  %s6 = ssub.s32 1, %s4
  %s7 = scalar_select 0, %s6, %s4
  // Predicated region
  $region2: #{_crnn_forward.43} parent=0 // pred_check
    _
  $region3: #{_crnn_forward.43} parent=0 // pred_check_branch
    %9 = sbr.rel (0) target = $region5
  $region4: #{_crnn_forward.43} parent=0 // pred_region
    _
  $region5: #{_crnn_forward.43} parent=0 // pred_fallthru
    _
  // Predicated region
  $region6: #{_crnn_forward.43} parent=0 // pred_check
    _
  $region7: #{_crnn_forward.43} parent=0 // pred_check_branch
    %11 = sbr.rel (0) target = $region9
  $region8: #{_crnn_forward.43} parent=0 // pred_region
    _
  $region9: #{_crnn_forward.43} parent=0 // pred_fallthru
    _
  // Predicated region
  $region10: #{_crnn_forward.43} parent=0 // pred_check
    _
  $region11: #{_crnn_forward.43} parent=0 // pred_check_branch
    %13 = sbr.rel (0) target = $region13
  $region12: #{_crnn_forward.43} parent=0 // pred_region
    _
  $region13: #{_crnn_forward.43} parent=0 // pred_fallthru
    _
  %v15 = vld [vmem:[%s0] sm:$0xff]
  %v16 = vld [vmem:[%s0 + $0x8] sm:$0xff]
  %v17 = vld [vmem:[%s0 + $0x10] sm:$0xff]
  %v18 = vld [vmem:[%s0 + $0x18] sm:$0xf]
  %v19 = vld [vmem:[%s0 + $0x1c] sm:$0xff]
  %v20 = vld [vmem:[%s0 + $0x24] sm:$0xff]
  %v21 = vld [vmem:[%s0 + $0x2c] sm:$0xff]
  %v22 = vld [vmem:[%s0 + $0x34] sm:$0xf]
  %v23 = vld [vmem:[%s1] sm:$0xff]
  %v24 = vld [vmem:[%s1 + $0x8] sm:$0xff]
  %v25 = vld [vmem:[%s1 + $0x10] sm:$0xff]
  %v26 = vld [vmem:[%s1 + $0x18] sm:$0xff]
  %v27 = vld [vmem:[%s1 + $0x20] sm:$0xff]
  %v28 = vld [vmem:[%s1 + $0x28] sm:$0xff]
  %v29 = vld [vmem:[%s1 + $0x30] sm:$0xff]
  %v30 = vld [vmem:[%s1 + $0x38] sm:$0xff]
  %v31 = vld [vmem:[%s1 + $0x40] sm:$0xff]
  %v32 = vld [vmem:[%s1 + $0x48] sm:$0xff]
  %v33 = vld [vmem:[%s1 + $0x50] sm:$0xff]
  %v34 = vld [vmem:[%s1 + $0x58] sm:$0xff]
  %v35 = vld [vmem:[%s1 + $0x60] sm:$0xff]
  %v36 = vld [vmem:[%s1 + $0x68] sm:$0xff]
  %v37 = vld [vmem:[%s1 + $0x70] sm:$0xff]
  %v38 = vld [vmem:[%s1 + $0x78] sm:$0xff]
  %v39 = vld [vmem:[%s1 + $0x80] sm:$0xff]
  %v40 = vld [vmem:[%s1 + $0x88] sm:$0xff]
  %v41 = vld [vmem:[%s1 + $0x90] sm:$0xff]
  %v42 = vld [vmem:[%s1 + $0x98] sm:$0xff]
  %v43 = vld [vmem:[%s1 + $0xa0] sm:$0xff]
  %v44 = vld [vmem:[%s1 + $0xa8] sm:$0xff]
  %v45 = vld [vmem:[%s1 + $0xb0] sm:$0xff]
  %v46 = vld [vmem:[%s1 + $0xb8] sm:$0xff]
  %v47 = vld [vmem:[%s1 + $0xc0] sm:$0xff]
  %v48 = vld [vmem:[%s1 + $0xc8] sm:$0xff]
  %v49 = vld [vmem:[%s1 + $0xd0] sm:$0xff]
  %v50 = vld [vmem:[%s1 + $0xd8] sm:$0xff]
  %v51 = vld [vmem:[%s1 + $0xe0] sm:$0xff]
  %v52 = vld [vmem:[%s1 + $0xe8] sm:$0xff]
  %v53 = vld [vmem:[%s1 + $0xf0] sm:$0xff]
  %v54 = vld [vmem:[%s1 + $0xf8] sm:$0xff]
  %v55 = vld [vmem:[%s1 + $0x100] sm:$0xff]
  %v56 = vld [vmem:[%s1 + $0x108] sm:$0xff]
  %v57 = vld [vmem:[%s1 + $0x110] sm:$0xff]
  %v58 = vld [vmem:[%s1 + $0x118] sm:$0xff]
  %v59 = vld [vmem:[%s1 + $0x120] sm:$0xff]
  %v60 = vld [vmem:[%s1 + $0x128] sm:$0xff]
  %v61 = vld [vmem:[%s1 + $0x130] sm:$0xff]
  %v62 = vld [vmem:[%s1 + $0x138] sm:$0xff]
  %v63 = vld [vmem:[%s1 + $0x140] sm:$0xff]
  %v64 = vld [vmem:[%s1 + $0x148] sm:$0xff]
  %v65 = vld [vmem:[%s1 + $0x150] sm:$0xff]
  %v66 = vld [vmem:[%s1 + $0x158] sm:$0xff]
  %v67 = vld [vmem:[%s1 + $0x160] sm:$0xff]
  %v68 = vld [vmem:[%s1 + $0x168] sm:$0xff]
  %v69 = vld [vmem:[%s1 + $0x170] sm:$0xff]
  %v70 = vld [vmem:[%s1 + $0x178] sm:$0xff]
  %v71 = vld [vmem:[%s1 + $0x180] sm:$0xff]
  %v72 = vld [vmem:[%s1 + $0x188] sm:$0xff]
  %v73 = vld [vmem:[%s1 + $0x190] sm:$0xff]
  %v74 = vld [vmem:[%s1 + $0x198] sm:$0xff]
  %v75 = vld [vmem:[%s1 + $0x1a0] sm:$0xff]
  %v76 = vld [vmem:[%s1 + $0x1a8] sm:$0xff]
  %v77 = vld [vmem:[%s1 + $0x1b0] sm:$0xff]
  %v78 = vld [vmem:[%s1 + $0x1b8] sm:$0xff]
  %v79 = vld [vmem:[%s1 + $0x1c0] sm:$0xff]
  %v80 = vld [vmem:[%s1 + $0x1c8] sm:$0xff]
  %v81 = vld [vmem:[%s1 + $0x1d0] sm:$0xff]
  %v82 = vld [vmem:[%s1 + $0x1d8] sm:$0xff]
  %v83 = vld [vmem:[%s1 + $0x1e0] sm:$0xff]
  %v84 = vld [vmem:[%s1 + $0x1e8] sm:$0xff]
  %v85 = vld [vmem:[%s1 + $0x1f0] sm:$0xff]
  %v86 = vld [vmem:[%s1 + $0x1f8] sm:$0xff]
  %v87 = vld [vmem:[%s1 + $0x200] sm:$0xff]
  %v88 = vld [vmem:[%s1 + $0x208] sm:$0xff]
  %v89 = vld [vmem:[%s1 + $0x210] sm:$0xff]
  %v90 = vld [vmem:[%s1 + $0x218] sm:$0xff]
  %v91 = vld [vmem:[%s1 + $0x220] sm:$0xff]
  %v92 = vld [vmem:[%s1 + $0x228] sm:$0xff]
  %v93 = vld [vmem:[%s1 + $0x230] sm:$0xff]
  %v94 = vld [vmem:[%s1 + $0x238] sm:$0xff]
  %v95 = vld [vmem:[%s1 + $0x240] sm:$0xff]
  %v96 = vld [vmem:[%s1 + $0x248] sm:$0xff]
  %v97 = vld [vmem:[%s1 + $0x250] sm:$0xff]
  %v98 = vld [vmem:[%s1 + $0x258] sm:$0xff]
  %v99 = vld [vmem:[%s1 + $0x260] sm:$0xff]
  %v100 = vld [vmem:[%s1 + $0x268] sm:$0xff]
  %v101 = vld [vmem:[%s1 + $0x270] sm:$0xff]
  %v102 = vld [vmem:[%s1 + $0x278] sm:$0xff]
  %v103 = vld [vmem:[%s1 + $0x280] sm:$0xff]
  %v104 = vld [vmem:[%s1 + $0x288] sm:$0xff]
  %v105 = vld [vmem:[%s1 + $0x290] sm:$0xff]
  %v106 = vld [vmem:[%s1 + $0x298] sm:$0xff]
  %v107 = vld [vmem:[%s1 + $0x2a0] sm:$0xff]
  %v108 = vld [vmem:[%s1 + $0x2a8] sm:$0xff]
  %v109 = vld [vmem:[%s1 + $0x2b0] sm:$0xff]
  %v110 = vld [vmem:[%s1 + $0x2b8] sm:$0xff]
  %v111 = vld [vmem:[%s1 + $0x2c0] sm:$0xff]
  %v112 = vld [vmem:[%s1 + $0x2c8] sm:$0xff]
  %v113 = vld [vmem:[%s1 + $0x2d0] sm:$0xff]
  %v114 = vld [vmem:[%s1 + $0x2d8] sm:$0xff]
  %v115 = vld [vmem:[%s1 + $0x2e0] sm:$0xff]
  %v116 = vld [vmem:[%s1 + $0x2e8] sm:$0xff]
  %v117 = vld [vmem:[%s1 + $0x2f0] sm:$0xff]
  %v118 = vld [vmem:[%s1 + $0x2f8] sm:$0xff]
  %v119 = vld [vmem:[%s1 + $0x300] sm:$0xff]
  %v120 = vld [vmem:[%s1 + $0x308] sm:$0xff]
  %v121 = vld [vmem:[%s1 + $0x310] sm:$0xff]
  %v122 = vld [vmem:[%s1 + $0x318] sm:$0xff]
  %v123 = vld [vmem:[%s1 + $0x320] sm:$0xff]
  %v124 = vld [vmem:[%s1 + $0x328] sm:$0xff]
  %v125 = vld [vmem:[%s1 + $0x330] sm:$0xff]
  %v126 = vld [vmem:[%s1 + $0x338] sm:$0xff]
  %v127 = vld [vmem:[%s1 + $0x340] sm:$0xff]
  %v128 = vld [vmem:[%s1 + $0x348] sm:$0xff]
  %v129 = vld [vmem:[%s1 + $0x350] sm:$0xff]
  %v130 = vld [vmem:[%s1 + $0x358] sm:$0xff]
  %v131 = vld [vmem:[%s1 + $0x360] sm:$0xff]
  %v132 = vld [vmem:[%s1 + $0x368] sm:$0xff]
  %v133 = vld [vmem:[%s1 + $0x370] sm:$0xff]
  %v134 = vld [vmem:[%s1 + $0x378] sm:$0xff]
  %v135 = vld [vmem:[%s2] sm:$0x3]
  %v137 = vlaneseq
  %v138 = vshrl.u32 %v137, 7
  %v139 = vsub.s32 0, %v138
  %v140 = vrot.slane %v135, %v139
  %v141 = vlaneseq
  %v142 = vshrl.u32 %v141, 7
  %v143 = vsub.s32 1, %v142
  %v144 = vrot.slane %v135, %v143
  %v155 = vunpack.c.l.b16 %v15
  %v156 = vunpack.c.h.b16 %v15
  %v157 = vunpack.c.l.b16 %v16
  %v158 = vunpack.c.h.b16 %v16
  %v159 = vunpack.c.l.b16 %v17
  %v160 = vunpack.c.h.b16 %v17
  %v161 = vunpack.c.l.b16 %v18
  %v162 = vunpack.c.l.b16 %v19
  %v163 = vunpack.c.h.b16 %v19
  %v164 = vunpack.c.l.b16 %v20
  %v165 = vunpack.c.h.b16 %v20
  %v166 = vunpack.c.l.b16 %v21
  %v167 = vunpack.c.h.b16 %v21
  %v168 = vunpack.c.l.b16 %v22
  %v169 = vpack.c.b16 %v162, %v155
  %v170 = vpack.c.b16 %v163, %v156
  %v171 = vpack.c.b16 %v164, %v157
  %v172 = vpack.c.b16 %v165, %v158
  %v173 = vpack.c.b16 %v166, %v159
  %v174 = vpack.c.b16 %v167, %v160
  %v175 = vpack.c.b16 %v168, %v161
  %v295 = vunpack.c.l.b16 %v23
  %v296 = vunpack.c.h.b16 %v23
  %v297 = vunpack.c.l.b16 %v24
  %v298 = vunpack.c.h.b16 %v24
  %v299 = vunpack.c.l.b16 %v25
  %v300 = vunpack.c.h.b16 %v25
  %v301 = vunpack.c.l.b16 %v26
  %v302 = vunpack.c.h.b16 %v26
  %v303 = vunpack.c.l.b16 %v27
  %v304 = vunpack.c.h.b16 %v27
  %v305 = vunpack.c.l.b16 %v28
  %v306 = vunpack.c.h.b16 %v28
  %v307 = vunpack.c.l.b16 %v29
  %v308 = vunpack.c.h.b16 %v29
  %v309 = vunpack.c.l.b16 %v30
  %v310 = vunpack.c.h.b16 %v30
  %v311 = vunpack.c.l.b16 %v31
  %v312 = vunpack.c.h.b16 %v31
  %v313 = vunpack.c.l.b16 %v32
  %v314 = vunpack.c.h.b16 %v32
  %v315 = vunpack.c.l.b16 %v33
  %v316 = vunpack.c.h.b16 %v33
  %v317 = vunpack.c.l.b16 %v34
  %v318 = vunpack.c.h.b16 %v34
  %v319 = vunpack.c.l.b16 %v35
  %v320 = vunpack.c.h.b16 %v35
  %v321 = vunpack.c.l.b16 %v36
  %v322 = vunpack.c.h.b16 %v36
  %v323 = vunpack.c.l.b16 %v37
  %v324 = vunpack.c.h.b16 %v37
  %v325 = vunpack.c.l.b16 %v38
  %v326 = vunpack.c.h.b16 %v38
  %v327 = vunpack.c.l.b16 %v39
  %v328 = vunpack.c.h.b16 %v39
  %v329 = vunpack.c.l.b16 %v40
  %v330 = vunpack.c.h.b16 %v40
  %v331 = vunpack.c.l.b16 %v41
  %v332 = vunpack.c.h.b16 %v41
  %v333 = vunpack.c.l.b16 %v42
  %v334 = vunpack.c.h.b16 %v42
  %v335 = vunpack.c.l.b16 %v43
  %v336 = vunpack.c.h.b16 %v43
  %v337 = vunpack.c.l.b16 %v44
  %v338 = vunpack.c.h.b16 %v44
  %v339 = vunpack.c.l.b16 %v45
  %v340 = vunpack.c.h.b16 %v45
  %v341 = vunpack.c.l.b16 %v46
  %v342 = vunpack.c.h.b16 %v46
  %v343 = vunpack.c.l.b16 %v47
  %v344 = vunpack.c.h.b16 %v47
  %v345 = vunpack.c.l.b16 %v48
  %v346 = vunpack.c.h.b16 %v48
  %v347 = vunpack.c.l.b16 %v49
  %v348 = vunpack.c.h.b16 %v49
  %v349 = vunpack.c.l.b16 %v50
  %v350 = vunpack.c.h.b16 %v50
  %v351 = vunpack.c.l.b16 %v51
  %v352 = vunpack.c.h.b16 %v51
  %v353 = vunpack.c.l.b16 %v52
  %v354 = vunpack.c.h.b16 %v52
  %v355 = vunpack.c.l.b16 %v53
  %v356 = vunpack.c.h.b16 %v53
  %v357 = vunpack.c.l.b16 %v54
  %v358 = vunpack.c.h.b16 %v54
  %v359 = vunpack.c.l.b16 %v55
  %v360 = vunpack.c.h.b16 %v55
  %v361 = vunpack.c.l.b16 %v56
  %v362 = vunpack.c.h.b16 %v56
  %v363 = vunpack.c.l.b16 %v57
  %v364 = vunpack.c.h.b16 %v57
  %v365 = vunpack.c.l.b16 %v58
  %v366 = vunpack.c.h.b16 %v58
  %v367 = vunpack.c.l.b16 %v59
  %v368 = vunpack.c.h.b16 %v59
  %v369 = vunpack.c.l.b16 %v60
  %v370 = vunpack.c.h.b16 %v60
  %v371 = vunpack.c.l.b16 %v61
  %v372 = vunpack.c.h.b16 %v61
  %v373 = vunpack.c.l.b16 %v62
  %v374 = vunpack.c.h.b16 %v62
  %v375 = vunpack.c.l.b16 %v63
  %v376 = vunpack.c.h.b16 %v63
  %v377 = vunpack.c.l.b16 %v64
  %v378 = vunpack.c.h.b16 %v64
  %v379 = vunpack.c.l.b16 %v65
  %v380 = vunpack.c.h.b16 %v65
  %v381 = vunpack.c.l.b16 %v66
  %v382 = vunpack.c.h.b16 %v66
  %v383 = vunpack.c.l.b16 %v67
  %v384 = vunpack.c.h.b16 %v67
  %v385 = vunpack.c.l.b16 %v68
  %v386 = vunpack.c.h.b16 %v68
  %v387 = vunpack.c.l.b16 %v69
  %v388 = vunpack.c.h.b16 %v69
  %v389 = vunpack.c.l.b16 %v70
  %v390 = vunpack.c.h.b16 %v70
  %v391 = vunpack.c.l.b16 %v71
  %v392 = vunpack.c.h.b16 %v71
  %v393 = vunpack.c.l.b16 %v72
  %v394 = vunpack.c.h.b16 %v72
  %v395 = vunpack.c.l.b16 %v73
  %v396 = vunpack.c.h.b16 %v73
  %v397 = vunpack.c.l.b16 %v74
  %v398 = vunpack.c.h.b16 %v74
  %v399 = vunpack.c.l.b16 %v75
  %v400 = vunpack.c.h.b16 %v75
  %v401 = vunpack.c.l.b16 %v76
  %v402 = vunpack.c.h.b16 %v76
  %v403 = vunpack.c.l.b16 %v77
  %v404 = vunpack.c.h.b16 %v77
  %v405 = vunpack.c.l.b16 %v78
  %v406 = vunpack.c.h.b16 %v78
  %v407 = vunpack.c.l.b16 %v79
  %v408 = vunpack.c.h.b16 %v79
  %v409 = vunpack.c.l.b16 %v80
  %v410 = vunpack.c.h.b16 %v80
  %v411 = vunpack.c.l.b16 %v81
  %v412 = vunpack.c.h.b16 %v81
  %v413 = vunpack.c.l.b16 %v82
  %v414 = vunpack.c.h.b16 %v82
  %v415 = vunpack.c.l.b16 %v83
  %v416 = vunpack.c.h.b16 %v83
  %v417 = vunpack.c.l.b16 %v84
  %v418 = vunpack.c.h.b16 %v84
  %v419 = vunpack.c.l.b16 %v85
  %v420 = vunpack.c.h.b16 %v85
  %v421 = vunpack.c.l.b16 %v86
  %v422 = vunpack.c.h.b16 %v86
  %v423 = vunpack.c.l.b16 %v87
  %v424 = vunpack.c.h.b16 %v87
  %v425 = vunpack.c.l.b16 %v88
  %v426 = vunpack.c.h.b16 %v88
  %v427 = vunpack.c.l.b16 %v89
  %v428 = vunpack.c.h.b16 %v89
  %v429 = vunpack.c.l.b16 %v90
  %v430 = vunpack.c.h.b16 %v90
  %v431 = vunpack.c.l.b16 %v91
  %v432 = vunpack.c.h.b16 %v91
  %v433 = vunpack.c.l.b16 %v92
  %v434 = vunpack.c.h.b16 %v92
  %v435 = vunpack.c.l.b16 %v93
  %v436 = vunpack.c.h.b16 %v93
  %v437 = vunpack.c.l.b16 %v94
  %v438 = vunpack.c.h.b16 %v94
  %v439 = vunpack.c.l.b16 %v95
  %v440 = vunpack.c.h.b16 %v95
  %v441 = vunpack.c.l.b16 %v96
  %v442 = vunpack.c.h.b16 %v96
  %v443 = vunpack.c.l.b16 %v97
  %v444 = vunpack.c.h.b16 %v97
  %v445 = vunpack.c.l.b16 %v98
  %v446 = vunpack.c.h.b16 %v98
  %v447 = vunpack.c.l.b16 %v99
  %v448 = vunpack.c.h.b16 %v99
  %v449 = vunpack.c.l.b16 %v100
  %v450 = vunpack.c.h.b16 %v100
  %v451 = vunpack.c.l.b16 %v101
  %v452 = vunpack.c.h.b16 %v101
  %v453 = vunpack.c.l.b16 %v102
  %v454 = vunpack.c.h.b16 %v102
  %v455 = vunpack.c.l.b16 %v103
  %v456 = vunpack.c.h.b16 %v103
  %v457 = vunpack.c.l.b16 %v104
  %v458 = vunpack.c.h.b16 %v104
  %v459 = vunpack.c.l.b16 %v105
  %v460 = vunpack.c.h.b16 %v105
  %v461 = vunpack.c.l.b16 %v106
  %v462 = vunpack.c.h.b16 %v106
  %v463 = vunpack.c.l.b16 %v107
  %v464 = vunpack.c.h.b16 %v107
  %v465 = vunpack.c.l.b16 %v108
  %v466 = vunpack.c.h.b16 %v108
  %v467 = vunpack.c.l.b16 %v109
  %v468 = vunpack.c.h.b16 %v109
  %v469 = vunpack.c.l.b16 %v110
  %v470 = vunpack.c.h.b16 %v110
  %v471 = vunpack.c.l.b16 %v111
  %v472 = vunpack.c.h.b16 %v111
  %v473 = vunpack.c.l.b16 %v112
  %v474 = vunpack.c.h.b16 %v112
  %v475 = vunpack.c.l.b16 %v113
  %v476 = vunpack.c.h.b16 %v113
  %v477 = vunpack.c.l.b16 %v114
  %v478 = vunpack.c.h.b16 %v114
  %v479 = vunpack.c.l.b16 %v115
  %v480 = vunpack.c.h.b16 %v115
  %v481 = vunpack.c.l.b16 %v116
  %v482 = vunpack.c.h.b16 %v116
  %v483 = vunpack.c.l.b16 %v117
  %v484 = vunpack.c.h.b16 %v117
  %v485 = vunpack.c.l.b16 %v118
  %v486 = vunpack.c.h.b16 %v118
  %v487 = vunpack.c.l.b16 %v119
  %v488 = vunpack.c.h.b16 %v119
  %v489 = vunpack.c.l.b16 %v120
  %v490 = vunpack.c.h.b16 %v120
  %v491 = vunpack.c.l.b16 %v121
  %v492 = vunpack.c.h.b16 %v121
  %v493 = vunpack.c.l.b16 %v122
  %v494 = vunpack.c.h.b16 %v122
  %v495 = vunpack.c.l.b16 %v123
  %v496 = vunpack.c.h.b16 %v123
  %v497 = vunpack.c.l.b16 %v124
  %v498 = vunpack.c.h.b16 %v124
  %v499 = vunpack.c.l.b16 %v125
  %v500 = vunpack.c.h.b16 %v125
  %v501 = vunpack.c.l.b16 %v126
  %v502 = vunpack.c.h.b16 %v126
  %v503 = vunpack.c.l.b16 %v127
  %v504 = vunpack.c.h.b16 %v127
  %v505 = vunpack.c.l.b16 %v128
  %v506 = vunpack.c.h.b16 %v128
  %v507 = vunpack.c.l.b16 %v129
  %v508 = vunpack.c.h.b16 %v129
  %v509 = vunpack.c.l.b16 %v130
  %v510 = vunpack.c.h.b16 %v130
  %v511 = vunpack.c.l.b16 %v131
  %v512 = vunpack.c.h.b16 %v131
  %v513 = vunpack.c.l.b16 %v132
  %v514 = vunpack.c.h.b16 %v132
  %v515 = vunpack.c.l.b16 %v133
  %v516 = vunpack.c.h.b16 %v133
  %v517 = vunpack.c.l.b16 %v134
  %v518 = vunpack.c.h.b16 %v134
  %v519 = vpack.c.b16 %v297, %v295
  %v520 = vpack.c.b16 %v298, %v296
  %v521 = vpack.c.b16 %v301, %v299
  %v522 = vpack.c.b16 %v302, %v300
  %v523 = vpack.c.b16 %v305, %v303
  %v524 = vpack.c.b16 %v306, %v304
  %v525 = vpack.c.b16 %v309, %v307
  %v526 = vpack.c.b16 %v310, %v308
  %v527 = vpack.c.b16 %v313, %v311
  %v528 = vpack.c.b16 %v314, %v312
  %v529 = vpack.c.b16 %v317, %v315
  %v530 = vpack.c.b16 %v318, %v316
  %v531 = vpack.c.b16 %v321, %v319
  %v532 = vpack.c.b16 %v322, %v320
  %v533 = vpack.c.b16 %v325, %v323
  %v534 = vpack.c.b16 %v326, %v324
  %v535 = vpack.c.b16 %v329, %v327
  %v536 = vpack.c.b16 %v330, %v328
  %v537 = vpack.c.b16 %v333, %v331
  %v538 = vpack.c.b16 %v334, %v332
  %v539 = vpack.c.b16 %v337, %v335
  %v540 = vpack.c.b16 %v338, %v336
  %v541 = vpack.c.b16 %v341, %v339
  %v542 = vpack.c.b16 %v342, %v340
  %v543 = vpack.c.b16 %v345, %v343
  %v544 = vpack.c.b16 %v346, %v344
  %v545 = vpack.c.b16 %v349, %v347
  %v546 = vpack.c.b16 %v350, %v348
  %v547 = vpack.c.b16 %v353, %v351
  %v548 = vpack.c.b16 %v354, %v352
  %v549 = vpack.c.b16 %v357, %v355
  %v550 = vpack.c.b16 %v358, %v356
  %v551 = vpack.c.b16 %v361, %v359
  %v552 = vpack.c.b16 %v362, %v360
  %v553 = vpack.c.b16 %v365, %v363
  %v554 = vpack.c.b16 %v366, %v364
  %v555 = vpack.c.b16 %v369, %v367
  %v556 = vpack.c.b16 %v370, %v368
  %v557 = vpack.c.b16 %v373, %v371
  %v558 = vpack.c.b16 %v374, %v372
  %v559 = vpack.c.b16 %v377, %v375
  %v560 = vpack.c.b16 %v378, %v376
  %v561 = vpack.c.b16 %v381, %v379
  %v562 = vpack.c.b16 %v382, %v380
  %v563 = vpack.c.b16 %v385, %v383
  %v564 = vpack.c.b16 %v386, %v384
  %v565 = vpack.c.b16 %v389, %v387
  %v566 = vpack.c.b16 %v390, %v388
  %v567 = vpack.c.b16 %v393, %v391
  %v568 = vpack.c.b16 %v394, %v392
  %v569 = vpack.c.b16 %v397, %v395
  %v570 = vpack.c.b16 %v398, %v396
  %v571 = vpack.c.b16 %v401, %v399
  %v572 = vpack.c.b16 %v402, %v400
  %v573 = vpack.c.b16 %v405, %v403
  %v574 = vpack.c.b16 %v406, %v404
  %v575 = vpack.c.b16 %v409, %v407
  %v576 = vpack.c.b16 %v410, %v408
  %v577 = vpack.c.b16 %v413, %v411
  %v578 = vpack.c.b16 %v414, %v412
  %v579 = vpack.c.b16 %v417, %v415
  %v580 = vpack.c.b16 %v418, %v416
  %v581 = vpack.c.b16 %v421, %v419
  %v582 = vpack.c.b16 %v422, %v420
  %v583 = vpack.c.b16 %v425, %v423
  %v584 = vpack.c.b16 %v426, %v424
  %v585 = vpack.c.b16 %v429, %v427
  %v586 = vpack.c.b16 %v430, %v428
  %v587 = vpack.c.b16 %v433, %v431
  %v588 = vpack.c.b16 %v434, %v432
  %v589 = vpack.c.b16 %v437, %v435
  %v590 = vpack.c.b16 %v438, %v436
  %v591 = vpack.c.b16 %v441, %v439
  %v592 = vpack.c.b16 %v442, %v440
  %v593 = vpack.c.b16 %v445, %v443
  %v594 = vpack.c.b16 %v446, %v444
  %v595 = vpack.c.b16 %v449, %v447
  %v596 = vpack.c.b16 %v450, %v448
  %v597 = vpack.c.b16 %v453, %v451
  %v598 = vpack.c.b16 %v454, %v452
  %v599 = vpack.c.b16 %v457, %v455
  %v600 = vpack.c.b16 %v458, %v456
  %v601 = vpack.c.b16 %v461, %v459
  %v602 = vpack.c.b16 %v462, %v460
  %v603 = vpack.c.b16 %v465, %v463
  %v604 = vpack.c.b16 %v466, %v464
  %v605 = vpack.c.b16 %v469, %v467
  %v606 = vpack.c.b16 %v470, %v468
  %v607 = vpack.c.b16 %v473, %v471
  %v608 = vpack.c.b16 %v474, %v472
  %v609 = vpack.c.b16 %v477, %v475
  %v610 = vpack.c.b16 %v478, %v476
  %v611 = vpack.c.b16 %v481, %v479
  %v612 = vpack.c.b16 %v482, %v480
  %v613 = vpack.c.b16 %v485, %v483
  %v614 = vpack.c.b16 %v486, %v484
  %v615 = vpack.c.b16 %v489, %v487
  %v616 = vpack.c.b16 %v490, %v488
  %v617 = vpack.c.b16 %v493, %v491
  %v618 = vpack.c.b16 %v494, %v492
  %v619 = vpack.c.b16 %v497, %v495
  %v620 = vpack.c.b16 %v498, %v496
  %v621 = vpack.c.b16 %v501, %v499
  %v622 = vpack.c.b16 %v502, %v500
  %v623 = vpack.c.b16 %v505, %v503
  %v624 = vpack.c.b16 %v506, %v504
  %v625 = vpack.c.b16 %v509, %v507
  %v626 = vpack.c.b16 %v510, %v508
  %v627 = vpack.c.b16 %v513, %v511
  %v628 = vpack.c.b16 %v514, %v512
  %v629 = vpack.c.b16 %v517, %v515
  %v630 = vpack.c.b16 %v518, %v516
  %743 = vmatprep.subr.bf16.mxu0 %v534
  %744 = vmatpush1.bf16.msra.mxu0 %v533
  %745 = vmatprep.subr.bf16.mxu0 %v532
  %746 = vmatpush1.bf16.msra.mxu0 %v531
  %747 = vmatprep.subr.bf16.mxu0 %v530
  %748 = vmatpush1.bf16.msra.mxu0 %v529
  %749 = vmatprep.subr.bf16.mxu0 %v528
  %750 = vmatpush1.bf16.msra.mxu0 %v527
  %751 = vmatprep.subr.bf16.mxu0 %v526
  %752 = vmatpush1.bf16.msra.mxu0 %v525
  %753 = vmatprep.subr.bf16.mxu0 %v524
  %754 = vmatpush1.bf16.msra.mxu0 %v523
  %755 = vmatprep.subr.bf16.mxu0 %v522
  %756 = vmatpush1.bf16.msra.mxu0 %v521
  %757 = vmatprep.subr.bf16.mxu0 %v520
  %758 = vmatpush1.bf16.msra.mxu0 %v519
  %759 = vmatprep.subr.bf16.mxu0 %v550
  %760 = vmatpush2.bf16.msra.mxu0 %v549
  %761 = vmatprep.subr.bf16.mxu0 %v548
  %762 = vmatpush2.bf16.msra.mxu0 %v547
  %763 = vmatprep.subr.bf16.mxu0 %v546
  %764 = vmatpush2.bf16.msra.mxu0 %v545
  %765 = vmatprep.subr.bf16.mxu0 %v544
  %766 = vmatpush2.bf16.msra.mxu0 %v543
  %767 = vmatprep.subr.bf16.mxu0 %v542
  %768 = vmatpush2.bf16.msra.mxu0 %v541
  %769 = vmatprep.subr.bf16.mxu0 %v540
  %770 = vmatpush2.bf16.msra.mxu0 %v539
  %771 = vmatprep.subr.bf16.mxu0 %v538
  %772 = vmatpush2.bf16.msra.mxu0 %v537
  %773 = vmatprep.subr.bf16.mxu0 %v536
  %774 = vmatpush2.bf16.msra.mxu0 %v535
  %775 = vmatprep.mubr.bf16.mxu0 %v170
  %776 = vmatmul.mubr.bf16.gmra.mxu0 %v169
  %v777 = vpop.f32.mrf.mxu0
  %v778 = vadd.f32 %v140, %v777
  %v779 = vpop.f32.mrf.mxu0
  %v780 = vadd.f32 %v144, %v779
  %v781 = vpop.f32.mrf.mxu0
  %v782 = vadd.f32 %v140, %v781
  %v783 = vpop.f32.mrf.mxu0
  %v784 = vadd.f32 %v144, %v783
  %785 = vdwg.mxu0
  %786 = vmatprep.subr.bf16.mxu0 %v566
  %787 = vmatpush1.bf16.msra.mxu0 %v565
  %788 = vmatprep.subr.bf16.mxu0 %v564
  %789 = vmatpush1.bf16.msra.mxu0 %v563
  %790 = vmatprep.subr.bf16.mxu0 %v562
  %791 = vmatpush1.bf16.msra.mxu0 %v561
  %792 = vmatprep.subr.bf16.mxu0 %v560
  %793 = vmatpush1.bf16.msra.mxu0 %v559
  %794 = vmatprep.subr.bf16.mxu0 %v558
  %795 = vmatpush1.bf16.msra.mxu0 %v557
  %796 = vmatprep.subr.bf16.mxu0 %v556
  %797 = vmatpush1.bf16.msra.mxu0 %v555
  %798 = vmatprep.subr.bf16.mxu0 %v554
  %799 = vmatpush1.bf16.msra.mxu0 %v553
  %800 = vmatprep.subr.bf16.mxu0 %v552
  %801 = vmatpush1.bf16.msra.mxu0 %v551
  %802 = vmatprep.subr.bf16.mxu0 %v582
  %803 = vmatpush2.bf16.msra.mxu0 %v581
  %804 = vmatprep.subr.bf16.mxu0 %v580
  %805 = vmatpush2.bf16.msra.mxu0 %v579
  %806 = vmatprep.subr.bf16.mxu0 %v578
  %807 = vmatpush2.bf16.msra.mxu0 %v577
  %808 = vmatprep.subr.bf16.mxu0 %v576
  %809 = vmatpush2.bf16.msra.mxu0 %v575
  %810 = vmatprep.subr.bf16.mxu0 %v574
  %811 = vmatpush2.bf16.msra.mxu0 %v573
  %812 = vmatprep.subr.bf16.mxu0 %v572
  %813 = vmatpush2.bf16.msra.mxu0 %v571
  %814 = vmatprep.subr.bf16.mxu0 %v570
  %815 = vmatpush2.bf16.msra.mxu0 %v569
  %816 = vmatprep.subr.bf16.mxu0 %v568
  %817 = vmatpush2.bf16.msra.mxu0 %v567
  %818 = vmatprep.mubr.bf16.mxu0 %v172
  %819 = vmatmul.mubr.bf16.gmra.mxu0 %v171
  %v820 = vpop.f32.mrf.mxu0
  %v821 = vadd.f32 %v778, %v820
  %v822 = vpop.f32.mrf.mxu0
  %v823 = vadd.f32 %v780, %v822
  %v824 = vpop.f32.mrf.mxu0
  %v825 = vadd.f32 %v782, %v824
  %v826 = vpop.f32.mrf.mxu0
  %v827 = vadd.f32 %v784, %v826
  %828 = vdwg.mxu0
  %829 = vmatprep.subr.bf16.mxu0 %v598
  %830 = vmatpush1.bf16.msra.mxu0 %v597
  %831 = vmatprep.subr.bf16.mxu0 %v596
  %832 = vmatpush1.bf16.msra.mxu0 %v595
  %833 = vmatprep.subr.bf16.mxu0 %v594
  %834 = vmatpush1.bf16.msra.mxu0 %v593
  %835 = vmatprep.subr.bf16.mxu0 %v592
  %836 = vmatpush1.bf16.msra.mxu0 %v591
  %837 = vmatprep.subr.bf16.mxu0 %v590
  %838 = vmatpush1.bf16.msra.mxu0 %v589
  %839 = vmatprep.subr.bf16.mxu0 %v588
  %840 = vmatpush1.bf16.msra.mxu0 %v587
  %841 = vmatprep.subr.bf16.mxu0 %v586
  %842 = vmatpush1.bf16.msra.mxu0 %v585
  %843 = vmatprep.subr.bf16.mxu0 %v584
  %844 = vmatpush1.bf16.msra.mxu0 %v583
  %845 = vmatprep.subr.bf16.mxu0 %v614
  %846 = vmatpush2.bf16.msra.mxu0 %v613
  %847 = vmatprep.subr.bf16.mxu0 %v612
  %848 = vmatpush2.bf16.msra.mxu0 %v611
  %849 = vmatprep.subr.bf16.mxu0 %v610
  %850 = vmatpush2.bf16.msra.mxu0 %v609
  %851 = vmatprep.subr.bf16.mxu0 %v608
  %852 = vmatpush2.bf16.msra.mxu0 %v607
  %853 = vmatprep.subr.bf16.mxu0 %v606
  %854 = vmatpush2.bf16.msra.mxu0 %v605
  %855 = vmatprep.subr.bf16.mxu0 %v604
  %856 = vmatpush2.bf16.msra.mxu0 %v603
  %857 = vmatprep.subr.bf16.mxu0 %v602
  %858 = vmatpush2.bf16.msra.mxu0 %v601
  %859 = vmatprep.subr.bf16.mxu0 %v600
  %860 = vmatpush2.bf16.msra.mxu0 %v599
  %861 = vmatprep.mubr.bf16.mxu0 %v174
  %862 = vmatmul.mubr.bf16.gmra.mxu0 %v173
  %v863 = vpop.f32.mrf.mxu0
  %v864 = vadd.f32 %v821, %v863
  %v865 = vpop.f32.mrf.mxu0
  %v866 = vadd.f32 %v823, %v865
  %v867 = vpop.f32.mrf.mxu0
  %v868 = vadd.f32 %v825, %v867
  %v869 = vpop.f32.mrf.mxu0
  %v870 = vadd.f32 %v827, %v869
  %871 = vdwg.mxu0
  %872 = vmatprep.subr.bf16.mxu0 %v630
  %873 = vmatpush1.bf16.msra.mxu0 %v629
  %874 = vmatprep.subr.bf16.mxu0 %v628
  %875 = vmatpush1.bf16.msra.mxu0 %v627
  %876 = vmatprep.subr.bf16.mxu0 %v626
  %877 = vmatpush1.bf16.msra.mxu0 %v625
  %878 = vmatprep.subr.bf16.mxu0 %v624
  %879 = vmatpush1.bf16.msra.mxu0 %v623
  %880 = vmatprep.subr.bf16.mxu0 %v622
  %881 = vmatpush1.bf16.msra.mxu0 %v621
  %882 = vmatprep.subr.bf16.mxu0 %v620
  %883 = vmatpush1.bf16.msra.mxu0 %v619
  %884 = vmatprep.subr.bf16.mxu0 %v618
  %885 = vmatpush1.bf16.msra.mxu0 %v617
  %886 = vmatprep.subr.bf16.mxu0 %v616
  %887 = vmatpush1.bf16.msra.mxu0 %v615
  %888 = vmatprep.subr.bf16.mxu0 0
  %889 = vmatpush2.bf16.msra.mxu0 0
  %890 = vmatprep.subr.bf16.mxu0 0
  %891 = vmatpush2.bf16.msra.mxu0 0
  %892 = vmatprep.subr.bf16.mxu0 0
  %893 = vmatpush2.bf16.msra.mxu0 0
  %894 = vmatprep.subr.bf16.mxu0 0
  %895 = vmatpush2.bf16.msra.mxu0 0
  %896 = vmatprep.subr.bf16.mxu0 0
  %897 = vmatpush2.bf16.msra.mxu0 0
  %898 = vmatprep.subr.bf16.mxu0 0
  %899 = vmatpush2.bf16.msra.mxu0 0
  %900 = vmatprep.subr.bf16.mxu0 0
  %901 = vmatpush2.bf16.msra.mxu0 0
  %902 = vmatprep.subr.bf16.mxu0 0
  %903 = vmatpush2.bf16.msra.mxu0 0
  %904 = vmatprep.mubr.bf16.mxu0 0
  %905 = vmatmul.mubr.bf16.gmra.mxu0 %v175
  %v906 = vpop.f32.mrf.mxu0
  %v907 = vadd.f32 %v864, %v906
  %v908 = vpop.f32.mrf.mxu0
  %v909 = vadd.f32 %v866, %v908
  %v910 = vpop.f32.mrf.mxu0
  %v911 = vadd.f32 %v868, %v910
  %v912 = vpop.f32.mrf.mxu0
  %v913 = vadd.f32 %v870, %v912
  %914 = vdwg.mxu0
  %915 = vst [vmem:[%s3] sm:$0xff] %v907
  %916 = vst [vmem:[%s3 + $0x8] sm:$0xff] %v909
  %917 = vst [vmem:[%s3 + $0x10] sm:$0xff] %v911
  %918 = vst [vmem:[%s3 + $0x18] sm:$0xff] %v913
  // Predicated region
  $region14: #{_crnn_forward.43} parent=0 // pred_check
    _
  $region15: #{_crnn_forward.43} parent=0 // pred_check_branch
    %920 = sbr.rel (0) target = $region17
  $region16: #{_crnn_forward.43} parent=0 // pred_region
    _
  $region17: #{_crnn_forward.43} parent=0 // pred_fallthru
    _
  // Predicated region
  $region18: #{_crnn_forward.43} parent=0 // pred_check
    _
  $region19: #{_crnn_forward.43} parent=0 // pred_check_branch
    %922 = sbr.rel (0) target = $region21
  $region20: #{_crnn_forward.43} parent=0 // pred_region
    _
  $region21: #{_crnn_forward.43} parent=0 // pred_fallthru
    _

</llo_original>
